<compile_context>
chip_gen: v7x
topology: tpu7x:2x2x1
jax: 0.10.0
libtpu: 0.0.40
codegen_flags: <defaults>
</compile_context>

<pallas_src>
import functools

import jax
import jax.numpy as jnp
from jax.experimental import pallas as pl
from jax.experimental.pallas import tpu as pltpu


# ----------------------------- in-kernel helpers ----------------------------

def _mm(a, b):
    """MXU matmul: bf16 operands, f32 accumulate."""
    return jnp.dot(a.astype(jnp.bfloat16), b.astype(jnp.bfloat16),
                   preferred_element_type=jnp.float32)


def _mm_t(a, b):
    """a @ b.T (contract last dim of both): bf16 operands, f32 accumulate."""
    return jax.lax.dot_general(a.astype(jnp.bfloat16), b.astype(jnp.bfloat16),
                               (((1,), (1,)), ((), ())),
                               preferred_element_type=jnp.float32)


def _ln(x, g, b, eps=1e-5):
    """LayerNorm over the last dim, f32 math (matches nn.LayerNorm defaults)."""
    mean = jnp.mean(x, axis=-1, keepdims=True)
    xc = x - mean
    var = jnp.mean(xc * xc, axis=-1, keepdims=True)
    return xc * jax.lax.rsqrt(var + eps) * g + b


def _run_block(x, wrefs, num_heads, head_dim, batch, seq):
    """One timm-style pre-LN transformer Block on flattened (B*S, D) tokens.

    Attention heads are batched: one 3-D dot_general for Q*K^T, one for P*V, and a single
    (B*S, D) @ (D, D) output projection.
    """
    (ln1g, ln1b, qkvw, qkvb, projw, projb,
     ln2g, ln2b, fc1w, fc1b, fc2w, fc2b) = [r[0] for r in wrefs]
    D = num_heads * head_dim

    # ---- attention branch -----------------------------------------------------
    h = _ln(x, ln1g, ln1b)
    qkv = _mm(h, qkvw) + qkvb                                  # (B*S, 3D) f32
    scale = float(head_dim) ** -0.5

    qs, ks, vs = [], [], []
    for b in range(batch):                                     # static (B*H small)
        r0 = b * seq
        for hh in range(num_heads):
            lo = hh * head_dim
            qs.append(qkv[r0:r0 + seq, lo:lo + head_dim])
            ks.append(qkv[r0:r0 + seq, D + lo:D + lo + head_dim])
            vs.append(qkv[r0:r0 + seq, 2 * D + lo:2 * D + lo + head_dim])
    q = jnp.stack(qs).astype(jnp.bfloat16)                     # (B*H, S, hd)
    k = jnp.stack(ks).astype(jnp.bfloat16)
    v = jnp.stack(vs).astype(jnp.bfloat16)

    s = jax.lax.dot_general(q, k, (((2,), (2,)), ((0,), (0,))),
                            preferred_element_type=jnp.float32) * scale     # (B*H, S, S)
    m = jnp.max(s, axis=-1, keepdims=True)
    p = jnp.exp(s - m)
    l = jnp.sum(p, axis=-1, keepdims=True)
    p = p * pl.reciprocal(l, approx=True)                      # EUP reciprocal
    o = jax.lax.dot_general(p.astype(jnp.bfloat16), v, (((2,), (1,)), ((0,), (0,))),
                            preferred_element_type=jnp.float32)              # (B*H, S, hd)

    heads = [jnp.concatenate([o[b * num_heads + hh] for hh in range(num_heads)], axis=-1)
             for b in range(batch)]
    o_cat = jnp.concatenate(heads, axis=0)                     # (B*S, D)
    attn = _mm(o_cat, projw) + projb                           # single projection matmul
    x1 = x + attn

    # ---- MLP branch --------------------------------------------------------------
    h2 = _ln(x1, ln2g, ln2b)
    f = _mm(h2, fc1w) + fc1b
    # TODO(synk): PyTorch nn.GELU default is exact (erf); tanh approximation used here.
    f = jax.nn.gelu(f, approximate=True)
    return x1 + _mm(f, fc2w) + fc2b


# ------------------------------ Pallas kernels -------------------------------

def _encoder_kernel(patches_ref, patch_w_ref, patch_b_ref, cls_ref, pos_ref,
                    ln1g, ln1b, qkvw, qkvb, projw, projb, ln2g, ln2b,
                    fc1w, fc1b, fc2w, fc2b,
                    normg_ref, normb_ref, decw_ref, decb_ref, dpos_ref,
                    o_ref, x_scr,
                    *, num_heads, head_dim, batch, seq, depth):
    """Fused: patch-embed + cls/pos + all encoder blocks + final LN + decoder_embed + pos.

    grid = (enc_depth,); block weights are stacked along depth, tokens stay in VMEM scratch.
    """
    d = pl.program_id(0)
    n_patch = seq - 1

    @pl.when(d == 0)
    def _embed():
        tok = _mm(patches_ref[...], patch_w_ref[...]) + patch_b_ref[...]     # (B*N, E)
        pos = pos_ref[...]                                                   # (N, E)
        rows = []
        for b in range(batch):
            rows.append(cls_ref[...])                                        # cls + pos[0]
            rows.append(tok[b * n_patch:(b + 1) * n_patch, :] + pos)
        x_scr[...] = jnp.concatenate(rows, axis=0)                           # (B*S, E)

    wrefs = (ln1g, ln1b, qkvw, qkvb, projw, projb, ln2g, ln2b, fc1w, fc1b, fc2w, fc2b)
    y = _run_block(x_scr[...], wrefs, num_heads, head_dim, batch, seq)
    x_scr[...] = y

    @pl.when(d == depth - 1)
    def _bridge():
        # encoder final LayerNorm -> decoder_embed -> + decoder pos embed
        h = _ln(y, normg_ref[...], normb_ref[...])
        dpos = jnp.concatenate([dpos_ref[...]] * batch, axis=0)              # (B*S, Dd)
        o_ref[...] = (_mm(h, decw_ref[...]) + decb_ref[...] + dpos).astype(o_ref.dtype)


def _decoder_head_kernel(x_ref,
                         ln1g, ln1b, qkvw, qkvb, projw, projb, ln2g, ln2b,
                         fc1w, fc1b, fc2w, fc2b,
                         ng_ref, nb_ref, fusew_ref, bng_ref, bnb_ref,
                         predwt_ref, predbt_ref, lbl_ref,
                         pred_ref, loss_ref, x_scr,
                         *, num_heads, head_dim, batch, seq, depth,
                         num_pix, num_classes, ignore_index, bn_eps):
    """Fused: decoder blocks + decoder LN + segmentation head + CE loss.

    grid = (dec_depth,); the head/loss runs once at the last depth step (whole batch is
    already VMEM-resident), logits are written exactly once per batch element.
    """
    d = pl.program_id(0)

    @pl.when(d == 0)
    def _load():
        x_scr[...] = x_ref[...]
        loss_ref[0] = jnp.float32(0.0)

    wrefs = (ln1g, ln1b, qkvw, qkvb, projw, projb, ln2g, ln2b, fc1w, fc1b, fc2w, fc2b)
    y = _run_block(x_scr[...], wrefs, num_heads, head_dim, batch, seq)
    x_scr[...] = y

    @pl.when(d == depth - 1)
    def _head_and_loss():
        xn = _ln(y, ng_ref[...], nb_ref[...])                                # (B*S, Dd)
        # TODO(synk): the reference head's forward is shape-inconsistent (Conv2d on a token
        # tensor); the CLS token is dropped and patch tokens become the (gh, gw) feature map.
        fm = jnp.concatenate(
            [xn[b * seq + 1:(b + 1) * seq, :] for b in range(batch)], axis=0)   # (B*P, Dd)
        h = jnp.maximum(_mm(fm, fusew_ref[...]), 0.0)                        # 1x1 conv + ReLU

        # BatchNorm2d (training mode): biased batch statistics over all B*P pixels.
        total = float(batch * num_pix)
        mean = jnp.sum(h, axis=0, keepdims=True) / total
        var = jnp.sum(h * h, axis=0, keepdims=True) / total - mean * mean
        inv = jax.lax.rsqrt(var + bn_eps)
        hn = (h - mean) * inv * bng_ref[...] + bnb_ref[...]

        loss_sum = jnp.float32(0.0)
        cnt = jnp.float32(0.0)
        for b in range(batch):                                               # static B=2
            hb = hn[b * num_pix:(b + 1) * num_pix, :]                        # (P, Dd)
            # pred 1x1 conv, channel-major (C, P): no transpose needed afterwards.
            logits = _mm_t(predwt_ref[...], hb) + predbt_ref[...]            # (C, P)
            pred_ref[b] = logits

            # CrossEntropyLoss(ignore_index=0), reductions over the class (sublane) axis.
            lbl = lbl_ref[b:b + 1, :]                                        # (1, P) int32
            m = jnp.max(logits, axis=0, keepdims=True)
            lse = m + jnp.log(jnp.sum(jnp.exp(logits - m), axis=0, keepdims=True))
            cls_idx = jax.lax.broadcasted_iota(jnp.int32, (num_classes, num_pix), 0)
            onehot = (cls_idx == lbl).astype(jnp.float32)
            picked = jnp.sum(logits * onehot, axis=0, keepdims=True)
            valid = (lbl != ignore_index).astype(jnp.float32)
            loss_sum += jnp.sum(valid * (lse - picked))
            cnt += jnp.sum(valid)

        # TODO(synk): PyTorch returns NaN when every pixel equals ignore_index; guarded to 0.
        loss_ref[0] = jnp.where(cnt > 0.0, loss_sum / cnt, jnp.float32(0.0))


# ------------------------------ module glue ----------------------------------

_BLOCK_WEIGHTS = ("ln1_g", "ln1_b", "qkv_w", "qkv_b", "proj_w", "proj_b",
                  "ln2_g", "ln2_b", "fc1_w", "fc1_b", "fc2_w", "fc2_b")
_BF16_BLOCK_WEIGHTS = ("qkv_w", "proj_w", "fc1_w", "fc2_w")


def _const_spec(arr):
    n = arr.ndim
    return pl.BlockSpec(tuple(arr.shape), lambda d, _n=n: (0,) * _n)


def _depth_spec(arr):
    n = arr.ndim - 1
    return pl.BlockSpec((1,) + tuple(arr.shape[1:]), lambda d, _n=n: (d,) + (0,) * _n)


def encoder_stage(params, image, cfg):
    """backbone.encode(x, idx_keep=None) + encoder->decoder bridge, all in one pallas_call."""
    B, C, H, W = image.shape
    ps = cfg["patch_size"]
    gh, gw = H // ps, W // ps
    N = gh * gw
    S = N + 1
    E = cfg["embed_dim"]
    Dd = cfg["decoder_embed_dim"]
    Cp = C * ps * ps
    depth = cfg["enc_depth"]

    # Conv2d(kernel=stride=patch_size) == matmul over flattened patches (c, ph, pw order).
    patches = image.reshape(B, C, gh, ps, gw, ps).transpose(0, 2, 4, 1, 3, 5)
    patches = patches.reshape(B * N, Cp)
    cls_pos = params["cls_token"][0] + params["pos_embed"][0, :1, :]         # (1, E)
    pos_patch = params["pos_embed"][0, 1:, :]                                # (N, E)
    # TODO(synk): the reference repeats the mask token `160 + 1 - S` times; with
    # idx_keep=None the encoder keeps all num_patches+1 tokens so zero mask tokens are
    # inserted — only that (no-op) path is implemented here.
    dec_pos = params["dec_pos_embed"][0]                                     # (S, Dd)
    blk = params["enc_blocks"]

    operands = [patches, params["patch_w"], params["patch_b"], cls_pos, pos_patch]
    specs = [_const_spec(o) for o in operands]
    for name in _BLOCK_WEIGHTS:
        w = blk[name]
        operands.append(w)
        specs.append(_depth_spec(w))
    tail = [params["enc_norm_g"], params["enc_norm_b"], params["dec_embed_w"],
            params["dec_embed_b"], dec_pos]
    operands += tail
    specs += [_const_spec(o) for o in tail]

    return pl.pallas_call(
        functools.partial(_encoder_kernel, num_heads=cfg["enc_heads"],
                          head_dim=E // cfg["enc_heads"], batch=B, seq=S, depth=depth),
        out_shape=jax.ShapeDtypeStruct((B * S, Dd), jnp.float32),
        grid=(depth,),
        in_specs=specs,
        out_specs=pl.BlockSpec((B * S, Dd), lambda d: (0, 0)),
        scratch_shapes=[pltpu.VMEM((B * S, E), jnp.float32)],
        compiler_params=pltpu.CompilerParams(dimension_semantics=("arbitrary",)),
    )(*operands)


def decoder_and_head(params, x, labels, cfg):
    """Decoder blocks + decoder LN + SegmentationHead + CE(ignore_index=0) in one call."""
    Dd = cfg["decoder_embed_dim"]
    B = labels.shape[0]
    gh = gw = cfg["grid"]
    P = gh * gw
    Cc = cfg["classes"]
    S = cfg["num_patches"] + 1
    depth = cfg["dec_depth"]
    blk = params["dec_blocks"]
    lbl = labels.reshape(B, P).astype(jnp.int32)

    operands = [x]
    specs = [_const_spec(x)]
    for name in _BLOCK_WEIGHTS:
        w = blk[name]
        operands.append(w)
        specs.append(_depth_spec(w))
    tail = [params["dec_norm_g"], params["dec_norm_b"], params["fuse_w"],
            params["bn_g"], params["bn_b"], params["pred_wt"], params["pred_bt"], lbl]
    operands += tail
    specs += [_const_spec(o) for o in tail]

    pred_flat, loss = pl.pallas_call(
        functools.partial(_decoder_head_kernel, num_heads=cfg["dec_heads"],
                          head_dim=Dd // cfg["dec_heads"], batch=B, seq=S, depth=depth,
                          num_pix=P, num_classes=Cc, ignore_index=0, bn_eps=1e-5),
        out_shape=(jax.ShapeDtypeStruct((B, Cc, P), jnp.float32),
                   jax.ShapeDtypeStruct((1,), jnp.float32)),
        grid=(depth,),
        in_specs=specs,
        out_specs=(pl.BlockSpec((B, Cc, P), lambda d: (0, 0, 0)),
                   pl.BlockSpec(memory_space=pltpu.MemorySpace.SMEM)),
        scratch_shapes=[pltpu.VMEM((B * S, Dd), jnp.float32)],
        compiler_params=pltpu.CompilerParams(dimension_semantics=("arbitrary",)),
    )(*operands)

    pred = pred_flat.reshape(B, Cc, gh, gw)      # NCHW, no host transpose needed
    return pred, loss[0]


def segmentation_vit_forward(params, image, label, cfg):
    x = encoder_stage(params, image, cfg)
    pred, loss = decoder_and_head(params, x, label, cfg)
    return pred, loss


# ------------------------------ init ----------------------------------------

def _init_block_stack(key, depth, dim, mlp_ratio):
    """Per-layer weights stacked along a leading depth axis; matmul weights pre-cast bf16."""
    hidden = int(dim * mlp_ratio)
    f32 = jnp.float32

    def one(k):
        ks = jax.random.split(k, 4)
        return dict(
            ln1_g=jnp.ones((1, dim), f32), ln1_b=jnp.zeros((1, dim), f32),
            qkv_w=0.02 * jax.random.normal(ks[0], (dim, 3 * dim), f32),
            qkv_b=jnp.zeros((1, 3 * dim), f32),
            proj_w=0.02 * jax.random.normal(ks[1], (dim, dim), f32),
            proj_b=jnp.zeros((1, dim), f32),
            ln2_g=jnp.ones((1, dim), f32), ln2_b=jnp.zeros((1, dim), f32),
            fc1_w=0.02 * jax.random.normal(ks[2], (dim, hidden), f32),
            fc1_b=jnp.zeros((1, hidden), f32),
            fc2_w=0.02 * jax.random.normal(ks[3], (hidden, dim), f32),
            fc2_b=jnp.zeros((1, dim), f32),
        )

    blocks = [one(k) for k in jax.random.split(key, depth)]
    stacked = {n: jnp.stack([b[n] for b in blocks], axis=0) for n in _BLOCK_WEIGHTS}
    for n in _BF16_BLOCK_WEIGHTS:
        stacked[n] = stacked[n].astype(jnp.bfloat16)
    return stacked


def init_params(key, cfg):
    E, Dd = cfg["embed_dim"], cfg["decoder_embed_dim"]
    C, ps, N = cfg["in_channels"], cfg["patch_size"], cfg["num_patches"]
    f32, bf16 = jnp.float32, jnp.bfloat16
    ks = jax.random.split(key, 8)
    pred_w = 0.02 * jax.random.normal(ks[5], (Dd, cfg["classes"]), f32)
    params = dict(
        # backbone (MAE ViT encoder)
        patch_w=(0.02 * jax.random.normal(ks[0], (C * ps * ps, E), f32)).astype(bf16),
        patch_b=jnp.zeros((1, E), f32),
        cls_token=0.02 * jax.random.normal(ks[1], (1, 1, E), f32),
        pos_embed=0.02 * jax.random.normal(ks[2], (1, N + 1, E), f32),
        enc_norm_g=jnp.ones((1, E), f32), enc_norm_b=jnp.zeros((1, E), f32),
        # decoder
        dec_embed_w=(0.02 * jax.random.normal(ks[3], (E, Dd), f32)).astype(bf16),
        dec_embed_b=jnp.zeros((1, Dd), f32),
        mask_token=jnp.full((1, 1, Dd), -1.0, f32),        # unused: no-op mask-token path
        dec_pos_embed=jnp.zeros((1, N + 1, Dd), f32),      # zeros, requires_grad=False
        dec_norm_g=jnp.ones((1, Dd), f32), dec_norm_b=jnp.zeros((1, Dd), f32),
        # SegmentationHead (channels = embed_dim; embedding_layer is unused in its forward)
        fuse_w=(0.02 * jax.random.normal(ks[4], (Dd, Dd), f32)).astype(bf16),  # 1x1 conv, bias=False
        bn_g=jnp.ones((1, Dd), f32), bn_b=jnp.zeros((1, Dd), f32),
        pred_wt=pred_w.T.astype(bf16),                     # (classes, Dd) channel-major
        pred_bt=jnp.zeros((cfg["classes"], 1), f32),
    )
    params["enc_blocks"] = _init_block_stack(ks[6], cfg["enc_depth"], E, cfg["mlp_ratio"])
    params["dec_blocks"] = _init_block_stack(ks[7], cfg["dec_depth"], Dd, cfg["mlp_ratio"])
    return params


# ------------------------------ main -----------------------------------------

if __name__ == "__main__":
    cfg = dict(
        img_size=16, patch_size=4, grid=4, num_patches=16,
        in_channels=3, classes=4,
        embed_dim=32, decoder_embed_dim=32,   # kept equal so the head's channel count is consistent
        enc_depth=2, enc_heads=4,
        dec_depth=2, dec_heads=4, mlp_ratio=4.0,
    )
    key = jax.random.PRNGKey(0)
    pkey, ikey, lkey = jax.random.split(key, 3)

    params = init_params(pkey, cfg)
    image = jax.random.normal(
        ikey, (2, cfg["in_channels"], cfg["img_size"], cfg["img_size"]), jnp.float32)  # NCHW
    label = jax.random.randint(lkey, (2, cfg["grid"], cfg["grid"]), 0, cfg["classes"])
    label = label.at[0, 0, 0].set(1)   # guarantee at least one non-ignored pixel

    fwd = jax.jit(functools.partial(segmentation_vit_forward, cfg=cfg))
    pred, loss = fwd(params, image, label)
    jax.block_until_ready((pred, loss))
    assert pred.shape == (2, cfg["classes"], cfg["grid"], cfg["grid"])
    assert bool(jnp.isfinite(loss))
    print("KERNEL_OK")
</pallas_src>

<mosaic_0001>
module attributes {stable_mosaic.version = 11 : i64} {
  func.func @_encoder_kernel(%arg0: i32, %arg1: memref<32x48xf32, #tpu.memory_space<vmem>>, %arg2: memref<48x32xbf16, #tpu.memory_space<vmem>>, %arg3: memref<1x32xf32, #tpu.memory_space<vmem>>, %arg4: memref<1x32xf32, #tpu.memory_space<vmem>>, %arg5: memref<16x32xf32, #tpu.memory_space<vmem>>, %arg6: memref<1x1x32xf32, #tpu.memory_space<vmem>>, %arg7: memref<1x1x32xf32, #tpu.memory_space<vmem>>, %arg8: memref<1x32x96xbf16, #tpu.memory_space<vmem>>, %arg9: memref<1x1x96xf32, #tpu.memory_space<vmem>>, %arg10: memref<1x32x32xbf16, #tpu.memory_space<vmem>>, %arg11: memref<1x1x32xf32, #tpu.memory_space<vmem>>, %arg12: memref<1x1x32xf32, #tpu.memory_space<vmem>>, %arg13: memref<1x1x32xf32, #tpu.memory_space<vmem>>, %arg14: memref<1x32x128xbf16, #tpu.memory_space<vmem>>, %arg15: memref<1x1x128xf32, #tpu.memory_space<vmem>>, %arg16: memref<1x128x32xbf16, #tpu.memory_space<vmem>>, %arg17: memref<1x1x32xf32, #tpu.memory_space<vmem>>, %arg18: memref<1x32xf32, #tpu.memory_space<vmem>>, %arg19: memref<1x32xf32, #tpu.memory_space<vmem>>, %arg20: memref<32x32xbf16, #tpu.memory_space<vmem>>, %arg21: memref<1x32xf32, #tpu.memory_space<vmem>>, %arg22: memref<17x32xf32, #tpu.memory_space<vmem>>, %arg23: memref<34x32xf32, #tpu.memory_space<vmem>>, %arg24: memref<34x32xf32, #tpu.memory_space<vmem>>) attributes {dimension_semantics = [#tpu.dimension_semantics<arbitrary>], iteration_bounds = array<i64: 2>, scalar_prefetch = 0 : i64, scratch_operands = 1 : i64, tpu.core_type = #tpu.core_type<tc>, window_params = [{pipeline_mode = #tpu.pipeline_mode<synchronous>, transform_indices = @transform_0, window_bounds = array<i64: 32, 48>}, {pipeline_mode = #tpu.pipeline_mode<synchronous>, transform_indices = @transform_1, window_bounds = array<i64: 48, 32>}, {pipeline_mode = #tpu.pipeline_mode<synchronous>, transform_indices = @transform_2, window_bounds = array<i64: 1, 32>}, {pipeline_mode = #tpu.pipeline_mode<synchronous>, transform_indices = @transform_3, window_bounds = array<i64: 1, 32>}, {pipeline_mode = #tpu.pipeline_mode<synchronous>, transform_indices = @transform_4, window_bounds = array<i64: 16, 32>}, {transform_indices = @transform_5, window_bounds = array<i64: 1, 1, 32>}, {transform_indices = @transform_6, window_bounds = array<i64: 1, 1, 32>}, {transform_indices = @transform_7, window_bounds = array<i64: 1, 32, 96>}, {transform_indices = @transform_8, window_bounds = array<i64: 1, 1, 96>}, {transform_indices = @transform_9, window_bounds = array<i64: 1, 32, 32>}, {transform_indices = @transform_10, window_bounds = array<i64: 1, 1, 32>}, {transform_indices = @transform_11, window_bounds = array<i64: 1, 1, 32>}, {transform_indices = @transform_12, window_bounds = array<i64: 1, 1, 32>}, {transform_indices = @transform_13, window_bounds = array<i64: 1, 32, 128>}, {transform_indices = @transform_14, window_bounds = array<i64: 1, 1, 128>}, {transform_indices = @transform_15, window_bounds = array<i64: 1, 128, 32>}, {transform_indices = @transform_16, window_bounds = array<i64: 1, 1, 32>}, {pipeline_mode = #tpu.pipeline_mode<synchronous>, transform_indices = @transform_17, window_bounds = array<i64: 1, 32>}, {pipeline_mode = #tpu.pipeline_mode<synchronous>, transform_indices = @transform_18, window_bounds = array<i64: 1, 32>}, {pipeline_mode = #tpu.pipeline_mode<synchronous>, transform_indices = @transform_19, window_bounds = array<i64: 32, 32>}, {pipeline_mode = #tpu.pipeline_mode<synchronous>, transform_indices = @transform_20, window_bounds = array<i64: 1, 32>}, {pipeline_mode = #tpu.pipeline_mode<synchronous>, transform_indices = @transform_21, window_bounds = array<i64: 17, 32>}, {pipeline_mode = #tpu.pipeline_mode<synchronous>, transform_indices = @transform_22, window_bounds = array<i64: 34, 32>}]} {
    %c0_i32 = arith.constant 0 : i32
    %0 = arith.cmpi eq, %arg0, %c0_i32 : i32
    %1 = arith.extui %0 : i1 to i32
    %c0_i32_0 = arith.constant 0 : i32
    %2 = arith.cmpi ne, %1, %c0_i32_0 : i32
    scf.if %2 {
      %c0_63 = arith.constant 0 : index
      %c0_64 = arith.constant 0 : index
      %191 = vector.load %arg1[%c0_63, %c0_64] : memref<32x48xf32, #tpu.memory_space<vmem>>, vector<32x48xf32>
      %c0_65 = arith.constant 0 : index
      %c0_66 = arith.constant 0 : index
      %192 = vector.load %arg2[%c0_65, %c0_66] : memref<48x32xbf16, #tpu.memory_space<vmem>>, vector<48x32xbf16>
      %193 = arith.truncf %191 : vector<32x48xf32> to vector<32x48xbf16>
      %cst_67 = arith.constant dense<0.000000e+00> : vector<32x32xf32>
      %194 = tpu.matmul %193, %192, %cst_67 {dimension_numbers = #tpu.dot_dimension_numbers<[1], [0], [0], [1], [0, 0, 1, 1], [], []>} : vector<32x48xbf16>, vector<48x32xbf16>, vector<32x32xf32> -> vector<32x32xf32>
      %c0_68 = arith.constant 0 : index
      %c0_69 = arith.constant 0 : index
      %195 = vector.load %arg3[%c0_68, %c0_69] : memref<1x32xf32, #tpu.memory_space<vmem>>, vector<1x32xf32>
      %196 = vector.broadcast %195 : vector<1x32xf32> to vector<32x32xf32>
      %197 = arith.addf %194, %196 : vector<32x32xf32>
      %c0_70 = arith.constant 0 : index
      %c0_71 = arith.constant 0 : index
      %198 = vector.load %arg5[%c0_70, %c0_71] : memref<16x32xf32, #tpu.memory_space<vmem>>, vector<16x32xf32>
      %c0_72 = arith.constant 0 : index
      %c0_73 = arith.constant 0 : index
      %199 = vector.load %arg4[%c0_72, %c0_73] : memref<1x32xf32, #tpu.memory_space<vmem>>, vector<1x32xf32>
      %200 = vector.extract_strided_slice %197 {offsets = [0, 0], sizes = [16, 32], strides = [1, 1]} : vector<32x32xf32> to vector<16x32xf32>
      %201 = arith.addf %200, %198 : vector<16x32xf32>
      %c0_74 = arith.constant 0 : index
      %c0_75 = arith.constant 0 : index
      %202 = vector.load %arg4[%c0_74, %c0_75] : memref<1x32xf32, #tpu.memory_space<vmem>>, vector<1x32xf32>
      %203 = vector.extract_strided_slice %197 {offsets = [16, 0], sizes = [16, 32], strides = [1, 1]} : vector<32x32xf32> to vector<16x32xf32>
      %204 = arith.addf %203, %198 : vector<16x32xf32>
      %205 = tpu.concatenate %199, %201, %202, %204 in 0 : vector<1x32xf32>, vector<16x32xf32>, vector<1x32xf32>, vector<16x32xf32> -> vector<34x32xf32>
      %c0_76 = arith.constant 0 : index
      %c0_77 = arith.constant 0 : index
      %206 = vector.load %arg24[%c0_76, %c0_77] : memref<34x32xf32, #tpu.memory_space<vmem>>, vector<34x32xf32>
      tpu.vector_store %arg24[%c0_76, %c0_77], %205 {strides = array<i32>} : memref<34x32xf32, #tpu.memory_space<vmem>>, vector<34x32xf32>,
    } else {
    }
    %c0 = arith.constant 0 : index
    %c0_1 = arith.constant 0 : index
    %3 = vector.load %arg24[%c0, %c0_1] : memref<34x32xf32, #tpu.memory_space<vmem>>, vector<34x32xf32>
    %c0_2 = arith.constant 0 : index
    %c0_3 = arith.constant 0 : index
    %c0_4 = arith.constant 0 : index
    %4 = vector.load %arg6[%c0_2, %c0_3, %c0_4] : memref<1x1x32xf32, #tpu.memory_space<vmem>>, vector<1x1x32xf32>
    %5 = vector.shape_cast %4 : vector<1x1x32xf32> to vector<1x32xf32>
    %c0_5 = arith.constant 0 : index
    %c0_6 = arith.constant 0 : index
    %c0_7 = arith.constant 0 : index
    %6 = vector.load %arg7[%c0_5, %c0_6, %c0_7] : memref<1x1x32xf32, #tpu.memory_space<vmem>>, vector<1x1x32xf32>
    %7 = vector.shape_cast %6 : vector<1x1x32xf32> to vector<1x32xf32>
    %c0_8 = arith.constant 0 : index
    %c0_9 = arith.constant 0 : index
    %c0_10 = arith.constant 0 : index
    %8 = vector.load %arg8[%c0_8, %c0_9, %c0_10] : memref<1x32x96xbf16, #tpu.memory_space<vmem>>, vector<1x32x96xbf16>
    %9 = vector.shape_cast %8 : vector<1x32x96xbf16> to vector<32x96xbf16>
    %c0_11 = arith.constant 0 : index
    %c0_12 = arith.constant 0 : index
    %c0_13 = arith.constant 0 : index
    %10 = vector.load %arg9[%c0_11, %c0_12, %c0_13] : memref<1x1x96xf32, #tpu.memory_space<vmem>>, vector<1x1x96xf32>
    %11 = vector.shape_cast %10 : vector<1x1x96xf32> to vector<1x96xf32>
    %c0_14 = arith.constant 0 : index
    %c0_15 = arith.constant 0 : index
    %c0_16 = arith.constant 0 : index
    %12 = vector.load %arg10[%c0_14, %c0_15, %c0_16] : memref<1x32x32xbf16, #tpu.memory_space<vmem>>, vector<1x32x32xbf16>
    %13 = vector.shape_cast %12 : vector<1x32x32xbf16> to vector<32x32xbf16>
    %c0_17 = arith.constant 0 : index
    %c0_18 = arith.constant 0 : index
    %c0_19 = arith.constant 0 : index
    %14 = vector.load %arg11[%c0_17, %c0_18, %c0_19] : memref<1x1x32xf32, #tpu.memory_space<vmem>>, vector<1x1x32xf32>
    %15 = vector.shape_cast %14 : vector<1x1x32xf32> to vector<1x32xf32>
    %c0_20 = arith.constant 0 : index
    %c0_21 = arith.constant 0 : index
    %c0_22 = arith.constant 0 : index
    %16 = vector.load %arg12[%c0_20, %c0_21, %c0_22] : memref<1x1x32xf32, #tpu.memory_space<vmem>>, vector<1x1x32xf32>
    %17 = vector.shape_cast %16 : vector<1x1x32xf32> to vector<1x32xf32>
    %c0_23 = arith.constant 0 : index
    %c0_24 = arith.constant 0 : index
    %c0_25 = arith.constant 0 : index
    %18 = vector.load %arg13[%c0_23, %c0_24, %c0_25] : memref<1x1x32xf32, #tpu.memory_space<vmem>>, vector<1x1x32xf32>
    %19 = vector.shape_cast %18 : vector<1x1x32xf32> to vector<1x32xf32>
    %c0_26 = arith.constant 0 : index
    %c0_27 = arith.constant 0 : index
    %c0_28 = arith.constant 0 : index
    %20 = vector.load %arg14[%c0_26, %c0_27, %c0_28] : memref<1x32x128xbf16, #tpu.memory_space<vmem>>, vector<1x32x128xbf16>
    %21 = vector.shape_cast %20 : vector<1x32x128xbf16> to vector<32x128xbf16>
    %c0_29 = arith.constant 0 : index
    %c0_30 = arith.constant 0 : index
    %c0_31 = arith.constant 0 : index
    %22 = vector.load %arg15[%c0_29, %c0_30, %c0_31] : memref<1x1x128xf32, #tpu.memory_space<vmem>>, vector<1x1x128xf32>
    %23 = vector.shape_cast %22 : vector<1x1x128xf32> to vector<1x128xf32>
    %c0_32 = arith.constant 0 : index
    %c0_33 = arith.constant 0 : index
    %c0_34 = arith.constant 0 : index
    %24 = vector.load %arg16[%c0_32, %c0_33, %c0_34] : memref<1x128x32xbf16, #tpu.memory_space<vmem>>, vector<1x128x32xbf16>
    %25 = vector.shape_cast %24 : vector<1x128x32xbf16> to vector<128x32xbf16>
    %c0_35 = arith.constant 0 : index
    %c0_36 = arith.constant 0 : index
    %c0_37 = arith.constant 0 : index
    %26 = vector.load %arg17[%c0_35, %c0_36, %c0_37] : memref<1x1x32xf32, #tpu.memory_space<vmem>>, vector<1x1x32xf32>
    %27 = vector.shape_cast %26 : vector<1x1x32xf32> to vector<1x32xf32>
    %cst = arith.constant dense<0.000000e+00> : vector<34xf32>
    %28 = vector.multi_reduction <add>, %3, %cst [1] : vector<34x32xf32> to vector<34xf32>
    %29 = vector.shape_cast %28 : vector<34xf32> to vector<34x1xf32>
    %cst_38 = arith.constant 3.200000e+01 : f32
    %30 = vector.broadcast %cst_38 : f32 to vector<34x1xf32>
    %31 = arith.divf %29, %30 : vector<34x1xf32>
    %32 = vector.broadcast %31 : vector<34x1xf32> to vector<34x32xf32>
    %33 = arith.subf %3, %32 : vector<34x32xf32>
    %34 = arith.mulf %33, %33 : vector<34x32xf32>
    %cst_39 = arith.constant dense<0.000000e+00> : vector<34xf32>
    %35 = vector.multi_reduction <add>, %34, %cst_39 [1] : vector<34x32xf32> to vector<34xf32>
    %36 = vector.shape_cast %35 : vector<34xf32> to vector<34x1xf32>
    %cst_40 = arith.constant 3.200000e+01 : f32
    %37 = vector.broadcast %cst_40 : f32 to vector<34x1xf32>
    %38 = arith.divf %36, %37 : vector<34x1xf32>
    %cst_41 = arith.constant 9.99999974E-6 : f32
    %39 = vector.broadcast %cst_41 : f32 to vector<34x1xf32>
    %40 = arith.addf %38, %39 : vector<34x1xf32>
    %41 = math.rsqrt %40 : vector<34x1xf32>
    %42 = vector.broadcast %41 : vector<34x1xf32> to vector<34x32xf32>
    %43 = arith.mulf %33, %42 : vector<34x32xf32>
    %44 = vector.broadcast %5 : vector<1x32xf32> to vector<34x32xf32>
    %45 = arith.mulf %43, %44 : vector<34x32xf32>
    %46 = vector.broadcast %7 : vector<1x32xf32> to vector<34x32xf32>
    %47 = arith.addf %45, %46 : vector<34x32xf32>
    %48 = arith.truncf %47 : vector<34x32xf32> to vector<34x32xbf16>
    %cst_42 = arith.constant dense<0.000000e+00> : vector<34x96xf32>
    %49 = tpu.matmul %48, %9, %cst_42 {dimension_numbers = #tpu.dot_dimension_numbers<[1], [0], [0], [1], [0, 0, 1, 1], [], []>} : vector<34x32xbf16>, vector<32x96xbf16>, vector<34x96xf32> -> vector<34x96xf32>
    %50 = vector.broadcast %11 : vector<1x96xf32> to vector<34x96xf32>
    %51 = arith.addf %49, %50 : vector<34x96xf32>
    %52 = vector.extract_strided_slice %51 {offsets = [0, 0], sizes = [17, 8], strides = [1, 1]} : vector<34x96xf32> to vector<17x8xf32>
    %53 = vector.extract_strided_slice %51 {offsets = [0, 32], sizes = [17, 8], strides = [1, 1]} : vector<34x96xf32> to vector<17x8xf32>
    %54 = vector.extract_strided_slice %51 {offsets = [0, 64], sizes = [17, 8], strides = [1, 1]} : vector<34x96xf32> to vector<17x8xf32>
    %55 = vector.extract_strided_slice %51 {offsets = [0, 8], sizes = [17, 8], strides = [1, 1]} : vector<34x96xf32> to vector<17x8xf32>
    %56 = vector.extract_strided_slice %51 {offsets = [0, 40], sizes = [17, 8], strides = [1, 1]} : vector<34x96xf32> to vector<17x8xf32>
    %57 = vector.extract_strided_slice %51 {offsets = [0, 72], sizes = [17, 8], strides = [1, 1]} : vector<34x96xf32> to vector<17x8xf32>
    %58 = vector.extract_strided_slice %51 {offsets = [0, 16], sizes = [17, 8], strides = [1, 1]} : vector<34x96xf32> to vector<17x8xf32>
    %59 = vector.extract_strided_slice %51 {offsets = [0, 48], sizes = [17, 8], strides = [1, 1]} : vector<34x96xf32> to vector<17x8xf32>
    %60 = vector.extract_strided_slice %51 {offsets = [0, 80], sizes = [17, 8], strides = [1, 1]} : vector<34x96xf32> to vector<17x8xf32>
    %61 = vector.extract_strided_slice %51 {offsets = [0, 24], sizes = [17, 8], strides = [1, 1]} : vector<34x96xf32> to vector<17x8xf32>
    %62 = vector.extract_strided_slice %51 {offsets = [0, 56], sizes = [17, 8], strides = [1, 1]} : vector<34x96xf32> to vector<17x8xf32>
    %63 = vector.extract_strided_slice %51 {offsets = [0, 88], sizes = [17, 8], strides = [1, 1]} : vector<34x96xf32> to vector<17x8xf32>
    %64 = vector.extract_strided_slice %51 {offsets = [17, 0], sizes = [17, 8], strides = [1, 1]} : vector<34x96xf32> to vector<17x8xf32>
    %65 = vector.extract_strided_slice %51 {offsets = [17, 32], sizes = [17, 8], strides = [1, 1]} : vector<34x96xf32> to vector<17x8xf32>
    %66 = vector.extract_strided_slice %51 {offsets = [17, 64], sizes = [17, 8], strides = [1, 1]} : vector<34x96xf32> to vector<17x8xf32>
    %67 = vector.extract_strided_slice %51 {offsets = [17, 8], sizes = [17, 8], strides = [1, 1]} : vector<34x96xf32> to vector<17x8xf32>
    %68 = vector.extract_strided_slice %51 {offsets = [17, 40], sizes = [17, 8], strides = [1, 1]} : vector<34x96xf32> to vector<17x8xf32>
    %69 = vector.extract_strided_slice %51 {offsets = [17, 72], sizes = [17, 8], strides = [1, 1]} : vector<34x96xf32> to vector<17x8xf32>
    %70 = vector.extract_strided_slice %51 {offsets = [17, 16], sizes = [17, 8], strides = [1, 1]} : vector<34x96xf32> to vector<17x8xf32>
    %71 = vector.extract_strided_slice %51 {offsets = [17, 48], sizes = [17, 8], strides = [1, 1]} : vector<34x96xf32> to vector<17x8xf32>
    %72 = vector.extract_strided_slice %51 {offsets = [17, 80], sizes = [17, 8], strides = [1, 1]} : vector<34x96xf32> to vector<17x8xf32>
    %73 = vector.extract_strided_slice %51 {offsets = [17, 24], sizes = [17, 8], strides = [1, 1]} : vector<34x96xf32> to vector<17x8xf32>
    %74 = vector.extract_strided_slice %51 {offsets = [17, 56], sizes = [17, 8], strides = [1, 1]} : vector<34x96xf32> to vector<17x8xf32>
    %75 = vector.extract_strided_slice %51 {offsets = [17, 88], sizes = [17, 8], strides = [1, 1]} : vector<34x96xf32> to vector<17x8xf32>
    %76 = vector.shape_cast %52 : vector<17x8xf32> to vector<1x17x8xf32>
    %77 = vector.shape_cast %55 : vector<17x8xf32> to vector<1x17x8xf32>
    %78 = vector.shape_cast %58 : vector<17x8xf32> to vector<1x17x8xf32>
    %79 = vector.shape_cast %61 : vector<17x8xf32> to vector<1x17x8xf32>
    %80 = vector.shape_cast %64 : vector<17x8xf32> to vector<1x17x8xf32>
    %81 = vector.shape_cast %67 : vector<17x8xf32> to vector<1x17x8xf32>
    %82 = vector.shape_cast %70 : vector<17x8xf32> to vector<1x17x8xf32>
    %83 = vector.shape_cast %73 : vector<17x8xf32> to vector<1x17x8xf32>
    %84 = tpu.concatenate %76, %77, %78, %79, %80, %81, %82, %83 in 0 : vector<1x17x8xf32>, vector<1x17x8xf32>, vector<1x17x8xf32>, vector<1x17x8xf32>, vector<1x17x8xf32>, vector<1x17x8xf32>, vector<1x17x8xf32>, vector<1x17x8xf32> -> vector<8x17x8xf32>
    %85 = arith.truncf %84 : vector<8x17x8xf32> to vector<8x17x8xbf16>
    %86 = vector.shape_cast %53 : vector<17x8xf32> to vector<1x17x8xf32>
    %87 = vector.shape_cast %56 : vector<17x8xf32> to vector<1x17x8xf32>
    %88 = vector.shape_cast %59 : vector<17x8xf32> to vector<1x17x8xf32>
    %89 = vector.shape_cast %62 : vector<17x8xf32> to vector<1x17x8xf32>
    %90 = vector.shape_cast %65 : vector<17x8xf32> to vector<1x17x8xf32>
    %91 = vector.shape_cast %68 : vector<17x8xf32> to vector<1x17x8xf32>
    %92 = vector.shape_cast %71 : vector<17x8xf32> to vector<1x17x8xf32>
    %93 = vector.shape_cast %74 : vector<17x8xf32> to vector<1x17x8xf32>
    %94 = tpu.concatenate %86, %87, %88, %89, %90, %91, %92, %93 in 0 : vector<1x17x8xf32>, vector<1x17x8xf32>, vector<1x17x8xf32>, vector<1x17x8xf32>, vector<1x17x8xf32>, vector<1x17x8xf32>, vector<1x17x8xf32>, vector<1x17x8xf32> -> vector<8x17x8xf32>
    %95 = arith.truncf %94 : vector<8x17x8xf32> to vector<8x17x8xbf16>
    %96 = vector.shape_cast %54 : vector<17x8xf32> to vector<1x17x8xf32>
    %97 = vector.shape_cast %57 : vector<17x8xf32> to vector<1x17x8xf32>
    %98 = vector.shape_cast %60 : vector<17x8xf32> to vector<1x17x8xf32>
    %99 = vector.shape_cast %63 : vector<17x8xf32> to vector<1x17x8xf32>
    %100 = vector.shape_cast %66 : vector<17x8xf32> to vector<1x17x8xf32>
    %101 = vector.shape_cast %69 : vector<17x8xf32> to vector<1x17x8xf32>
    %102 = vector.shape_cast %72 : vector<17x8xf32> to vector<1x17x8xf32>
    %103 = vector.shape_cast %75 : vector<17x8xf32> to vector<1x17x8xf32>
    %104 = tpu.concatenate %96, %97, %98, %99, %100, %101, %102, %103 in 0 : vector<1x17x8xf32>, vector<1x17x8xf32>, vector<1x17x8xf32>, vector<1x17x8xf32>, vector<1x17x8xf32>, vector<1x17x8xf32>, vector<1x17x8xf32>, vector<1x17x8xf32> -> vector<8x17x8xf32>
    %105 = arith.truncf %104 : vector<8x17x8xf32> to vector<8x17x8xbf16>
    %cst_43 = arith.constant dense<0.000000e+00> : vector<8x17x17xf32>
    %106 = tpu.matmul %85, %95, %cst_43 {dimension_numbers = #tpu.dot_dimension_numbers<[2], [2], [1], [1], [0, 0, 0, 1, 1, 1], [0], [0]>} : vector<8x17x8xbf16>, vector<8x17x8xbf16>, vector<8x17x17xf32> -> vector<8x17x17xf32>
    %cst_44 = arith.constant 0.353553385 : f32
    %107 = vector.broadcast %cst_44 : f32 to vector<8x17x17xf32>
    %108 = arith.mulf %106, %107 : vector<8x17x17xf32>
    %cst_45 = arith.constant dense<0xFF800000> : vector<8x17xf32>
    %109 = vector.multi_reduction <maximumf>, %108, %cst_45 [2] : vector<8x17x17xf32> to vector<8x17xf32>
    %110 = vector.shape_cast %109 : vector<8x17xf32> to vector<8x17x1xf32>
    %111 = vector.broadcast %110 : vector<8x17x1xf32> to vector<8x17x17xf32>
    %112 = arith.subf %108, %111 : vector<8x17x17xf32>
    %113 = math.exp %112 : vector<8x17x17xf32>
    %cst_46 = arith.constant dense<0.000000e+00> : vector<8x17xf32>
    %114 = vector.multi_reduction <add>, %113, %cst_46 [2] : vector<8x17x17xf32> to vector<8x17xf32>
    %115 = vector.shape_cast %114 : vector<8x17xf32> to vector<8x17x1xf32>
    %116 = tpu.reciprocal %115 {approx = true} : vector<8x17x1xf32> -> vector<8x17x1xf32>
    %117 = vector.broadcast %116 : vector<8x17x1xf32> to vector<8x17x17xf32>
    %118 = arith.mulf %113, %117 : vector<8x17x17xf32>
    %119 = arith.truncf %118 : vector<8x17x17xf32> to vector<8x17x17xbf16>
    %cst_47 = arith.constant dense<0.000000e+00> : vector<8x17x8xf32>
    %120 = tpu.matmul %119, %105, %cst_47 {dimension_numbers = #tpu.dot_dimension_numbers<[2], [1], [1], [2], [0, 0, 0, 1, 1, 2], [0], [0]>} : vector<8x17x17xbf16>, vector<8x17x8xbf16>, vector<8x17x8xf32> -> vector<8x17x8xf32>
    %121 = vector.extract_strided_slice %120 {offsets = [0, 0, 0], sizes = [1, 17, 8], strides = [1, 1, 1]} : vector<8x17x8xf32> to vector<1x17x8xf32>
    %122 = vector.shape_cast %121 : vector<1x17x8xf32> to vector<17x8xf32>
    %123 = vector.extract_strided_slice %120 {offsets = [1, 0, 0], sizes = [1, 17, 8], strides = [1, 1, 1]} : vector<8x17x8xf32> to vector<1x17x8xf32>
    %124 = vector.shape_cast %123 : vector<1x17x8xf32> to vector<17x8xf32>
    %125 = vector.extract_strided_slice %120 {offsets = [2, 0, 0], sizes = [1, 17, 8], strides = [1, 1, 1]} : vector<8x17x8xf32> to vector<1x17x8xf32>
    %126 = vector.shape_cast %125 : vector<1x17x8xf32> to vector<17x8xf32>
    %127 = vector.extract_strided_slice %120 {offsets = [3, 0, 0], sizes = [1, 17, 8], strides = [1, 1, 1]} : vector<8x17x8xf32> to vector<1x17x8xf32>
    %128 = vector.shape_cast %127 : vector<1x17x8xf32> to vector<17x8xf32>
    %129 = tpu.concatenate %122, %124, %126, %128 in 1 : vector<17x8xf32>, vector<17x8xf32>, vector<17x8xf32>, vector<17x8xf32> -> vector<17x32xf32>
    %130 = vector.extract_strided_slice %120 {offsets = [4, 0, 0], sizes = [1, 17, 8], strides = [1, 1, 1]} : vector<8x17x8xf32> to vector<1x17x8xf32>
    %131 = vector.shape_cast %130 : vector<1x17x8xf32> to vector<17x8xf32>
    %132 = vector.extract_strided_slice %120 {offsets = [5, 0, 0], sizes = [1, 17, 8], strides = [1, 1, 1]} : vector<8x17x8xf32> to vector<1x17x8xf32>
    %133 = vector.shape_cast %132 : vector<1x17x8xf32> to vector<17x8xf32>
    %134 = vector.extract_strided_slice %120 {offsets = [6, 0, 0], sizes = [1, 17, 8], strides = [1, 1, 1]} : vector<8x17x8xf32> to vector<1x17x8xf32>
    %135 = vector.shape_cast %134 : vector<1x17x8xf32> to vector<17x8xf32>
    %136 = vector.extract_strided_slice %120 {offsets = [7, 0, 0], sizes = [1, 17, 8], strides = [1, 1, 1]} : vector<8x17x8xf32> to vector<1x17x8xf32>
    %137 = vector.shape_cast %136 : vector<1x17x8xf32> to vector<17x8xf32>
    %138 = tpu.concatenate %131, %133, %135, %137 in 1 : vector<17x8xf32>, vector<17x8xf32>, vector<17x8xf32>, vector<17x8xf32> -> vector<17x32xf32>
    %139 = tpu.concatenate %129, %138 in 0 : vector<17x32xf32>, vector<17x32xf32> -> vector<34x32xf32>
    %140 = arith.truncf %139 : vector<34x32xf32> to vector<34x32xbf16>
    %cst_48 = arith.constant dense<0.000000e+00> : vector<34x32xf32>
    %141 = tpu.matmul %140, %13, %cst_48 {dimension_numbers = #tpu.dot_dimension_numbers<[1], [0], [0], [1], [0, 0, 1, 1], [], []>} : vector<34x32xbf16>, vector<32x32xbf16>, vector<34x32xf32> -> vector<34x32xf32>
    %142 = vector.broadcast %15 : vector<1x32xf32> to vector<34x32xf32>
    %143 = arith.addf %141, %142 : vector<34x32xf32>
    %144 = arith.addf %3, %143 : vector<34x32xf32>
    %cst_49 = arith.constant dense<0.000000e+00> : vector<34xf32>
    %145 = vector.multi_reduction <add>, %144, %cst_49 [1] : vector<34x32xf32> to vector<34xf32>
    %146 = vector.shape_cast %145 : vector<34xf32> to vector<34x1xf32>
    %cst_50 = arith.constant 3.200000e+01 : f32
    %147 = vector.broadcast %cst_50 : f32 to vector<34x1xf32>
    %148 = arith.divf %146, %147 : vector<34x1xf32>
    %149 = vector.broadcast %148 : vector<34x1xf32> to vector<34x32xf32>
    %150 = arith.subf %144, %149 : vector<34x32xf32>
    %151 = arith.mulf %150, %150 : vector<34x32xf32>
    %cst_51 = arith.constant dense<0.000000e+00> : vector<34xf32>
    %152 = vector.multi_reduction <add>, %151, %cst_51 [1] : vector<34x32xf32> to vector<34xf32>
    %153 = vector.shape_cast %152 : vector<34xf32> to vector<34x1xf32>
    %cst_52 = arith.constant 3.200000e+01 : f32
    %154 = vector.broadcast %cst_52 : f32 to vector<34x1xf32>
    %155 = arith.divf %153, %154 : vector<34x1xf32>
    %cst_53 = arith.constant 9.99999974E-6 : f32
    %156 = vector.broadcast %cst_53 : f32 to vector<34x1xf32>
    %157 = arith.addf %155, %156 : vector<34x1xf32>
    %158 = math.rsqrt %157 : vector<34x1xf32>
    %159 = vector.broadcast %158 : vector<34x1xf32> to vector<34x32xf32>
    %160 = arith.mulf %150, %159 : vector<34x32xf32>
    %161 = vector.broadcast %17 : vector<1x32xf32> to vector<34x32xf32>
    %162 = arith.mulf %160, %161 : vector<34x32xf32>
    %163 = vector.broadcast %19 : vector<1x32xf32> to vector<34x32xf32>
    %164 = arith.addf %162, %163 : vector<34x32xf32>
    %165 = arith.truncf %164 : vector<34x32xf32> to vector<34x32xbf16>
    %cst_54 = arith.constant dense<0.000000e+00> : vector<34x128xf32>
    %166 = tpu.matmul %165, %21, %cst_54 {dimension_numbers = #tpu.dot_dimension_numbers<[1], [0], [0], [1], [0, 0, 1, 1], [], []>} : vector<34x32xbf16>, vector<32x128xbf16>, vector<34x128xf32> -> vector<34x128xf32>
    %167 = vector.broadcast %23 : vector<1x128xf32> to vector<34x128xf32>
    %168 = arith.addf %166, %167 : vector<34x128xf32>
    %169 = arith.mulf %168, %168 : vector<34x128xf32>
    %170 = arith.mulf %168, %169 : vector<34x128xf32>
    %cst_55 = arith.constant 4.471500e-02 : f32
    %171 = vector.broadcast %cst_55 : f32 to vector<34x128xf32>
    %172 = arith.mulf %171, %170 : vector<34x128xf32>
    %173 = arith.addf %168, %172 : vector<34x128xf32>
    %cst_56 = arith.constant 0.797884583 : f32
    %174 = vector.broadcast %cst_56 : f32 to vector<34x128xf32>
    %175 = arith.mulf %174, %173 : vector<34x128xf32>
    %176 = math.tanh %175 : vector<34x128xf32>
    %cst_57 = arith.constant 1.000000e+00 : f32
    %177 = vector.broadcast %cst_57 : f32 to vector<34x128xf32>
    %178 = arith.addf %177, %176 : vector<34x128xf32>
    %cst_58 = arith.constant 5.000000e-01 : f32
    %179 = vector.broadcast %cst_58 : f32 to vector<34x128xf32>
    %180 = arith.mulf %179, %178 : vector<34x128xf32>
    %181 = arith.mulf %168, %180 : vector<34x128xf32>
    %182 = arith.truncf %181 : vector<34x128xf32> to vector<34x128xbf16>
    %cst_59 = arith.constant dense<0.000000e+00> : vector<34x32xf32>
    %183 = tpu.matmul %182, %25, %cst_59 {dimension_numbers = #tpu.dot_dimension_numbers<[1], [0], [0], [1], [0, 0, 1, 1], [], []>} : vector<34x128xbf16>, vector<128x32xbf16>, vector<34x32xf32> -> vector<34x32xf32>
    %184 = arith.addf %144, %183 : vector<34x32xf32>
    %185 = vector.broadcast %27 : vector<1x32xf32> to vector<34x32xf32>
    %186 = arith.addf %184, %185 : vector<34x32xf32>
    %c0_60 = arith.constant 0 : index
    %c0_61 = arith.constant 0 : index
    %187 = vector.load %arg24[%c0_60, %c0_61] : memref<34x32xf32, #tpu.memory_space<vmem>>, vector<34x32xf32>
    tpu.vector_store %arg24[%c0_60, %c0_61], %186 {strides = array<i32>} : memref<34x32xf32, #tpu.memory_space<vmem>>, vector<34x32xf32>,
    %c1_i32 = arith.constant 1 : i32
    %188 = arith.cmpi eq, %arg0, %c1_i32 : i32
    %189 = arith.extui %188 : i1 to i32
    %c0_i32_62 = arith.constant 0 : i32
    %190 = arith.cmpi ne, %189, %c0_i32_62 : i32
    scf.if %190 {
      %c0_63 = arith.constant 0 : index
      %c0_64 = arith.constant 0 : index
      %191 = vector.load %arg18[%c0_63, %c0_64] : memref<1x32xf32, #tpu.memory_space<vmem>>, vector<1x32xf32>
      %c0_65 = arith.constant 0 : index
      %c0_66 = arith.constant 0 : index
      %192 = vector.load %arg19[%c0_65, %c0_66] : memref<1x32xf32, #tpu.memory_space<vmem>>, vector<1x32xf32>
      %cst_67 = arith.constant dense<0.000000e+00> : vector<34xf32>
      %193 = vector.multi_reduction <add>, %186, %cst_67 [1] : vector<34x32xf32> to vector<34xf32>
      %194 = vector.shape_cast %193 : vector<34xf32> to vector<34x1xf32>
      %cst_68 = arith.constant 3.200000e+01 : f32
      %195 = vector.broadcast %cst_68 : f32 to vector<34x1xf32>
      %196 = arith.divf %194, %195 : vector<34x1xf32>
      %197 = vector.broadcast %196 : vector<34x1xf32> to vector<34x32xf32>
      %198 = arith.subf %186, %197 : vector<34x32xf32>
      %199 = arith.mulf %198, %198 : vector<34x32xf32>
      %cst_69 = arith.constant dense<0.000000e+00> : vector<34xf32>
      %200 = vector.multi_reduction <add>, %199, %cst_69 [1] : vector<34x32xf32> to vector<34xf32>
      %201 = vector.shape_cast %200 : vector<34xf32> to vector<34x1xf32>
      %cst_70 = arith.constant 3.200000e+01 : f32
      %202 = vector.broadcast %cst_70 : f32 to vector<34x1xf32>
      %203 = arith.divf %201, %202 : vector<34x1xf32>
      %cst_71 = arith.constant 9.99999974E-6 : f32
      %204 = vector.broadcast %cst_71 : f32 to vector<34x1xf32>
      %205 = arith.addf %203, %204 : vector<34x1xf32>
      %206 = math.rsqrt %205 : vector<34x1xf32>
      %207 = vector.broadcast %206 : vector<34x1xf32> to vector<34x32xf32>
      %208 = arith.mulf %198, %207 : vector<34x32xf32>
      %209 = vector.broadcast %191 : vector<1x32xf32> to vector<34x32xf32>
      %210 = arith.mulf %208, %209 : vector<34x32xf32>
      %211 = vector.broadcast %192 : vector<1x32xf32> to vector<34x32xf32>
      %212 = arith.addf %210, %211 : vector<34x32xf32>
      %c0_72 = arith.constant 0 : index
      %c0_73 = arith.constant 0 : index
      %213 = vector.load %arg22[%c0_72, %c0_73] : memref<17x32xf32, #tpu.memory_space<vmem>>, vector<17x32xf32>
      %214 = tpu.concatenate %213, %213 in 0 : vector<17x32xf32>, vector<17x32xf32> -> vector<34x32xf32>
      %c0_74 = arith.constant 0 : index
      %c0_75 = arith.constant 0 : index
      %215 = vector.load %arg20[%c0_74, %c0_75] : memref<32x32xbf16, #tpu.memory_space<vmem>>, vector<32x32xbf16>
      %216 = arith.truncf %212 : vector<34x32xf32> to vector<34x32xbf16>
      %cst_76 = arith.constant dense<0.000000e+00> : vector<34x32xf32>
      %217 = tpu.matmul %216, %215, %cst_76 {dimension_numbers = #tpu.dot_dimension_numbers<[1], [0], [0], [1], [0, 0, 1, 1], [], []>} : vector<34x32xbf16>, vector<32x32xbf16>, vector<34x32xf32> -> vector<34x32xf32>
      %c0_77 = arith.constant 0 : index
      %c0_78 = arith.constant 0 : index
      %218 = vector.load %arg21[%c0_77, %c0_78] : memref<1x32xf32, #tpu.memory_space<vmem>>, vector<1x32xf32>
      %219 = vector.broadcast %218 : vector<1x32xf32> to vector<34x32xf32>
      %220 = arith.addf %217, %219 : vector<34x32xf32>
      %221 = arith.addf %220, %214 : vector<34x32xf32>
      %c0_79 = arith.constant 0 : index
      %c0_80 = arith.constant 0 : index
      %222 = vector.load %arg23[%c0_79, %c0_80] : memref<34x32xf32, #tpu.memory_space<vmem>>, vector<34x32xf32>
      tpu.vector_store %arg23[%c0_79, %c0_80], %221 {strides = array<i32>} : memref<34x32xf32, #tpu.memory_space<vmem>>, vector<34x32xf32>,
    } else {
    }
    return
  }
  func.func @transform_0(%arg0: i32) -> (i32, i32) {
    %c0_i32 = arith.constant 0 : i32
    %c0_i32_0 = arith.constant 0 : i32
    %c0_i32_1 = arith.constant 0 : i32
    return %c0_i32, %c0_i32_0 : i32, i32
  }
  func.func @transform_1(%arg0: i32) -> (i32, i32) {
    %c0_i32 = arith.constant 0 : i32
    %c0_i32_0 = arith.constant 0 : i32
    %c0_i32_1 = arith.constant 0 : i32
    return %c0_i32, %c0_i32_0 : i32, i32
  }
  func.func @transform_2(%arg0: i32) -> (i32, i32) {
    %c0_i32 = arith.constant 0 : i32
    %c0_i32_0 = arith.constant 0 : i32
    %c0_i32_1 = arith.constant 0 : i32
    return %c0_i32, %c0_i32_0 : i32, i32
  }
  func.func @transform_3(%arg0: i32) -> (i32, i32) {
    %c0_i32 = arith.constant 0 : i32
    %c0_i32_0 = arith.constant 0 : i32
    %c0_i32_1 = arith.constant 0 : i32
    return %c0_i32, %c0_i32_0 : i32, i32
  }
  func.func @transform_4(%arg0: i32) -> (i32, i32) {
    %c0_i32 = arith.constant 0 : i32
    %c0_i32_0 = arith.constant 0 : i32
    %c0_i32_1 = arith.constant 0 : i32
    return %c0_i32, %c0_i32_0 : i32, i32
  }
  func.func @transform_5(%arg0: i32) -> (i32, i32, i32) {
    %c0_i32 = arith.constant 0 : i32
    %c0_i32_0 = arith.constant 0 : i32
    %c0_i32_1 = arith.constant 0 : i32
    return %arg0, %c0_i32, %c0_i32_0 : i32, i32, i32
  }
  func.func @transform_6(%arg0: i32) -> (i32, i32, i32) {
    %c0_i32 = arith.constant 0 : i32
    %c0_i32_0 = arith.constant 0 : i32
    %c0_i32_1 = arith.constant 0 : i32
    return %arg0, %c0_i32, %c0_i32_0 : i32, i32, i32
  }
  func.func @transform_7(%arg0: i32) -> (i32, i32, i32) {
    %c0_i32 = arith.constant 0 : i32
    %c0_i32_0 = arith.constant 0 : i32
    %c0_i32_1 = arith.constant 0 : i32
    return %arg0, %c0_i32, %c0_i32_0 : i32, i32, i32
  }
  func.func @transform_8(%arg0: i32) -> (i32, i32, i32) {
    %c0_i32 = arith.constant 0 : i32
    %c0_i32_0 = arith.constant 0 : i32
    %c0_i32_1 = arith.constant 0 : i32
    return %arg0, %c0_i32, %c0_i32_0 : i32, i32, i32
  }
  func.func @transform_9(%arg0: i32) -> (i32, i32, i32) {
    %c0_i32 = arith.constant 0 : i32
    %c0_i32_0 = arith.constant 0 : i32
    %c0_i32_1 = arith.constant 0 : i32
    return %arg0, %c0_i32, %c0_i32_0 : i32, i32, i32
  }
  func.func @transform_10(%arg0: i32) -> (i32, i32, i32) {
    %c0_i32 = arith.constant 0 : i32
    %c0_i32_0 = arith.constant 0 : i32
    %c0_i32_1 = arith.constant 0 : i32
    return %arg0, %c0_i32, %c0_i32_0 : i32, i32, i32
  }
  func.func @transform_11(%arg0: i32) -> (i32, i32, i32) {
    %c0_i32 = arith.constant 0 : i32
    %c0_i32_0 = arith.constant 0 : i32
    %c0_i32_1 = arith.constant 0 : i32
    return %arg0, %c0_i32, %c0_i32_0 : i32, i32, i32
  }
  func.func @transform_12(%arg0: i32) -> (i32, i32, i32) {
    %c0_i32 = arith.constant 0 : i32
    %c0_i32_0 = arith.constant 0 : i32
    %c0_i32_1 = arith.constant 0 : i32
    return %arg0, %c0_i32, %c0_i32_0 : i32, i32, i32
  }
  func.func @transform_13(%arg0: i32) -> (i32, i32, i32) {
    %c0_i32 = arith.constant 0 : i32
    %c0_i32_0 = arith.constant 0 : i32
    %c0_i32_1 = arith.constant 0 : i32
    return %arg0, %c0_i32, %c0_i32_0 : i32, i32, i32
  }
  func.func @transform_14(%arg0: i32) -> (i32, i32, i32) {
    %c0_i32 = arith.constant 0 : i32
    %c0_i32_0 = arith.constant 0 : i32
    %c0_i32_1 = arith.constant 0 : i32
    return %arg0, %c0_i32, %c0_i32_0 : i32, i32, i32
  }
  func.func @transform_15(%arg0: i32) -> (i32, i32, i32) {
    %c0_i32 = arith.constant 0 : i32
    %c0_i32_0 = arith.constant 0 : i32
    %c0_i32_1 = arith.constant 0 : i32
    return %arg0, %c0_i32, %c0_i32_0 : i32, i32, i32
  }
  func.func @transform_16(%arg0: i32) -> (i32, i32, i32) {
    %c0_i32 = arith.constant 0 : i32
    %c0_i32_0 = arith.constant 0 : i32
    %c0_i32_1 = arith.constant 0 : i32
    return %arg0, %c0_i32, %c0_i32_0 : i32, i32, i32
  }
  func.func @transform_17(%arg0: i32) -> (i32, i32) {
    %c0_i32 = arith.constant 0 : i32
    %c0_i32_0 = arith.constant 0 : i32
    %c0_i32_1 = arith.constant 0 : i32
    return %c0_i32, %c0_i32_0 : i32, i32
  }
  func.func @transform_18(%arg0: i32) -> (i32, i32) {
    %c0_i32 = arith.constant 0 : i32
    %c0_i32_0 = arith.constant 0 : i32
    %c0_i32_1 = arith.constant 0 : i32
    return %c0_i32, %c0_i32_0 : i32, i32
  }
  func.func @transform_19(%arg0: i32) -> (i32, i32) {
    %c0_i32 = arith.constant 0 : i32
    %c0_i32_0 = arith.constant 0 : i32
    %c0_i32_1 = arith.constant 0 : i32
    return %c0_i32, %c0_i32_0 : i32, i32
  }
  func.func @transform_20(%arg0: i32) -> (i32, i32) {
    %c0_i32 = arith.constant 0 : i32
    %c0_i32_0 = arith.constant 0 : i32
    %c0_i32_1 = arith.constant 0 : i32
    return %c0_i32, %c0_i32_0 : i32, i32
  }
  func.func @transform_21(%arg0: i32) -> (i32, i32) {
    %c0_i32 = arith.constant 0 : i32
    %c0_i32_0 = arith.constant 0 : i32
    %c0_i32_1 = arith.constant 0 : i32
    return %c0_i32, %c0_i32_0 : i32, i32
  }
  func.func @transform_22(%arg0: i32) -> (i32, i32) {
    %c0_i32 = arith.constant 0 : i32
    %c0_i32_0 = arith.constant 0 : i32
    %c0_i32_1 = arith.constant 0 : i32
    return %c0_i32, %c0_i32_0 : i32, i32
  }
}

module attributes {stable_mosaic.version = 11 : i64} {
  func.func @_decoder_head_kernel(%arg0: i32, %arg1: memref<34x32xf32, #tpu.memory_space<vmem>>, %arg2: memref<1x1x32xf32, #tpu.memory_space<vmem>>, %arg3: memref<1x1x32xf32, #tpu.memory_space<vmem>>, %arg4: memref<1x32x96xbf16, #tpu.memory_space<vmem>>, %arg5: memref<1x1x96xf32, #tpu.memory_space<vmem>>, %arg6: memref<1x32x32xbf16, #tpu.memory_space<vmem>>, %arg7: memref<1x1x32xf32, #tpu.memory_space<vmem>>, %arg8: memref<1x1x32xf32, #tpu.memory_space<vmem>>, %arg9: memref<1x1x32xf32, #tpu.memory_space<vmem>>, %arg10: memref<1x32x128xbf16, #tpu.memory_space<vmem>>, %arg11: memref<1x1x128xf32, #tpu.memory_space<vmem>>, %arg12: memref<1x128x32xbf16, #tpu.memory_space<vmem>>, %arg13: memref<1x1x32xf32, #tpu.memory_space<vmem>>, %arg14: memref<1x32xf32, #tpu.memory_space<vmem>>, %arg15: memref<1x32xf32, #tpu.memory_space<vmem>>, %arg16: memref<32x32xbf16, #tpu.memory_space<vmem>>, %arg17: memref<1x32xf32, #tpu.memory_space<vmem>>, %arg18: memref<1x32xf32, #tpu.memory_space<vmem>>, %arg19: memref<4x32xbf16, #tpu.memory_space<vmem>>, %arg20: memref<4x1xf32, #tpu.memory_space<vmem>>, %arg21: memref<2x16xi32, #tpu.memory_space<vmem>>, %arg22: memref<2x4x16xf32, #tpu.memory_space<vmem>>, %arg23: memref<1xf32, #tpu.memory_space<smem>>, %arg24: memref<34x32xf32, #tpu.memory_space<vmem>>) attributes {dimension_semantics = [#tpu.dimension_semantics<arbitrary>], iteration_bounds = array<i64: 2>, scalar_prefetch = 0 : i64, scratch_operands = 1 : i64, tpu.core_type = #tpu.core_type<tc>, window_params = [{pipeline_mode = #tpu.pipeline_mode<synchronous>, transform_indices = @transform_0, window_bounds = array<i64: 34, 32>}, {transform_indices = @transform_1, window_bounds = array<i64: 1, 1, 32>}, {transform_indices = @transform_2, window_bounds = array<i64: 1, 1, 32>}, {transform_indices = @transform_3, window_bounds = array<i64: 1, 32, 96>}, {transform_indices = @transform_4, window_bounds = array<i64: 1, 1, 96>}, {transform_indices = @transform_5, window_bounds = array<i64: 1, 32, 32>}, {transform_indices = @transform_6, window_bounds = array<i64: 1, 1, 32>}, {transform_indices = @transform_7, window_bounds = array<i64: 1, 1, 32>}, {transform_indices = @transform_8, window_bounds = array<i64: 1, 1, 32>}, {transform_indices = @transform_9, window_bounds = array<i64: 1, 32, 128>}, {transform_indices = @transform_10, window_bounds = array<i64: 1, 1, 128>}, {transform_indices = @transform_11, window_bounds = array<i64: 1, 128, 32>}, {transform_indices = @transform_12, window_bounds = array<i64: 1, 1, 32>}, {pipeline_mode = #tpu.pipeline_mode<synchronous>, transform_indices = @transform_13, window_bounds = array<i64: 1, 32>}, {pipeline_mode = #tpu.pipeline_mode<synchronous>, transform_indices = @transform_14, window_bounds = array<i64: 1, 32>}, {pipeline_mode = #tpu.pipeline_mode<synchronous>, transform_indices = @transform_15, window_bounds = array<i64: 32, 32>}, {pipeline_mode = #tpu.pipeline_mode<synchronous>, transform_indices = @transform_16, window_bounds = array<i64: 1, 32>}, {pipeline_mode = #tpu.pipeline_mode<synchronous>, transform_indices = @transform_17, window_bounds = array<i64: 1, 32>}, {pipeline_mode = #tpu.pipeline_mode<synchronous>, transform_indices = @transform_18, window_bounds = array<i64: 4, 32>}, {pipeline_mode = #tpu.pipeline_mode<synchronous>, transform_indices = @transform_19, window_bounds = array<i64: 4, 1>}, {pipeline_mode = #tpu.pipeline_mode<synchronous>, transform_indices = @transform_20, window_bounds = array<i64: 2, 16>}, {pipeline_mode = #tpu.pipeline_mode<synchronous>, transform_indices = @transform_21, window_bounds = array<i64: 2, 4, 16>}, {transform_indices = @transform_22, window_bounds = array<i64: 1>}]} {
    %c0_i32 = arith.constant 0 : i32
    %0 = arith.cmpi eq, %arg0, %c0_i32 : i32
    %1 = arith.extui %0 : i1 to i32
    %c0_i32_0 = arith.constant 0 : i32
    %2 = arith.cmpi ne, %1, %c0_i32_0 : i32
    scf.if %2 {
      %c0_63 = arith.constant 0 : index
      %c0_64 = arith.constant 0 : index
      %191 = vector.load %arg1[%c0_63, %c0_64] : memref<34x32xf32, #tpu.memory_space<vmem>>, vector<34x32xf32>
      %c0_65 = arith.constant 0 : index
      %c0_66 = arith.constant 0 : index
      %192 = vector.load %arg24[%c0_65, %c0_66] : memref<34x32xf32, #tpu.memory_space<vmem>>, vector<34x32xf32>
      tpu.vector_store %arg24[%c0_65, %c0_66], %191 {strides = array<i32>} : memref<34x32xf32, #tpu.memory_space<vmem>>, vector<34x32xf32>,
      %cst_67 = arith.constant 0.000000e+00 : f32
      %c0_68 = arith.constant 0 : index
      %193 = memref.load %arg23[%c0_68] : memref<1xf32, #tpu.memory_space<smem>>
      memref.store %cst_67, %arg23[%c0_68] : memref<1xf32, #tpu.memory_space<smem>>
    } else {
    }
    %c0 = arith.constant 0 : index
    %c0_1 = arith.constant 0 : index
    %3 = vector.load %arg24[%c0, %c0_1] : memref<34x32xf32, #tpu.memory_space<vmem>>, vector<34x32xf32>
    %c0_2 = arith.constant 0 : index
    %c0_3 = arith.constant 0 : index
    %c0_4 = arith.constant 0 : index
    %4 = vector.load %arg2[%c0_2, %c0_3, %c0_4] : memref<1x1x32xf32, #tpu.memory_space<vmem>>, vector<1x1x32xf32>
    %5 = vector.shape_cast %4 : vector<1x1x32xf32> to vector<1x32xf32>
    %c0_5 = arith.constant 0 : index
    %c0_6 = arith.constant 0 : index
    %c0_7 = arith.constant 0 : index
    %6 = vector.load %arg3[%c0_5, %c0_6, %c0_7] : memref<1x1x32xf32, #tpu.memory_space<vmem>>, vector<1x1x32xf32>
    %7 = vector.shape_cast %6 : vector<1x1x32xf32> to vector<1x32xf32>
    %c0_8 = arith.constant 0 : index
    %c0_9 = arith.constant 0 : index
    %c0_10 = arith.constant 0 : index
    %8 = vector.load %arg4[%c0_8, %c0_9, %c0_10] : memref<1x32x96xbf16, #tpu.memory_space<vmem>>, vector<1x32x96xbf16>
    %9 = vector.shape_cast %8 : vector<1x32x96xbf16> to vector<32x96xbf16>
    %c0_11 = arith.constant 0 : index
    %c0_12 = arith.constant 0 : index
    %c0_13 = arith.constant 0 : index
    %10 = vector.load %arg5[%c0_11, %c0_12, %c0_13] : memref<1x1x96xf32, #tpu.memory_space<vmem>>, vector<1x1x96xf32>
    %11 = vector.shape_cast %10 : vector<1x1x96xf32> to vector<1x96xf32>
    %c0_14 = arith.constant 0 : index
    %c0_15 = arith.constant 0 : index
    %c0_16 = arith.constant 0 : index
    %12 = vector.load %arg6[%c0_14, %c0_15, %c0_16] : memref<1x32x32xbf16, #tpu.memory_space<vmem>>, vector<1x32x32xbf16>
    %13 = vector.shape_cast %12 : vector<1x32x32xbf16> to vector<32x32xbf16>
    %c0_17 = arith.constant 0 : index
    %c0_18 = arith.constant 0 : index
    %c0_19 = arith.constant 0 : index
    %14 = vector.load %arg7[%c0_17, %c0_18, %c0_19] : memref<1x1x32xf32, #tpu.memory_space<vmem>>, vector<1x1x32xf32>
    %15 = vector.shape_cast %14 : vector<1x1x32xf32> to vector<1x32xf32>
    %c0_20 = arith.constant 0 : index
    %c0_21 = arith.constant 0 : index
    %c0_22 = arith.constant 0 : index
    %16 = vector.load %arg8[%c0_20, %c0_21, %c0_22] : memref<1x1x32xf32, #tpu.memory_space<vmem>>, vector<1x1x32xf32>
    %17 = vector.shape_cast %16 : vector<1x1x32xf32> to vector<1x32xf32>
    %c0_23 = arith.constant 0 : index
    %c0_24 = arith.constant 0 : index
    %c0_25 = arith.constant 0 : index
    %18 = vector.load %arg9[%c0_23, %c0_24, %c0_25] : memref<1x1x32xf32, #tpu.memory_space<vmem>>, vector<1x1x32xf32>
    %19 = vector.shape_cast %18 : vector<1x1x32xf32> to vector<1x32xf32>
    %c0_26 = arith.constant 0 : index
    %c0_27 = arith.constant 0 : index
    %c0_28 = arith.constant 0 : index
    %20 = vector.load %arg10[%c0_26, %c0_27, %c0_28] : memref<1x32x128xbf16, #tpu.memory_space<vmem>>, vector<1x32x128xbf16>
    %21 = vector.shape_cast %20 : vector<1x32x128xbf16> to vector<32x128xbf16>
    %c0_29 = arith.constant 0 : index
    %c0_30 = arith.constant 0 : index
    %c0_31 = arith.constant 0 : index
    %22 = vector.load %arg11[%c0_29, %c0_30, %c0_31] : memref<1x1x128xf32, #tpu.memory_space<vmem>>, vector<1x1x128xf32>
    %23 = vector.shape_cast %22 : vector<1x1x128xf32> to vector<1x128xf32>
    %c0_32 = arith.constant 0 : index
    %c0_33 = arith.constant 0 : index
    %c0_34 = arith.constant 0 : index
    %24 = vector.load %arg12[%c0_32, %c0_33, %c0_34] : memref<1x128x32xbf16, #tpu.memory_space<vmem>>, vector<1x128x32xbf16>
    %25 = vector.shape_cast %24 : vector<1x128x32xbf16> to vector<128x32xbf16>
    %c0_35 = arith.constant 0 : index
    %c0_36 = arith.constant 0 : index
    %c0_37 = arith.constant 0 : index
    %26 = vector.load %arg13[%c0_35, %c0_36, %c0_37] : memref<1x1x32xf32, #tpu.memory_space<vmem>>, vector<1x1x32xf32>
    %27 = vector.shape_cast %26 : vector<1x1x32xf32> to vector<1x32xf32>
    %cst = arith.constant dense<0.000000e+00> : vector<34xf32>
    %28 = vector.multi_reduction <add>, %3, %cst [1] : vector<34x32xf32> to vector<34xf32>
    %29 = vector.shape_cast %28 : vector<34xf32> to vector<34x1xf32>
    %cst_38 = arith.constant 3.200000e+01 : f32
    %30 = vector.broadcast %cst_38 : f32 to vector<34x1xf32>
    %31 = arith.divf %29, %30 : vector<34x1xf32>
    %32 = vector.broadcast %31 : vector<34x1xf32> to vector<34x32xf32>
    %33 = arith.subf %3, %32 : vector<34x32xf32>
    %34 = arith.mulf %33, %33 : vector<34x32xf32>
    %cst_39 = arith.constant dense<0.000000e+00> : vector<34xf32>
    %35 = vector.multi_reduction <add>, %34, %cst_39 [1] : vector<34x32xf32> to vector<34xf32>
    %36 = vector.shape_cast %35 : vector<34xf32> to vector<34x1xf32>
    %cst_40 = arith.constant 3.200000e+01 : f32
    %37 = vector.broadcast %cst_40 : f32 to vector<34x1xf32>
    %38 = arith.divf %36, %37 : vector<34x1xf32>
    %cst_41 = arith.constant 9.99999974E-6 : f32
    %39 = vector.broadcast %cst_41 : f32 to vector<34x1xf32>
    %40 = arith.addf %38, %39 : vector<34x1xf32>
    %41 = math.rsqrt %40 : vector<34x1xf32>
    %42 = vector.broadcast %41 : vector<34x1xf32> to vector<34x32xf32>
    %43 = arith.mulf %33, %42 : vector<34x32xf32>
    %44 = vector.broadcast %5 : vector<1x32xf32> to vector<34x32xf32>
    %45 = arith.mulf %43, %44 : vector<34x32xf32>
    %46 = vector.broadcast %7 : vector<1x32xf32> to vector<34x32xf32>
    %47 = arith.addf %45, %46 : vector<34x32xf32>
    %48 = arith.truncf %47 : vector<34x32xf32> to vector<34x32xbf16>
    %cst_42 = arith.constant dense<0.000000e+00> : vector<34x96xf32>
    %49 = tpu.matmul %48, %9, %cst_42 {dimension_numbers = #tpu.dot_dimension_numbers<[1], [0], [0], [1], [0, 0, 1, 1], [], []>} : vector<34x32xbf16>, vector<32x96xbf16>, vector<34x96xf32> -> vector<34x96xf32>
    %50 = vector.broadcast %11 : vector<1x96xf32> to vector<34x96xf32>
    %51 = arith.addf %49, %50 : vector<34x96xf32>
    %52 = vector.extract_strided_slice %51 {offsets = [0, 0], sizes = [17, 8], strides = [1, 1]} : vector<34x96xf32> to vector<17x8xf32>
    %53 = vector.extract_strided_slice %51 {offsets = [0, 32], sizes = [17, 8], strides = [1, 1]} : vector<34x96xf32> to vector<17x8xf32>
    %54 = vector.extract_strided_slice %51 {offsets = [0, 64], sizes = [17, 8], strides = [1, 1]} : vector<34x96xf32> to vector<17x8xf32>
    %55 = vector.extract_strided_slice %51 {offsets = [0, 8], sizes = [17, 8], strides = [1, 1]} : vector<34x96xf32> to vector<17x8xf32>
    %56 = vector.extract_strided_slice %51 {offsets = [0, 40], sizes = [17, 8], strides = [1, 1]} : vector<34x96xf32> to vector<17x8xf32>
    %57 = vector.extract_strided_slice %51 {offsets = [0, 72], sizes = [17, 8], strides = [1, 1]} : vector<34x96xf32> to vector<17x8xf32>
    %58 = vector.extract_strided_slice %51 {offsets = [0, 16], sizes = [17, 8], strides = [1, 1]} : vector<34x96xf32> to vector<17x8xf32>
    %59 = vector.extract_strided_slice %51 {offsets = [0, 48], sizes = [17, 8], strides = [1, 1]} : vector<34x96xf32> to vector<17x8xf32>
    %60 = vector.extract_strided_slice %51 {offsets = [0, 80], sizes = [17, 8], strides = [1, 1]} : vector<34x96xf32> to vector<17x8xf32>
    %61 = vector.extract_strided_slice %51 {offsets = [0, 24], sizes = [17, 8], strides = [1, 1]} : vector<34x96xf32> to vector<17x8xf32>
    %62 = vector.extract_strided_slice %51 {offsets = [0, 56], sizes = [17, 8], strides = [1, 1]} : vector<34x96xf32> to vector<17x8xf32>
    %63 = vector.extract_strided_slice %51 {offsets = [0, 88], sizes = [17, 8], strides = [1, 1]} : vector<34x96xf32> to vector<17x8xf32>
    %64 = vector.extract_strided_slice %51 {offsets = [17, 0], sizes = [17, 8], strides = [1, 1]} : vector<34x96xf32> to vector<17x8xf32>
    %65 = vector.extract_strided_slice %51 {offsets = [17, 32], sizes = [17, 8], strides = [1, 1]} : vector<34x96xf32> to vector<17x8xf32>
    %66 = vector.extract_strided_slice %51 {offsets = [17, 64], sizes = [17, 8], strides = [1, 1]} : vector<34x96xf32> to vector<17x8xf32>
    %67 = vector.extract_strided_slice %51 {offsets = [17, 8], sizes = [17, 8], strides = [1, 1]} : vector<34x96xf32> to vector<17x8xf32>
    %68 = vector.extract_strided_slice %51 {offsets = [17, 40], sizes = [17, 8], strides = [1, 1]} : vector<34x96xf32> to vector<17x8xf32>
    %69 = vector.extract_strided_slice %51 {offsets = [17, 72], sizes = [17, 8], strides = [1, 1]} : vector<34x96xf32> to vector<17x8xf32>
    %70 = vector.extract_strided_slice %51 {offsets = [17, 16], sizes = [17, 8], strides = [1, 1]} : vector<34x96xf32> to vector<17x8xf32>
    %71 = vector.extract_strided_slice %51 {offsets = [17, 48], sizes = [17, 8], strides = [1, 1]} : vector<34x96xf32> to vector<17x8xf32>
    %72 = vector.extract_strided_slice %51 {offsets = [17, 80], sizes = [17, 8], strides = [1, 1]} : vector<34x96xf32> to vector<17x8xf32>
    %73 = vector.extract_strided_slice %51 {offsets = [17, 24], sizes = [17, 8], strides = [1, 1]} : vector<34x96xf32> to vector<17x8xf32>
    %74 = vector.extract_strided_slice %51 {offsets = [17, 56], sizes = [17, 8], strides = [1, 1]} : vector<34x96xf32> to vector<17x8xf32>
    %75 = vector.extract_strided_slice %51 {offsets = [17, 88], sizes = [17, 8], strides = [1, 1]} : vector<34x96xf32> to vector<17x8xf32>
    %76 = vector.shape_cast %52 : vector<17x8xf32> to vector<1x17x8xf32>
    %77 = vector.shape_cast %55 : vector<17x8xf32> to vector<1x17x8xf32>
    %78 = vector.shape_cast %58 : vector<17x8xf32> to vector<1x17x8xf32>
    %79 = vector.shape_cast %61 : vector<17x8xf32> to vector<1x17x8xf32>
    %80 = vector.shape_cast %64 : vector<17x8xf32> to vector<1x17x8xf32>
    %81 = vector.shape_cast %67 : vector<17x8xf32> to vector<1x17x8xf32>
    %82 = vector.shape_cast %70 : vector<17x8xf32> to vector<1x17x8xf32>
    %83 = vector.shape_cast %73 : vector<17x8xf32> to vector<1x17x8xf32>
    %84 = tpu.concatenate %76, %77, %78, %79, %80, %81, %82, %83 in 0 : vector<1x17x8xf32>, vector<1x17x8xf32>, vector<1x17x8xf32>, vector<1x17x8xf32>, vector<1x17x8xf32>, vector<1x17x8xf32>, vector<1x17x8xf32>, vector<1x17x8xf32> -> vector<8x17x8xf32>
    %85 = arith.truncf %84 : vector<8x17x8xf32> to vector<8x17x8xbf16>
    %86 = vector.shape_cast %53 : vector<17x8xf32> to vector<1x17x8xf32>
    %87 = vector.shape_cast %56 : vector<17x8xf32> to vector<1x17x8xf32>
    %88 = vector.shape_cast %59 : vector<17x8xf32> to vector<1x17x8xf32>
    %89 = vector.shape_cast %62 : vector<17x8xf32> to vector<1x17x8xf32>
    %90 = vector.shape_cast %65 : vector<17x8xf32> to vector<1x17x8xf32>
    %91 = vector.shape_cast %68 : vector<17x8xf32> to vector<1x17x8xf32>
    %92 = vector.shape_cast %71 : vector<17x8xf32> to vector<1x17x8xf32>
    %93 = vector.shape_cast %74 : vector<17x8xf32> to vector<1x17x8xf32>
    %94 = tpu.concatenate %86, %87, %88, %89, %90, %91, %92, %93 in 0 : vector<1x17x8xf32>, vector<1x17x8xf32>, vector<1x17x8xf32>, vector<1x17x8xf32>, vector<1x17x8xf32>, vector<1x17x8xf32>, vector<1x17x8xf32>, vector<1x17x8xf32> -> vector<8x17x8xf32>
    %95 = arith.truncf %94 : vector<8x17x8xf32> to vector<8x17x8xbf16>
    %96 = vector.shape_cast %54 : vector<17x8xf32> to vector<1x17x8xf32>
    %97 = vector.shape_cast %57 : vector<17x8xf32> to vector<1x17x8xf32>
    %98 = vector.shape_cast %60 : vector<17x8xf32> to vector<1x17x8xf32>
    %99 = vector.shape_cast %63 : vector<17x8xf32> to vector<1x17x8xf32>
    %100 = vector.shape_cast %66 : vector<17x8xf32> to vector<1x17x8xf32>
    %101 = vector.shape_cast %69 : vector<17x8xf32> to vector<1x17x8xf32>
    %102 = vector.shape_cast %72 : vector<17x8xf32> to vector<1x17x8xf32>
    %103 = vector.shape_cast %75 : vector<17x8xf32> to vector<1x17x8xf32>
    %104 = tpu.concatenate %96, %97, %98, %99, %100, %101, %102, %103 in 0 : vector<1x17x8xf32>, vector<1x17x8xf32>, vector<1x17x8xf32>, vector<1x17x8xf32>, vector<1x17x8xf32>, vector<1x17x8xf32>, vector<1x17x8xf32>, vector<1x17x8xf32> -> vector<8x17x8xf32>
    %105 = arith.truncf %104 : vector<8x17x8xf32> to vector<8x17x8xbf16>
    %cst_43 = arith.constant dense<0.000000e+00> : vector<8x17x17xf32>
    %106 = tpu.matmul %85, %95, %cst_43 {dimension_numbers = #tpu.dot_dimension_numbers<[2], [2], [1], [1], [0, 0, 0, 1, 1, 1], [0], [0]>} : vector<8x17x8xbf16>, vector<8x17x8xbf16>, vector<8x17x17xf32> -> vector<8x17x17xf32>
    %cst_44 = arith.constant 0.353553385 : f32
    %107 = vector.broadcast %cst_44 : f32 to vector<8x17x17xf32>
    %108 = arith.mulf %106, %107 : vector<8x17x17xf32>
    %cst_45 = arith.constant dense<0xFF800000> : vector<8x17xf32>
    %109 = vector.multi_reduction <maximumf>, %108, %cst_45 [2] : vector<8x17x17xf32> to vector<8x17xf32>
    %110 = vector.shape_cast %109 : vector<8x17xf32> to vector<8x17x1xf32>
    %111 = vector.broadcast %110 : vector<8x17x1xf32> to vector<8x17x17xf32>
    %112 = arith.subf %108, %111 : vector<8x17x17xf32>
    %113 = math.exp %112 : vector<8x17x17xf32>
    %cst_46 = arith.constant dense<0.000000e+00> : vector<8x17xf32>
    %114 = vector.multi_reduction <add>, %113, %cst_46 [2] : vector<8x17x17xf32> to vector<8x17xf32>
    %115 = vector.shape_cast %114 : vector<8x17xf32> to vector<8x17x1xf32>
    %116 = tpu.reciprocal %115 {approx = true} : vector<8x17x1xf32> -> vector<8x17x1xf32>
    %117 = vector.broadcast %116 : vector<8x17x1xf32> to vector<8x17x17xf32>
    %118 = arith.mulf %113, %117 : vector<8x17x17xf32>
    %119 = arith.truncf %118 : vector<8x17x17xf32> to vector<8x17x17xbf16>
    %cst_47 = arith.constant dense<0.000000e+00> : vector<8x17x8xf32>
    %120 = tpu.matmul %119, %105, %cst_47 {dimension_numbers = #tpu.dot_dimension_numbers<[2], [1], [1], [2], [0, 0, 0, 1, 1, 2], [0], [0]>} : vector<8x17x17xbf16>, vector<8x17x8xbf16>, vector<8x17x8xf32> -> vector<8x17x8xf32>
    %121 = vector.extract_strided_slice %120 {offsets = [0, 0, 0], sizes = [1, 17, 8], strides = [1, 1, 1]} : vector<8x17x8xf32> to vector<1x17x8xf32>
    %122 = vector.shape_cast %121 : vector<1x17x8xf32> to vector<17x8xf32>
    %123 = vector.extract_strided_slice %120 {offsets = [1, 0, 0], sizes = [1, 17, 8], strides = [1, 1, 1]} : vector<8x17x8xf32> to vector<1x17x8xf32>
    %124 = vector.shape_cast %123 : vector<1x17x8xf32> to vector<17x8xf32>
    %125 = vector.extract_strided_slice %120 {offsets = [2, 0, 0], sizes = [1, 17, 8], strides = [1, 1, 1]} : vector<8x17x8xf32> to vector<1x17x8xf32>
    %126 = vector.shape_cast %125 : vector<1x17x8xf32> to vector<17x8xf32>
    %127 = vector.extract_strided_slice %120 {offsets = [3, 0, 0], sizes = [1, 17, 8], strides = [1, 1, 1]} : vector<8x17x8xf32> to vector<1x17x8xf32>
    %128 = vector.shape_cast %127 : vector<1x17x8xf32> to vector<17x8xf32>
    %129 = tpu.concatenate %122, %124, %126, %128 in 1 : vector<17x8xf32>, vector<17x8xf32>, vector<17x8xf32>, vector<17x8xf32> -> vector<17x32xf32>
    %130 = vector.extract_strided_slice %120 {offsets = [4, 0, 0], sizes = [1, 17, 8], strides = [1, 1, 1]} : vector<8x17x8xf32> to vector<1x17x8xf32>
    %131 = vector.shape_cast %130 : vector<1x17x8xf32> to vector<17x8xf32>
    %132 = vector.extract_strided_slice %120 {offsets = [5, 0, 0], sizes = [1, 17, 8], strides = [1, 1, 1]} : vector<8x17x8xf32> to vector<1x17x8xf32>
    %133 = vector.shape_cast %132 : vector<1x17x8xf32> to vector<17x8xf32>
    %134 = vector.extract_strided_slice %120 {offsets = [6, 0, 0], sizes = [1, 17, 8], strides = [1, 1, 1]} : vector<8x17x8xf32> to vector<1x17x8xf32>
    %135 = vector.shape_cast %134 : vector<1x17x8xf32> to vector<17x8xf32>
    %136 = vector.extract_strided_slice %120 {offsets = [7, 0, 0], sizes = [1, 17, 8], strides = [1, 1, 1]} : vector<8x17x8xf32> to vector<1x17x8xf32>
    %137 = vector.shape_cast %136 : vector<1x17x8xf32> to vector<17x8xf32>
    %138 = tpu.concatenate %131, %133, %135, %137 in 1 : vector<17x8xf32>, vector<17x8xf32>, vector<17x8xf32>, vector<17x8xf32> -> vector<17x32xf32>
    %139 = tpu.concatenate %129, %138 in 0 : vector<17x32xf32>, vector<17x32xf32> -> vector<34x32xf32>
    %140 = arith.truncf %139 : vector<34x32xf32> to vector<34x32xbf16>
    %cst_48 = arith.constant dense<0.000000e+00> : vector<34x32xf32>
    %141 = tpu.matmul %140, %13, %cst_48 {dimension_numbers = #tpu.dot_dimension_numbers<[1], [0], [0], [1], [0, 0, 1, 1], [], []>} : vector<34x32xbf16>, vector<32x32xbf16>, vector<34x32xf32> -> vector<34x32xf32>
    %142 = vector.broadcast %15 : vector<1x32xf32> to vector<34x32xf32>
    %143 = arith.addf %141, %142 : vector<34x32xf32>
    %144 = arith.addf %3, %143 : vector<34x32xf32>
    %cst_49 = arith.constant dense<0.000000e+00> : vector<34xf32>
    %145 = vector.multi_reduction <add>, %144, %cst_49 [1] : vector<34x32xf32> to vector<34xf32>
    %146 = vector.shape_cast %145 : vector<34xf32> to vector<34x1xf32>
    %cst_50 = arith.constant 3.200000e+01 : f32
    %147 = vector.broadcast %cst_50 : f32 to vector<34x1xf32>
    %148 = arith.divf %146, %147 : vector<34x1xf32>
    %149 = vector.broadcast %148 : vector<34x1xf32> to vector<34x32xf32>
    %150 = arith.subf %144, %149 : vector<34x32xf32>
    %151 = arith.mulf %150, %150 : vector<34x32xf32>
    %cst_51 = arith.constant dense<0.000000e+00> : vector<34xf32>
    %152 = vector.multi_reduction <add>, %151, %cst_51 [1] : vector<34x32xf32> to vector<34xf32>
    %153 = vector.shape_cast %152 : vector<34xf32> to vector<34x1xf32>
    %cst_52 = arith.constant 3.200000e+01 : f32
    %154 = vector.broadcast %cst_52 : f32 to vector<34x1xf32>
    %155 = arith.divf %153, %154 : vector<34x1xf32>
    %cst_53 = arith.constant 9.99999974E-6 : f32
    %156 = vector.broadcast %cst_53 : f32 to vector<34x1xf32>
    %157 = arith.addf %155, %156 : vector<34x1xf32>
    %158 = math.rsqrt %157 : vector<34x1xf32>
    %159 = vector.broadcast %158 : vector<34x1xf32> to vector<34x32xf32>
    %160 = arith.mulf %150, %159 : vector<34x32xf32>
    %161 = vector.broadcast %17 : vector<1x32xf32> to vector<34x32xf32>
    %162 = arith.mulf %160, %161 : vector<34x32xf32>
    %163 = vector.broadcast %19 : vector<1x32xf32> to vector<34x32xf32>
    %164 = arith.addf %162, %163 : vector<34x32xf32>
    %165 = arith.truncf %164 : vector<34x32xf32> to vector<34x32xbf16>
    %cst_54 = arith.constant dense<0.000000e+00> : vector<34x128xf32>
    %166 = tpu.matmul %165, %21, %cst_54 {dimension_numbers = #tpu.dot_dimension_numbers<[1], [0], [0], [1], [0, 0, 1, 1], [], []>} : vector<34x32xbf16>, vector<32x128xbf16>, vector<34x128xf32> -> vector<34x128xf32>
    %167 = vector.broadcast %23 : vector<1x128xf32> to vector<34x128xf32>
    %168 = arith.addf %166, %167 : vector<34x128xf32>
    %169 = arith.mulf %168, %168 : vector<34x128xf32>
    %170 = arith.mulf %168, %169 : vector<34x128xf32>
    %cst_55 = arith.constant 4.471500e-02 : f32
    %171 = vector.broadcast %cst_55 : f32 to vector<34x128xf32>
    %172 = arith.mulf %171, %170 : vector<34x128xf32>
    %173 = arith.addf %168, %172 : vector<34x128xf32>
    %cst_56 = arith.constant 0.797884583 : f32
    %174 = vector.broadcast %cst_56 : f32 to vector<34x128xf32>
    %175 = arith.mulf %174, %173 : vector<34x128xf32>
    %176 = math.tanh %175 : vector<34x128xf32>
    %cst_57 = arith.constant 1.000000e+00 : f32
    %177 = vector.broadcast %cst_57 : f32 to vector<34x128xf32>
    %178 = arith.addf %177, %176 : vector<34x128xf32>
    %cst_58 = arith.constant 5.000000e-01 : f32
    %179 = vector.broadcast %cst_58 : f32 to vector<34x128xf32>
    %180 = arith.mulf %179, %178 : vector<34x128xf32>
    %181 = arith.mulf %168, %180 : vector<34x128xf32>
    %182 = arith.truncf %181 : vector<34x128xf32> to vector<34x128xbf16>
    %cst_59 = arith.constant dense<0.000000e+00> : vector<34x32xf32>
    %183 = tpu.matmul %182, %25, %cst_59 {dimension_numbers = #tpu.dot_dimension_numbers<[1], [0], [0], [1], [0, 0, 1, 1], [], []>} : vector<34x128xbf16>, vector<128x32xbf16>, vector<34x32xf32> -> vector<34x32xf32>
    %184 = arith.addf %144, %183 : vector<34x32xf32>
    %185 = vector.broadcast %27 : vector<1x32xf32> to vector<34x32xf32>
    %186 = arith.addf %184, %185 : vector<34x32xf32>
    %c0_60 = arith.constant 0 : index
    %c0_61 = arith.constant 0 : index
    %187 = vector.load %arg24[%c0_60, %c0_61] : memref<34x32xf32, #tpu.memory_space<vmem>>, vector<34x32xf32>
    tpu.vector_store %arg24[%c0_60, %c0_61], %186 {strides = array<i32>} : memref<34x32xf32, #tpu.memory_space<vmem>>, vector<34x32xf32>,
    %c1_i32 = arith.constant 1 : i32
    %188 = arith.cmpi eq, %arg0, %c1_i32 : i32
    %189 = arith.extui %188 : i1 to i32
    %c0_i32_62 = arith.constant 0 : i32
    %190 = arith.cmpi ne, %189, %c0_i32_62 : i32
    scf.if %190 {
      %c0_63 = arith.constant 0 : index
      %c0_64 = arith.constant 0 : index
      %191 = vector.load %arg14[%c0_63, %c0_64] : memref<1x32xf32, #tpu.memory_space<vmem>>, vector<1x32xf32>
      %c0_65 = arith.constant 0 : index
      %c0_66 = arith.constant 0 : index
      %192 = vector.load %arg15[%c0_65, %c0_66] : memref<1x32xf32, #tpu.memory_space<vmem>>, vector<1x32xf32>
      %cst_67 = arith.constant dense<0.000000e+00> : vector<34xf32>
      %193 = vector.multi_reduction <add>, %186, %cst_67 [1] : vector<34x32xf32> to vector<34xf32>
      %194 = vector.shape_cast %193 : vector<34xf32> to vector<34x1xf32>
      %cst_68 = arith.constant 3.200000e+01 : f32
      %195 = vector.broadcast %cst_68 : f32 to vector<34x1xf32>
      %196 = arith.divf %194, %195 : vector<34x1xf32>
      %197 = vector.broadcast %196 : vector<34x1xf32> to vector<34x32xf32>
      %198 = arith.subf %186, %197 : vector<34x32xf32>
      %199 = arith.mulf %198, %198 : vector<34x32xf32>
      %cst_69 = arith.constant dense<0.000000e+00> : vector<34xf32>
      %200 = vector.multi_reduction <add>, %199, %cst_69 [1] : vector<34x32xf32> to vector<34xf32>
      %201 = vector.shape_cast %200 : vector<34xf32> to vector<34x1xf32>
      %cst_70 = arith.constant 3.200000e+01 : f32
      %202 = vector.broadcast %cst_70 : f32 to vector<34x1xf32>
      %203 = arith.divf %201, %202 : vector<34x1xf32>
      %cst_71 = arith.constant 9.99999974E-6 : f32
      %204 = vector.broadcast %cst_71 : f32 to vector<34x1xf32>
      %205 = arith.addf %203, %204 : vector<34x1xf32>
      %206 = math.rsqrt %205 : vector<34x1xf32>
      %207 = vector.broadcast %206 : vector<34x1xf32> to vector<34x32xf32>
      %208 = arith.mulf %198, %207 : vector<34x32xf32>
      %209 = vector.broadcast %191 : vector<1x32xf32> to vector<34x32xf32>
      %210 = arith.mulf %208, %209 : vector<34x32xf32>
      %211 = vector.broadcast %192 : vector<1x32xf32> to vector<34x32xf32>
      %212 = arith.addf %210, %211 : vector<34x32xf32>
      %213 = vector.extract_strided_slice %212 {offsets = [1, 0], sizes = [16, 32], strides = [1, 1]} : vector<34x32xf32> to vector<16x32xf32>
      %214 = vector.extract_strided_slice %212 {offsets = [18, 0], sizes = [16, 32], strides = [1, 1]} : vector<34x32xf32> to vector<16x32xf32>
      %215 = tpu.concatenate %213, %214 in 0 : vector<16x32xf32>, vector<16x32xf32> -> vector<32x32xf32>
      %c0_72 = arith.constant 0 : index
      %c0_73 = arith.constant 0 : index
      %216 = vector.load %arg16[%c0_72, %c0_73] : memref<32x32xbf16, #tpu.memory_space<vmem>>, vector<32x32xbf16>
      %217 = arith.truncf %215 : vector<32x32xf32> to vector<32x32xbf16>
      %cst_74 = arith.constant dense<0.000000e+00> : vector<32x32xf32>
      %218 = tpu.matmul %217, %216, %cst_74 {dimension_numbers = #tpu.dot_dimension_numbers<[1], [0], [0], [1], [0, 0, 1, 1], [], []>} : vector<32x32xbf16>, vector<32x32xbf16>, vector<32x32xf32> -> vector<32x32xf32>
      %cst_75 = arith.constant 0.000000e+00 : f32
      %219 = vector.broadcast %cst_75 : f32 to vector<32x32xf32>
      %220 = arith.maximumf %218, %219 : vector<32x32xf32>
      %cst_76 = arith.constant dense<0.000000e+00> : vector<32xf32>
      %221 = vector.multi_reduction <add>, %220, %cst_76 [0] : vector<32x32xf32> to vector<32xf32>
      %222 = vector.shape_cast %221 : vector<32xf32> to vector<1x32xf32>
      %cst_77 = arith.constant 3.200000e+01 : f32
      %223 = vector.broadcast %cst_77 : f32 to vector<1x32xf32>
      %224 = arith.divf %222, %223 : vector<1x32xf32>
      %225 = arith.mulf %220, %220 : vector<32x32xf32>
      %cst_78 = arith.constant dense<0.000000e+00> : vector<32xf32>
      %226 = vector.multi_reduction <add>, %225, %cst_78 [0] : vector<32x32xf32> to vector<32xf32>
      %227 = vector.shape_cast %226 : vector<32xf32> to vector<1x32xf32>
      %cst_79 = arith.constant 3.200000e+01 : f32
      %228 = vector.broadcast %cst_79 : f32 to vector<1x32xf32>
      %229 = arith.divf %227, %228 : vector<1x32xf32>
      %230 = arith.mulf %224, %224 : vector<1x32xf32>
      %231 = arith.subf %229, %230 : vector<1x32xf32>
      %cst_80 = arith.constant 9.99999974E-6 : f32
      %232 = vector.broadcast %cst_80 : f32 to vector<1x32xf32>
      %233 = arith.addf %231, %232 : vector<1x32xf32>
      %234 = math.rsqrt %233 : vector<1x32xf32>
      %235 = vector.broadcast %224 : vector<1x32xf32> to vector<32x32xf32>
      %236 = arith.subf %220, %235 : vector<32x32xf32>
      %237 = vector.broadcast %234 : vector<1x32xf32> to vector<32x32xf32>
      %238 = arith.mulf %236, %237 : vector<32x32xf32>
      %c0_81 = arith.constant 0 : index
      %c0_82 = arith.constant 0 : index
      %239 = vector.load %arg17[%c0_81, %c0_82] : memref<1x32xf32, #tpu.memory_space<vmem>>, vector<1x32xf32>
      %240 = vector.broadcast %239 : vector<1x32xf32> to vector<32x32xf32>
      %241 = arith.mulf %238, %240 : vector<32x32xf32>
      %c0_83 = arith.constant 0 : index
      %c0_84 = arith.constant 0 : index
      %242 = vector.load %arg18[%c0_83, %c0_84] : memref<1x32xf32, #tpu.memory_space<vmem>>, vector<1x32xf32>
      %243 = vector.broadcast %242 : vector<1x32xf32> to vector<32x32xf32>
      %244 = arith.addf %241, %243 : vector<32x32xf32>
      %245 = vector.extract_strided_slice %244 {offsets = [0, 0], sizes = [16, 32], strides = [1, 1]} : vector<32x32xf32> to vector<16x32xf32>
      %c0_85 = arith.constant 0 : index
      %c0_86 = arith.constant 0 : index
      %246 = vector.load %arg19[%c0_85, %c0_86] : memref<4x32xbf16, #tpu.memory_space<vmem>>, vector<4x32xbf16>
      %247 = arith.truncf %245 : vector<16x32xf32> to vector<16x32xbf16>
      %cst_87 = arith.constant dense<0.000000e+00> : vector<4x16xf32>
      %248 = tpu.matmul %246, %247, %cst_87 {dimension_numbers = #tpu.dot_dimension_numbers<[1], [1], [0], [0], [0, 0, 1, 0], [], []>} : vector<4x32xbf16>, vector<16x32xbf16>, vector<4x16xf32> -> vector<4x16xf32>
      %c0_88 = arith.constant 0 : index
      %c0_89 = arith.constant 0 : index
      %249 = vector.load %arg20[%c0_88, %c0_89] : memref<4x1xf32, #tpu.memory_space<vmem>>, vector<4x1xf32>
      %250 = vector.broadcast %249 : vector<4x1xf32> to vector<4x16xf32>
      %251 = arith.addf %248, %250 : vector<4x16xf32>
      %c0_90 = arith.constant 0 : index
      %c0_91 = arith.constant 0 : index
      %c0_92 = arith.constant 0 : index
      %252 = vector.load %arg22[%c0_90, %c0_91, %c0_92] : memref<2x4x16xf32, #tpu.memory_space<vmem>>, vector<1x4x16xf32>
      %253 = vector.shape_cast %252 : vector<1x4x16xf32> to vector<4x16xf32>
      %254 = vector.shape_cast %251 : vector<4x16xf32> to vector<1x4x16xf32>
      tpu.vector_store %arg22[%c0_90, %c0_91, %c0_92], %254 {strides = array<i32>} : memref<2x4x16xf32, #tpu.memory_space<vmem>>, vector<1x4x16xf32>,
      %c0_93 = arith.constant 0 : index
      %c0_94 = arith.constant 0 : index
      %255 = vector.load %arg21[%c0_93, %c0_94] : memref<2x16xi32, #tpu.memory_space<vmem>>, vector<1x16xi32>
      %cst_95 = arith.constant dense<0xFF800000> : vector<16xf32>
      %256 = vector.multi_reduction <maximumf>, %251, %cst_95 [0] : vector<4x16xf32> to vector<16xf32>
      %257 = vector.shape_cast %256 : vector<16xf32> to vector<1x16xf32>
      %258 = vector.broadcast %257 : vector<1x16xf32> to vector<4x16xf32>
      %259 = arith.subf %251, %258 : vector<4x16xf32>
      %260 = math.exp %259 : vector<4x16xf32>
      %cst_96 = arith.constant dense<0.000000e+00> : vector<16xf32>
      %261 = vector.multi_reduction <add>, %260, %cst_96 [0] : vector<4x16xf32> to vector<16xf32>
      %262 = vector.shape_cast %261 : vector<16xf32> to vector<1x16xf32>
      %263 = math.log %262 : vector<1x16xf32>
      %264 = arith.addf %257, %263 : vector<1x16xf32>
      %265 = tpu.iota {dimensions = array<i32: 0>} : vector<4x16xi32>
      %266 = vector.broadcast %255 : vector<1x16xi32> to vector<4x16xi32>
      %267 = arith.cmpi eq, %265, %266 : vector<4x16xi32>
      %268 = arith.extui %267 : vector<4x16xi1> to vector<4x16xi32>
      %269 = arith.sitofp %268 : vector<4x16xi32> to vector<4x16xf32>
      %270 = arith.mulf %251, %269 : vector<4x16xf32>
      %cst_97 = arith.constant dense<0.000000e+00> : vector<16xf32>
      %271 = vector.multi_reduction <add>, %270, %cst_97 [0] : vector<4x16xf32> to vector<16xf32>
      %272 = vector.shape_cast %271 : vector<16xf32> to vector<1x16xf32>
      %c0_i32_98 = arith.constant 0 : i32
      %273 = vector.broadcast %c0_i32_98 : i32 to vector<1x16xi32>
      %274 = arith.cmpi ne, %255, %273 : vector<1x16xi32>
      %275 = arith.extui %274 : vector<1x16xi1> to vector<1x16xi32>
      %276 = arith.sitofp %275 : vector<1x16xi32> to vector<1x16xf32>
      %277 = arith.subf %264, %272 : vector<1x16xf32>
      %278 = arith.mulf %276, %277 : vector<1x16xf32>
      %279 = vector.shape_cast %278 : vector<1x16xf32> to vector<1x1x16xf32>
      %cst_99 = arith.constant dense<0.000000e+00> : vector<1xf32>
      %280 = vector.multi_reduction <add>, %279, %cst_99 [1, 2] : vector<1x1x16xf32> to vector<1xf32>
      %281 = vector.shape_cast %280 : vector<1xf32> to vector<1x1x1xf32>
      %282 = vector.extract %281[0, 0, 0] : f32 from vector<1x1x1xf32>
      %cst_100 = arith.constant 0.000000e+00 : f32
      %283 = arith.addf %cst_100, %282 : f32
      %284 = vector.shape_cast %276 : vector<1x16xf32> to vector<1x1x16xf32>
      %cst_101 = arith.constant dense<0.000000e+00> : vector<1xf32>
      %285 = vector.multi_reduction <add>, %284, %cst_101 [1, 2] : vector<1x1x16xf32> to vector<1xf32>
      %286 = vector.shape_cast %285 : vector<1xf32> to vector<1x1x1xf32>
      %287 = vector.extract %286[0, 0, 0] : f32 from vector<1x1x1xf32>
      %cst_102 = arith.constant 0.000000e+00 : f32
      %288 = arith.addf %cst_102, %287 : f32
      %289 = vector.extract_strided_slice %244 {offsets = [16, 0], sizes = [16, 32], strides = [1, 1]} : vector<32x32xf32> to vector<16x32xf32>
      %c0_103 = arith.constant 0 : index
      %c0_104 = arith.constant 0 : index
      %290 = vector.load %arg19[%c0_103, %c0_104] : memref<4x32xbf16, #tpu.memory_space<vmem>>, vector<4x32xbf16>
      %291 = arith.truncf %289 : vector<16x32xf32> to vector<16x32xbf16>
      %cst_105 = arith.constant dense<0.000000e+00> : vector<4x16xf32>
      %292 = tpu.matmul %290, %291, %cst_105 {dimension_numbers = #tpu.dot_dimension_numbers<[1], [1], [0], [0], [0, 0, 1, 0], [], []>} : vector<4x32xbf16>, vector<16x32xbf16>, vector<4x16xf32> -> vector<4x16xf32>
      %c0_106 = arith.constant 0 : index
      %c0_107 = arith.constant 0 : index
      %293 = vector.load %arg20[%c0_106, %c0_107] : memref<4x1xf32, #tpu.memory_space<vmem>>, vector<4x1xf32>
      %294 = vector.broadcast %293 : vector<4x1xf32> to vector<4x16xf32>
      %295 = arith.addf %292, %294 : vector<4x16xf32>
      %c1 = arith.constant 1 : index
      %c0_108 = arith.constant 0 : index
      %c0_109 = arith.constant 0 : index
      %296 = vector.load %arg22[%c1, %c0_108, %c0_109] : memref<2x4x16xf32, #tpu.memory_space<vmem>>, vector<1x4x16xf32>
      %297 = vector.shape_cast %296 : vector<1x4x16xf32> to vector<4x16xf32>
      %298 = vector.shape_cast %295 : vector<4x16xf32> to vector<1x4x16xf32>
      tpu.vector_store %arg22[%c1, %c0_108, %c0_109], %298 {strides = array<i32>} : memref<2x4x16xf32, #tpu.memory_space<vmem>>, vector<1x4x16xf32>,
      %c1_110 = arith.constant 1 : index
      %c0_111 = arith.constant 0 : index
      %299 = vector.load %arg21[%c1_110, %c0_111] : memref<2x16xi32, #tpu.memory_space<vmem>>, vector<1x16xi32>
      %cst_112 = arith.constant dense<0xFF800000> : vector<16xf32>
      %300 = vector.multi_reduction <maximumf>, %295, %cst_112 [0] : vector<4x16xf32> to vector<16xf32>
      %301 = vector.shape_cast %300 : vector<16xf32> to vector<1x16xf32>
      %302 = vector.broadcast %301 : vector<1x16xf32> to vector<4x16xf32>
      %303 = arith.subf %295, %302 : vector<4x16xf32>
      %304 = math.exp %303 : vector<4x16xf32>
      %cst_113 = arith.constant dense<0.000000e+00> : vector<16xf32>
      %305 = vector.multi_reduction <add>, %304, %cst_113 [0] : vector<4x16xf32> to vector<16xf32>
      %306 = vector.shape_cast %305 : vector<16xf32> to vector<1x16xf32>
      %307 = math.log %306 : vector<1x16xf32>
      %308 = arith.addf %301, %307 : vector<1x16xf32>
      %309 = tpu.iota {dimensions = array<i32: 0>} : vector<4x16xi32>
      %310 = vector.broadcast %299 : vector<1x16xi32> to vector<4x16xi32>
      %311 = arith.cmpi eq, %309, %310 : vector<4x16xi32>
      %312 = arith.extui %311 : vector<4x16xi1> to vector<4x16xi32>
      %313 = arith.sitofp %312 : vector<4x16xi32> to vector<4x16xf32>
      %314 = arith.mulf %295, %313 : vector<4x16xf32>
      %cst_114 = arith.constant dense<0.000000e+00> : vector<16xf32>
      %315 = vector.multi_reduction <add>, %314, %cst_114 [0] : vector<4x16xf32> to vector<16xf32>
      %316 = vector.shape_cast %315 : vector<16xf32> to vector<1x16xf32>
      %c0_i32_115 = arith.constant 0 : i32
      %317 = vector.broadcast %c0_i32_115 : i32 to vector<1x16xi32>
      %318 = arith.cmpi ne, %299, %317 : vector<1x16xi32>
      %319 = arith.extui %318 : vector<1x16xi1> to vector<1x16xi32>
      %320 = arith.sitofp %319 : vector<1x16xi32> to vector<1x16xf32>
      %321 = arith.subf %308, %316 : vector<1x16xf32>
      %322 = arith.mulf %320, %321 : vector<1x16xf32>
      %323 = vector.shape_cast %322 : vector<1x16xf32> to vector<1x1x16xf32>
      %cst_116 = arith.constant dense<0.000000e+00> : vector<1xf32>
      %324 = vector.multi_reduction <add>, %323, %cst_116 [1, 2] : vector<1x1x16xf32> to vector<1xf32>
      %325 = vector.shape_cast %324 : vector<1xf32> to vector<1x1x1xf32>
      %326 = vector.extract %325[0, 0, 0] : f32 from vector<1x1x1xf32>
      %327 = arith.addf %283, %326 : f32
      %328 = vector.shape_cast %320 : vector<1x16xf32> to vector<1x1x16xf32>
      %cst_117 = arith.constant dense<0.000000e+00> : vector<1xf32>
      %329 = vector.multi_reduction <add>, %328, %cst_117 [1, 2] : vector<1x1x16xf32> to vector<1xf32>
      %330 = vector.shape_cast %329 : vector<1xf32> to vector<1x1x1xf32>
      %331 = vector.extract %330[0, 0, 0] : f32 from vector<1x1x1xf32>
      %332 = arith.addf %288, %331 : f32
      %cst_118 = arith.constant 0.000000e+00 : f32
      %333 = arith.cmpf ogt, %332, %cst_118 : f32
      %334 = arith.divf %327, %332 : f32
      %cst_119 = arith.constant 0.000000e+00 : f32
      %335 = arith.select %333, %334, %cst_119 : f32
      %c0_120 = arith.constant 0 : index
      %336 = memref.load %arg23[%c0_120] : memref<1xf32, #tpu.memory_space<smem>>
      memref.store %335, %arg23[%c0_120] : memref<1xf32, #tpu.memory_space<smem>>
    } else {
    }
    return
  }
  func.func @transform_0(%arg0: i32) -> (i32, i32) {
    %c0_i32 = arith.constant 0 : i32
    %c0_i32_0 = arith.constant 0 : i32
    %c0_i32_1 = arith.constant 0 : i32
    return %c0_i32, %c0_i32_0 : i32, i32
  }
  func.func @transform_1(%arg0: i32) -> (i32, i32, i32) {
    %c0_i32 = arith.constant 0 : i32
    %c0_i32_0 = arith.constant 0 : i32
    %c0_i32_1 = arith.constant 0 : i32
    return %arg0, %c0_i32, %c0_i32_0 : i32, i32, i32
  }
  func.func @transform_2(%arg0: i32) -> (i32, i32, i32) {
    %c0_i32 = arith.constant 0 : i32
    %c0_i32_0 = arith.constant 0 : i32
    %c0_i32_1 = arith.constant 0 : i32
    return %arg0, %c0_i32, %c0_i32_0 : i32, i32, i32
  }
  func.func @transform_3(%arg0: i32) -> (i32, i32, i32) {
    %c0_i32 = arith.constant 0 : i32
    %c0_i32_0 = arith.constant 0 : i32
    %c0_i32_1 = arith.constant 0 : i32
    return %arg0, %c0_i32, %c0_i32_0 : i32, i32, i32
  }
  func.func @transform_4(%arg0: i32) -> (i32, i32, i32) {
    %c0_i32 = arith.constant 0 : i32
    %c0_i32_0 = arith.constant 0 : i32
    %c0_i32_1 = arith.constant 0 : i32
    return %arg0, %c0_i32, %c0_i32_0 : i32, i32, i32
  }
  func.func @transform_5(%arg0: i32) -> (i32, i32, i32) {
    %c0_i32 = arith.constant 0 : i32
    %c0_i32_0 = arith.constant 0 : i32
    %c0_i32_1 = arith.constant 0 : i32
    return %arg0, %c0_i32, %c0_i32_0 : i32, i32, i32
  }
  func.func @transform_6(%arg0: i32) -> (i32, i32, i32) {
    %c0_i32 = arith.constant 0 : i32
    %c0_i32_0 = arith.constant 0 : i32
    %c0_i32_1 = arith.constant 0 : i32
    return %arg0, %c0_i32, %c0_i32_0 : i32, i32, i32
  }
  func.func @transform_7(%arg0: i32) -> (i32, i32, i32) {
    %c0_i32 = arith.constant 0 : i32
    %c0_i32_0 = arith.constant 0 : i32
    %c0_i32_1 = arith.constant 0 : i32
    return %arg0, %c0_i32, %c0_i32_0 : i32, i32, i32
  }
  func.func @transform_8(%arg0: i32) -> (i32, i32, i32) {
    %c0_i32 = arith.constant 0 : i32
    %c0_i32_0 = arith.constant 0 : i32
    %c0_i32_1 = arith.constant 0 : i32
    return %arg0, %c0_i32, %c0_i32_0 : i32, i32, i32
  }
  func.func @transform_9(%arg0: i32) -> (i32, i32, i32) {
    %c0_i32 = arith.constant 0 : i32
    %c0_i32_0 = arith.constant 0 : i32
    %c0_i32_1 = arith.constant 0 : i32
    return %arg0, %c0_i32, %c0_i32_0 : i32, i32, i32
  }
  func.func @transform_10(%arg0: i32) -> (i32, i32, i32) {
    %c0_i32 = arith.constant 0 : i32
    %c0_i32_0 = arith.constant 0 : i32
    %c0_i32_1 = arith.constant 0 : i32
    return %arg0, %c0_i32, %c0_i32_0 : i32, i32, i32
  }
  func.func @transform_11(%arg0: i32) -> (i32, i32, i32) {
    %c0_i32 = arith.constant 0 : i32
    %c0_i32_0 = arith.constant 0 : i32
    %c0_i32_1 = arith.constant 0 : i32
    return %arg0, %c0_i32, %c0_i32_0 : i32, i32, i32
  }
  func.func @transform_12(%arg0: i32) -> (i32, i32, i32) {
    %c0_i32 = arith.constant 0 : i32
    %c0_i32_0 = arith.constant 0 : i32
    %c0_i32_1 = arith.constant 0 : i32
    return %arg0, %c0_i32, %c0_i32_0 : i32, i32, i32
  }
  func.func @transform_13(%arg0: i32) -> (i32, i32) {
    %c0_i32 = arith.constant 0 : i32
    %c0_i32_0 = arith.constant 0 : i32
    %c0_i32_1 = arith.constant 0 : i32
    return %c0_i32, %c0_i32_0 : i32, i32
  }
  func.func @transform_14(%arg0: i32) -> (i32, i32) {
    %c0_i32 = arith.constant 0 : i32
    %c0_i32_0 = arith.constant 0 : i32
    %c0_i32_1 = arith.constant 0 : i32
    return %c0_i32, %c0_i32_0 : i32, i32
  }
  func.func @transform_15(%arg0: i32) -> (i32, i32) {
    %c0_i32 = arith.constant 0 : i32
    %c0_i32_0 = arith.constant 0 : i32
    %c0_i32_1 = arith.constant 0 : i32
    return %c0_i32, %c0_i32_0 : i32, i32
  }
  func.func @transform_16(%arg0: i32) -> (i32, i32) {
    %c0_i32 = arith.constant 0 : i32
    %c0_i32_0 = arith.constant 0 : i32
    %c0_i32_1 = arith.constant 0 : i32
    return %c0_i32, %c0_i32_0 : i32, i32
  }
  func.func @transform_17(%arg0: i32) -> (i32, i32) {
    %c0_i32 = arith.constant 0 : i32
    %c0_i32_0 = arith.constant 0 : i32
    %c0_i32_1 = arith.constant 0 : i32
    return %c0_i32, %c0_i32_0 : i32, i32
  }
  func.func @transform_18(%arg0: i32) -> (i32, i32) {
    %c0_i32 = arith.constant 0 : i32
    %c0_i32_0 = arith.constant 0 : i32
    %c0_i32_1 = arith.constant 0 : i32
    return %c0_i32, %c0_i32_0 : i32, i32
  }
  func.func @transform_19(%arg0: i32) -> (i32, i32) {
    %c0_i32 = arith.constant 0 : i32
    %c0_i32_0 = arith.constant 0 : i32
    %c0_i32_1 = arith.constant 0 : i32
    return %c0_i32, %c0_i32_0 : i32, i32
  }
  func.func @transform_20(%arg0: i32) -> (i32, i32) {
    %c0_i32 = arith.constant 0 : i32
    %c0_i32_0 = arith.constant 0 : i32
    %c0_i32_1 = arith.constant 0 : i32
    return %c0_i32, %c0_i32_0 : i32, i32
  }
  func.func @transform_21(%arg0: i32) -> (i32, i32, i32) {
    %c0_i32 = arith.constant 0 : i32
    %c0_i32_0 = arith.constant 0 : i32
    %c0_i32_1 = arith.constant 0 : i32
    %c0_i32_2 = arith.constant 0 : i32
    return %c0_i32, %c0_i32_0, %c0_i32_1 : i32, i32, i32
  }
  func.func @transform_22(%arg0: i32) -> i32 {
    %c0_i32 = arith.constant 0 : i32
    %c0_i32_0 = arith.constant 0 : i32
    return %c0_i32 : i32
  }
}

</mosaic_0001>

<llo_original>
// kernel: segmentation_vit_forward.2
$region0: #{segmentation_vit_forward.2}
  #allocation0 [shape = 'u32[]', space=smem, size = 0x4, offset = 0x4, fixed_abs, tag = 'smem constant byte address 0x4 - core index']
  #allocation1 [shape = 'u32[144,128]{1,0:T(1,128)}', space=vmem, size = 0x12000, scoped, tag = 'internal scratch']
  #allocation2 [shape = 'f32[34,32]{1,0:T(8,128)}', space=vmem, size = 0x5000, scoped, tag = 'scratch operand']
  %s0 = inlined_call_operand.vmem [shape: f32[32,48], index: 0, kind: input, shape index: {}]
  %s1 = inlined_call_operand.vmem [shape: bf16[48,32], index: 1, kind: input, shape index: {}]
  %s2 = inlined_call_operand.vmem [shape: f32[1,32], index: 2, kind: input, shape index: {}]
  %s3 = inlined_call_operand.vmem [shape: f32[1,32], index: 3, kind: input, shape index: {}]
  %s4 = inlined_call_operand.vmem [shape: f32[16,32], index: 4, kind: input, shape index: {}]
  %s5 = inlined_call_operand.vmem [shape: f32[2,1,32], index: 5, kind: input, shape index: {}]
  %s6 = inlined_call_operand.vmem [shape: f32[2,1,32], index: 6, kind: input, shape index: {}]
  %s7 = inlined_call_operand.vmem [shape: bf16[2,32,96], index: 7, kind: input, shape index: {}]
  %s8 = inlined_call_operand.vmem [shape: f32[2,1,96], index: 8, kind: input, shape index: {}]
  %s9 = inlined_call_operand.vmem [shape: bf16[2,32,32], index: 9, kind: input, shape index: {}]
  %s10 = inlined_call_operand.vmem [shape: f32[2,1,32], index: 10, kind: input, shape index: {}]
  %s11 = inlined_call_operand.vmem [shape: f32[2,1,32], index: 11, kind: input, shape index: {}]
  %s12 = inlined_call_operand.vmem [shape: f32[2,1,32], index: 12, kind: input, shape index: {}]
  %s13 = inlined_call_operand.vmem [shape: bf16[2,32,128], index: 13, kind: input, shape index: {}]
  %s14 = inlined_call_operand.vmem [shape: f32[2,1,128], index: 14, kind: input, shape index: {}]
  %s15 = inlined_call_operand.vmem [shape: bf16[2,128,32], index: 15, kind: input, shape index: {}]
  %s16 = inlined_call_operand.vmem [shape: f32[2,1,32], index: 16, kind: input, shape index: {}]
  %s17 = inlined_call_operand.vmem [shape: f32[1,32], index: 17, kind: input, shape index: {}]
  %s18 = inlined_call_operand.vmem [shape: f32[1,32], index: 18, kind: input, shape index: {}]
  %s19 = inlined_call_operand.vmem [shape: bf16[32,32], index: 19, kind: input, shape index: {}]
  %s20 = inlined_call_operand.vmem [shape: f32[1,32], index: 20, kind: input, shape index: {}]
  %s21 = inlined_call_operand.vmem [shape: f32[17,32], index: 21, kind: input, shape index: {}]
  %s22 = inlined_call_operand.vmem [shape: f32[34,32], index: 22, kind: output, shape index: {}]
  %s23 = sld [smem:[#allocation0]]
  $region129: #{segmentation_vit_forward.2} parent=0
    _
  %s25 = ssub.s32 1, %s23
  %s26 = scalar_select 0, %s25, %s23
  loop: start=0, step=1, limit=4
  $region2: #{segmentation_vit_forward.2} parent=0 // loop_pre_header
    _
  $region3: #{segmentation_vit_forward.2} parent=0 // loop_header
    %s28 = sphi 0, %s32
    %p29 = scmp.ge.s32.totalorder %s28, 4
    %s36 = sphi 0, %s36
    %s38 = sphi 0, %s36
    %s39 = sphi 0, %s38
    %s53 = sphi 0, %s39
    %s57 = sphi 0, %s57
    %s59 = sphi 0, %s57
    %s60 = sphi 0, %s59
    %s74 = sphi 0, %s60
    %s78 = sphi 0, %s78
    %s80 = sphi 0, %s78
    %s81 = sphi 0, %s80
    %s95 = sphi 0, %s81
    %s99 = sphi 0, %s99
    %s101 = sphi 0, %s99
    %s102 = sphi 0, %s101
    %s116 = sphi 0, %s102
    %s120 = sphi 0, %s120
    %s122 = sphi 0, %s120
    %s123 = sphi 0, %s122
    %s137 = sphi 0, %s123
    %s143 = sphi 0, %s145
    %s146 = sphi 0, %s143
    %s147 = sphi 0, %s146
    %s163 = sphi 0, %s147
    %s169 = sphi 0, %s171
    %s172 = sphi 0, %s169
    %s173 = sphi 0, %s172
    %s189 = sphi 0, %s173
    %s195 = sphi 0, %s197
    %s198 = sphi 0, %s195
    %s199 = sphi 0, %s198
    %s215 = sphi 0, %s199
    %s221 = sphi 0, %s223
    %s224 = sphi 0, %s221
    %s225 = sphi 0, %s224
    %s241 = sphi 0, %s225
    %s247 = sphi 0, %s249
    %s250 = sphi 0, %s247
    %s251 = sphi 0, %s250
    %s267 = sphi 0, %s251
    %s273 = sphi 0, %s275
    %s276 = sphi 0, %s273
    %s277 = sphi 0, %s276
    %s293 = sphi 0, %s277
    %s299 = sphi 0, %s301
    %s302 = sphi 0, %s299
    %s303 = sphi 0, %s302
    %s319 = sphi 0, %s303
    %s325 = sphi 0, %s327
    %s328 = sphi 0, %s325
    %s329 = sphi 0, %s328
    %s345 = sphi 0, %s329
    %s351 = sphi 0, %s353
    %s354 = sphi 0, %s351
    %s355 = sphi 0, %s354
    %s371 = sphi 0, %s355
    %s377 = sphi 0, %s379
    %s380 = sphi 0, %s377
    %s381 = sphi 0, %s380
    %s397 = sphi 0, %s381
    %s403 = sphi 0, %s405
    %s406 = sphi 0, %s403
    %s407 = sphi 0, %s406
    %s423 = sphi 0, %s407
    %s429 = sphi 0, %s431
    %s432 = sphi 0, %s429
    %s433 = sphi 0, %s432
    %s449 = sphi 0, %s433
    %s453 = sphi 0, %s453
    %s455 = sphi 0, %s453
    %s456 = sphi 0, %s455
    %s470 = sphi 0, %s456
    %s474 = sphi 0, %s474
    %s476 = sphi 0, %s474
    %s477 = sphi 0, %s476
    %s491 = sphi 0, %s477
    %s495 = sphi 0, %s495
    %s497 = sphi 0, %s495
    %s498 = sphi 0, %s497
    %s512 = sphi 0, %s498
    %s516 = sphi 0, %s516
    %s518 = sphi 0, %s516
    %s519 = sphi 0, %s518
    %s533 = sphi 0, %s519
    %s537 = sphi 0, %s537
    %s539 = sphi 0, %s537
    %s540 = sphi 0, %s539
    %s554 = sphi 0, %s540
    %s558 = sphi 0, %s558
    %s560 = sphi 0, %s558
    %s561 = sphi 0, %s560
    %s575 = sphi 0, %s561
  $region4: #{segmentation_vit_forward.2} parent=0 // loop_header_branch
    %31 = sbr.rel (%p29) target = $region8
  $region5: #{segmentation_vit_forward.2} parent=0 // loop_body
    %s33 = ssub.s32 %s28, 1
    %s34 = ssub.s32 %s28, 2
    %s35 = sadd.s32 %s28, 1
    %s37 = sadd.s32 %s36, 1
    %p40 = scmp.eq.s32.totalorder %s28, 1
    %p41 = scmp.ne.s32.totalorder %s36, %s38
    %p42 = scmp.eq.s32.totalorder %s28, 0
    %p43 = por %p41, %p42
    %p44 = scmp.ne.s32.totalorder %s36, %s38
    %p45 = scmp.eq.s32.totalorder %s33, 1
    %p46 = por %p44, %p45
    %p47 = scmp.ne.s32.totalorder %s38, %s39
    %p48 = scmp.eq.s32.totalorder %s33, 0
    %p49 = por %p47, %p48
    %p50 = scmp.ne.s32.totalorder %s38, %s39
    %p51 = scmp.eq.s32.totalorder %s34, 1
    %p52 = por %p50, %p51
    %p54 = scmp.ne.s32.totalorder %s39, %s53
    %p55 = scmp.eq.s32.totalorder %s34, 0
    %p56 = por %p54, %p55
    %s58 = sadd.s32 %s57, 1
    %p61 = scmp.eq.s32.totalorder %s28, 1
    %p62 = scmp.ne.s32.totalorder %s57, %s59
    %p63 = scmp.eq.s32.totalorder %s28, 0
    %p64 = por %p62, %p63
    %p65 = scmp.ne.s32.totalorder %s57, %s59
    %p66 = scmp.eq.s32.totalorder %s33, 1
    %p67 = por %p65, %p66
    %p68 = scmp.ne.s32.totalorder %s59, %s60
    %p69 = scmp.eq.s32.totalorder %s33, 0
    %p70 = por %p68, %p69
    %p71 = scmp.ne.s32.totalorder %s59, %s60
    %p72 = scmp.eq.s32.totalorder %s34, 1
    %p73 = por %p71, %p72
    %p75 = scmp.ne.s32.totalorder %s60, %s74
    %p76 = scmp.eq.s32.totalorder %s34, 0
    %p77 = por %p75, %p76
    %s79 = sadd.s32 %s78, 1
    %p82 = scmp.eq.s32.totalorder %s28, 1
    %p83 = scmp.ne.s32.totalorder %s78, %s80
    %p84 = scmp.eq.s32.totalorder %s28, 0
    %p85 = por %p83, %p84
    %p86 = scmp.ne.s32.totalorder %s78, %s80
    %p87 = scmp.eq.s32.totalorder %s33, 1
    %p88 = por %p86, %p87
    %p89 = scmp.ne.s32.totalorder %s80, %s81
    %p90 = scmp.eq.s32.totalorder %s33, 0
    %p91 = por %p89, %p90
    %p92 = scmp.ne.s32.totalorder %s80, %s81
    %p93 = scmp.eq.s32.totalorder %s34, 1
    %p94 = por %p92, %p93
    %p96 = scmp.ne.s32.totalorder %s81, %s95
    %p97 = scmp.eq.s32.totalorder %s34, 0
    %p98 = por %p96, %p97
    %s100 = sadd.s32 %s99, 1
    %p103 = scmp.eq.s32.totalorder %s28, 1
    %p104 = scmp.ne.s32.totalorder %s99, %s101
    %p105 = scmp.eq.s32.totalorder %s28, 0
    %p106 = por %p104, %p105
    %p107 = scmp.ne.s32.totalorder %s99, %s101
    %p108 = scmp.eq.s32.totalorder %s33, 1
    %p109 = por %p107, %p108
    %p110 = scmp.ne.s32.totalorder %s101, %s102
    %p111 = scmp.eq.s32.totalorder %s33, 0
    %p112 = por %p110, %p111
    %p113 = scmp.ne.s32.totalorder %s101, %s102
    %p114 = scmp.eq.s32.totalorder %s34, 1
    %p115 = por %p113, %p114
    %p117 = scmp.ne.s32.totalorder %s102, %s116
    %p118 = scmp.eq.s32.totalorder %s34, 0
    %p119 = por %p117, %p118
    %s121 = sadd.s32 %s120, 1
    %p124 = scmp.eq.s32.totalorder %s28, 1
    %p125 = scmp.ne.s32.totalorder %s120, %s122
    %p126 = scmp.eq.s32.totalorder %s28, 0
    %p127 = por %p125, %p126
    %p128 = scmp.ne.s32.totalorder %s120, %s122
    %p129 = scmp.eq.s32.totalorder %s33, 1
    %p130 = por %p128, %p129
    %p131 = scmp.ne.s32.totalorder %s122, %s123
    %p132 = scmp.eq.s32.totalorder %s33, 0
    %p133 = por %p131, %p132
    %p134 = scmp.ne.s32.totalorder %s122, %s123
    %p135 = scmp.eq.s32.totalorder %s34, 1
    %p136 = por %p134, %p135
    %p138 = scmp.ne.s32.totalorder %s123, %s137
    %p139 = scmp.eq.s32.totalorder %s34, 0
    %p140 = por %p138, %p139
    %s141 = ssub.s32 %s28, %s35
    %p142 = scmp.eq.s32.totalorder %s141, 0
    %s144 = sadd.s32 %s143, 1
    %s145 = scalar_select %p142, %s143, %s144
    %p148 = pneg %p142
    %p149 = scmp.eq.s32.totalorder %s28, 1
    %p150 = por %p148, %p149
    %p151 = scmp.ne.s32.totalorder %s143, %s146
    %p152 = scmp.eq.s32.totalorder %s28, 0
    %p153 = por %p151, %p152
    %p154 = scmp.ne.s32.totalorder %s143, %s146
    %p155 = scmp.eq.s32.totalorder %s33, 1
    %p156 = por %p154, %p155
    %p157 = scmp.ne.s32.totalorder %s146, %s147
    %p158 = scmp.eq.s32.totalorder %s33, 0
    %p159 = por %p157, %p158
    %p160 = scmp.ne.s32.totalorder %s146, %s147
    %p161 = scmp.eq.s32.totalorder %s34, 1
    %p162 = por %p160, %p161
    %p164 = scmp.ne.s32.totalorder %s147, %s163
    %p165 = scmp.eq.s32.totalorder %s34, 0
    %p166 = por %p164, %p165
    %s167 = ssub.s32 %s28, %s35
    %p168 = scmp.eq.s32.totalorder %s167, 0
    %s170 = sadd.s32 %s169, 1
    %s171 = scalar_select %p168, %s169, %s170
    %p174 = pneg %p168
    %p175 = scmp.eq.s32.totalorder %s28, 1
    %p176 = por %p174, %p175
    %p177 = scmp.ne.s32.totalorder %s169, %s172
    %p178 = scmp.eq.s32.totalorder %s28, 0
    %p179 = por %p177, %p178
    %p180 = scmp.ne.s32.totalorder %s169, %s172
    %p181 = scmp.eq.s32.totalorder %s33, 1
    %p182 = por %p180, %p181
    %p183 = scmp.ne.s32.totalorder %s172, %s173
    %p184 = scmp.eq.s32.totalorder %s33, 0
    %p185 = por %p183, %p184
    %p186 = scmp.ne.s32.totalorder %s172, %s173
    %p187 = scmp.eq.s32.totalorder %s34, 1
    %p188 = por %p186, %p187
    %p190 = scmp.ne.s32.totalorder %s173, %s189
    %p191 = scmp.eq.s32.totalorder %s34, 0
    %p192 = por %p190, %p191
    %s193 = ssub.s32 %s28, %s35
    %p194 = scmp.eq.s32.totalorder %s193, 0
    %s196 = sadd.s32 %s195, 1
    %s197 = scalar_select %p194, %s195, %s196
    %p200 = pneg %p194
    %p201 = scmp.eq.s32.totalorder %s28, 1
    %p202 = por %p200, %p201
    %p203 = scmp.ne.s32.totalorder %s195, %s198
    %p204 = scmp.eq.s32.totalorder %s28, 0
    %p205 = por %p203, %p204
    %p206 = scmp.ne.s32.totalorder %s195, %s198
    %p207 = scmp.eq.s32.totalorder %s33, 1
    %p208 = por %p206, %p207
    %p209 = scmp.ne.s32.totalorder %s198, %s199
    %p210 = scmp.eq.s32.totalorder %s33, 0
    %p211 = por %p209, %p210
    %p212 = scmp.ne.s32.totalorder %s198, %s199
    %p213 = scmp.eq.s32.totalorder %s34, 1
    %p214 = por %p212, %p213
    %p216 = scmp.ne.s32.totalorder %s199, %s215
    %p217 = scmp.eq.s32.totalorder %s34, 0
    %p218 = por %p216, %p217
    %s219 = ssub.s32 %s28, %s35
    %p220 = scmp.eq.s32.totalorder %s219, 0
    %s222 = sadd.s32 %s221, 1
    %s223 = scalar_select %p220, %s221, %s222
    %p226 = pneg %p220
    %p227 = scmp.eq.s32.totalorder %s28, 1
    %p228 = por %p226, %p227
    %p229 = scmp.ne.s32.totalorder %s221, %s224
    %p230 = scmp.eq.s32.totalorder %s28, 0
    %p231 = por %p229, %p230
    %p232 = scmp.ne.s32.totalorder %s221, %s224
    %p233 = scmp.eq.s32.totalorder %s33, 1
    %p234 = por %p232, %p233
    %p235 = scmp.ne.s32.totalorder %s224, %s225
    %p236 = scmp.eq.s32.totalorder %s33, 0
    %p237 = por %p235, %p236
    %p238 = scmp.ne.s32.totalorder %s224, %s225
    %p239 = scmp.eq.s32.totalorder %s34, 1
    %p240 = por %p238, %p239
    %p242 = scmp.ne.s32.totalorder %s225, %s241
    %p243 = scmp.eq.s32.totalorder %s34, 0
    %p244 = por %p242, %p243
    %s245 = ssub.s32 %s28, %s35
    %p246 = scmp.eq.s32.totalorder %s245, 0
    %s248 = sadd.s32 %s247, 1
    %s249 = scalar_select %p246, %s247, %s248
    %p252 = pneg %p246
    %p253 = scmp.eq.s32.totalorder %s28, 1
    %p254 = por %p252, %p253
    %p255 = scmp.ne.s32.totalorder %s247, %s250
    %p256 = scmp.eq.s32.totalorder %s28, 0
    %p257 = por %p255, %p256
    %p258 = scmp.ne.s32.totalorder %s247, %s250
    %p259 = scmp.eq.s32.totalorder %s33, 1
    %p260 = por %p258, %p259
    %p261 = scmp.ne.s32.totalorder %s250, %s251
    %p262 = scmp.eq.s32.totalorder %s33, 0
    %p263 = por %p261, %p262
    %p264 = scmp.ne.s32.totalorder %s250, %s251
    %p265 = scmp.eq.s32.totalorder %s34, 1
    %p266 = por %p264, %p265
    %p268 = scmp.ne.s32.totalorder %s251, %s267
    %p269 = scmp.eq.s32.totalorder %s34, 0
    %p270 = por %p268, %p269
    %s271 = ssub.s32 %s28, %s35
    %p272 = scmp.eq.s32.totalorder %s271, 0
    %s274 = sadd.s32 %s273, 1
    %s275 = scalar_select %p272, %s273, %s274
    %p278 = pneg %p272
    %p279 = scmp.eq.s32.totalorder %s28, 1
    %p280 = por %p278, %p279
    %p281 = scmp.ne.s32.totalorder %s273, %s276
    %p282 = scmp.eq.s32.totalorder %s28, 0
    %p283 = por %p281, %p282
    %p284 = scmp.ne.s32.totalorder %s273, %s276
    %p285 = scmp.eq.s32.totalorder %s33, 1
    %p286 = por %p284, %p285
    %p287 = scmp.ne.s32.totalorder %s276, %s277
    %p288 = scmp.eq.s32.totalorder %s33, 0
    %p289 = por %p287, %p288
    %p290 = scmp.ne.s32.totalorder %s276, %s277
    %p291 = scmp.eq.s32.totalorder %s34, 1
    %p292 = por %p290, %p291
    %p294 = scmp.ne.s32.totalorder %s277, %s293
    %p295 = scmp.eq.s32.totalorder %s34, 0
    %p296 = por %p294, %p295
    %s297 = ssub.s32 %s28, %s35
    %p298 = scmp.eq.s32.totalorder %s297, 0
    %s300 = sadd.s32 %s299, 1
    %s301 = scalar_select %p298, %s299, %s300
    %p304 = pneg %p298
    %p305 = scmp.eq.s32.totalorder %s28, 1
    %p306 = por %p304, %p305
    %p307 = scmp.ne.s32.totalorder %s299, %s302
    %p308 = scmp.eq.s32.totalorder %s28, 0
    %p309 = por %p307, %p308
    %p310 = scmp.ne.s32.totalorder %s299, %s302
    %p311 = scmp.eq.s32.totalorder %s33, 1
    %p312 = por %p310, %p311
    %p313 = scmp.ne.s32.totalorder %s302, %s303
    %p314 = scmp.eq.s32.totalorder %s33, 0
    %p315 = por %p313, %p314
    %p316 = scmp.ne.s32.totalorder %s302, %s303
    %p317 = scmp.eq.s32.totalorder %s34, 1
    %p318 = por %p316, %p317
    %p320 = scmp.ne.s32.totalorder %s303, %s319
    %p321 = scmp.eq.s32.totalorder %s34, 0
    %p322 = por %p320, %p321
    %s323 = ssub.s32 %s28, %s35
    %p324 = scmp.eq.s32.totalorder %s323, 0
    %s326 = sadd.s32 %s325, 1
    %s327 = scalar_select %p324, %s325, %s326
    %p330 = pneg %p324
    %p331 = scmp.eq.s32.totalorder %s28, 1
    %p332 = por %p330, %p331
    %p333 = scmp.ne.s32.totalorder %s325, %s328
    %p334 = scmp.eq.s32.totalorder %s28, 0
    %p335 = por %p333, %p334
    %p336 = scmp.ne.s32.totalorder %s325, %s328
    %p337 = scmp.eq.s32.totalorder %s33, 1
    %p338 = por %p336, %p337
    %p339 = scmp.ne.s32.totalorder %s328, %s329
    %p340 = scmp.eq.s32.totalorder %s33, 0
    %p341 = por %p339, %p340
    %p342 = scmp.ne.s32.totalorder %s328, %s329
    %p343 = scmp.eq.s32.totalorder %s34, 1
    %p344 = por %p342, %p343
    %p346 = scmp.ne.s32.totalorder %s329, %s345
    %p347 = scmp.eq.s32.totalorder %s34, 0
    %p348 = por %p346, %p347
    %s349 = ssub.s32 %s28, %s35
    %p350 = scmp.eq.s32.totalorder %s349, 0
    %s352 = sadd.s32 %s351, 1
    %s353 = scalar_select %p350, %s351, %s352
    %p356 = pneg %p350
    %p357 = scmp.eq.s32.totalorder %s28, 1
    %p358 = por %p356, %p357
    %p359 = scmp.ne.s32.totalorder %s351, %s354
    %p360 = scmp.eq.s32.totalorder %s28, 0
    %p361 = por %p359, %p360
    %p362 = scmp.ne.s32.totalorder %s351, %s354
    %p363 = scmp.eq.s32.totalorder %s33, 1
    %p364 = por %p362, %p363
    %p365 = scmp.ne.s32.totalorder %s354, %s355
    %p366 = scmp.eq.s32.totalorder %s33, 0
    %p367 = por %p365, %p366
    %p368 = scmp.ne.s32.totalorder %s354, %s355
    %p369 = scmp.eq.s32.totalorder %s34, 1
    %p370 = por %p368, %p369
    %p372 = scmp.ne.s32.totalorder %s355, %s371
    %p373 = scmp.eq.s32.totalorder %s34, 0
    %p374 = por %p372, %p373
    %s375 = ssub.s32 %s28, %s35
    %p376 = scmp.eq.s32.totalorder %s375, 0
    %s378 = sadd.s32 %s377, 1
    %s379 = scalar_select %p376, %s377, %s378
    %p382 = pneg %p376
    %p383 = scmp.eq.s32.totalorder %s28, 1
    %p384 = por %p382, %p383
    %p385 = scmp.ne.s32.totalorder %s377, %s380
    %p386 = scmp.eq.s32.totalorder %s28, 0
    %p387 = por %p385, %p386
    %p388 = scmp.ne.s32.totalorder %s377, %s380
    %p389 = scmp.eq.s32.totalorder %s33, 1
    %p390 = por %p388, %p389
    %p391 = scmp.ne.s32.totalorder %s380, %s381
    %p392 = scmp.eq.s32.totalorder %s33, 0
    %p393 = por %p391, %p392
    %p394 = scmp.ne.s32.totalorder %s380, %s381
    %p395 = scmp.eq.s32.totalorder %s34, 1
    %p396 = por %p394, %p395
    %p398 = scmp.ne.s32.totalorder %s381, %s397
    %p399 = scmp.eq.s32.totalorder %s34, 0
    %p400 = por %p398, %p399
    %s401 = ssub.s32 %s28, %s35
    %p402 = scmp.eq.s32.totalorder %s401, 0
    %s404 = sadd.s32 %s403, 1
    %s405 = scalar_select %p402, %s403, %s404
    %p408 = pneg %p402
    %p409 = scmp.eq.s32.totalorder %s28, 1
    %p410 = por %p408, %p409
    %p411 = scmp.ne.s32.totalorder %s403, %s406
    %p412 = scmp.eq.s32.totalorder %s28, 0
    %p413 = por %p411, %p412
    %p414 = scmp.ne.s32.totalorder %s403, %s406
    %p415 = scmp.eq.s32.totalorder %s33, 1
    %p416 = por %p414, %p415
    %p417 = scmp.ne.s32.totalorder %s406, %s407
    %p418 = scmp.eq.s32.totalorder %s33, 0
    %p419 = por %p417, %p418
    %p420 = scmp.ne.s32.totalorder %s406, %s407
    %p421 = scmp.eq.s32.totalorder %s34, 1
    %p422 = por %p420, %p421
    %p424 = scmp.ne.s32.totalorder %s407, %s423
    %p425 = scmp.eq.s32.totalorder %s34, 0
    %p426 = por %p424, %p425
    %s427 = ssub.s32 %s28, %s35
    %p428 = scmp.eq.s32.totalorder %s427, 0
    %s430 = sadd.s32 %s429, 1
    %s431 = scalar_select %p428, %s429, %s430
    %p434 = pneg %p428
    %p435 = scmp.eq.s32.totalorder %s28, 1
    %p436 = por %p434, %p435
    %p437 = scmp.ne.s32.totalorder %s429, %s432
    %p438 = scmp.eq.s32.totalorder %s28, 0
    %p439 = por %p437, %p438
    %p440 = scmp.ne.s32.totalorder %s429, %s432
    %p441 = scmp.eq.s32.totalorder %s33, 1
    %p442 = por %p440, %p441
    %p443 = scmp.ne.s32.totalorder %s432, %s433
    %p444 = scmp.eq.s32.totalorder %s33, 0
    %p445 = por %p443, %p444
    %p446 = scmp.ne.s32.totalorder %s432, %s433
    %p447 = scmp.eq.s32.totalorder %s34, 1
    %p448 = por %p446, %p447
    %p450 = scmp.ne.s32.totalorder %s433, %s449
    %p451 = scmp.eq.s32.totalorder %s34, 0
    %p452 = por %p450, %p451
    %s454 = sadd.s32 %s453, 1
    %p457 = scmp.eq.s32.totalorder %s28, 1
    %p458 = scmp.ne.s32.totalorder %s453, %s455
    %p459 = scmp.eq.s32.totalorder %s28, 0
    %p460 = por %p458, %p459
    %p461 = scmp.ne.s32.totalorder %s453, %s455
    %p462 = scmp.eq.s32.totalorder %s33, 1
    %p463 = por %p461, %p462
    %p464 = scmp.ne.s32.totalorder %s455, %s456
    %p465 = scmp.eq.s32.totalorder %s33, 0
    %p466 = por %p464, %p465
    %p467 = scmp.ne.s32.totalorder %s455, %s456
    %p468 = scmp.eq.s32.totalorder %s34, 1
    %p469 = por %p467, %p468
    %p471 = scmp.ne.s32.totalorder %s456, %s470
    %p472 = scmp.eq.s32.totalorder %s34, 0
    %p473 = por %p471, %p472
    %s475 = sadd.s32 %s474, 1
    %p478 = scmp.eq.s32.totalorder %s28, 1
    %p479 = scmp.ne.s32.totalorder %s474, %s476
    %p480 = scmp.eq.s32.totalorder %s28, 0
    %p481 = por %p479, %p480
    %p482 = scmp.ne.s32.totalorder %s474, %s476
    %p483 = scmp.eq.s32.totalorder %s33, 1
    %p484 = por %p482, %p483
    %p485 = scmp.ne.s32.totalorder %s476, %s477
    %p486 = scmp.eq.s32.totalorder %s33, 0
    %p487 = por %p485, %p486
    %p488 = scmp.ne.s32.totalorder %s476, %s477
    %p489 = scmp.eq.s32.totalorder %s34, 1
    %p490 = por %p488, %p489
    %p492 = scmp.ne.s32.totalorder %s477, %s491
    %p493 = scmp.eq.s32.totalorder %s34, 0
    %p494 = por %p492, %p493
    %s496 = sadd.s32 %s495, 1
    %p499 = scmp.eq.s32.totalorder %s28, 1
    %p500 = scmp.ne.s32.totalorder %s495, %s497
    %p501 = scmp.eq.s32.totalorder %s28, 0
    %p502 = por %p500, %p501
    %p503 = scmp.ne.s32.totalorder %s495, %s497
    %p504 = scmp.eq.s32.totalorder %s33, 1
    %p505 = por %p503, %p504
    %p506 = scmp.ne.s32.totalorder %s497, %s498
    %p507 = scmp.eq.s32.totalorder %s33, 0
    %p508 = por %p506, %p507
    %p509 = scmp.ne.s32.totalorder %s497, %s498
    %p510 = scmp.eq.s32.totalorder %s34, 1
    %p511 = por %p509, %p510
    %p513 = scmp.ne.s32.totalorder %s498, %s512
    %p514 = scmp.eq.s32.totalorder %s34, 0
    %p515 = por %p513, %p514
    %s517 = sadd.s32 %s516, 1
    %p520 = scmp.eq.s32.totalorder %s28, 1
    %p521 = scmp.ne.s32.totalorder %s516, %s518
    %p522 = scmp.eq.s32.totalorder %s28, 0
    %p523 = por %p521, %p522
    %p524 = scmp.ne.s32.totalorder %s516, %s518
    %p525 = scmp.eq.s32.totalorder %s33, 1
    %p526 = por %p524, %p525
    %p527 = scmp.ne.s32.totalorder %s518, %s519
    %p528 = scmp.eq.s32.totalorder %s33, 0
    %p529 = por %p527, %p528
    %p530 = scmp.ne.s32.totalorder %s518, %s519
    %p531 = scmp.eq.s32.totalorder %s34, 1
    %p532 = por %p530, %p531
    %p534 = scmp.ne.s32.totalorder %s519, %s533
    %p535 = scmp.eq.s32.totalorder %s34, 0
    %p536 = por %p534, %p535
    %s538 = sadd.s32 %s537, 1
    %p541 = scmp.eq.s32.totalorder %s28, 1
    %p542 = scmp.ne.s32.totalorder %s537, %s539
    %p543 = scmp.eq.s32.totalorder %s28, 0
    %p544 = por %p542, %p543
    %p545 = scmp.ne.s32.totalorder %s537, %s539
    %p546 = scmp.eq.s32.totalorder %s33, 1
    %p547 = por %p545, %p546
    %p548 = scmp.ne.s32.totalorder %s539, %s540
    %p549 = scmp.eq.s32.totalorder %s33, 0
    %p550 = por %p548, %p549
    %p551 = scmp.ne.s32.totalorder %s539, %s540
    %p552 = scmp.eq.s32.totalorder %s34, 1
    %p553 = por %p551, %p552
    %p555 = scmp.ne.s32.totalorder %s540, %s554
    %p556 = scmp.eq.s32.totalorder %s34, 0
    %p557 = por %p555, %p556
    %s559 = sadd.s32 %s558, 1
    %p562 = scmp.eq.s32.totalorder %s28, 1
    %p563 = scmp.ne.s32.totalorder %s558, %s560
    %p564 = scmp.eq.s32.totalorder %s28, 0
    %p565 = por %p563, %p564
    %p566 = scmp.ne.s32.totalorder %s558, %s560
    %p567 = scmp.eq.s32.totalorder %s33, 1
    %p568 = por %p566, %p567
    %p569 = scmp.ne.s32.totalorder %s560, %s561
    %p570 = scmp.eq.s32.totalorder %s33, 0
    %p571 = por %p569, %p570
    %p572 = scmp.ne.s32.totalorder %s560, %s561
    %p573 = scmp.eq.s32.totalorder %s34, 1
    %p574 = por %p572, %p573
    %p576 = scmp.ne.s32.totalorder %s561, %s575
    %p577 = scmp.eq.s32.totalorder %s34, 0
    %p578 = por %p576, %p577
    %p579 = scmp.le.s32.totalorder 1, %s28
    %p580 = scmp.lt.s32.totalorder %s28, 3
    %p581 = pnand %p579, %p580
    %p582 = pneg %p581
    // Predicated region
    $region9: #{segmentation_vit_forward.2} parent=5 // pred_check
      _
    $region10: #{segmentation_vit_forward.2} parent=5 // pred_check_branch
      %584 = sbr.rel (%p581) target = $region12
    $region11: #{segmentation_vit_forward.2} parent=5 // pred_region
      %s585 = ssub.s32 %s28, 1
      // Predicated region
      $region13: #{segmentation_vit_forward.2} parent=11 // pred_check
        %p586 = pneg %p49
      $region14: #{segmentation_vit_forward.2} parent=11 // pred_check_branch
        %588 = sbr.rel (%p586) target = $region16
      $region15: #{segmentation_vit_forward.2} parent=11 // pred_region
        _
      $region16: #{segmentation_vit_forward.2} parent=11 // pred_fallthru
        _
      // Predicated region
      $region17: #{segmentation_vit_forward.2} parent=11 // pred_check
        %p589 = pneg %p70
      $region18: #{segmentation_vit_forward.2} parent=11 // pred_check_branch
        %591 = sbr.rel (%p589) target = $region20
      $region19: #{segmentation_vit_forward.2} parent=11 // pred_region
        _
      $region20: #{segmentation_vit_forward.2} parent=11 // pred_fallthru
        _
      // Predicated region
      $region21: #{segmentation_vit_forward.2} parent=11 // pred_check
        %p592 = pneg %p91
      $region22: #{segmentation_vit_forward.2} parent=11 // pred_check_branch
        %594 = sbr.rel (%p592) target = $region24
      $region23: #{segmentation_vit_forward.2} parent=11 // pred_region
        _
      $region24: #{segmentation_vit_forward.2} parent=11 // pred_fallthru
        _
      // Predicated region
      $region25: #{segmentation_vit_forward.2} parent=11 // pred_check
        %p595 = pneg %p112
      $region26: #{segmentation_vit_forward.2} parent=11 // pred_check_branch
        %597 = sbr.rel (%p595) target = $region28
      $region27: #{segmentation_vit_forward.2} parent=11 // pred_region
        _
      $region28: #{segmentation_vit_forward.2} parent=11 // pred_fallthru
        _
      // Predicated region
      $region29: #{segmentation_vit_forward.2} parent=11 // pred_check
        %p598 = pneg %p133
      $region30: #{segmentation_vit_forward.2} parent=11 // pred_check_branch
        %600 = sbr.rel (%p598) target = $region32
      $region31: #{segmentation_vit_forward.2} parent=11 // pred_region
        _
      $region32: #{segmentation_vit_forward.2} parent=11 // pred_fallthru
        _
      // Predicated region
      $region33: #{segmentation_vit_forward.2} parent=11 // pred_check
        %p601 = pneg %p466
      $region34: #{segmentation_vit_forward.2} parent=11 // pred_check_branch
        %603 = sbr.rel (%p601) target = $region36
      $region35: #{segmentation_vit_forward.2} parent=11 // pred_region
        _
      $region36: #{segmentation_vit_forward.2} parent=11 // pred_fallthru
        _
      // Predicated region
      $region37: #{segmentation_vit_forward.2} parent=11 // pred_check
        %p604 = pneg %p487
      $region38: #{segmentation_vit_forward.2} parent=11 // pred_check_branch
        %606 = sbr.rel (%p604) target = $region40
      $region39: #{segmentation_vit_forward.2} parent=11 // pred_region
        _
      $region40: #{segmentation_vit_forward.2} parent=11 // pred_fallthru
        _
      // Predicated region
      $region41: #{segmentation_vit_forward.2} parent=11 // pred_check
        %p607 = pneg %p508
      $region42: #{segmentation_vit_forward.2} parent=11 // pred_check_branch
        %609 = sbr.rel (%p607) target = $region44
      $region43: #{segmentation_vit_forward.2} parent=11 // pred_region
        _
      $region44: #{segmentation_vit_forward.2} parent=11 // pred_fallthru
        _
      // Predicated region
      $region45: #{segmentation_vit_forward.2} parent=11 // pred_check
        %p610 = pneg %p529
      $region46: #{segmentation_vit_forward.2} parent=11 // pred_check_branch
        %612 = sbr.rel (%p610) target = $region48
      $region47: #{segmentation_vit_forward.2} parent=11 // pred_region
        _
      $region48: #{segmentation_vit_forward.2} parent=11 // pred_fallthru
        _
      // Predicated region
      $region49: #{segmentation_vit_forward.2} parent=11 // pred_check
        %p613 = pneg %p550
      $region50: #{segmentation_vit_forward.2} parent=11 // pred_check_branch
        %615 = sbr.rel (%p613) target = $region52
      $region51: #{segmentation_vit_forward.2} parent=11 // pred_region
        _
      $region52: #{segmentation_vit_forward.2} parent=11 // pred_fallthru
        _
    $region12: #{segmentation_vit_forward.2} parent=5 // pred_fallthru
      _
    %p616 = scmp.lt.s32.totalorder %s28, 2
    // Predicated region
    $region53: #{segmentation_vit_forward.2} parent=5 // pred_check
      %p617 = pneg %p616
    $region54: #{segmentation_vit_forward.2} parent=5 // pred_check_branch
      %619 = sbr.rel (%p617) target = $region56
    $region55: #{segmentation_vit_forward.2} parent=5 // pred_region
      // Predicated region
      $region57: #{segmentation_vit_forward.2} parent=55 // pred_check
        %p620 = pneg %p153
      $region58: #{segmentation_vit_forward.2} parent=55 // pred_check_branch
        %622 = sbr.rel (%p620) target = $region60
      $region59: #{segmentation_vit_forward.2} parent=55 // pred_region
        %p623 = scmp.lt.s32.totalorder %s28, 1
        %s624 = scalar_select %p623, %s28, 1
        %s625 = scalar_lea.vmem %s5, %s624
      $region60: #{segmentation_vit_forward.2} parent=55 // pred_fallthru
        _
      // Predicated region
      $region61: #{segmentation_vit_forward.2} parent=55 // pred_check
        %p626 = pneg %p179
      $region62: #{segmentation_vit_forward.2} parent=55 // pred_check_branch
        %628 = sbr.rel (%p626) target = $region64
      $region63: #{segmentation_vit_forward.2} parent=55 // pred_region
        %p629 = scmp.lt.s32.totalorder %s28, 1
        %s630 = scalar_select %p629, %s28, 1
        %s631 = scalar_lea.vmem %s6, %s630
      $region64: #{segmentation_vit_forward.2} parent=55 // pred_fallthru
        _
      // Predicated region
      $region65: #{segmentation_vit_forward.2} parent=55 // pred_check
        %p632 = pneg %p205
      $region66: #{segmentation_vit_forward.2} parent=55 // pred_check_branch
        %634 = sbr.rel (%p632) target = $region68
      $region67: #{segmentation_vit_forward.2} parent=55 // pred_region
        %p635 = scmp.lt.s32.totalorder %s28, 1
        %s636 = scalar_select %p635, %s28, 1
        %s637 = smul.addr %s636, 4
        %s638 = smul.addr %s637, 4
        %s639 = scalar_lea.vmem %s7, %s638
      $region68: #{segmentation_vit_forward.2} parent=55 // pred_fallthru
        _
      // Predicated region
      $region69: #{segmentation_vit_forward.2} parent=55 // pred_check
        %p640 = pneg %p231
      $region70: #{segmentation_vit_forward.2} parent=55 // pred_check_branch
        %642 = sbr.rel (%p640) target = $region72
      $region71: #{segmentation_vit_forward.2} parent=55 // pred_region
        %p643 = scmp.lt.s32.totalorder %s28, 1
        %s644 = scalar_select %p643, %s28, 1
        %s645 = scalar_lea.vmem %s8, %s644
      $region72: #{segmentation_vit_forward.2} parent=55 // pred_fallthru
        _
      // Predicated region
      $region73: #{segmentation_vit_forward.2} parent=55 // pred_check
        %p646 = pneg %p257
      $region74: #{segmentation_vit_forward.2} parent=55 // pred_check_branch
        %648 = sbr.rel (%p646) target = $region76
      $region75: #{segmentation_vit_forward.2} parent=55 // pred_region
        %p649 = scmp.lt.s32.totalorder %s28, 1
        %s650 = scalar_select %p649, %s28, 1
        %s651 = smul.addr %s650, 4
        %s652 = smul.addr %s651, 4
        %s653 = scalar_lea.vmem %s9, %s652
      $region76: #{segmentation_vit_forward.2} parent=55 // pred_fallthru
        _
      // Predicated region
      $region77: #{segmentation_vit_forward.2} parent=55 // pred_check
        %p654 = pneg %p283
      $region78: #{segmentation_vit_forward.2} parent=55 // pred_check_branch
        %656 = sbr.rel (%p654) target = $region80
      $region79: #{segmentation_vit_forward.2} parent=55 // pred_region
        %p657 = scmp.lt.s32.totalorder %s28, 1
        %s658 = scalar_select %p657, %s28, 1
        %s659 = scalar_lea.vmem %s10, %s658
      $region80: #{segmentation_vit_forward.2} parent=55 // pred_fallthru
        _
      // Predicated region
      $region81: #{segmentation_vit_forward.2} parent=55 // pred_check
        %p660 = pneg %p309
      $region82: #{segmentation_vit_forward.2} parent=55 // pred_check_branch
        %662 = sbr.rel (%p660) target = $region84
      $region83: #{segmentation_vit_forward.2} parent=55 // pred_region
        %p663 = scmp.lt.s32.totalorder %s28, 1
        %s664 = scalar_select %p663, %s28, 1
        %s665 = scalar_lea.vmem %s11, %s664
      $region84: #{segmentation_vit_forward.2} parent=55 // pred_fallthru
        _
      // Predicated region
      $region85: #{segmentation_vit_forward.2} parent=55 // pred_check
        %p666 = pneg %p335
      $region86: #{segmentation_vit_forward.2} parent=55 // pred_check_branch
        %668 = sbr.rel (%p666) target = $region88
      $region87: #{segmentation_vit_forward.2} parent=55 // pred_region
        %p669 = scmp.lt.s32.totalorder %s28, 1
        %s670 = scalar_select %p669, %s28, 1
        %s671 = scalar_lea.vmem %s12, %s670
      $region88: #{segmentation_vit_forward.2} parent=55 // pred_fallthru
        _
      // Predicated region
      $region89: #{segmentation_vit_forward.2} parent=55 // pred_check
        %p672 = pneg %p361
      $region90: #{segmentation_vit_forward.2} parent=55 // pred_check_branch
        %674 = sbr.rel (%p672) target = $region92
      $region91: #{segmentation_vit_forward.2} parent=55 // pred_region
        %p675 = scmp.lt.s32.totalorder %s28, 1
        %s676 = scalar_select %p675, %s28, 1
        %s677 = smul.addr %s676, 4
        %s678 = smul.addr %s677, 4
        %s679 = scalar_lea.vmem %s13, %s678
      $region92: #{segmentation_vit_forward.2} parent=55 // pred_fallthru
        _
      // Predicated region
      $region93: #{segmentation_vit_forward.2} parent=55 // pred_check
        %p680 = pneg %p387
      $region94: #{segmentation_vit_forward.2} parent=55 // pred_check_branch
        %682 = sbr.rel (%p680) target = $region96
      $region95: #{segmentation_vit_forward.2} parent=55 // pred_region
        %p683 = scmp.lt.s32.totalorder %s28, 1
        %s684 = scalar_select %p683, %s28, 1
        %s685 = scalar_lea.vmem %s14, %s684
      $region96: #{segmentation_vit_forward.2} parent=55 // pred_fallthru
        _
      // Predicated region
      $region97: #{segmentation_vit_forward.2} parent=55 // pred_check
        %p686 = pneg %p413
      $region98: #{segmentation_vit_forward.2} parent=55 // pred_check_branch
        %688 = sbr.rel (%p686) target = $region100
      $region99: #{segmentation_vit_forward.2} parent=55 // pred_region
        %p689 = scmp.lt.s32.totalorder %s28, 1
        %s690 = scalar_select %p689, %s28, 1
        %s691 = smul.addr %s690, 16
        %s692 = smul.addr %s691, 4
        %s693 = scalar_lea.vmem %s15, %s692
      $region100: #{segmentation_vit_forward.2} parent=55 // pred_fallthru
        _
      // Predicated region
      $region101: #{segmentation_vit_forward.2} parent=55 // pred_check
        %p694 = pneg %p439
      $region102: #{segmentation_vit_forward.2} parent=55 // pred_check_branch
        %696 = sbr.rel (%p694) target = $region104
      $region103: #{segmentation_vit_forward.2} parent=55 // pred_region
        %p697 = scmp.lt.s32.totalorder %s28, 1
        %s698 = scalar_select %p697, %s28, 1
        %s699 = scalar_lea.vmem %s16, %s698
      $region104: #{segmentation_vit_forward.2} parent=55 // pred_fallthru
        _
    $region56: #{segmentation_vit_forward.2} parent=5 // pred_fallthru
      _
    %p700 = scmp.le.s32.totalorder 1, %s28
    %p701 = scmp.lt.s32.totalorder %s28, 3
    %p702 = pnand %p700, %p701
    %p703 = pneg %p702
    // Predicated region
    $region105: #{segmentation_vit_forward.2} parent=5 // pred_check
      _
    $region106: #{segmentation_vit_forward.2} parent=5 // pred_check_branch
      %705 = sbr.rel (%p702) target = $region108
    $region107: #{segmentation_vit_forward.2} parent=5 // pred_region
      %s706 = ssub.s32 %s28, 1
      %p707 = pneg %p49
      %p708 = pneg %p46
      %p709 = pneg %p70
      %p710 = pneg %p67
      %p711 = pneg %p91
      %p712 = pneg %p88
      %p713 = pneg %p112
      %p714 = pneg %p109
      %p715 = pneg %p133
      %p716 = pneg %p130
      %p717 = scmp.lt.s32.totalorder %s33, 1
      %s718 = scalar_select %p717, %s33, 1
      %s719 = scalar_lea.vmem %s5, %s718
      %p720 = pneg %p159
      %p721 = pneg %p156
      %p722 = scmp.lt.s32.totalorder %s33, 1
      %s723 = scalar_select %p722, %s33, 1
      %s724 = scalar_lea.vmem %s6, %s723
      %p725 = pneg %p185
      %p726 = pneg %p182
      %p727 = scmp.lt.s32.totalorder %s33, 1
      %s728 = scalar_select %p727, %s33, 1
      %s729 = smul.addr %s728, 4
      %s730 = smul.addr %s729, 4
      %s731 = scalar_lea.vmem %s7, %s730
      %p732 = pneg %p211
      %p733 = pneg %p208
      %p734 = scmp.lt.s32.totalorder %s33, 1
      %s735 = scalar_select %p734, %s33, 1
      %s736 = scalar_lea.vmem %s8, %s735
      %p737 = pneg %p237
      %p738 = pneg %p234
      %p739 = scmp.lt.s32.totalorder %s33, 1
      %s740 = scalar_select %p739, %s33, 1
      %s741 = smul.addr %s740, 4
      %s742 = smul.addr %s741, 4
      %s743 = scalar_lea.vmem %s9, %s742
      %p744 = pneg %p263
      %p745 = pneg %p260
      %p746 = scmp.lt.s32.totalorder %s33, 1
      %s747 = scalar_select %p746, %s33, 1
      %s748 = scalar_lea.vmem %s10, %s747
      %p749 = pneg %p289
      %p750 = pneg %p286
      %p751 = scmp.lt.s32.totalorder %s33, 1
      %s752 = scalar_select %p751, %s33, 1
      %s753 = scalar_lea.vmem %s11, %s752
      %p754 = pneg %p315
      %p755 = pneg %p312
      %p756 = scmp.lt.s32.totalorder %s33, 1
      %s757 = scalar_select %p756, %s33, 1
      %s758 = scalar_lea.vmem %s12, %s757
      %p759 = pneg %p341
      %p760 = pneg %p338
      %p761 = scmp.lt.s32.totalorder %s33, 1
      %s762 = scalar_select %p761, %s33, 1
      %s763 = smul.addr %s762, 4
      %s764 = smul.addr %s763, 4
      %s765 = scalar_lea.vmem %s13, %s764
      %p766 = pneg %p367
      %p767 = pneg %p364
      %p768 = scmp.lt.s32.totalorder %s33, 1
      %s769 = scalar_select %p768, %s33, 1
      %s770 = scalar_lea.vmem %s14, %s769
      %p771 = pneg %p393
      %p772 = pneg %p390
      %p773 = scmp.lt.s32.totalorder %s33, 1
      %s774 = scalar_select %p773, %s33, 1
      %s775 = smul.addr %s774, 16
      %s776 = smul.addr %s775, 4
      %s777 = scalar_lea.vmem %s15, %s776
      %p778 = pneg %p419
      %p779 = pneg %p416
      %p780 = scmp.lt.s32.totalorder %s33, 1
      %s781 = scalar_select %p780, %s33, 1
      %s782 = scalar_lea.vmem %s16, %s781
      %p783 = pneg %p445
      %p784 = pneg %p442
      %p785 = pneg %p466
      %p786 = pneg %p463
      %p787 = pneg %p487
      %p788 = pneg %p484
      %p789 = pneg %p508
      %p790 = pneg %p505
      %p791 = pneg %p529
      %p792 = pneg %p526
      %p793 = pneg %p550
      %p794 = pneg %p547
      %p795 = pneg %p571
      %p796 = pneg %p568
      %p797 = scmp.lt.s32.totalorder %s33, 1
      %s798 = scalar_select %p797, %s33, 1
      %s799 = scalar_lea.vmem %s5, %s798
      %p800 = scmp.lt.s32.totalorder %s33, 1
      %s801 = scalar_select %p800, %s33, 1
      %s802 = scalar_lea.vmem %s6, %s801
      %p803 = scmp.lt.s32.totalorder %s33, 1
      %s804 = scalar_select %p803, %s33, 1
      %s805 = smul.addr %s804, 4
      %s806 = smul.addr %s805, 4
      %s807 = scalar_lea.vmem %s7, %s806
      %p808 = scmp.lt.s32.totalorder %s33, 1
      %s809 = scalar_select %p808, %s33, 1
      %s810 = scalar_lea.vmem %s8, %s809
      %p811 = scmp.lt.s32.totalorder %s33, 1
      %s812 = scalar_select %p811, %s33, 1
      %s813 = smul.addr %s812, 4
      %s814 = smul.addr %s813, 4
      %s815 = scalar_lea.vmem %s9, %s814
      %p816 = scmp.lt.s32.totalorder %s33, 1
      %s817 = scalar_select %p816, %s33, 1
      %s818 = scalar_lea.vmem %s10, %s817
      %p819 = scmp.lt.s32.totalorder %s33, 1
      %s820 = scalar_select %p819, %s33, 1
      %s821 = scalar_lea.vmem %s11, %s820
      %p822 = scmp.lt.s32.totalorder %s33, 1
      %s823 = scalar_select %p822, %s33, 1
      %s824 = scalar_lea.vmem %s12, %s823
      %p825 = scmp.lt.s32.totalorder %s33, 1
      %s826 = scalar_select %p825, %s33, 1
      %s827 = smul.addr %s826, 4
      %s828 = smul.addr %s827, 4
      %s829 = scalar_lea.vmem %s13, %s828
      %p830 = scmp.lt.s32.totalorder %s33, 1
      %s831 = scalar_select %p830, %s33, 1
      %s832 = scalar_lea.vmem %s14, %s831
      %p833 = scmp.lt.s32.totalorder %s33, 1
      %s834 = scalar_select %p833, %s33, 1
      %s835 = smul.addr %s834, 16
      %s836 = smul.addr %s835, 4
      %s837 = scalar_lea.vmem %s15, %s836
      %p838 = scmp.lt.s32.totalorder %s33, 1
      %s839 = scalar_select %p838, %s33, 1
      %s840 = scalar_lea.vmem %s16, %s839
      %p842 = scmp.eq.s32.totalorder %s33, 0
      // Predicated region
      $region109: #{segmentation_vit_forward.2} parent=107 // pred_check
        %p843 = pneg %p842
      $region110: #{segmentation_vit_forward.2} parent=107 // pred_check_branch
        %845 = sbr.rel (%p843) target = $region112
      $region111: #{segmentation_vit_forward.2} parent=107 // pred_region
        %v846 = vld [vmem:[%s0] sm:$0xff]
        %v847 = vld [vmem:[%s0 + $0x8] sm:$0xff]
        %v848 = vld [vmem:[%s0 + $0x10] sm:$0xff]
        %v849 = vld [vmem:[%s0 + $0x18] sm:$0xff]
        %v850 = vld [vmem:[%s1] sm:$0xf]
        %v851 = vld [vmem:[%s1 + $0x4] sm:$0xf]
        %v852 = vld [vmem:[%s1 + $0x8] sm:$0xf]
        %v853 = vld [vmem:[%s1 + $0xc] sm:$0xf]
        %v854 = vld [vmem:[%s1 + $0x10] sm:$0xf]
        %v855 = vld [vmem:[%s1 + $0x14] sm:$0xf]
        %v856 = vpack.c.bf16 %v847, %v846
        %v857 = vpack.c.bf16 %v849, %v848
        %v858 = vld [vmem:[%s2] sm:$0x1]
        %v860 = vlaneseq
        %v861 = vshrl.u32 %v860, 7
        %v862 = vsub.s32 0, %v861
        %v863 = vrot.slane %v858, %v862
        %v871 = vunpack.c.l.b16 %v850
        %v872 = vunpack.c.l.b16 %v851
        %v873 = vunpack.c.l.b16 %v852
        %v874 = vunpack.c.l.b16 %v853
        %v875 = vunpack.c.l.b16 %v854
        %v876 = vunpack.c.l.b16 %v855
        %v877 = vpack.c.b16 %v872, %v871
        %v878 = vpack.c.b16 %v874, %v873
        %v879 = vpack.c.b16 %v876, %v875
        %vm883 = vcmask 392192
        %v885 = vsel %vm883, %v856, 0
        %v888 = vsel %vm883, %v857, 0
        %890 = vmatprep.subr.bf16.mxu0 0
        %891 = vmatpush1.bf16.msra.mxu0 %v877
        %892 = vmatprep.subr.bf16.mxu0 0
        %893 = vmatpush1.bf16.msra.mxu0 %v878
        %894 = vmatprep.subr.bf16.mxu0 0
        %895 = vmatpush1.bf16.msra.mxu0 %v879
        %896 = vmatprep.subr.bf16.mxu0 0
        %897 = vmatpush1.bf16.msra.mxu0 0
        %898 = vmatprep.subr.bf16.mxu0 0
        %899 = vmatpush1.bf16.msra.mxu0 0
        %900 = vmatprep.subr.bf16.mxu0 0
        %901 = vmatpush1.bf16.msra.mxu0 0
        %902 = vmatprep.subr.bf16.mxu0 0
        %903 = vmatpush1.bf16.msra.mxu0 0
        %904 = vmatprep.subr.bf16.mxu0 0
        %905 = vmatpush1.bf16.msra.mxu0 0
        %906 = vmatprep.subr.bf16.mxu0 0
        %907 = vmatpush1.bf16.msra.mxu0 0
        %908 = vmatprep.subr.bf16.mxu0 0
        %909 = vmatpush1.bf16.msra.mxu0 0
        %910 = vmatprep.subr.bf16.mxu0 0
        %911 = vmatpush1.bf16.msra.mxu0 0
        %912 = vmatprep.subr.bf16.mxu0 0
        %913 = vmatpush1.bf16.msra.mxu0 0
        %914 = vmatprep.subr.bf16.mxu0 0
        %915 = vmatpush1.bf16.msra.mxu0 0
        %916 = vmatprep.subr.bf16.mxu0 0
        %917 = vmatpush1.bf16.msra.mxu0 0
        %918 = vmatprep.subr.bf16.mxu0 0
        %919 = vmatpush1.bf16.msra.mxu0 0
        %920 = vmatprep.subr.bf16.mxu0 0
        %921 = vmatpush1.bf16.msra.mxu0 0
        %922 = vmatprep.mubr.bf16.mxu0 0
        %923 = vmatmul.mubr.bf16.gmra.mrb[0].mxu0 %v885
        %v924 = vpop.f32.mrb[0].mxu0
        %v925 = vadd.f32 %v863, %v924
        %v926 = vpop.f32.mrb[0].mxu0
        %v927 = vpop.f32.mrb[0].mxu0
        %v928 = vadd.f32 %v863, %v927
        %v929 = vpop.f32.mrb[0].mxu0
        %930 = vmatprep.mubr.bf16.mxu0 0
        %931 = vmatmul.mubr.bf16.gmra.mrb[0].mxu0 %v888
        %v932 = vpop.f32.mrb[0].mxu0
        %v933 = vadd.f32 %v863, %v932
        %v934 = vpop.f32.mrb[0].mxu0
        %v935 = vpop.f32.mrb[0].mxu0
        %v936 = vadd.f32 %v863, %v935
        %v937 = vpop.f32.mrb[0].mxu0
        %938 = vdwg.mxu0
        %v939 = vld [vmem:[%s4] sm:$0xff]
        %v940 = vld [vmem:[%s4 + $0x8] sm:$0xff]
        %v941 = vld [vmem:[%s3] sm:$0x1]
        %v942 = vadd.f32 %v925, %v939
        %v943 = vadd.f32 %v928, %v940
        %v944 = vadd.f32 %v933, %v939
        %v945 = vadd.f32 %v936, %v940
        %vm948 = vcmask 1040384
        %v949 = vrot.slane %v942, 7
        %v950 = vrot.slane %v943, 7
        %v951 = vsel %vm948, %v949, %v950
        %v956 = vlaneseq
        %v957 = vshrl.u32 %v956, 7
        %v958 = vsub.s32 0, %v957
        %v959 = vrot.slane %v941, %v958
        %vm963 = vcmask 1041408
        %v964 = vrot.slane %v944, 6
        %v965 = vrot.slane %v945, 6
        %v966 = vsel %vm963, %v964, %v965
        %v970 = vsel %vm948, %v941, %v949
        %v971 = vsel %vm948, %v950, %v959
        %v972 = vsel %vm963, %v971, %v964
        %vm973 = vcmask 261120
        %974 = vst.msk [vmem:[#allocation2] sm:$0xff] %vm973, %v970
        %975 = vst.msk [vmem:[#allocation2 + $0x8] sm:$0xff] %vm973, %v951
        %976 = vst.msk [vmem:[#allocation2 + $0x10] sm:$0xff] %vm973, %v972
        %977 = vst.msk [vmem:[#allocation2 + $0x18] sm:$0xff] %vm973, %v966
        %vm978 = vcmask 254976
        %979 = vst.msk [vmem:[#allocation2 + $0x20] sm:$0x3] %vm978, %v965
      $region112: #{segmentation_vit_forward.2} parent=107 // pred_fallthru
        _
      %v980 = vld [vmem:[#allocation2] sm:$0xff]
      %v981 = vld [vmem:[#allocation2 + $0x8] sm:$0xff]
      %v982 = vld [vmem:[#allocation2 + $0x10] sm:$0xff]
      %v983 = vld [vmem:[#allocation2 + $0x18] sm:$0xff]
      %v984 = vld [vmem:[#allocation2 + $0x20] sm:$0x3]
      %v985 = vld [vmem:[%s799] sm:$0x1]
      %v986 = vld [vmem:[%s802] sm:$0x1]
      %v987 = vld [vmem:[%s807] sm:$0xf]
      %v988 = vld [vmem:[%s807 + $0x4] sm:$0xf]
      %v989 = vld [vmem:[%s807 + $0x8] sm:$0xf]
      %v990 = vld [vmem:[%s807 + $0xc] sm:$0xf]
      %v991 = vld [vmem:[%s810] sm:$0x1]
      %v992 = vld [vmem:[%s815] sm:$0xf]
      %v993 = vld [vmem:[%s815 + $0x4] sm:$0xf]
      %v994 = vld [vmem:[%s815 + $0x8] sm:$0xf]
      %v995 = vld [vmem:[%s815 + $0xc] sm:$0xf]
      %v996 = vld [vmem:[%s818] sm:$0x1]
      %v997 = vld [vmem:[%s821] sm:$0x1]
      %v998 = vld [vmem:[%s824] sm:$0x1]
      %v999 = vld [vmem:[%s829] sm:$0xf]
      %v1000 = vld [vmem:[%s829 + $0x4] sm:$0xf]
      %v1001 = vld [vmem:[%s829 + $0x8] sm:$0xf]
      %v1002 = vld [vmem:[%s829 + $0xc] sm:$0xf]
      %v1003 = vld [vmem:[%s832] sm:$0x1]
      %v1004 = vld [vmem:[%s837] sm:$0xf]
      %v1005 = vld [vmem:[%s837 + $0x4] sm:$0xf]
      %v1006 = vld [vmem:[%s837 + $0x8] sm:$0xf]
      %v1007 = vld [vmem:[%s837 + $0xc] sm:$0xf]
      %v1008 = vld [vmem:[%s837 + $0x10] sm:$0xf]
      %v1009 = vld [vmem:[%s837 + $0x14] sm:$0xf]
      %v1010 = vld [vmem:[%s837 + $0x18] sm:$0xf]
      %v1011 = vld [vmem:[%s837 + $0x1c] sm:$0xf]
      %v1012 = vld [vmem:[%s837 + $0x20] sm:$0xf]
      %v1013 = vld [vmem:[%s837 + $0x24] sm:$0xf]
      %v1014 = vld [vmem:[%s837 + $0x28] sm:$0xf]
      %v1015 = vld [vmem:[%s837 + $0x2c] sm:$0xf]
      %v1016 = vld [vmem:[%s837 + $0x30] sm:$0xf]
      %v1017 = vld [vmem:[%s837 + $0x34] sm:$0xf]
      %v1018 = vld [vmem:[%s837 + $0x38] sm:$0xf]
      %v1019 = vld [vmem:[%s837 + $0x3c] sm:$0xf]
      %v1020 = vld [vmem:[%s840] sm:$0x1]
      %vm1021 = vcmask 261120
      %v1022 = vsel %vm1021, %v980, 0.0
      %1023 = vadd.xlane.f32.xlu0 %v1022
      %v1024 = vpop.xlane.xlu0 %1023
      %v1025 = vsel %vm1021, %v981, 0.0
      %1026 = vadd.xlane.f32.xlu0 %v1025
      %v1027 = vpop.xlane.xlu0 %1026
      %v1028 = vsel %vm1021, %v982, 0.0
      %1029 = vadd.xlane.f32.xlu0 %v1028
      %v1030 = vpop.xlane.xlu0 %1029
      %v1031 = vsel %vm1021, %v983, 0.0
      %1032 = vadd.xlane.f32.xlu0 %v1031
      %v1033 = vpop.xlane.xlu0 %1032
      %vm1034 = vcmask 254976
      %v1035 = vsel %vm1034, %v984, 0.0
      %1036 = vadd.xlane.f32.xlu0 %v1035
      %v1037 = vpop.xlane.xlu0 %1036
      %v1038 = vrcp.pop 32.0
      %v1039 = vmul.f32 %v1024, %v1038
      %v1040 = vmul.f32 %v1027, %v1038
      %v1041 = vmul.f32 %v1030, %v1038
      %v1042 = vmul.f32 %v1033, %v1038
      %v1043 = vmul.f32 %v1037, %v1038
      %v1044 = vsub.f32 %v980, %v1039
      %v1045 = vsub.f32 %v981, %v1040
      %v1046 = vsub.f32 %v982, %v1041
      %v1047 = vsub.f32 %v983, %v1042
      %v1048 = vsub.f32 %v984, %v1043
      %v1049 = vmul.f32 %v1044, %v1044
      %v1050 = vmul.f32 %v1045, %v1045
      %v1051 = vmul.f32 %v1046, %v1046
      %v1052 = vmul.f32 %v1047, %v1047
      %v1053 = vmul.f32 %v1048, %v1048
      %v1054 = vsel %vm1021, %v1049, 0.0
      %1055 = vadd.xlane.f32.xlu0 %v1054
      %v1056 = vpop.xlane.xlu0 %1055
      %v1057 = vsel %vm1021, %v1050, 0.0
      %1058 = vadd.xlane.f32.xlu0 %v1057
      %v1059 = vpop.xlane.xlu0 %1058
      %v1060 = vsel %vm1021, %v1051, 0.0
      %1061 = vadd.xlane.f32.xlu0 %v1060
      %v1062 = vpop.xlane.xlu0 %1061
      %v1063 = vsel %vm1021, %v1052, 0.0
      %1064 = vadd.xlane.f32.xlu0 %v1063
      %v1065 = vpop.xlane.xlu0 %1064
      %v1066 = vsel %vm1034, %v1053, 0.0
      %1067 = vadd.xlane.f32.xlu0 %v1066
      %v1068 = vpop.xlane.xlu0 %1067
      %v1069 = vmul.f32 %v1056, %v1038
      %v1070 = vmul.f32 %v1059, %v1038
      %v1071 = vmul.f32 %v1062, %v1038
      %v1072 = vmul.f32 %v1065, %v1038
      %v1073 = vmul.f32 %v1068, %v1038
      %v1074 = vadd.f32 %v1069, 1e-05
      %v1075 = vadd.f32 %v1070, 1e-05
      %v1076 = vadd.f32 %v1071, 1e-05
      %v1077 = vadd.f32 %v1072, 1e-05
      %v1078 = vadd.f32 %v1073, 1e-05
      %v1079 = vrsqrt.pop %v1074
      %v1080 = vrsqrt.pop %v1075
      %v1081 = vrsqrt.pop %v1076
      %v1082 = vrsqrt.pop %v1077
      %v1083 = vrsqrt.pop %v1078
      %v1084 = vmul.f32 %v1044, %v1079
      %v1085 = vmul.f32 %v1045, %v1080
      %v1086 = vmul.f32 %v1046, %v1081
      %v1087 = vmul.f32 %v1047, %v1082
      %v1088 = vmul.f32 %v1048, %v1083
      %v1090 = vlaneseq
      %v1091 = vshrl.u32 %v1090, 7
      %v1092 = vsub.s32 0, %v1091
      %v1093 = vrot.slane %v985, %v1092
      %v1095 = vmul.f32 %v1084, %v1093
      %v1096 = vmul.f32 %v1085, %v1093
      %v1097 = vmul.f32 %v1086, %v1093
      %v1098 = vmul.f32 %v1087, %v1093
      %v1099 = vmul.f32 %v1088, %v1093
      %v1101 = vlaneseq
      %v1102 = vshrl.u32 %v1101, 7
      %v1103 = vsub.s32 0, %v1102
      %v1104 = vrot.slane %v986, %v1103
      %v1106 = vadd.f32 %v1095, %v1104
      %v1107 = vadd.f32 %v1096, %v1104
      %v1108 = vadd.f32 %v1097, %v1104
      %v1109 = vadd.f32 %v1098, %v1104
      %v1110 = vadd.f32 %v1099, %v1104
      %v1111 = vpack.c.bf16 %v1107, %v1106
      %v1112 = vpack.c.bf16 %v1109, %v1108
      %v1113 = vpack.c.bf16 %v1110, %v1110
      %v1115 = vlaneseq
      %v1116 = vshrl.u32 %v1115, 7
      %v1117 = vsub.s32 0, %v1116
      %v1118 = vrot.slane %v991, %v1117
      %v1124 = vunpack.c.l.b16 %v987
      %v1125 = vunpack.c.l.b16 %v988
      %v1126 = vunpack.c.l.b16 %v989
      %v1127 = vunpack.c.l.b16 %v990
      %v1128 = vpack.c.b16 %v1125, %v1124
      %v1129 = vpack.c.b16 %v1127, %v1126
      %v1133 = vsel %vm1021, %v1111, 0
      %v1136 = vsel %vm1021, %v1112, 0
      %v1139 = vsel %vm1021, %v1113, 0
      %1141 = vmatprep.subr.bf16.mxu0 0
      %1142 = vmatpush1.bf16.msra.mxu0 %v1128
      %1143 = vmatprep.subr.bf16.mxu0 0
      %1144 = vmatpush1.bf16.msra.mxu0 %v1129
      %1145 = vmatprep.subr.bf16.mxu0 0
      %1146 = vmatpush1.bf16.msra.mxu0 0
      %1147 = vmatprep.subr.bf16.mxu0 0
      %1148 = vmatpush1.bf16.msra.mxu0 0
      %1149 = vmatprep.subr.bf16.mxu0 0
      %1150 = vmatpush1.bf16.msra.mxu0 0
      %1151 = vmatprep.subr.bf16.mxu0 0
      %1152 = vmatpush1.bf16.msra.mxu0 0
      %1153 = vmatprep.subr.bf16.mxu0 0
      %1154 = vmatpush1.bf16.msra.mxu0 0
      %1155 = vmatprep.subr.bf16.mxu0 0
      %1156 = vmatpush1.bf16.msra.mxu0 0
      %1157 = vmatprep.subr.bf16.mxu0 0
      %1158 = vmatpush1.bf16.msra.mxu0 0
      %1159 = vmatprep.subr.bf16.mxu0 0
      %1160 = vmatpush1.bf16.msra.mxu0 0
      %1161 = vmatprep.subr.bf16.mxu0 0
      %1162 = vmatpush1.bf16.msra.mxu0 0
      %1163 = vmatprep.subr.bf16.mxu0 0
      %1164 = vmatpush1.bf16.msra.mxu0 0
      %1165 = vmatprep.subr.bf16.mxu0 0
      %1166 = vmatpush1.bf16.msra.mxu0 0
      %1167 = vmatprep.subr.bf16.mxu0 0
      %1168 = vmatpush1.bf16.msra.mxu0 0
      %1169 = vmatprep.subr.bf16.mxu0 0
      %1170 = vmatpush1.bf16.msra.mxu0 0
      %1171 = vmatprep.subr.bf16.mxu0 0
      %1172 = vmatpush1.bf16.msra.mxu0 0
      %1173 = vmatprep.mubr.bf16.mxu0 0
      %1174 = vmatmul.mubr.bf16.gmra.mrb[0].mxu0 %v1133
      %v1175 = vpop.f32.mrb[0].mxu0
      %v1176 = vadd.f32 %v1118, %v1175
      %v1177 = vpop.f32.mrb[0].mxu0
      %v1178 = vpop.f32.mrb[0].mxu0
      %v1179 = vadd.f32 %v1118, %v1178
      %v1180 = vpop.f32.mrb[0].mxu0
      %1181 = vmatprep.mubr.bf16.mxu0 0
      %1182 = vmatmul.mubr.bf16.gmra.mrb[0].mxu0 %v1136
      %v1183 = vpop.f32.mrb[0].mxu0
      %v1184 = vadd.f32 %v1118, %v1183
      %v1185 = vpop.f32.mrb[0].mxu0
      %v1186 = vpop.f32.mrb[0].mxu0
      %v1187 = vadd.f32 %v1118, %v1186
      %v1188 = vpop.f32.mrb[0].mxu0
      %1189 = vmatprep.mubr.bf16.mxu0 0
      %1190 = vmatmul.mubr.bf16.gmra.mrb[0].mxu0 %v1139
      %v1191 = vpop.f32.mrb[0].mxu0
      %v1192 = vadd.f32 %v1118, %v1191
      %v1193 = vpop.f32.mrb[0].mxu0
      %v1194 = vpop.f32.mrb[0].mxu0
      %v1195 = vpop.f32.mrb[0].mxu0
      %1196 = vdwg.mxu0
      %1200 = vrot.lane.b32.xlu0 %v1176, 120
      %v1201 = vpop.permute.xlu0 %1200
      %1202 = vrot.lane.b32.xlu0 %v1179, 120
      %v1203 = vpop.permute.xlu0 %1202
      %1204 = vrot.lane.b32.xlu0 %v1184, 120
      %v1205 = vpop.permute.xlu0 %1204
      %1209 = vrot.lane.b32.xlu0 %v1176, 112
      %v1210 = vpop.permute.xlu0 %1209
      %1211 = vrot.lane.b32.xlu0 %v1179, 112
      %v1212 = vpop.permute.xlu0 %1211
      %1213 = vrot.lane.b32.xlu0 %v1184, 112
      %v1214 = vpop.permute.xlu0 %1213
      %1218 = vrot.lane.b32.xlu0 %v1176, 104
      %v1219 = vpop.permute.xlu0 %1218
      %1220 = vrot.lane.b32.xlu0 %v1179, 104
      %v1221 = vpop.permute.xlu0 %1220
      %1222 = vrot.lane.b32.xlu0 %v1184, 104
      %v1223 = vpop.permute.xlu0 %1222
      %vm1229 = vcmask 1046528
      %v1230 = vrot.slane %v1184, 1
      %v1231 = vrot.slane %v1187, 1
      %v1232 = vsel %vm1229, %v1230, %v1231
      %v1233 = vrot.slane %v1192, 1
      %v1234 = vsel %vm1229, %v1231, %v1233
      %1238 = vrot.lane.b32.xlu0 %v1232, 120
      %v1239 = vpop.permute.xlu0 %1238
      %1240 = vrot.lane.b32.xlu0 %v1234, 120
      %v1241 = vpop.permute.xlu0 %1240
      %1242 = vrot.lane.b32.xlu0 %v1233, 120
      %v1243 = vpop.permute.xlu0 %1242
      %1247 = vrot.lane.b32.xlu0 %v1232, 112
      %v1248 = vpop.permute.xlu0 %1247
      %1249 = vrot.lane.b32.xlu0 %v1234, 112
      %v1250 = vpop.permute.xlu0 %1249
      %1251 = vrot.lane.b32.xlu0 %v1233, 112
      %v1252 = vpop.permute.xlu0 %1251
      %1256 = vrot.lane.b32.xlu0 %v1232, 104
      %v1257 = vpop.permute.xlu0 %1256
      %1258 = vrot.lane.b32.xlu0 %v1234, 104
      %v1259 = vpop.permute.xlu0 %1258
      %1260 = vrot.lane.b32.xlu0 %v1233, 104
      %v1261 = vpop.permute.xlu0 %1260
      %v1265 = vpack.c.bf16 %v1179, %v1176
      %v1266 = vpack.c.bf16 %v1184, %v1184
      %v1267 = vpack.c.bf16 %v1203, %v1201
      %v1268 = vpack.c.bf16 %v1205, %v1205
      %v1269 = vpack.c.bf16 %v1212, %v1210
      %v1270 = vpack.c.bf16 %v1214, %v1214
      %v1271 = vpack.c.bf16 %v1221, %v1219
      %v1272 = vpack.c.bf16 %v1223, %v1223
      %v1273 = vpack.c.bf16 %v1234, %v1232
      %v1274 = vpack.c.bf16 %v1233, %v1233
      %v1275 = vpack.c.bf16 %v1241, %v1239
      %v1276 = vpack.c.bf16 %v1243, %v1243
      %v1277 = vpack.c.bf16 %v1250, %v1248
      %v1278 = vpack.c.bf16 %v1252, %v1252
      %v1279 = vpack.c.bf16 %v1259, %v1257
      %v1280 = vpack.c.bf16 %v1261, %v1261
      %1283 = vrot.lane.b32.xlu0 %v1265, 96
      %v1284 = vpop.permute.xlu0 %1283
      %1285 = vrot.lane.b32.xlu0 %v1266, 96
      %v1286 = vpop.permute.xlu0 %1285
      %vm1287 = vcmask 64512
      %v1289 = vsel %vm1287, %v1265, 0
      %v1292 = vsel %vm1287, %v1266, 0
      %v1295 = vsel %vm1287, %v1284, 0
      %v1298 = vsel %vm1287, %v1286, 0
      %1300 = vmatprep.subr.bf16.mxu0 0
      %1301 = vmatpush1.bf16.xpose.msra.mxu0 %v1295
      %1302 = vmatprep.subr.bf16.mxu0 0
      %1303 = vmatpush1.bf16.xpose.msra.mxu0 %v1298
      %1304 = vmatprep.subr.bf16.mxu0 0
      %1305 = vmatpush1.bf16.xpose.msra.mxu0 0
      %1306 = vmatprep.subr.bf16.mxu0 0
      %1307 = vmatpush1.bf16.xpose.msra.mxu0 0
      %1308 = vmatprep.subr.bf16.mxu0 0
      %1309 = vmatpush1.bf16.xpose.msra.mxu0 0
      %1310 = vmatprep.subr.bf16.mxu0 0
      %1311 = vmatpush1.bf16.xpose.msra.mxu0 0
      %1312 = vmatprep.subr.bf16.mxu0 0
      %1313 = vmatpush1.bf16.xpose.msra.mxu0 0
      %1314 = vmatprep.subr.bf16.mxu0 0
      %1315 = vmatpush1.bf16.xpose.msra.mxu0 0
      %1316 = vmatprep.subr.bf16.mxu0 0
      %1317 = vmatpush1.bf16.xpose.msra.mxu0 0
      %1318 = vmatprep.subr.bf16.mxu0 0
      %1319 = vmatpush1.bf16.xpose.msra.mxu0 0
      %1320 = vmatprep.subr.bf16.mxu0 0
      %1321 = vmatpush1.bf16.xpose.msra.mxu0 0
      %1322 = vmatprep.subr.bf16.mxu0 0
      %1323 = vmatpush1.bf16.xpose.msra.mxu0 0
      %1324 = vmatprep.subr.bf16.mxu0 0
      %1325 = vmatpush1.bf16.xpose.msra.mxu0 0
      %1326 = vmatprep.subr.bf16.mxu0 0
      %1327 = vmatpush1.bf16.xpose.msra.mxu0 0
      %1328 = vmatprep.subr.bf16.mxu0 0
      %1329 = vmatpush1.bf16.xpose.msra.mxu0 0
      %1330 = vmatprep.subr.bf16.mxu0 0
      %1331 = vmatpush1.bf16.xpose.msra.mxu0 0
      %1332 = vmatprep.mubr.bf16.mxu0 0
      %1333 = vmatmul.mubr.bf16.gmra.mrb[0].mxu0 %v1289
      %v1334 = vpop.f32.mrb[0].mxu0
      %v1335 = vadd.f32 0.0, %v1334
      %v1336 = vpop.f32.mrb[0].mxu0
      %v1337 = vpop.f32.mrb[0].mxu0
      %v1338 = vadd.f32 0.0, %v1337
      %v1339 = vpop.f32.mrb[0].mxu0
      %1340 = vmatprep.mubr.bf16.mxu0 0
      %1341 = vmatmul.mubr.bf16.gmra.mrb[0].mxu0 %v1292
      %v1342 = vpop.f32.mrb[0].mxu0
      %v1343 = vadd.f32 0.0, %v1342
      %v1344 = vpop.f32.mrb[0].mxu0
      %v1345 = vpop.f32.mrb[0].mxu0
      %v1346 = vpop.f32.mrb[0].mxu0
      %1347 = vdwg.mxu0
      %1350 = vrot.lane.b32.xlu0 %v1267, 96
      %v1351 = vpop.permute.xlu0 %1350
      %1352 = vrot.lane.b32.xlu0 %v1268, 96
      %v1353 = vpop.permute.xlu0 %1352
      %v1355 = vsel %vm1287, %v1267, 0
      %v1358 = vsel %vm1287, %v1268, 0
      %v1361 = vsel %vm1287, %v1351, 0
      %v1364 = vsel %vm1287, %v1353, 0
      %1366 = vmatprep.subr.bf16.mxu0 0
      %1367 = vmatpush1.bf16.xpose.msra.mxu0 %v1361
      %1368 = vmatprep.subr.bf16.mxu0 0
      %1369 = vmatpush1.bf16.xpose.msra.mxu0 %v1364
      %1370 = vmatprep.subr.bf16.mxu0 0
      %1371 = vmatpush1.bf16.xpose.msra.mxu0 0
      %1372 = vmatprep.subr.bf16.mxu0 0
      %1373 = vmatpush1.bf16.xpose.msra.mxu0 0
      %1374 = vmatprep.subr.bf16.mxu0 0
      %1375 = vmatpush1.bf16.xpose.msra.mxu0 0
      %1376 = vmatprep.subr.bf16.mxu0 0
      %1377 = vmatpush1.bf16.xpose.msra.mxu0 0
      %1378 = vmatprep.subr.bf16.mxu0 0
      %1379 = vmatpush1.bf16.xpose.msra.mxu0 0
      %1380 = vmatprep.subr.bf16.mxu0 0
      %1381 = vmatpush1.bf16.xpose.msra.mxu0 0
      %1382 = vmatprep.subr.bf16.mxu0 0
      %1383 = vmatpush1.bf16.xpose.msra.mxu0 0
      %1384 = vmatprep.subr.bf16.mxu0 0
      %1385 = vmatpush1.bf16.xpose.msra.mxu0 0
      %1386 = vmatprep.subr.bf16.mxu0 0
      %1387 = vmatpush1.bf16.xpose.msra.mxu0 0
      %1388 = vmatprep.subr.bf16.mxu0 0
      %1389 = vmatpush1.bf16.xpose.msra.mxu0 0
      %1390 = vmatprep.subr.bf16.mxu0 0
      %1391 = vmatpush1.bf16.xpose.msra.mxu0 0
      %1392 = vmatprep.subr.bf16.mxu0 0
      %1393 = vmatpush1.bf16.xpose.msra.mxu0 0
      %1394 = vmatprep.subr.bf16.mxu0 0
      %1395 = vmatpush1.bf16.xpose.msra.mxu0 0
      %1396 = vmatprep.subr.bf16.mxu0 0
      %1397 = vmatpush1.bf16.xpose.msra.mxu0 0
      %1398 = vmatprep.mubr.bf16.mxu0 0
      %1399 = vmatmul.mubr.bf16.gmra.mrb[0].mxu0 %v1355
      %v1400 = vpop.f32.mrb[0].mxu0
      %v1401 = vadd.f32 0.0, %v1400
      %v1402 = vpop.f32.mrb[0].mxu0
      %v1403 = vpop.f32.mrb[0].mxu0
      %v1404 = vadd.f32 0.0, %v1403
      %v1405 = vpop.f32.mrb[0].mxu0
      %1406 = vmatprep.mubr.bf16.mxu0 0
      %1407 = vmatmul.mubr.bf16.gmra.mrb[0].mxu0 %v1358
      %v1408 = vpop.f32.mrb[0].mxu0
      %v1409 = vadd.f32 0.0, %v1408
      %v1410 = vpop.f32.mrb[0].mxu0
      %v1411 = vpop.f32.mrb[0].mxu0
      %v1412 = vpop.f32.mrb[0].mxu0
      %1413 = vdwg.mxu0
      %1416 = vrot.lane.b32.xlu0 %v1269, 96
      %v1417 = vpop.permute.xlu0 %1416
      %1418 = vrot.lane.b32.xlu0 %v1270, 96
      %v1419 = vpop.permute.xlu0 %1418
      %v1421 = vsel %vm1287, %v1269, 0
      %v1424 = vsel %vm1287, %v1270, 0
      %v1427 = vsel %vm1287, %v1417, 0
      %v1430 = vsel %vm1287, %v1419, 0
      %1432 = vmatprep.subr.bf16.mxu0 0
      %1433 = vmatpush1.bf16.xpose.msra.mxu0 %v1427
      %1434 = vmatprep.subr.bf16.mxu0 0
      %1435 = vmatpush1.bf16.xpose.msra.mxu0 %v1430
      %1436 = vmatprep.subr.bf16.mxu0 0
      %1437 = vmatpush1.bf16.xpose.msra.mxu0 0
      %1438 = vmatprep.subr.bf16.mxu0 0
      %1439 = vmatpush1.bf16.xpose.msra.mxu0 0
      %1440 = vmatprep.subr.bf16.mxu0 0
      %1441 = vmatpush1.bf16.xpose.msra.mxu0 0
      %1442 = vmatprep.subr.bf16.mxu0 0
      %1443 = vmatpush1.bf16.xpose.msra.mxu0 0
      %1444 = vmatprep.subr.bf16.mxu0 0
      %1445 = vmatpush1.bf16.xpose.msra.mxu0 0
      %1446 = vmatprep.subr.bf16.mxu0 0
      %1447 = vmatpush1.bf16.xpose.msra.mxu0 0
      %1448 = vmatprep.subr.bf16.mxu0 0
      %1449 = vmatpush1.bf16.xpose.msra.mxu0 0
      %1450 = vmatprep.subr.bf16.mxu0 0
      %1451 = vmatpush1.bf16.xpose.msra.mxu0 0
      %1452 = vmatprep.subr.bf16.mxu0 0
      %1453 = vmatpush1.bf16.xpose.msra.mxu0 0
      %1454 = vmatprep.subr.bf16.mxu0 0
      %1455 = vmatpush1.bf16.xpose.msra.mxu0 0
      %1456 = vmatprep.subr.bf16.mxu0 0
      %1457 = vmatpush1.bf16.xpose.msra.mxu0 0
      %1458 = vmatprep.subr.bf16.mxu0 0
      %1459 = vmatpush1.bf16.xpose.msra.mxu0 0
      %1460 = vmatprep.subr.bf16.mxu0 0
      %1461 = vmatpush1.bf16.xpose.msra.mxu0 0
      %1462 = vmatprep.subr.bf16.mxu0 0
      %1463 = vmatpush1.bf16.xpose.msra.mxu0 0
      %1464 = vmatprep.mubr.bf16.mxu0 0
      %1465 = vmatmul.mubr.bf16.gmra.mrb[0].mxu0 %v1421
      %v1466 = vpop.f32.mrb[0].mxu0
      %v1467 = vadd.f32 0.0, %v1466
      %v1468 = vpop.f32.mrb[0].mxu0
      %v1469 = vpop.f32.mrb[0].mxu0
      %v1470 = vadd.f32 0.0, %v1469
      %v1471 = vpop.f32.mrb[0].mxu0
      %1472 = vmatprep.mubr.bf16.mxu0 0
      %1473 = vmatmul.mubr.bf16.gmra.mrb[0].mxu0 %v1424
      %v1474 = vpop.f32.mrb[0].mxu0
      %v1475 = vadd.f32 0.0, %v1474
      %v1476 = vpop.f32.mrb[0].mxu0
      %v1477 = vpop.f32.mrb[0].mxu0
      %v1478 = vpop.f32.mrb[0].mxu0
      %1479 = vdwg.mxu0
      %1482 = vrot.lane.b32.xlu0 %v1271, 96
      %v1483 = vpop.permute.xlu0 %1482
      %1484 = vrot.lane.b32.xlu0 %v1272, 96
      %v1485 = vpop.permute.xlu0 %1484
      %v1487 = vsel %vm1287, %v1271, 0
      %v1490 = vsel %vm1287, %v1272, 0
      %v1493 = vsel %vm1287, %v1483, 0
      %v1496 = vsel %vm1287, %v1485, 0
      %1498 = vmatprep.subr.bf16.mxu0 0
      %1499 = vmatpush1.bf16.xpose.msra.mxu0 %v1493
      %1500 = vmatprep.subr.bf16.mxu0 0
      %1501 = vmatpush1.bf16.xpose.msra.mxu0 %v1496
      %1502 = vmatprep.subr.bf16.mxu0 0
      %1503 = vmatpush1.bf16.xpose.msra.mxu0 0
      %1504 = vmatprep.subr.bf16.mxu0 0
      %1505 = vmatpush1.bf16.xpose.msra.mxu0 0
      %1506 = vmatprep.subr.bf16.mxu0 0
      %1507 = vmatpush1.bf16.xpose.msra.mxu0 0
      %1508 = vmatprep.subr.bf16.mxu0 0
      %1509 = vmatpush1.bf16.xpose.msra.mxu0 0
      %1510 = vmatprep.subr.bf16.mxu0 0
      %1511 = vmatpush1.bf16.xpose.msra.mxu0 0
      %1512 = vmatprep.subr.bf16.mxu0 0
      %1513 = vmatpush1.bf16.xpose.msra.mxu0 0
      %1514 = vmatprep.subr.bf16.mxu0 0
      %1515 = vmatpush1.bf16.xpose.msra.mxu0 0
      %1516 = vmatprep.subr.bf16.mxu0 0
      %1517 = vmatpush1.bf16.xpose.msra.mxu0 0
      %1518 = vmatprep.subr.bf16.mxu0 0
      %1519 = vmatpush1.bf16.xpose.msra.mxu0 0
      %1520 = vmatprep.subr.bf16.mxu0 0
      %1521 = vmatpush1.bf16.xpose.msra.mxu0 0
      %1522 = vmatprep.subr.bf16.mxu0 0
      %1523 = vmatpush1.bf16.xpose.msra.mxu0 0
      %1524 = vmatprep.subr.bf16.mxu0 0
      %1525 = vmatpush1.bf16.xpose.msra.mxu0 0
      %1526 = vmatprep.subr.bf16.mxu0 0
      %1527 = vmatpush1.bf16.xpose.msra.mxu0 0
      %1528 = vmatprep.subr.bf16.mxu0 0
      %1529 = vmatpush1.bf16.xpose.msra.mxu0 0
      %1530 = vmatprep.mubr.bf16.mxu0 0
      %1531 = vmatmul.mubr.bf16.gmra.mrb[0].mxu0 %v1487
      %v1532 = vpop.f32.mrb[0].mxu0
      %v1533 = vadd.f32 0.0, %v1532
      %v1534 = vpop.f32.mrb[0].mxu0
      %v1535 = vpop.f32.mrb[0].mxu0
      %v1536 = vadd.f32 0.0, %v1535
      %v1537 = vpop.f32.mrb[0].mxu0
      %1538 = vmatprep.mubr.bf16.mxu0 0
      %1539 = vmatmul.mubr.bf16.gmra.mrb[0].mxu0 %v1490
      %v1540 = vpop.f32.mrb[0].mxu0
      %v1541 = vadd.f32 0.0, %v1540
      %v1542 = vpop.f32.mrb[0].mxu0
      %v1543 = vpop.f32.mrb[0].mxu0
      %v1544 = vpop.f32.mrb[0].mxu0
      %1545 = vdwg.mxu0
      %1548 = vrot.lane.b32.xlu0 %v1273, 96
      %v1549 = vpop.permute.xlu0 %1548
      %1550 = vrot.lane.b32.xlu0 %v1274, 96
      %v1551 = vpop.permute.xlu0 %1550
      %v1553 = vsel %vm1287, %v1273, 0
      %v1556 = vsel %vm1287, %v1274, 0
      %v1559 = vsel %vm1287, %v1549, 0
      %v1562 = vsel %vm1287, %v1551, 0
      %1564 = vmatprep.subr.bf16.mxu0 0
      %1565 = vmatpush1.bf16.xpose.msra.mxu0 %v1559
      %1566 = vmatprep.subr.bf16.mxu0 0
      %1567 = vmatpush1.bf16.xpose.msra.mxu0 %v1562
      %1568 = vmatprep.subr.bf16.mxu0 0
      %1569 = vmatpush1.bf16.xpose.msra.mxu0 0
      %1570 = vmatprep.subr.bf16.mxu0 0
      %1571 = vmatpush1.bf16.xpose.msra.mxu0 0
      %1572 = vmatprep.subr.bf16.mxu0 0
      %1573 = vmatpush1.bf16.xpose.msra.mxu0 0
      %1574 = vmatprep.subr.bf16.mxu0 0
      %1575 = vmatpush1.bf16.xpose.msra.mxu0 0
      %1576 = vmatprep.subr.bf16.mxu0 0
      %1577 = vmatpush1.bf16.xpose.msra.mxu0 0
      %1578 = vmatprep.subr.bf16.mxu0 0
      %1579 = vmatpush1.bf16.xpose.msra.mxu0 0
      %1580 = vmatprep.subr.bf16.mxu0 0
      %1581 = vmatpush1.bf16.xpose.msra.mxu0 0
      %1582 = vmatprep.subr.bf16.mxu0 0
      %1583 = vmatpush1.bf16.xpose.msra.mxu0 0
      %1584 = vmatprep.subr.bf16.mxu0 0
      %1585 = vmatpush1.bf16.xpose.msra.mxu0 0
      %1586 = vmatprep.subr.bf16.mxu0 0
      %1587 = vmatpush1.bf16.xpose.msra.mxu0 0
      %1588 = vmatprep.subr.bf16.mxu0 0
      %1589 = vmatpush1.bf16.xpose.msra.mxu0 0
      %1590 = vmatprep.subr.bf16.mxu0 0
      %1591 = vmatpush1.bf16.xpose.msra.mxu0 0
      %1592 = vmatprep.subr.bf16.mxu0 0
      %1593 = vmatpush1.bf16.xpose.msra.mxu0 0
      %1594 = vmatprep.subr.bf16.mxu0 0
      %1595 = vmatpush1.bf16.xpose.msra.mxu0 0
      %1596 = vmatprep.mubr.bf16.mxu0 0
      %1597 = vmatmul.mubr.bf16.gmra.mrb[0].mxu0 %v1553
      %v1598 = vpop.f32.mrb[0].mxu0
      %v1599 = vadd.f32 0.0, %v1598
      %v1600 = vpop.f32.mrb[0].mxu0
      %v1601 = vpop.f32.mrb[0].mxu0
      %v1602 = vadd.f32 0.0, %v1601
      %v1603 = vpop.f32.mrb[0].mxu0
      %1604 = vmatprep.mubr.bf16.mxu0 0
      %1605 = vmatmul.mubr.bf16.gmra.mrb[0].mxu0 %v1556
      %v1606 = vpop.f32.mrb[0].mxu0
      %v1607 = vadd.f32 0.0, %v1606
      %v1608 = vpop.f32.mrb[0].mxu0
      %v1609 = vpop.f32.mrb[0].mxu0
      %v1610 = vpop.f32.mrb[0].mxu0
      %1611 = vdwg.mxu0
      %1614 = vrot.lane.b32.xlu0 %v1275, 96
      %v1615 = vpop.permute.xlu0 %1614
      %1616 = vrot.lane.b32.xlu0 %v1276, 96
      %v1617 = vpop.permute.xlu0 %1616
      %v1619 = vsel %vm1287, %v1275, 0
      %v1622 = vsel %vm1287, %v1276, 0
      %v1625 = vsel %vm1287, %v1615, 0
      %v1628 = vsel %vm1287, %v1617, 0
      %1630 = vmatprep.subr.bf16.mxu0 0
      %1631 = vmatpush1.bf16.xpose.msra.mxu0 %v1625
      %1632 = vmatprep.subr.bf16.mxu0 0
      %1633 = vmatpush1.bf16.xpose.msra.mxu0 %v1628
      %1634 = vmatprep.subr.bf16.mxu0 0
      %1635 = vmatpush1.bf16.xpose.msra.mxu0 0
      %1636 = vmatprep.subr.bf16.mxu0 0
      %1637 = vmatpush1.bf16.xpose.msra.mxu0 0
      %1638 = vmatprep.subr.bf16.mxu0 0
      %1639 = vmatpush1.bf16.xpose.msra.mxu0 0
      %1640 = vmatprep.subr.bf16.mxu0 0
      %1641 = vmatpush1.bf16.xpose.msra.mxu0 0
      %1642 = vmatprep.subr.bf16.mxu0 0
      %1643 = vmatpush1.bf16.xpose.msra.mxu0 0
      %1644 = vmatprep.subr.bf16.mxu0 0
      %1645 = vmatpush1.bf16.xpose.msra.mxu0 0
      %1646 = vmatprep.subr.bf16.mxu0 0
      %1647 = vmatpush1.bf16.xpose.msra.mxu0 0
      %1648 = vmatprep.subr.bf16.mxu0 0
      %1649 = vmatpush1.bf16.xpose.msra.mxu0 0
      %1650 = vmatprep.subr.bf16.mxu0 0
      %1651 = vmatpush1.bf16.xpose.msra.mxu0 0
      %1652 = vmatprep.subr.bf16.mxu0 0
      %1653 = vmatpush1.bf16.xpose.msra.mxu0 0
      %1654 = vmatprep.subr.bf16.mxu0 0
      %1655 = vmatpush1.bf16.xpose.msra.mxu0 0
      %1656 = vmatprep.subr.bf16.mxu0 0
      %1657 = vmatpush1.bf16.xpose.msra.mxu0 0
      %1658 = vmatprep.subr.bf16.mxu0 0
      %1659 = vmatpush1.bf16.xpose.msra.mxu0 0
      %1660 = vmatprep.subr.bf16.mxu0 0
      %1661 = vmatpush1.bf16.xpose.msra.mxu0 0
      %1662 = vmatprep.mubr.bf16.mxu0 0
      %1663 = vmatmul.mubr.bf16.gmra.mrb[0].mxu0 %v1619
      %v1664 = vpop.f32.mrb[0].mxu0
      %v1665 = vadd.f32 0.0, %v1664
      %v1666 = vpop.f32.mrb[0].mxu0
      %v1667 = vpop.f32.mrb[0].mxu0
      %v1668 = vadd.f32 0.0, %v1667
      %v1669 = vpop.f32.mrb[0].mxu0
      %1670 = vmatprep.mubr.bf16.mxu0 0
      %1671 = vmatmul.mubr.bf16.gmra.mrb[0].mxu0 %v1622
      %v1672 = vpop.f32.mrb[0].mxu0
      %v1673 = vadd.f32 0.0, %v1672
      %v1674 = vpop.f32.mrb[0].mxu0
      %v1675 = vpop.f32.mrb[0].mxu0
      %v1676 = vpop.f32.mrb[0].mxu0
      %1677 = vdwg.mxu0
      %1680 = vrot.lane.b32.xlu0 %v1277, 96
      %v1681 = vpop.permute.xlu0 %1680
      %1682 = vrot.lane.b32.xlu0 %v1278, 96
      %v1683 = vpop.permute.xlu0 %1682
      %v1685 = vsel %vm1287, %v1277, 0
      %v1688 = vsel %vm1287, %v1278, 0
      %v1691 = vsel %vm1287, %v1681, 0
      %v1694 = vsel %vm1287, %v1683, 0
      %1696 = vmatprep.subr.bf16.mxu0 0
      %1697 = vmatpush1.bf16.xpose.msra.mxu0 %v1691
      %1698 = vmatprep.subr.bf16.mxu0 0
      %1699 = vmatpush1.bf16.xpose.msra.mxu0 %v1694
      %1700 = vmatprep.subr.bf16.mxu0 0
      %1701 = vmatpush1.bf16.xpose.msra.mxu0 0
      %1702 = vmatprep.subr.bf16.mxu0 0
      %1703 = vmatpush1.bf16.xpose.msra.mxu0 0
      %1704 = vmatprep.subr.bf16.mxu0 0
      %1705 = vmatpush1.bf16.xpose.msra.mxu0 0
      %1706 = vmatprep.subr.bf16.mxu0 0
      %1707 = vmatpush1.bf16.xpose.msra.mxu0 0
      %1708 = vmatprep.subr.bf16.mxu0 0
      %1709 = vmatpush1.bf16.xpose.msra.mxu0 0
      %1710 = vmatprep.subr.bf16.mxu0 0
      %1711 = vmatpush1.bf16.xpose.msra.mxu0 0
      %1712 = vmatprep.subr.bf16.mxu0 0
      %1713 = vmatpush1.bf16.xpose.msra.mxu0 0
      %1714 = vmatprep.subr.bf16.mxu0 0
      %1715 = vmatpush1.bf16.xpose.msra.mxu0 0
      %1716 = vmatprep.subr.bf16.mxu0 0
      %1717 = vmatpush1.bf16.xpose.msra.mxu0 0
      %1718 = vmatprep.subr.bf16.mxu0 0
      %1719 = vmatpush1.bf16.xpose.msra.mxu0 0
      %1720 = vmatprep.subr.bf16.mxu0 0
      %1721 = vmatpush1.bf16.xpose.msra.mxu0 0
      %1722 = vmatprep.subr.bf16.mxu0 0
      %1723 = vmatpush1.bf16.xpose.msra.mxu0 0
      %1724 = vmatprep.subr.bf16.mxu0 0
      %1725 = vmatpush1.bf16.xpose.msra.mxu0 0
      %1726 = vmatprep.subr.bf16.mxu0 0
      %1727 = vmatpush1.bf16.xpose.msra.mxu0 0
      %1728 = vmatprep.mubr.bf16.mxu0 0
      %1729 = vmatmul.mubr.bf16.gmra.mrb[0].mxu0 %v1685
      %v1730 = vpop.f32.mrb[0].mxu0
      %v1731 = vadd.f32 0.0, %v1730
      %v1732 = vpop.f32.mrb[0].mxu0
      %v1733 = vpop.f32.mrb[0].mxu0
      %v1734 = vadd.f32 0.0, %v1733
      %v1735 = vpop.f32.mrb[0].mxu0
      %1736 = vmatprep.mubr.bf16.mxu0 0
      %1737 = vmatmul.mubr.bf16.gmra.mrb[0].mxu0 %v1688
      %v1738 = vpop.f32.mrb[0].mxu0
      %v1739 = vadd.f32 0.0, %v1738
      %v1740 = vpop.f32.mrb[0].mxu0
      %v1741 = vpop.f32.mrb[0].mxu0
      %v1742 = vpop.f32.mrb[0].mxu0
      %1743 = vdwg.mxu0
      %1746 = vrot.lane.b32.xlu0 %v1279, 96
      %v1747 = vpop.permute.xlu0 %1746
      %1748 = vrot.lane.b32.xlu0 %v1280, 96
      %v1749 = vpop.permute.xlu0 %1748
      %v1751 = vsel %vm1287, %v1279, 0
      %v1754 = vsel %vm1287, %v1280, 0
      %v1757 = vsel %vm1287, %v1747, 0
      %v1760 = vsel %vm1287, %v1749, 0
      %1762 = vmatprep.subr.bf16.mxu0 0
      %1763 = vmatpush1.bf16.xpose.msra.mxu0 %v1757
      %1764 = vmatprep.subr.bf16.mxu0 0
      %1765 = vmatpush1.bf16.xpose.msra.mxu0 %v1760
      %1766 = vmatprep.subr.bf16.mxu0 0
      %1767 = vmatpush1.bf16.xpose.msra.mxu0 0
      %1768 = vmatprep.subr.bf16.mxu0 0
      %1769 = vmatpush1.bf16.xpose.msra.mxu0 0
      %1770 = vmatprep.subr.bf16.mxu0 0
      %1771 = vmatpush1.bf16.xpose.msra.mxu0 0
      %1772 = vmatprep.subr.bf16.mxu0 0
      %1773 = vmatpush1.bf16.xpose.msra.mxu0 0
      %1774 = vmatprep.subr.bf16.mxu0 0
      %1775 = vmatpush1.bf16.xpose.msra.mxu0 0
      %1776 = vmatprep.subr.bf16.mxu0 0
      %1777 = vmatpush1.bf16.xpose.msra.mxu0 0
      %1778 = vmatprep.subr.bf16.mxu0 0
      %1779 = vmatpush1.bf16.xpose.msra.mxu0 0
      %1780 = vmatprep.subr.bf16.mxu0 0
      %1781 = vmatpush1.bf16.xpose.msra.mxu0 0
      %1782 = vmatprep.subr.bf16.mxu0 0
      %1783 = vmatpush1.bf16.xpose.msra.mxu0 0
      %1784 = vmatprep.subr.bf16.mxu0 0
      %1785 = vmatpush1.bf16.xpose.msra.mxu0 0
      %1786 = vmatprep.subr.bf16.mxu0 0
      %1787 = vmatpush1.bf16.xpose.msra.mxu0 0
      %1788 = vmatprep.subr.bf16.mxu0 0
      %1789 = vmatpush1.bf16.xpose.msra.mxu0 0
      %1790 = vmatprep.subr.bf16.mxu0 0
      %1791 = vmatpush1.bf16.xpose.msra.mxu0 0
      %1792 = vmatprep.subr.bf16.mxu0 0
      %1793 = vmatpush1.bf16.xpose.msra.mxu0 0
      %1794 = vmatprep.mubr.bf16.mxu0 0
      %1795 = vmatmul.mubr.bf16.gmra.mrb[0].mxu0 %v1751
      %v1796 = vpop.f32.mrb[0].mxu0
      %v1797 = vadd.f32 0.0, %v1796
      %v1798 = vpop.f32.mrb[0].mxu0
      %v1799 = vpop.f32.mrb[0].mxu0
      %v1800 = vadd.f32 0.0, %v1799
      %v1801 = vpop.f32.mrb[0].mxu0
      %1802 = vmatprep.mubr.bf16.mxu0 0
      %1803 = vmatmul.mubr.bf16.gmra.mrb[0].mxu0 %v1754
      %v1804 = vpop.f32.mrb[0].mxu0
      %v1805 = vadd.f32 0.0, %v1804
      %v1806 = vpop.f32.mrb[0].mxu0
      %v1807 = vpop.f32.mrb[0].mxu0
      %v1808 = vpop.f32.mrb[0].mxu0
      %1809 = vdwg.mxu0
      %v1810 = vmul.f32 %v1335, 0.35355338
      %v1811 = vmul.f32 %v1338, 0.35355338
      %v1812 = vmul.f32 %v1343, 0.35355338
      %v1813 = vmul.f32 %v1401, 0.35355338
      %v1814 = vmul.f32 %v1404, 0.35355338
      %v1815 = vmul.f32 %v1409, 0.35355338
      %v1816 = vmul.f32 %v1467, 0.35355338
      %v1817 = vmul.f32 %v1470, 0.35355338
      %v1818 = vmul.f32 %v1475, 0.35355338
      %v1819 = vmul.f32 %v1533, 0.35355338
      %v1820 = vmul.f32 %v1536, 0.35355338
      %v1821 = vmul.f32 %v1541, 0.35355338
      %v1822 = vmul.f32 %v1599, 0.35355338
      %v1823 = vmul.f32 %v1602, 0.35355338
      %v1824 = vmul.f32 %v1607, 0.35355338
      %v1825 = vmul.f32 %v1665, 0.35355338
      %v1826 = vmul.f32 %v1668, 0.35355338
      %v1827 = vmul.f32 %v1673, 0.35355338
      %v1828 = vmul.f32 %v1731, 0.35355338
      %v1829 = vmul.f32 %v1734, 0.35355338
      %v1830 = vmul.f32 %v1739, 0.35355338
      %v1831 = vmul.f32 %v1797, 0.35355338
      %v1832 = vmul.f32 %v1800, 0.35355338
      %v1833 = vmul.f32 %v1805, 0.35355338
      %vm1834 = vcmask 138240
      %v1835 = vsel %vm1834, %v1810, -inf
      %1836 = vmax.xlane.f32.xlu0 %v1835
      %v1837 = vpop.xlane.xlu0 %1836
      %v1838 = vsel %vm1834, %v1811, -inf
      %1839 = vmax.xlane.f32.xlu0 %v1838
      %v1840 = vpop.xlane.xlu0 %1839
      %vm1841 = vcmask 131072
      %v1842 = vsel %vm1841, %v1812, -inf
      %1843 = vmax.xlane.f32.xlu0 %v1842
      %v1844 = vpop.xlane.xlu0 %1843
      %v1845 = vsel %vm1834, %v1813, -inf
      %1846 = vmax.xlane.f32.xlu0 %v1845
      %v1847 = vpop.xlane.xlu0 %1846
      %v1848 = vsel %vm1834, %v1814, -inf
      %1849 = vmax.xlane.f32.xlu0 %v1848
      %v1850 = vpop.xlane.xlu0 %1849
      %v1851 = vsel %vm1841, %v1815, -inf
      %1852 = vmax.xlane.f32.xlu0 %v1851
      %v1853 = vpop.xlane.xlu0 %1852
      %v1854 = vsel %vm1834, %v1816, -inf
      %1855 = vmax.xlane.f32.xlu0 %v1854
      %v1856 = vpop.xlane.xlu0 %1855
      %v1857 = vsel %vm1834, %v1817, -inf
      %1858 = vmax.xlane.f32.xlu0 %v1857
      %v1859 = vpop.xlane.xlu0 %1858
      %v1860 = vsel %vm1841, %v1818, -inf
      %1861 = vmax.xlane.f32.xlu0 %v1860
      %v1862 = vpop.xlane.xlu0 %1861
      %v1863 = vsel %vm1834, %v1819, -inf
      %1864 = vmax.xlane.f32.xlu0 %v1863
      %v1865 = vpop.xlane.xlu0 %1864
      %v1866 = vsel %vm1834, %v1820, -inf
      %1867 = vmax.xlane.f32.xlu0 %v1866
      %v1868 = vpop.xlane.xlu0 %1867
      %v1869 = vsel %vm1841, %v1821, -inf
      %1870 = vmax.xlane.f32.xlu0 %v1869
      %v1871 = vpop.xlane.xlu0 %1870
      %v1872 = vsel %vm1834, %v1822, -inf
      %1873 = vmax.xlane.f32.xlu0 %v1872
      %v1874 = vpop.xlane.xlu0 %1873
      %v1875 = vsel %vm1834, %v1823, -inf
      %1876 = vmax.xlane.f32.xlu0 %v1875
      %v1877 = vpop.xlane.xlu0 %1876
      %v1878 = vsel %vm1841, %v1824, -inf
      %1879 = vmax.xlane.f32.xlu0 %v1878
      %v1880 = vpop.xlane.xlu0 %1879
      %v1881 = vsel %vm1834, %v1825, -inf
      %1882 = vmax.xlane.f32.xlu0 %v1881
      %v1883 = vpop.xlane.xlu0 %1882
      %v1884 = vsel %vm1834, %v1826, -inf
      %1885 = vmax.xlane.f32.xlu0 %v1884
      %v1886 = vpop.xlane.xlu0 %1885
      %v1887 = vsel %vm1841, %v1827, -inf
      %1888 = vmax.xlane.f32.xlu0 %v1887
      %v1889 = vpop.xlane.xlu0 %1888
      %v1890 = vsel %vm1834, %v1828, -inf
      %1891 = vmax.xlane.f32.xlu0 %v1890
      %v1892 = vpop.xlane.xlu0 %1891
      %v1893 = vsel %vm1834, %v1829, -inf
      %1894 = vmax.xlane.f32.xlu0 %v1893
      %v1895 = vpop.xlane.xlu0 %1894
      %v1896 = vsel %vm1841, %v1830, -inf
      %1897 = vmax.xlane.f32.xlu0 %v1896
      %v1898 = vpop.xlane.xlu0 %1897
      %v1899 = vsel %vm1834, %v1831, -inf
      %1900 = vmax.xlane.f32.xlu0 %v1899
      %v1901 = vpop.xlane.xlu0 %1900
      %v1902 = vsel %vm1834, %v1832, -inf
      %1903 = vmax.xlane.f32.xlu0 %v1902
      %v1904 = vpop.xlane.xlu0 %1903
      %v1905 = vsel %vm1841, %v1833, -inf
      %1906 = vmax.xlane.f32.xlu0 %v1905
      %v1907 = vpop.xlane.xlu0 %1906
      %v1908 = vsub.f32 %v1810, %v1837
      %v1909 = vsub.f32 %v1811, %v1840
      %v1910 = vsub.f32 %v1812, %v1844
      %v1911 = vsub.f32 %v1813, %v1847
      %v1912 = vsub.f32 %v1814, %v1850
      %v1913 = vsub.f32 %v1815, %v1853
      %v1914 = vsub.f32 %v1816, %v1856
      %v1915 = vsub.f32 %v1817, %v1859
      %v1916 = vsub.f32 %v1818, %v1862
      %v1917 = vsub.f32 %v1819, %v1865
      %v1918 = vsub.f32 %v1820, %v1868
      %v1919 = vsub.f32 %v1821, %v1871
      %v1920 = vsub.f32 %v1822, %v1874
      %v1921 = vsub.f32 %v1823, %v1877
      %v1922 = vsub.f32 %v1824, %v1880
      %v1923 = vsub.f32 %v1825, %v1883
      %v1924 = vsub.f32 %v1826, %v1886
      %v1925 = vsub.f32 %v1827, %v1889
      %v1926 = vsub.f32 %v1828, %v1892
      %v1927 = vsub.f32 %v1829, %v1895
      %v1928 = vsub.f32 %v1830, %v1898
      %v1929 = vsub.f32 %v1831, %v1901
      %v1930 = vsub.f32 %v1832, %v1904
      %v1931 = vsub.f32 %v1833, %v1907
      %v1932 = vmul.f32 %v1908, 1.442695
      %v1933 = vpow.pop %v1932
      %v1934 = vmul.f32 %v1909, 1.442695
      %v1935 = vpow.pop %v1934
      %v1936 = vmul.f32 %v1910, 1.442695
      %v1937 = vpow.pop %v1936
      %v1938 = vmul.f32 %v1911, 1.442695
      %v1939 = vpow.pop %v1938
      %v1940 = vmul.f32 %v1912, 1.442695
      %v1941 = vpow.pop %v1940
      %v1942 = vmul.f32 %v1913, 1.442695
      %v1943 = vpow.pop %v1942
      %v1944 = vmul.f32 %v1914, 1.442695
      %v1945 = vpow.pop %v1944
      %v1946 = vmul.f32 %v1915, 1.442695
      %v1947 = vpow.pop %v1946
      %v1948 = vmul.f32 %v1916, 1.442695
      %v1949 = vpow.pop %v1948
      %v1950 = vmul.f32 %v1917, 1.442695
      %v1951 = vpow.pop %v1950
      %v1952 = vmul.f32 %v1918, 1.442695
      %v1953 = vpow.pop %v1952
      %v1954 = vmul.f32 %v1919, 1.442695
      %v1955 = vpow.pop %v1954
      %v1956 = vmul.f32 %v1920, 1.442695
      %v1957 = vpow.pop %v1956
      %v1958 = vmul.f32 %v1921, 1.442695
      %v1959 = vpow.pop %v1958
      %v1960 = vmul.f32 %v1922, 1.442695
      %v1961 = vpow.pop %v1960
      %v1962 = vmul.f32 %v1923, 1.442695
      %v1963 = vpow.pop %v1962
      %v1964 = vmul.f32 %v1924, 1.442695
      %v1965 = vpow.pop %v1964
      %v1966 = vmul.f32 %v1925, 1.442695
      %v1967 = vpow.pop %v1966
      %v1968 = vmul.f32 %v1926, 1.442695
      %v1969 = vpow.pop %v1968
      %v1970 = vmul.f32 %v1927, 1.442695
      %v1971 = vpow.pop %v1970
      %v1972 = vmul.f32 %v1928, 1.442695
      %v1973 = vpow.pop %v1972
      %v1974 = vmul.f32 %v1929, 1.442695
      %v1975 = vpow.pop %v1974
      %v1976 = vmul.f32 %v1930, 1.442695
      %v1977 = vpow.pop %v1976
      %v1978 = vmul.f32 %v1931, 1.442695
      %v1979 = vpow.pop %v1978
      %v1980 = vsel %vm1834, %v1933, 0.0
      %1981 = vadd.xlane.f32.xlu0 %v1980
      %v1982 = vpop.xlane.xlu0 %1981
      %v1983 = vsel %vm1834, %v1935, 0.0
      %1984 = vadd.xlane.f32.xlu0 %v1983
      %v1985 = vpop.xlane.xlu0 %1984
      %v1986 = vsel %vm1841, %v1937, 0.0
      %1987 = vadd.xlane.f32.xlu0 %v1986
      %v1988 = vpop.xlane.xlu0 %1987
      %v1989 = vsel %vm1834, %v1939, 0.0
      %1990 = vadd.xlane.f32.xlu0 %v1989
      %v1991 = vpop.xlane.xlu0 %1990
      %v1992 = vsel %vm1834, %v1941, 0.0
      %1993 = vadd.xlane.f32.xlu0 %v1992
      %v1994 = vpop.xlane.xlu0 %1993
      %v1995 = vsel %vm1841, %v1943, 0.0
      %1996 = vadd.xlane.f32.xlu0 %v1995
      %v1997 = vpop.xlane.xlu0 %1996
      %v1998 = vsel %vm1834, %v1945, 0.0
      %1999 = vadd.xlane.f32.xlu0 %v1998
      %v2000 = vpop.xlane.xlu0 %1999
      %v2001 = vsel %vm1834, %v1947, 0.0
      %2002 = vadd.xlane.f32.xlu0 %v2001
      %v2003 = vpop.xlane.xlu0 %2002
      %v2004 = vsel %vm1841, %v1949, 0.0
      %2005 = vadd.xlane.f32.xlu0 %v2004
      %v2006 = vpop.xlane.xlu0 %2005
      %v2007 = vsel %vm1834, %v1951, 0.0
      %2008 = vadd.xlane.f32.xlu0 %v2007
      %v2009 = vpop.xlane.xlu0 %2008
      %v2010 = vsel %vm1834, %v1953, 0.0
      %2011 = vadd.xlane.f32.xlu0 %v2010
      %v2012 = vpop.xlane.xlu0 %2011
      %v2013 = vsel %vm1841, %v1955, 0.0
      %2014 = vadd.xlane.f32.xlu0 %v2013
      %v2015 = vpop.xlane.xlu0 %2014
      %v2016 = vsel %vm1834, %v1957, 0.0
      %2017 = vadd.xlane.f32.xlu0 %v2016
      %v2018 = vpop.xlane.xlu0 %2017
      %v2019 = vsel %vm1834, %v1959, 0.0
      %2020 = vadd.xlane.f32.xlu0 %v2019
      %v2021 = vpop.xlane.xlu0 %2020
      %v2022 = vsel %vm1841, %v1961, 0.0
      %2023 = vadd.xlane.f32.xlu0 %v2022
      %v2024 = vpop.xlane.xlu0 %2023
      %v2025 = vsel %vm1834, %v1963, 0.0
      %2026 = vadd.xlane.f32.xlu0 %v2025
      %v2027 = vpop.xlane.xlu0 %2026
      %v2028 = vsel %vm1834, %v1965, 0.0
      %2029 = vadd.xlane.f32.xlu0 %v2028
      %v2030 = vpop.xlane.xlu0 %2029
      %v2031 = vsel %vm1841, %v1967, 0.0
      %2032 = vadd.xlane.f32.xlu0 %v2031
      %v2033 = vpop.xlane.xlu0 %2032
      %v2034 = vsel %vm1834, %v1969, 0.0
      %2035 = vadd.xlane.f32.xlu0 %v2034
      %v2036 = vpop.xlane.xlu0 %2035
      %v2037 = vsel %vm1834, %v1971, 0.0
      %2038 = vadd.xlane.f32.xlu0 %v2037
      %v2039 = vpop.xlane.xlu0 %2038
      %v2040 = vsel %vm1841, %v1973, 0.0
      %2041 = vadd.xlane.f32.xlu0 %v2040
      %v2042 = vpop.xlane.xlu0 %2041
      %v2043 = vsel %vm1834, %v1975, 0.0
      %2044 = vadd.xlane.f32.xlu0 %v2043
      %v2045 = vpop.xlane.xlu0 %2044
      %v2046 = vsel %vm1834, %v1977, 0.0
      %2047 = vadd.xlane.f32.xlu0 %v2046
      %v2048 = vpop.xlane.xlu0 %2047
      %v2049 = vsel %vm1841, %v1979, 0.0
      %2050 = vadd.xlane.f32.xlu0 %v2049
      %v2051 = vpop.xlane.xlu0 %2050
      %v2052 = vrcp.pop %v1982
      %v2053 = vrcp.pop %v1985
      %v2054 = vrcp.pop %v1988
      %v2055 = vrcp.pop %v1991
      %v2056 = vrcp.pop %v1994
      %v2057 = vrcp.pop %v1997
      %v2058 = vrcp.pop %v2000
      %v2059 = vrcp.pop %v2003
      %v2060 = vrcp.pop %v2006
      %v2061 = vrcp.pop %v2009
      %v2062 = vrcp.pop %v2012
      %v2063 = vrcp.pop %v2015
      %v2064 = vrcp.pop %v2018
      %v2065 = vrcp.pop %v2021
      %v2066 = vrcp.pop %v2024
      %v2067 = vrcp.pop %v2027
      %v2068 = vrcp.pop %v2030
      %v2069 = vrcp.pop %v2033
      %v2070 = vrcp.pop %v2036
      %v2071 = vrcp.pop %v2039
      %v2072 = vrcp.pop %v2042
      %v2073 = vrcp.pop %v2045
      %v2074 = vrcp.pop %v2048
      %v2075 = vrcp.pop %v2051
      %v2076 = vmul.f32 %v1933, %v2052
      %v2077 = vmul.f32 %v1935, %v2053
      %v2078 = vmul.f32 %v1937, %v2054
      %v2079 = vmul.f32 %v1939, %v2055
      %v2080 = vmul.f32 %v1941, %v2056
      %v2081 = vmul.f32 %v1943, %v2057
      %v2082 = vmul.f32 %v1945, %v2058
      %v2083 = vmul.f32 %v1947, %v2059
      %v2084 = vmul.f32 %v1949, %v2060
      %v2085 = vmul.f32 %v1951, %v2061
      %v2086 = vmul.f32 %v1953, %v2062
      %v2087 = vmul.f32 %v1955, %v2063
      %v2088 = vmul.f32 %v1957, %v2064
      %v2089 = vmul.f32 %v1959, %v2065
      %v2090 = vmul.f32 %v1961, %v2066
      %v2091 = vmul.f32 %v1963, %v2067
      %v2092 = vmul.f32 %v1965, %v2068
      %v2093 = vmul.f32 %v1967, %v2069
      %v2094 = vmul.f32 %v1969, %v2070
      %v2095 = vmul.f32 %v1971, %v2071
      %v2096 = vmul.f32 %v1973, %v2072
      %v2097 = vmul.f32 %v1975, %v2073
      %v2098 = vmul.f32 %v1977, %v2074
      %v2099 = vmul.f32 %v1979, %v2075
      %v2100 = vpack.c.bf16 %v2077, %v2076
      %v2101 = vpack.c.bf16 %v2078, %v2078
      %v2102 = vpack.c.bf16 %v2080, %v2079
      %v2103 = vpack.c.bf16 %v2081, %v2081
      %v2104 = vpack.c.bf16 %v2083, %v2082
      %v2105 = vpack.c.bf16 %v2084, %v2084
      %v2106 = vpack.c.bf16 %v2086, %v2085
      %v2107 = vpack.c.bf16 %v2087, %v2087
      %v2108 = vpack.c.bf16 %v2089, %v2088
      %v2109 = vpack.c.bf16 %v2090, %v2090
      %v2110 = vpack.c.bf16 %v2092, %v2091
      %v2111 = vpack.c.bf16 %v2093, %v2093
      %v2112 = vpack.c.bf16 %v2095, %v2094
      %v2113 = vpack.c.bf16 %v2096, %v2096
      %v2114 = vpack.c.bf16 %v2098, %v2097
      %v2115 = vpack.c.bf16 %v2099, %v2099
      %2116 = vrot.lane.b32.xlu0 %v1265, 64
      %v2117 = vpop.permute.xlu0 %2116
      %2118 = vrot.lane.b32.xlu0 %v1266, 64
      %v2119 = vpop.permute.xlu0 %2118
      %v2122 = vsel %vm1834, %v2100, 0
      %v2125 = vsel %vm1834, %v2101, 0
      %vm2127 = vcmask 1040384
      %v2128 = vsel 0, 4294967295, 65535
      %v2129 = vsel %vm2127, %v2128, 0
      %v2131 = vand.u32 %v2119, %v2129
      %2133 = vmatprep.subr.bf16.mxu0 0
      %2134 = vmatpush1.bf16.msra.mxu0 %v2117
      %2135 = vmatprep.subr.bf16.mxu0 0
      %2136 = vmatpush1.bf16.msra.mxu0 %v2131
      %2137 = vmatprep.subr.bf16.mxu0 0
      %2138 = vmatpush1.bf16.msra.mxu0 0
      %2139 = vmatprep.subr.bf16.mxu0 0
      %2140 = vmatpush1.bf16.msra.mxu0 0
      %2141 = vmatprep.subr.bf16.mxu0 0
      %2142 = vmatpush1.bf16.msra.mxu0 0
      %2143 = vmatprep.subr.bf16.mxu0 0
      %2144 = vmatpush1.bf16.msra.mxu0 0
      %2145 = vmatprep.subr.bf16.mxu0 0
      %2146 = vmatpush1.bf16.msra.mxu0 0
      %2147 = vmatprep.subr.bf16.mxu0 0
      %2148 = vmatpush1.bf16.msra.mxu0 0
      %2149 = vmatprep.subr.bf16.mxu0 0
      %2150 = vmatpush1.bf16.msra.mxu0 0
      %2151 = vmatprep.subr.bf16.mxu0 0
      %2152 = vmatpush1.bf16.msra.mxu0 0
      %2153 = vmatprep.subr.bf16.mxu0 0
      %2154 = vmatpush1.bf16.msra.mxu0 0
      %2155 = vmatprep.subr.bf16.mxu0 0
      %2156 = vmatpush1.bf16.msra.mxu0 0
      %2157 = vmatprep.subr.bf16.mxu0 0
      %2158 = vmatpush1.bf16.msra.mxu0 0
      %2159 = vmatprep.subr.bf16.mxu0 0
      %2160 = vmatpush1.bf16.msra.mxu0 0
      %2161 = vmatprep.subr.bf16.mxu0 0
      %2162 = vmatpush1.bf16.msra.mxu0 0
      %2163 = vmatprep.subr.bf16.mxu0 0
      %2164 = vmatpush1.bf16.msra.mxu0 0
      %2165 = vmatprep.mubr.bf16.mxu0 0
      %2166 = vmatmul.mubr.bf16.gmra.mrb[0].mxu0 %v2122
      %v2167 = vpop.f32.mrb[0].mxu0
      %v2168 = vadd.f32 0.0, %v2167
      %v2169 = vpop.f32.mrb[0].mxu0
      %v2170 = vpop.f32.mrb[0].mxu0
      %v2171 = vadd.f32 0.0, %v2170
      %v2172 = vpop.f32.mrb[0].mxu0
      %2173 = vmatprep.mubr.bf16.mxu0 0
      %2174 = vmatmul.mubr.bf16.gmra.mrb[0].mxu0 %v2125
      %v2175 = vpop.f32.mrb[0].mxu0
      %v2176 = vadd.f32 0.0, %v2175
      %v2177 = vpop.f32.mrb[0].mxu0
      %v2178 = vpop.f32.mrb[0].mxu0
      %v2179 = vpop.f32.mrb[0].mxu0
      %2180 = vdwg.mxu0
      %2181 = vrot.lane.b32.xlu0 %v1267, 64
      %v2182 = vpop.permute.xlu0 %2181
      %2183 = vrot.lane.b32.xlu0 %v1268, 64
      %v2184 = vpop.permute.xlu0 %2183
      %v2187 = vsel %vm1834, %v2102, 0
      %v2190 = vsel %vm1834, %v2103, 0
      %v2193 = vand.u32 %v2184, %v2129
      %2195 = vmatprep.subr.bf16.mxu0 0
      %2196 = vmatpush1.bf16.msra.mxu0 %v2182
      %2197 = vmatprep.subr.bf16.mxu0 0
      %2198 = vmatpush1.bf16.msra.mxu0 %v2193
      %2199 = vmatprep.subr.bf16.mxu0 0
      %2200 = vmatpush1.bf16.msra.mxu0 0
      %2201 = vmatprep.subr.bf16.mxu0 0
      %2202 = vmatpush1.bf16.msra.mxu0 0
      %2203 = vmatprep.subr.bf16.mxu0 0
      %2204 = vmatpush1.bf16.msra.mxu0 0
      %2205 = vmatprep.subr.bf16.mxu0 0
      %2206 = vmatpush1.bf16.msra.mxu0 0
      %2207 = vmatprep.subr.bf16.mxu0 0
      %2208 = vmatpush1.bf16.msra.mxu0 0
      %2209 = vmatprep.subr.bf16.mxu0 0
      %2210 = vmatpush1.bf16.msra.mxu0 0
      %2211 = vmatprep.subr.bf16.mxu0 0
      %2212 = vmatpush1.bf16.msra.mxu0 0
      %2213 = vmatprep.subr.bf16.mxu0 0
      %2214 = vmatpush1.bf16.msra.mxu0 0
      %2215 = vmatprep.subr.bf16.mxu0 0
      %2216 = vmatpush1.bf16.msra.mxu0 0
      %2217 = vmatprep.subr.bf16.mxu0 0
      %2218 = vmatpush1.bf16.msra.mxu0 0
      %2219 = vmatprep.subr.bf16.mxu0 0
      %2220 = vmatpush1.bf16.msra.mxu0 0
      %2221 = vmatprep.subr.bf16.mxu0 0
      %2222 = vmatpush1.bf16.msra.mxu0 0
      %2223 = vmatprep.subr.bf16.mxu0 0
      %2224 = vmatpush1.bf16.msra.mxu0 0
      %2225 = vmatprep.subr.bf16.mxu0 0
      %2226 = vmatpush1.bf16.msra.mxu0 0
      %2227 = vmatprep.mubr.bf16.mxu0 0
      %2228 = vmatmul.mubr.bf16.gmra.mrb[0].mxu0 %v2187
      %v2229 = vpop.f32.mrb[0].mxu0
      %v2230 = vadd.f32 0.0, %v2229
      %v2231 = vpop.f32.mrb[0].mxu0
      %v2232 = vpop.f32.mrb[0].mxu0
      %v2233 = vadd.f32 0.0, %v2232
      %v2234 = vpop.f32.mrb[0].mxu0
      %2235 = vmatprep.mubr.bf16.mxu0 0
      %2236 = vmatmul.mubr.bf16.gmra.mrb[0].mxu0 %v2190
      %v2237 = vpop.f32.mrb[0].mxu0
      %v2238 = vadd.f32 0.0, %v2237
      %v2239 = vpop.f32.mrb[0].mxu0
      %v2240 = vpop.f32.mrb[0].mxu0
      %v2241 = vpop.f32.mrb[0].mxu0
      %2242 = vdwg.mxu0
      %2243 = vrot.lane.b32.xlu0 %v1269, 64
      %v2244 = vpop.permute.xlu0 %2243
      %2245 = vrot.lane.b32.xlu0 %v1270, 64
      %v2246 = vpop.permute.xlu0 %2245
      %v2249 = vsel %vm1834, %v2104, 0
      %v2252 = vsel %vm1834, %v2105, 0
      %v2255 = vand.u32 %v2246, %v2129
      %2257 = vmatprep.subr.bf16.mxu0 0
      %2258 = vmatpush1.bf16.msra.mxu0 %v2244
      %2259 = vmatprep.subr.bf16.mxu0 0
      %2260 = vmatpush1.bf16.msra.mxu0 %v2255
      %2261 = vmatprep.subr.bf16.mxu0 0
      %2262 = vmatpush1.bf16.msra.mxu0 0
      %2263 = vmatprep.subr.bf16.mxu0 0
      %2264 = vmatpush1.bf16.msra.mxu0 0
      %2265 = vmatprep.subr.bf16.mxu0 0
      %2266 = vmatpush1.bf16.msra.mxu0 0
      %2267 = vmatprep.subr.bf16.mxu0 0
      %2268 = vmatpush1.bf16.msra.mxu0 0
      %2269 = vmatprep.subr.bf16.mxu0 0
      %2270 = vmatpush1.bf16.msra.mxu0 0
      %2271 = vmatprep.subr.bf16.mxu0 0
      %2272 = vmatpush1.bf16.msra.mxu0 0
      %2273 = vmatprep.subr.bf16.mxu0 0
      %2274 = vmatpush1.bf16.msra.mxu0 0
      %2275 = vmatprep.subr.bf16.mxu0 0
      %2276 = vmatpush1.bf16.msra.mxu0 0
      %2277 = vmatprep.subr.bf16.mxu0 0
      %2278 = vmatpush1.bf16.msra.mxu0 0
      %2279 = vmatprep.subr.bf16.mxu0 0
      %2280 = vmatpush1.bf16.msra.mxu0 0
      %2281 = vmatprep.subr.bf16.mxu0 0
      %2282 = vmatpush1.bf16.msra.mxu0 0
      %2283 = vmatprep.subr.bf16.mxu0 0
      %2284 = vmatpush1.bf16.msra.mxu0 0
      %2285 = vmatprep.subr.bf16.mxu0 0
      %2286 = vmatpush1.bf16.msra.mxu0 0
      %2287 = vmatprep.subr.bf16.mxu0 0
      %2288 = vmatpush1.bf16.msra.mxu0 0
      %2289 = vmatprep.mubr.bf16.mxu0 0
      %2290 = vmatmul.mubr.bf16.gmra.mrb[0].mxu0 %v2249
      %v2291 = vpop.f32.mrb[0].mxu0
      %v2292 = vadd.f32 0.0, %v2291
      %v2293 = vpop.f32.mrb[0].mxu0
      %v2294 = vpop.f32.mrb[0].mxu0
      %v2295 = vadd.f32 0.0, %v2294
      %v2296 = vpop.f32.mrb[0].mxu0
      %2297 = vmatprep.mubr.bf16.mxu0 0
      %2298 = vmatmul.mubr.bf16.gmra.mrb[0].mxu0 %v2252
      %v2299 = vpop.f32.mrb[0].mxu0
      %v2300 = vadd.f32 0.0, %v2299
      %v2301 = vpop.f32.mrb[0].mxu0
      %v2302 = vpop.f32.mrb[0].mxu0
      %v2303 = vpop.f32.mrb[0].mxu0
      %2304 = vdwg.mxu0
      %2305 = vrot.lane.b32.xlu0 %v1271, 64
      %v2306 = vpop.permute.xlu0 %2305
      %2307 = vrot.lane.b32.xlu0 %v1272, 64
      %v2308 = vpop.permute.xlu0 %2307
      %v2311 = vsel %vm1834, %v2106, 0
      %v2314 = vsel %vm1834, %v2107, 0
      %v2317 = vand.u32 %v2308, %v2129
      %2319 = vmatprep.subr.bf16.mxu0 0
      %2320 = vmatpush1.bf16.msra.mxu0 %v2306
      %2321 = vmatprep.subr.bf16.mxu0 0
      %2322 = vmatpush1.bf16.msra.mxu0 %v2317
      %2323 = vmatprep.subr.bf16.mxu0 0
      %2324 = vmatpush1.bf16.msra.mxu0 0
      %2325 = vmatprep.subr.bf16.mxu0 0
      %2326 = vmatpush1.bf16.msra.mxu0 0
      %2327 = vmatprep.subr.bf16.mxu0 0
      %2328 = vmatpush1.bf16.msra.mxu0 0
      %2329 = vmatprep.subr.bf16.mxu0 0
      %2330 = vmatpush1.bf16.msra.mxu0 0
      %2331 = vmatprep.subr.bf16.mxu0 0
      %2332 = vmatpush1.bf16.msra.mxu0 0
      %2333 = vmatprep.subr.bf16.mxu0 0
      %2334 = vmatpush1.bf16.msra.mxu0 0
      %2335 = vmatprep.subr.bf16.mxu0 0
      %2336 = vmatpush1.bf16.msra.mxu0 0
      %2337 = vmatprep.subr.bf16.mxu0 0
      %2338 = vmatpush1.bf16.msra.mxu0 0
      %2339 = vmatprep.subr.bf16.mxu0 0
      %2340 = vmatpush1.bf16.msra.mxu0 0
      %2341 = vmatprep.subr.bf16.mxu0 0
      %2342 = vmatpush1.bf16.msra.mxu0 0
      %2343 = vmatprep.subr.bf16.mxu0 0
      %2344 = vmatpush1.bf16.msra.mxu0 0
      %2345 = vmatprep.subr.bf16.mxu0 0
      %2346 = vmatpush1.bf16.msra.mxu0 0
      %2347 = vmatprep.subr.bf16.mxu0 0
      %2348 = vmatpush1.bf16.msra.mxu0 0
      %2349 = vmatprep.subr.bf16.mxu0 0
      %2350 = vmatpush1.bf16.msra.mxu0 0
      %2351 = vmatprep.mubr.bf16.mxu0 0
      %2352 = vmatmul.mubr.bf16.gmra.mrb[0].mxu0 %v2311
      %v2353 = vpop.f32.mrb[0].mxu0
      %v2354 = vadd.f32 0.0, %v2353
      %v2355 = vpop.f32.mrb[0].mxu0
      %v2356 = vpop.f32.mrb[0].mxu0
      %v2357 = vadd.f32 0.0, %v2356
      %v2358 = vpop.f32.mrb[0].mxu0
      %2359 = vmatprep.mubr.bf16.mxu0 0
      %2360 = vmatmul.mubr.bf16.gmra.mrb[0].mxu0 %v2314
      %v2361 = vpop.f32.mrb[0].mxu0
      %v2362 = vadd.f32 0.0, %v2361
      %v2363 = vpop.f32.mrb[0].mxu0
      %v2364 = vpop.f32.mrb[0].mxu0
      %v2365 = vpop.f32.mrb[0].mxu0
      %2366 = vdwg.mxu0
      %2367 = vrot.lane.b32.xlu0 %v1273, 64
      %v2368 = vpop.permute.xlu0 %2367
      %2369 = vrot.lane.b32.xlu0 %v1274, 64
      %v2370 = vpop.permute.xlu0 %2369
      %v2373 = vsel %vm1834, %v2108, 0
      %v2376 = vsel %vm1834, %v2109, 0
      %v2379 = vand.u32 %v2370, %v2129
      %2381 = vmatprep.subr.bf16.mxu0 0
      %2382 = vmatpush1.bf16.msra.mxu0 %v2368
      %2383 = vmatprep.subr.bf16.mxu0 0
      %2384 = vmatpush1.bf16.msra.mxu0 %v2379
      %2385 = vmatprep.subr.bf16.mxu0 0
      %2386 = vmatpush1.bf16.msra.mxu0 0
      %2387 = vmatprep.subr.bf16.mxu0 0
      %2388 = vmatpush1.bf16.msra.mxu0 0
      %2389 = vmatprep.subr.bf16.mxu0 0
      %2390 = vmatpush1.bf16.msra.mxu0 0
      %2391 = vmatprep.subr.bf16.mxu0 0
      %2392 = vmatpush1.bf16.msra.mxu0 0
      %2393 = vmatprep.subr.bf16.mxu0 0
      %2394 = vmatpush1.bf16.msra.mxu0 0
      %2395 = vmatprep.subr.bf16.mxu0 0
      %2396 = vmatpush1.bf16.msra.mxu0 0
      %2397 = vmatprep.subr.bf16.mxu0 0
      %2398 = vmatpush1.bf16.msra.mxu0 0
      %2399 = vmatprep.subr.bf16.mxu0 0
      %2400 = vmatpush1.bf16.msra.mxu0 0
      %2401 = vmatprep.subr.bf16.mxu0 0
      %2402 = vmatpush1.bf16.msra.mxu0 0
      %2403 = vmatprep.subr.bf16.mxu0 0
      %2404 = vmatpush1.bf16.msra.mxu0 0
      %2405 = vmatprep.subr.bf16.mxu0 0
      %2406 = vmatpush1.bf16.msra.mxu0 0
      %2407 = vmatprep.subr.bf16.mxu0 0
      %2408 = vmatpush1.bf16.msra.mxu0 0
      %2409 = vmatprep.subr.bf16.mxu0 0
      %2410 = vmatpush1.bf16.msra.mxu0 0
      %2411 = vmatprep.subr.bf16.mxu0 0
      %2412 = vmatpush1.bf16.msra.mxu0 0
      %2413 = vmatprep.mubr.bf16.mxu0 0
      %2414 = vmatmul.mubr.bf16.gmra.mrb[0].mxu0 %v2373
      %v2415 = vpop.f32.mrb[0].mxu0
      %v2416 = vadd.f32 0.0, %v2415
      %v2417 = vpop.f32.mrb[0].mxu0
      %v2418 = vpop.f32.mrb[0].mxu0
      %v2419 = vadd.f32 0.0, %v2418
      %v2420 = vpop.f32.mrb[0].mxu0
      %2421 = vmatprep.mubr.bf16.mxu0 0
      %2422 = vmatmul.mubr.bf16.gmra.mrb[0].mxu0 %v2376
      %v2423 = vpop.f32.mrb[0].mxu0
      %v2424 = vadd.f32 0.0, %v2423
      %v2425 = vpop.f32.mrb[0].mxu0
      %v2426 = vpop.f32.mrb[0].mxu0
      %v2427 = vpop.f32.mrb[0].mxu0
      %2428 = vdwg.mxu0
      %2429 = vrot.lane.b32.xlu0 %v1275, 64
      %v2430 = vpop.permute.xlu0 %2429
      %2431 = vrot.lane.b32.xlu0 %v1276, 64
      %v2432 = vpop.permute.xlu0 %2431
      %v2435 = vsel %vm1834, %v2110, 0
      %v2438 = vsel %vm1834, %v2111, 0
      %v2441 = vand.u32 %v2432, %v2129
      %2443 = vmatprep.subr.bf16.mxu0 0
      %2444 = vmatpush1.bf16.msra.mxu0 %v2430
      %2445 = vmatprep.subr.bf16.mxu0 0
      %2446 = vmatpush1.bf16.msra.mxu0 %v2441
      %2447 = vmatprep.subr.bf16.mxu0 0
      %2448 = vmatpush1.bf16.msra.mxu0 0
      %2449 = vmatprep.subr.bf16.mxu0 0
      %2450 = vmatpush1.bf16.msra.mxu0 0
      %2451 = vmatprep.subr.bf16.mxu0 0
      %2452 = vmatpush1.bf16.msra.mxu0 0
      %2453 = vmatprep.subr.bf16.mxu0 0
      %2454 = vmatpush1.bf16.msra.mxu0 0
      %2455 = vmatprep.subr.bf16.mxu0 0
      %2456 = vmatpush1.bf16.msra.mxu0 0
      %2457 = vmatprep.subr.bf16.mxu0 0
      %2458 = vmatpush1.bf16.msra.mxu0 0
      %2459 = vmatprep.subr.bf16.mxu0 0
      %2460 = vmatpush1.bf16.msra.mxu0 0
      %2461 = vmatprep.subr.bf16.mxu0 0
      %2462 = vmatpush1.bf16.msra.mxu0 0
      %2463 = vmatprep.subr.bf16.mxu0 0
      %2464 = vmatpush1.bf16.msra.mxu0 0
      %2465 = vmatprep.subr.bf16.mxu0 0
      %2466 = vmatpush1.bf16.msra.mxu0 0
      %2467 = vmatprep.subr.bf16.mxu0 0
      %2468 = vmatpush1.bf16.msra.mxu0 0
      %2469 = vmatprep.subr.bf16.mxu0 0
      %2470 = vmatpush1.bf16.msra.mxu0 0
      %2471 = vmatprep.subr.bf16.mxu0 0
      %2472 = vmatpush1.bf16.msra.mxu0 0
      %2473 = vmatprep.subr.bf16.mxu0 0
      %2474 = vmatpush1.bf16.msra.mxu0 0
      %2475 = vmatprep.mubr.bf16.mxu0 0
      %2476 = vmatmul.mubr.bf16.gmra.mrb[0].mxu0 %v2435
      %v2477 = vpop.f32.mrb[0].mxu0
      %v2478 = vadd.f32 0.0, %v2477
      %v2479 = vpop.f32.mrb[0].mxu0
      %v2480 = vpop.f32.mrb[0].mxu0
      %v2481 = vadd.f32 0.0, %v2480
      %v2482 = vpop.f32.mrb[0].mxu0
      %2483 = vmatprep.mubr.bf16.mxu0 0
      %2484 = vmatmul.mubr.bf16.gmra.mrb[0].mxu0 %v2438
      %v2485 = vpop.f32.mrb[0].mxu0
      %v2486 = vadd.f32 0.0, %v2485
      %v2487 = vpop.f32.mrb[0].mxu0
      %v2488 = vpop.f32.mrb[0].mxu0
      %v2489 = vpop.f32.mrb[0].mxu0
      %2490 = vdwg.mxu0
      %2491 = vrot.lane.b32.xlu0 %v1277, 64
      %v2492 = vpop.permute.xlu0 %2491
      %2493 = vrot.lane.b32.xlu0 %v1278, 64
      %v2494 = vpop.permute.xlu0 %2493
      %v2497 = vsel %vm1834, %v2112, 0
      %v2500 = vsel %vm1834, %v2113, 0
      %v2503 = vand.u32 %v2494, %v2129
      %2505 = vmatprep.subr.bf16.mxu0 0
      %2506 = vmatpush1.bf16.msra.mxu0 %v2492
      %2507 = vmatprep.subr.bf16.mxu0 0
      %2508 = vmatpush1.bf16.msra.mxu0 %v2503
      %2509 = vmatprep.subr.bf16.mxu0 0
      %2510 = vmatpush1.bf16.msra.mxu0 0
      %2511 = vmatprep.subr.bf16.mxu0 0
      %2512 = vmatpush1.bf16.msra.mxu0 0
      %2513 = vmatprep.subr.bf16.mxu0 0
      %2514 = vmatpush1.bf16.msra.mxu0 0
      %2515 = vmatprep.subr.bf16.mxu0 0
      %2516 = vmatpush1.bf16.msra.mxu0 0
      %2517 = vmatprep.subr.bf16.mxu0 0
      %2518 = vmatpush1.bf16.msra.mxu0 0
      %2519 = vmatprep.subr.bf16.mxu0 0
      %2520 = vmatpush1.bf16.msra.mxu0 0
      %2521 = vmatprep.subr.bf16.mxu0 0
      %2522 = vmatpush1.bf16.msra.mxu0 0
      %2523 = vmatprep.subr.bf16.mxu0 0
      %2524 = vmatpush1.bf16.msra.mxu0 0
      %2525 = vmatprep.subr.bf16.mxu0 0
      %2526 = vmatpush1.bf16.msra.mxu0 0
      %2527 = vmatprep.subr.bf16.mxu0 0
      %2528 = vmatpush1.bf16.msra.mxu0 0
      %2529 = vmatprep.subr.bf16.mxu0 0
      %2530 = vmatpush1.bf16.msra.mxu0 0
      %2531 = vmatprep.subr.bf16.mxu0 0
      %2532 = vmatpush1.bf16.msra.mxu0 0
      %2533 = vmatprep.subr.bf16.mxu0 0
      %2534 = vmatpush1.bf16.msra.mxu0 0
      %2535 = vmatprep.subr.bf16.mxu0 0
      %2536 = vmatpush1.bf16.msra.mxu0 0
      %2537 = vmatprep.mubr.bf16.mxu0 0
      %2538 = vmatmul.mubr.bf16.gmra.mrb[0].mxu0 %v2497
      %v2539 = vpop.f32.mrb[0].mxu0
      %v2540 = vadd.f32 0.0, %v2539
      %v2541 = vpop.f32.mrb[0].mxu0
      %v2542 = vpop.f32.mrb[0].mxu0
      %v2543 = vadd.f32 0.0, %v2542
      %v2544 = vpop.f32.mrb[0].mxu0
      %2545 = vmatprep.mubr.bf16.mxu0 0
      %2546 = vmatmul.mubr.bf16.gmra.mrb[0].mxu0 %v2500
      %v2547 = vpop.f32.mrb[0].mxu0
      %v2548 = vadd.f32 0.0, %v2547
      %v2549 = vpop.f32.mrb[0].mxu0
      %v2550 = vpop.f32.mrb[0].mxu0
      %v2551 = vpop.f32.mrb[0].mxu0
      %2552 = vdwg.mxu0
      %2553 = vrot.lane.b32.xlu0 %v1279, 64
      %v2554 = vpop.permute.xlu0 %2553
      %2555 = vrot.lane.b32.xlu0 %v1280, 64
      %v2556 = vpop.permute.xlu0 %2555
      %v2559 = vsel %vm1834, %v2114, 0
      %v2562 = vsel %vm1834, %v2115, 0
      %v2565 = vand.u32 %v2556, %v2129
      %2567 = vmatprep.subr.bf16.mxu0 0
      %2568 = vmatpush1.bf16.msra.mxu0 %v2554
      %2569 = vmatprep.subr.bf16.mxu0 0
      %2570 = vmatpush1.bf16.msra.mxu0 %v2565
      %2571 = vmatprep.subr.bf16.mxu0 0
      %2572 = vmatpush1.bf16.msra.mxu0 0
      %2573 = vmatprep.subr.bf16.mxu0 0
      %2574 = vmatpush1.bf16.msra.mxu0 0
      %2575 = vmatprep.subr.bf16.mxu0 0
      %2576 = vmatpush1.bf16.msra.mxu0 0
      %2577 = vmatprep.subr.bf16.mxu0 0
      %2578 = vmatpush1.bf16.msra.mxu0 0
      %2579 = vmatprep.subr.bf16.mxu0 0
      %2580 = vmatpush1.bf16.msra.mxu0 0
      %2581 = vmatprep.subr.bf16.mxu0 0
      %2582 = vmatpush1.bf16.msra.mxu0 0
      %2583 = vmatprep.subr.bf16.mxu0 0
      %2584 = vmatpush1.bf16.msra.mxu0 0
      %2585 = vmatprep.subr.bf16.mxu0 0
      %2586 = vmatpush1.bf16.msra.mxu0 0
      %2587 = vmatprep.subr.bf16.mxu0 0
      %2588 = vmatpush1.bf16.msra.mxu0 0
      %2589 = vmatprep.subr.bf16.mxu0 0
      %2590 = vmatpush1.bf16.msra.mxu0 0
      %2591 = vmatprep.subr.bf16.mxu0 0
      %2592 = vmatpush1.bf16.msra.mxu0 0
      %2593 = vmatprep.subr.bf16.mxu0 0
      %2594 = vmatpush1.bf16.msra.mxu0 0
      %2595 = vmatprep.subr.bf16.mxu0 0
      %2596 = vmatpush1.bf16.msra.mxu0 0
      %2597 = vmatprep.subr.bf16.mxu0 0
      %2598 = vmatpush1.bf16.msra.mxu0 0
      %2599 = vmatprep.mubr.bf16.mxu0 0
      %2600 = vmatmul.mubr.bf16.gmra.mrb[0].mxu0 %v2559
      %v2601 = vpop.f32.mrb[0].mxu0
      %v2602 = vadd.f32 0.0, %v2601
      %v2603 = vpop.f32.mrb[0].mxu0
      %v2604 = vpop.f32.mrb[0].mxu0
      %v2605 = vadd.f32 0.0, %v2604
      %v2606 = vpop.f32.mrb[0].mxu0
      %2607 = vmatprep.mubr.bf16.mxu0 0
      %2608 = vmatmul.mubr.bf16.gmra.mrb[0].mxu0 %v2562
      %v2609 = vpop.f32.mrb[0].mxu0
      %v2610 = vadd.f32 0.0, %v2609
      %v2611 = vpop.f32.mrb[0].mxu0
      %v2612 = vpop.f32.mrb[0].mxu0
      %v2613 = vpop.f32.mrb[0].mxu0
      %2614 = vdwg.mxu0
      %2618 = vrot.lane.b32.xlu0 %v2230, 8
      %v2619 = vpop.permute.xlu0 %2618
      %2620 = vrot.lane.b32.xlu0 %v2233, 8
      %v2621 = vpop.permute.xlu0 %2620
      %2622 = vrot.lane.b32.xlu0 %v2238, 8
      %v2623 = vpop.permute.xlu0 %2622
      %2630 = vrot.lane.b32.xlu0 %v2292, 16
      %v2631 = vpop.permute.xlu0 %2630
      %2632 = vrot.lane.b32.xlu0 %v2295, 16
      %v2633 = vpop.permute.xlu0 %2632
      %2634 = vrot.lane.b32.xlu0 %v2300, 16
      %v2635 = vpop.permute.xlu0 %2634
      %2642 = vrot.lane.b32.xlu0 %v2354, 24
      %v2643 = vpop.permute.xlu0 %2642
      %2644 = vrot.lane.b32.xlu0 %v2357, 24
      %v2645 = vpop.permute.xlu0 %2644
      %2646 = vrot.lane.b32.xlu0 %v2362, 24
      %v2647 = vpop.permute.xlu0 %2646
      %v2651 = vsel %vm1287, %v2168, %v2619
      %v2652 = vsel %vm1287, %v2171, %v2621
      %v2653 = vsel %vm1287, %v2176, %v2623
      %vm2654 = vcmask 130048
      %v2655 = vsel %vm2654, %v2651, %v2631
      %v2656 = vsel %vm2654, %v2652, %v2633
      %v2657 = vsel %vm2654, %v2653, %v2635
      %vm2658 = vcmask 195584
      %v2659 = vsel %vm2658, %v2655, %v2643
      %v2660 = vsel %vm2658, %v2656, %v2645
      %v2661 = vsel %vm2658, %v2657, %v2647
      %2665 = vrot.lane.b32.xlu0 %v2478, 8
      %v2666 = vpop.permute.xlu0 %2665
      %2667 = vrot.lane.b32.xlu0 %v2481, 8
      %v2668 = vpop.permute.xlu0 %2667
      %2669 = vrot.lane.b32.xlu0 %v2486, 8
      %v2670 = vpop.permute.xlu0 %2669
      %2677 = vrot.lane.b32.xlu0 %v2540, 16
      %v2678 = vpop.permute.xlu0 %2677
      %2679 = vrot.lane.b32.xlu0 %v2543, 16
      %v2680 = vpop.permute.xlu0 %2679
      %2681 = vrot.lane.b32.xlu0 %v2548, 16
      %v2682 = vpop.permute.xlu0 %2681
      %2689 = vrot.lane.b32.xlu0 %v2602, 24
      %v2690 = vpop.permute.xlu0 %2689
      %2691 = vrot.lane.b32.xlu0 %v2605, 24
      %v2692 = vpop.permute.xlu0 %2691
      %2693 = vrot.lane.b32.xlu0 %v2610, 24
      %v2694 = vpop.permute.xlu0 %2693
      %v2698 = vsel %vm1287, %v2416, %v2666
      %v2699 = vsel %vm1287, %v2419, %v2668
      %v2700 = vsel %vm1287, %v2424, %v2670
      %v2701 = vsel %vm2654, %v2698, %v2678
      %v2702 = vsel %vm2654, %v2699, %v2680
      %v2703 = vsel %vm2654, %v2700, %v2682
      %v2704 = vsel %vm2658, %v2701, %v2690
      %v2705 = vsel %vm2658, %v2702, %v2692
      %v2706 = vsel %vm2658, %v2703, %v2694
      %v2710 = vrot.slane %v2704, 7
      %v2711 = vrot.slane %v2705, 7
      %v2712 = vsel %vm2127, %v2710, %v2711
      %v2713 = vrot.slane %v2706, 7
      %v2714 = vsel %vm2127, %v2711, %v2713
      %v2718 = vsel %vm2127, %v2661, %v2710
      %v2719 = vpack.c.bf16 %v2660, %v2659
      %v2720 = vpack.c.bf16 %v2712, %v2718
      %v2721 = vpack.c.bf16 %v2714, %v2714
      %v2723 = vlaneseq
      %v2724 = vshrl.u32 %v2723, 7
      %v2725 = vsub.s32 0, %v2724
      %v2726 = vrot.slane %v996, %v2725
      %v2732 = vunpack.c.l.b16 %v992
      %v2733 = vunpack.c.l.b16 %v993
      %v2734 = vunpack.c.l.b16 %v994
      %v2735 = vunpack.c.l.b16 %v995
      %v2736 = vpack.c.b16 %v2733, %v2732
      %v2737 = vpack.c.b16 %v2735, %v2734
      %v2741 = vsel %vm1021, %v2719, 0
      %v2744 = vsel %vm1021, %v2720, 0
      %v2747 = vsel %vm1021, %v2721, 0
      %2749 = vmatprep.subr.bf16.mxu0 0
      %2750 = vmatpush1.bf16.msra.mxu0 %v2736
      %2751 = vmatprep.subr.bf16.mxu0 0
      %2752 = vmatpush1.bf16.msra.mxu0 %v2737
      %2753 = vmatprep.subr.bf16.mxu0 0
      %2754 = vmatpush1.bf16.msra.mxu0 0
      %2755 = vmatprep.subr.bf16.mxu0 0
      %2756 = vmatpush1.bf16.msra.mxu0 0
      %2757 = vmatprep.subr.bf16.mxu0 0
      %2758 = vmatpush1.bf16.msra.mxu0 0
      %2759 = vmatprep.subr.bf16.mxu0 0
      %2760 = vmatpush1.bf16.msra.mxu0 0
      %2761 = vmatprep.subr.bf16.mxu0 0
      %2762 = vmatpush1.bf16.msra.mxu0 0
      %2763 = vmatprep.subr.bf16.mxu0 0
      %2764 = vmatpush1.bf16.msra.mxu0 0
      %2765 = vmatprep.subr.bf16.mxu0 0
      %2766 = vmatpush1.bf16.msra.mxu0 0
      %2767 = vmatprep.subr.bf16.mxu0 0
      %2768 = vmatpush1.bf16.msra.mxu0 0
      %2769 = vmatprep.subr.bf16.mxu0 0
      %2770 = vmatpush1.bf16.msra.mxu0 0
      %2771 = vmatprep.subr.bf16.mxu0 0
      %2772 = vmatpush1.bf16.msra.mxu0 0
      %2773 = vmatprep.subr.bf16.mxu0 0
      %2774 = vmatpush1.bf16.msra.mxu0 0
      %2775 = vmatprep.subr.bf16.mxu0 0
      %2776 = vmatpush1.bf16.msra.mxu0 0
      %2777 = vmatprep.subr.bf16.mxu0 0
      %2778 = vmatpush1.bf16.msra.mxu0 0
      %2779 = vmatprep.subr.bf16.mxu0 0
      %2780 = vmatpush1.bf16.msra.mxu0 0
      %2781 = vmatprep.mubr.bf16.mxu0 0
      %2782 = vmatmul.mubr.bf16.gmra.mrb[0].mxu0 %v2741
      %v2783 = vpop.f32.mrb[0].mxu0
      %v2784 = vadd.f32 %v2726, %v2783
      %v2785 = vpop.f32.mrb[0].mxu0
      %v2786 = vpop.f32.mrb[0].mxu0
      %v2787 = vadd.f32 %v2726, %v2786
      %v2788 = vpop.f32.mrb[0].mxu0
      %2789 = vmatprep.mubr.bf16.mxu0 0
      %2790 = vmatmul.mubr.bf16.gmra.mrb[0].mxu0 %v2744
      %v2791 = vpop.f32.mrb[0].mxu0
      %v2792 = vadd.f32 %v2726, %v2791
      %v2793 = vpop.f32.mrb[0].mxu0
      %v2794 = vpop.f32.mrb[0].mxu0
      %v2795 = vadd.f32 %v2726, %v2794
      %v2796 = vpop.f32.mrb[0].mxu0
      %2797 = vmatprep.mubr.bf16.mxu0 0
      %2798 = vmatmul.mubr.bf16.gmra.mrb[0].mxu0 %v2747
      %v2799 = vpop.f32.mrb[0].mxu0
      %v2800 = vadd.f32 %v2726, %v2799
      %v2801 = vpop.f32.mrb[0].mxu0
      %v2802 = vpop.f32.mrb[0].mxu0
      %v2803 = vpop.f32.mrb[0].mxu0
      %2804 = vdwg.mxu0
      %v2805 = vadd.f32 %v980, %v2784
      %v2806 = vadd.f32 %v981, %v2787
      %v2807 = vadd.f32 %v982, %v2792
      %v2808 = vadd.f32 %v983, %v2795
      %v2809 = vadd.f32 %v984, %v2800
      %v2810 = vsel %vm1021, %v2805, 0.0
      %2811 = vadd.xlane.f32.xlu0 %v2810
      %v2812 = vpop.xlane.xlu0 %2811
      %v2813 = vsel %vm1021, %v2806, 0.0
      %2814 = vadd.xlane.f32.xlu0 %v2813
      %v2815 = vpop.xlane.xlu0 %2814
      %v2816 = vsel %vm1021, %v2807, 0.0
      %2817 = vadd.xlane.f32.xlu0 %v2816
      %v2818 = vpop.xlane.xlu0 %2817
      %v2819 = vsel %vm1021, %v2808, 0.0
      %2820 = vadd.xlane.f32.xlu0 %v2819
      %v2821 = vpop.xlane.xlu0 %2820
      %v2822 = vsel %vm1034, %v2809, 0.0
      %2823 = vadd.xlane.f32.xlu0 %v2822
      %v2824 = vpop.xlane.xlu0 %2823
      %v2825 = vmul.f32 %v2812, %v1038
      %v2826 = vmul.f32 %v2815, %v1038
      %v2827 = vmul.f32 %v2818, %v1038
      %v2828 = vmul.f32 %v2821, %v1038
      %v2829 = vmul.f32 %v2824, %v1038
      %v2830 = vsub.f32 %v2805, %v2825
      %v2831 = vsub.f32 %v2806, %v2826
      %v2832 = vsub.f32 %v2807, %v2827
      %v2833 = vsub.f32 %v2808, %v2828
      %v2834 = vsub.f32 %v2809, %v2829
      %v2835 = vmul.f32 %v2830, %v2830
      %v2836 = vmul.f32 %v2831, %v2831
      %v2837 = vmul.f32 %v2832, %v2832
      %v2838 = vmul.f32 %v2833, %v2833
      %v2839 = vmul.f32 %v2834, %v2834
      %v2840 = vsel %vm1021, %v2835, 0.0
      %2841 = vadd.xlane.f32.xlu0 %v2840
      %v2842 = vpop.xlane.xlu0 %2841
      %v2843 = vsel %vm1021, %v2836, 0.0
      %2844 = vadd.xlane.f32.xlu0 %v2843
      %v2845 = vpop.xlane.xlu0 %2844
      %v2846 = vsel %vm1021, %v2837, 0.0
      %2847 = vadd.xlane.f32.xlu0 %v2846
      %v2848 = vpop.xlane.xlu0 %2847
      %v2849 = vsel %vm1021, %v2838, 0.0
      %2850 = vadd.xlane.f32.xlu0 %v2849
      %v2851 = vpop.xlane.xlu0 %2850
      %v2852 = vsel %vm1034, %v2839, 0.0
      %2853 = vadd.xlane.f32.xlu0 %v2852
      %v2854 = vpop.xlane.xlu0 %2853
      %v2855 = vmul.f32 %v2842, %v1038
      %v2856 = vmul.f32 %v2845, %v1038
      %v2857 = vmul.f32 %v2848, %v1038
      %v2858 = vmul.f32 %v2851, %v1038
      %v2859 = vmul.f32 %v2854, %v1038
      %v2860 = vadd.f32 %v2855, 1e-05
      %v2861 = vadd.f32 %v2856, 1e-05
      %v2862 = vadd.f32 %v2857, 1e-05
      %v2863 = vadd.f32 %v2858, 1e-05
      %v2864 = vadd.f32 %v2859, 1e-05
      %v2865 = vrsqrt.pop %v2860
      %v2866 = vrsqrt.pop %v2861
      %v2867 = vrsqrt.pop %v2862
      %v2868 = vrsqrt.pop %v2863
      %v2869 = vrsqrt.pop %v2864
      %v2870 = vmul.f32 %v2830, %v2865
      %v2871 = vmul.f32 %v2831, %v2866
      %v2872 = vmul.f32 %v2832, %v2867
      %v2873 = vmul.f32 %v2833, %v2868
      %v2874 = vmul.f32 %v2834, %v2869
      %v2876 = vlaneseq
      %v2877 = vshrl.u32 %v2876, 7
      %v2878 = vsub.s32 0, %v2877
      %v2879 = vrot.slane %v997, %v2878
      %v2881 = vmul.f32 %v2870, %v2879
      %v2882 = vmul.f32 %v2871, %v2879
      %v2883 = vmul.f32 %v2872, %v2879
      %v2884 = vmul.f32 %v2873, %v2879
      %v2885 = vmul.f32 %v2874, %v2879
      %v2887 = vlaneseq
      %v2888 = vshrl.u32 %v2887, 7
      %v2889 = vsub.s32 0, %v2888
      %v2890 = vrot.slane %v998, %v2889
      %v2892 = vadd.f32 %v2881, %v2890
      %v2893 = vadd.f32 %v2882, %v2890
      %v2894 = vadd.f32 %v2883, %v2890
      %v2895 = vadd.f32 %v2884, %v2890
      %v2896 = vadd.f32 %v2885, %v2890
      %v2897 = vpack.c.bf16 %v2893, %v2892
      %v2898 = vpack.c.bf16 %v2895, %v2894
      %v2899 = vpack.c.bf16 %v2896, %v2896
      %v2901 = vlaneseq
      %v2902 = vshrl.u32 %v2901, 7
      %v2903 = vsub.s32 0, %v2902
      %v2904 = vrot.slane %v1003, %v2903
      %v2910 = vunpack.c.l.b16 %v999
      %v2911 = vunpack.c.l.b16 %v1000
      %v2912 = vunpack.c.l.b16 %v1001
      %v2913 = vunpack.c.l.b16 %v1002
      %v2914 = vpack.c.b16 %v2911, %v2910
      %v2915 = vpack.c.b16 %v2913, %v2912
      %v2919 = vsel %vm1021, %v2897, 0
      %v2922 = vsel %vm1021, %v2898, 0
      %v2925 = vsel %vm1021, %v2899, 0
      %2927 = vmatprep.subr.bf16.mxu0 0
      %2928 = vmatpush1.bf16.msra.mxu0 %v2914
      %2929 = vmatprep.subr.bf16.mxu0 0
      %2930 = vmatpush1.bf16.msra.mxu0 %v2915
      %2931 = vmatprep.subr.bf16.mxu0 0
      %2932 = vmatpush1.bf16.msra.mxu0 0
      %2933 = vmatprep.subr.bf16.mxu0 0
      %2934 = vmatpush1.bf16.msra.mxu0 0
      %2935 = vmatprep.subr.bf16.mxu0 0
      %2936 = vmatpush1.bf16.msra.mxu0 0
      %2937 = vmatprep.subr.bf16.mxu0 0
      %2938 = vmatpush1.bf16.msra.mxu0 0
      %2939 = vmatprep.subr.bf16.mxu0 0
      %2940 = vmatpush1.bf16.msra.mxu0 0
      %2941 = vmatprep.subr.bf16.mxu0 0
      %2942 = vmatpush1.bf16.msra.mxu0 0
      %2943 = vmatprep.subr.bf16.mxu0 0
      %2944 = vmatpush1.bf16.msra.mxu0 0
      %2945 = vmatprep.subr.bf16.mxu0 0
      %2946 = vmatpush1.bf16.msra.mxu0 0
      %2947 = vmatprep.subr.bf16.mxu0 0
      %2948 = vmatpush1.bf16.msra.mxu0 0
      %2949 = vmatprep.subr.bf16.mxu0 0
      %2950 = vmatpush1.bf16.msra.mxu0 0
      %2951 = vmatprep.subr.bf16.mxu0 0
      %2952 = vmatpush1.bf16.msra.mxu0 0
      %2953 = vmatprep.subr.bf16.mxu0 0
      %2954 = vmatpush1.bf16.msra.mxu0 0
      %2955 = vmatprep.subr.bf16.mxu0 0
      %2956 = vmatpush1.bf16.msra.mxu0 0
      %2957 = vmatprep.subr.bf16.mxu0 0
      %2958 = vmatpush1.bf16.msra.mxu0 0
      %2959 = vmatprep.mubr.bf16.mxu0 0
      %2960 = vmatmul.mubr.bf16.gmra.mrb[0].mxu0 %v2919
      %v2961 = vpop.f32.mrb[0].mxu0
      %v2962 = vadd.f32 %v2904, %v2961
      %v2963 = vpop.f32.mrb[0].mxu0
      %v2964 = vpop.f32.mrb[0].mxu0
      %v2965 = vadd.f32 %v2904, %v2964
      %v2966 = vpop.f32.mrb[0].mxu0
      %2967 = vmatprep.mubr.bf16.mxu0 0
      %2968 = vmatmul.mubr.bf16.gmra.mrb[0].mxu0 %v2922
      %v2969 = vpop.f32.mrb[0].mxu0
      %v2970 = vadd.f32 %v2904, %v2969
      %v2971 = vpop.f32.mrb[0].mxu0
      %v2972 = vpop.f32.mrb[0].mxu0
      %v2973 = vadd.f32 %v2904, %v2972
      %v2974 = vpop.f32.mrb[0].mxu0
      %2975 = vmatprep.mubr.bf16.mxu0 0
      %2976 = vmatmul.mubr.bf16.gmra.mrb[0].mxu0 %v2925
      %v2977 = vpop.f32.mrb[0].mxu0
      %v2978 = vadd.f32 %v2904, %v2977
      %v2979 = vpop.f32.mrb[0].mxu0
      %v2980 = vpop.f32.mrb[0].mxu0
      %v2981 = vpop.f32.mrb[0].mxu0
      %2982 = vdwg.mxu0
      %v2983 = vmul.f32 %v2962, %v2962
      %v2984 = vmul.f32 %v2965, %v2965
      %v2985 = vmul.f32 %v2970, %v2970
      %v2986 = vmul.f32 %v2973, %v2973
      %v2987 = vmul.f32 %v2978, %v2978
      %v2988 = vmul.f32 %v2962, %v2983
      %v2989 = vmul.f32 %v2965, %v2984
      %v2990 = vmul.f32 %v2970, %v2985
      %v2991 = vmul.f32 %v2973, %v2986
      %v2992 = vmul.f32 %v2978, %v2987
      %v2993 = vmul.f32 %v2988, 0.044715
      %v2994 = vmul.f32 %v2989, 0.044715
      %v2995 = vmul.f32 %v2990, 0.044715
      %v2996 = vmul.f32 %v2991, 0.044715
      %v2997 = vmul.f32 %v2992, 0.044715
      %v2998 = vadd.f32 %v2962, %v2993
      %v2999 = vadd.f32 %v2965, %v2994
      %v3000 = vadd.f32 %v2970, %v2995
      %v3001 = vadd.f32 %v2973, %v2996
      %v3002 = vadd.f32 %v2978, %v2997
      %v3003 = vmul.f32 %v2998, 0.7978846
      %v3004 = vmul.f32 %v2999, 0.7978846
      %v3005 = vmul.f32 %v3000, 0.7978846
      %v3006 = vmul.f32 %v3001, 0.7978846
      %v3007 = vmul.f32 %v3002, 0.7978846
      %v3008 = vtanh.pop %v3003
      %v3009 = vtanh.pop %v3004
      %v3010 = vtanh.pop %v3005
      %v3011 = vtanh.pop %v3006
      %v3012 = vtanh.pop %v3007
      %v3013 = vadd.f32 %v3008, 1.0
      %v3014 = vadd.f32 %v3009, 1.0
      %v3015 = vadd.f32 %v3010, 1.0
      %v3016 = vadd.f32 %v3011, 1.0
      %v3017 = vadd.f32 %v3012, 1.0
      %v3018 = vmul.f32 %v3013, 0.5
      %v3019 = vmul.f32 %v3014, 0.5
      %v3020 = vmul.f32 %v3015, 0.5
      %v3021 = vmul.f32 %v3016, 0.5
      %v3022 = vmul.f32 %v3017, 0.5
      %v3023 = vmul.f32 %v2962, %v3018
      %v3024 = vmul.f32 %v2965, %v3019
      %v3025 = vmul.f32 %v2970, %v3020
      %v3026 = vmul.f32 %v2973, %v3021
      %v3027 = vmul.f32 %v2978, %v3022
      %v3028 = vpack.c.bf16 %v3024, %v3023
      %v3029 = vpack.c.bf16 %v3026, %v3025
      %v3030 = vpack.c.bf16 %v3027, %v3027
      %v3047 = vunpack.c.l.b16 %v1004
      %v3048 = vunpack.c.l.b16 %v1005
      %v3049 = vunpack.c.l.b16 %v1006
      %v3050 = vunpack.c.l.b16 %v1007
      %v3051 = vunpack.c.l.b16 %v1008
      %v3052 = vunpack.c.l.b16 %v1009
      %v3053 = vunpack.c.l.b16 %v1010
      %v3054 = vunpack.c.l.b16 %v1011
      %v3055 = vunpack.c.l.b16 %v1012
      %v3056 = vunpack.c.l.b16 %v1013
      %v3057 = vunpack.c.l.b16 %v1014
      %v3058 = vunpack.c.l.b16 %v1015
      %v3059 = vunpack.c.l.b16 %v1016
      %v3060 = vunpack.c.l.b16 %v1017
      %v3061 = vunpack.c.l.b16 %v1018
      %v3062 = vunpack.c.l.b16 %v1019
      %v3063 = vpack.c.b16 %v3048, %v3047
      %v3064 = vpack.c.b16 %v3050, %v3049
      %v3065 = vpack.c.b16 %v3052, %v3051
      %v3066 = vpack.c.b16 %v3054, %v3053
      %v3067 = vpack.c.b16 %v3056, %v3055
      %v3068 = vpack.c.b16 %v3058, %v3057
      %v3069 = vpack.c.b16 %v3060, %v3059
      %v3070 = vpack.c.b16 %v3062, %v3061
      %3079 = vmatprep.subr.bf16.mxu0 0
      %3080 = vmatpush1.bf16.msra.mxu0 %v3063
      %3081 = vmatprep.subr.bf16.mxu0 0
      %3082 = vmatpush1.bf16.msra.mxu0 %v3064
      %3083 = vmatprep.subr.bf16.mxu0 0
      %3084 = vmatpush1.bf16.msra.mxu0 %v3065
      %3085 = vmatprep.subr.bf16.mxu0 0
      %3086 = vmatpush1.bf16.msra.mxu0 %v3066
      %3087 = vmatprep.subr.bf16.mxu0 0
      %3088 = vmatpush1.bf16.msra.mxu0 %v3067
      %3089 = vmatprep.subr.bf16.mxu0 0
      %3090 = vmatpush1.bf16.msra.mxu0 %v3068
      %3091 = vmatprep.subr.bf16.mxu0 0
      %3092 = vmatpush1.bf16.msra.mxu0 %v3069
      %3093 = vmatprep.subr.bf16.mxu0 0
      %3094 = vmatpush1.bf16.msra.mxu0 %v3070
      %3095 = vmatprep.subr.bf16.mxu0 0
      %3096 = vmatpush1.bf16.msra.mxu0 0
      %3097 = vmatprep.subr.bf16.mxu0 0
      %3098 = vmatpush1.bf16.msra.mxu0 0
      %3099 = vmatprep.subr.bf16.mxu0 0
      %3100 = vmatpush1.bf16.msra.mxu0 0
      %3101 = vmatprep.subr.bf16.mxu0 0
      %3102 = vmatpush1.bf16.msra.mxu0 0
      %3103 = vmatprep.subr.bf16.mxu0 0
      %3104 = vmatpush1.bf16.msra.mxu0 0
      %3105 = vmatprep.subr.bf16.mxu0 0
      %3106 = vmatpush1.bf16.msra.mxu0 0
      %3107 = vmatprep.subr.bf16.mxu0 0
      %3108 = vmatpush1.bf16.msra.mxu0 0
      %3109 = vmatprep.subr.bf16.mxu0 0
      %3110 = vmatpush1.bf16.msra.mxu0 0
      %3111 = vmatprep.mubr.bf16.mxu0 0
      %3112 = vmatmul.mubr.bf16.gmra.mrb[0].mxu0 %v3028
      %v3113 = vpop.f32.mrb[0].mxu0
      %v3114 = vadd.f32 0.0, %v3113
      %v3115 = vpop.f32.mrb[0].mxu0
      %v3116 = vpop.f32.mrb[0].mxu0
      %v3117 = vadd.f32 0.0, %v3116
      %v3118 = vpop.f32.mrb[0].mxu0
      %3119 = vmatprep.mubr.bf16.mxu0 0
      %3120 = vmatmul.mubr.bf16.gmra.mrb[0].mxu0 %v3029
      %v3121 = vpop.f32.mrb[0].mxu0
      %v3122 = vadd.f32 0.0, %v3121
      %v3123 = vpop.f32.mrb[0].mxu0
      %v3124 = vpop.f32.mrb[0].mxu0
      %v3125 = vadd.f32 0.0, %v3124
      %v3126 = vpop.f32.mrb[0].mxu0
      %3127 = vmatprep.mubr.bf16.mxu0 0
      %3128 = vmatmul.mubr.bf16.gmra.mrb[0].mxu0 %v3030
      %v3129 = vpop.f32.mrb[0].mxu0
      %v3130 = vadd.f32 0.0, %v3129
      %v3131 = vpop.f32.mrb[0].mxu0
      %v3132 = vpop.f32.mrb[0].mxu0
      %v3133 = vpop.f32.mrb[0].mxu0
      %3134 = vdwg.mxu0
      %v3135 = vadd.f32 %v2805, %v3114
      %v3136 = vadd.f32 %v2806, %v3117
      %v3137 = vadd.f32 %v2807, %v3122
      %v3138 = vadd.f32 %v2808, %v3125
      %v3139 = vadd.f32 %v2809, %v3130
      %v3141 = vlaneseq
      %v3142 = vshrl.u32 %v3141, 7
      %v3143 = vsub.s32 0, %v3142
      %v3144 = vrot.slane %v1020, %v3143
      %v3146 = vadd.f32 %v3135, %v3144
      %v3147 = vadd.f32 %v3136, %v3144
      %v3148 = vadd.f32 %v3137, %v3144
      %v3149 = vadd.f32 %v3138, %v3144
      %v3150 = vadd.f32 %v3139, %v3144
      %3151 = vst.msk [vmem:[#allocation2] sm:$0xff] %vm1021, %v3146
      %3152 = vst.msk [vmem:[#allocation2 + $0x8] sm:$0xff] %vm1021, %v3147
      %3153 = vst.msk [vmem:[#allocation2 + $0x10] sm:$0xff] %vm1021, %v3148
      %3154 = vst.msk [vmem:[#allocation2 + $0x18] sm:$0xff] %vm1021, %v3149
      %3155 = vst.msk [vmem:[#allocation2 + $0x20] sm:$0x3] %vm1034, %v3150
      %p3156 = scmp.eq.s32.totalorder %s33, 1
      // Predicated region
      $region113: #{segmentation_vit_forward.2} parent=107 // pred_check
        %p3157 = pneg %p3156
      $region114: #{segmentation_vit_forward.2} parent=107 // pred_check_branch
        %3159 = sbr.rel (%p3157) target = $region116
      $region115: #{segmentation_vit_forward.2} parent=107 // pred_region
        %v3160 = vld [vmem:[%s17] sm:$0x1]
        %v3161 = vld [vmem:[%s18] sm:$0x1]
        %v3162 = vsel %vm1021, %v3146, 0.0
        %3163 = vadd.xlane.f32.xlu0 %v3162
        %v3164 = vpop.xlane.xlu0 %3163
        %v3165 = vsel %vm1021, %v3147, 0.0
        %3166 = vadd.xlane.f32.xlu0 %v3165
        %v3167 = vpop.xlane.xlu0 %3166
        %v3168 = vsel %vm1021, %v3148, 0.0
        %3169 = vadd.xlane.f32.xlu0 %v3168
        %v3170 = vpop.xlane.xlu0 %3169
        %v3171 = vsel %vm1021, %v3149, 0.0
        %3172 = vadd.xlane.f32.xlu0 %v3171
        %v3173 = vpop.xlane.xlu0 %3172
        %v3174 = vsel %vm1034, %v3150, 0.0
        %3175 = vadd.xlane.f32.xlu0 %v3174
        %v3176 = vpop.xlane.xlu0 %3175
        %v3177 = vmul.f32 %v3164, %v1038
        %v3178 = vmul.f32 %v3167, %v1038
        %v3179 = vmul.f32 %v3170, %v1038
        %v3180 = vmul.f32 %v3173, %v1038
        %v3181 = vmul.f32 %v3176, %v1038
        %v3182 = vsub.f32 %v3146, %v3177
        %v3183 = vsub.f32 %v3147, %v3178
        %v3184 = vsub.f32 %v3148, %v3179
        %v3185 = vsub.f32 %v3149, %v3180
        %v3186 = vsub.f32 %v3150, %v3181
        %v3187 = vmul.f32 %v3182, %v3182
        %v3188 = vmul.f32 %v3183, %v3183
        %v3189 = vmul.f32 %v3184, %v3184
        %v3190 = vmul.f32 %v3185, %v3185
        %v3191 = vmul.f32 %v3186, %v3186
        %v3192 = vsel %vm1021, %v3187, 0.0
        %3193 = vadd.xlane.f32.xlu0 %v3192
        %v3194 = vpop.xlane.xlu0 %3193
        %v3195 = vsel %vm1021, %v3188, 0.0
        %3196 = vadd.xlane.f32.xlu0 %v3195
        %v3197 = vpop.xlane.xlu0 %3196
        %v3198 = vsel %vm1021, %v3189, 0.0
        %3199 = vadd.xlane.f32.xlu0 %v3198
        %v3200 = vpop.xlane.xlu0 %3199
        %v3201 = vsel %vm1021, %v3190, 0.0
        %3202 = vadd.xlane.f32.xlu0 %v3201
        %v3203 = vpop.xlane.xlu0 %3202
        %v3204 = vsel %vm1034, %v3191, 0.0
        %3205 = vadd.xlane.f32.xlu0 %v3204
        %v3206 = vpop.xlane.xlu0 %3205
        %v3207 = vmul.f32 %v3194, %v1038
        %v3208 = vmul.f32 %v3197, %v1038
        %v3209 = vmul.f32 %v3200, %v1038
        %v3210 = vmul.f32 %v3203, %v1038
        %v3211 = vmul.f32 %v3206, %v1038
        %v3212 = vadd.f32 %v3207, 1e-05
        %v3213 = vadd.f32 %v3208, 1e-05
        %v3214 = vadd.f32 %v3209, 1e-05
        %v3215 = vadd.f32 %v3210, 1e-05
        %v3216 = vadd.f32 %v3211, 1e-05
        %v3217 = vrsqrt.pop %v3212
        %v3218 = vrsqrt.pop %v3213
        %v3219 = vrsqrt.pop %v3214
        %v3220 = vrsqrt.pop %v3215
        %v3221 = vrsqrt.pop %v3216
        %v3222 = vmul.f32 %v3182, %v3217
        %v3223 = vmul.f32 %v3183, %v3218
        %v3224 = vmul.f32 %v3184, %v3219
        %v3225 = vmul.f32 %v3185, %v3220
        %v3226 = vmul.f32 %v3186, %v3221
        %v3228 = vlaneseq
        %v3229 = vshrl.u32 %v3228, 7
        %v3230 = vsub.s32 0, %v3229
        %v3231 = vrot.slane %v3160, %v3230
        %v3233 = vmul.f32 %v3222, %v3231
        %v3234 = vmul.f32 %v3223, %v3231
        %v3235 = vmul.f32 %v3224, %v3231
        %v3236 = vmul.f32 %v3225, %v3231
        %v3237 = vmul.f32 %v3226, %v3231
        %v3239 = vlaneseq
        %v3240 = vshrl.u32 %v3239, 7
        %v3241 = vsub.s32 0, %v3240
        %v3242 = vrot.slane %v3161, %v3241
        %v3244 = vadd.f32 %v3233, %v3242
        %v3245 = vadd.f32 %v3234, %v3242
        %v3246 = vadd.f32 %v3235, %v3242
        %v3247 = vadd.f32 %v3236, %v3242
        %v3248 = vadd.f32 %v3237, %v3242
        %v3249 = vld [vmem:[%s21] sm:$0xff]
        %v3250 = vld [vmem:[%s21 + $0x8] sm:$0xff]
        %v3251 = vld [vmem:[%s21 + $0x10] sm:$0x1]
        %v3255 = vrot.slane %v3249, 7
        %v3256 = vrot.slane %v3250, 7
        %v3257 = vsel %vm2127, %v3255, %v3256
        %v3258 = vrot.slane %v3251, 7
        %v3259 = vsel %vm2127, %v3256, %v3258
        %v3263 = vsel %vm2127, %v3251, %v3255
        %v3264 = vld [vmem:[%s19] sm:$0xf]
        %v3265 = vld [vmem:[%s19 + $0x4] sm:$0xf]
        %v3266 = vld [vmem:[%s19 + $0x8] sm:$0xf]
        %v3267 = vld [vmem:[%s19 + $0xc] sm:$0xf]
        %v3268 = vpack.c.bf16 %v3245, %v3244
        %v3269 = vpack.c.bf16 %v3247, %v3246
        %v3270 = vpack.c.bf16 %v3248, %v3248
        %v3271 = vld [vmem:[%s20] sm:$0x1]
        %v3273 = vlaneseq
        %v3274 = vshrl.u32 %v3273, 7
        %v3275 = vsub.s32 0, %v3274
        %v3276 = vrot.slane %v3271, %v3275
        %v3282 = vunpack.c.l.b16 %v3264
        %v3283 = vunpack.c.l.b16 %v3265
        %v3284 = vunpack.c.l.b16 %v3266
        %v3285 = vunpack.c.l.b16 %v3267
        %v3286 = vpack.c.b16 %v3283, %v3282
        %v3287 = vpack.c.b16 %v3285, %v3284
        %v3291 = vsel %vm1021, %v3268, 0
        %v3294 = vsel %vm1021, %v3269, 0
        %v3297 = vsel %vm1021, %v3270, 0
        %3299 = vmatprep.subr.bf16.mxu0 0
        %3300 = vmatpush1.bf16.msra.mxu0 %v3286
        %3301 = vmatprep.subr.bf16.mxu0 0
        %3302 = vmatpush1.bf16.msra.mxu0 %v3287
        %3303 = vmatprep.subr.bf16.mxu0 0
        %3304 = vmatpush1.bf16.msra.mxu0 0
        %3305 = vmatprep.subr.bf16.mxu0 0
        %3306 = vmatpush1.bf16.msra.mxu0 0
        %3307 = vmatprep.subr.bf16.mxu0 0
        %3308 = vmatpush1.bf16.msra.mxu0 0
        %3309 = vmatprep.subr.bf16.mxu0 0
        %3310 = vmatpush1.bf16.msra.mxu0 0
        %3311 = vmatprep.subr.bf16.mxu0 0
        %3312 = vmatpush1.bf16.msra.mxu0 0
        %3313 = vmatprep.subr.bf16.mxu0 0
        %3314 = vmatpush1.bf16.msra.mxu0 0
        %3315 = vmatprep.subr.bf16.mxu0 0
        %3316 = vmatpush1.bf16.msra.mxu0 0
        %3317 = vmatprep.subr.bf16.mxu0 0
        %3318 = vmatpush1.bf16.msra.mxu0 0
        %3319 = vmatprep.subr.bf16.mxu0 0
        %3320 = vmatpush1.bf16.msra.mxu0 0
        %3321 = vmatprep.subr.bf16.mxu0 0
        %3322 = vmatpush1.bf16.msra.mxu0 0
        %3323 = vmatprep.subr.bf16.mxu0 0
        %3324 = vmatpush1.bf16.msra.mxu0 0
        %3325 = vmatprep.subr.bf16.mxu0 0
        %3326 = vmatpush1.bf16.msra.mxu0 0
        %3327 = vmatprep.subr.bf16.mxu0 0
        %3328 = vmatpush1.bf16.msra.mxu0 0
        %3329 = vmatprep.subr.bf16.mxu0 0
        %3330 = vmatpush1.bf16.msra.mxu0 0
        %3331 = vmatprep.mubr.bf16.mxu0 0
        %3332 = vmatmul.mubr.bf16.gmra.mrb[0].mxu0 %v3291
        %v3333 = vpop.f32.mrb[0].mxu0
        %v3334 = vadd.f32 %v3276, %v3333
        %v3335 = vpop.f32.mrb[0].mxu0
        %v3336 = vpop.f32.mrb[0].mxu0
        %v3337 = vadd.f32 %v3276, %v3336
        %v3338 = vpop.f32.mrb[0].mxu0
        %3339 = vmatprep.mubr.bf16.mxu0 0
        %3340 = vmatmul.mubr.bf16.gmra.mrb[0].mxu0 %v3294
        %v3341 = vpop.f32.mrb[0].mxu0
        %v3342 = vadd.f32 %v3276, %v3341
        %v3343 = vpop.f32.mrb[0].mxu0
        %v3344 = vpop.f32.mrb[0].mxu0
        %v3345 = vadd.f32 %v3276, %v3344
        %v3346 = vpop.f32.mrb[0].mxu0
        %3347 = vmatprep.mubr.bf16.mxu0 0
        %3348 = vmatmul.mubr.bf16.gmra.mrb[0].mxu0 %v3297
        %v3349 = vpop.f32.mrb[0].mxu0
        %v3350 = vadd.f32 %v3276, %v3349
        %v3351 = vpop.f32.mrb[0].mxu0
        %v3352 = vpop.f32.mrb[0].mxu0
        %v3353 = vpop.f32.mrb[0].mxu0
        %3354 = vdwg.mxu0
        %v3355 = vadd.f32 %v3334, %v3249
        %v3356 = vadd.f32 %v3337, %v3250
        %v3357 = vadd.f32 %v3342, %v3263
        %v3358 = vadd.f32 %v3345, %v3257
        %v3359 = vadd.f32 %v3350, %v3259
        %3360 = vst.msk [vmem:[%s22] sm:$0xff] %vm1021, %v3355
        %3361 = vst.msk [vmem:[%s22 + $0x8] sm:$0xff] %vm1021, %v3356
        %3362 = vst.msk [vmem:[%s22 + $0x10] sm:$0xff] %vm1021, %v3357
        %3363 = vst.msk [vmem:[%s22 + $0x18] sm:$0xff] %vm1021, %v3358
        %3364 = vst.msk [vmem:[%s22 + $0x20] sm:$0x3] %vm1034, %v3359
      $region116: #{segmentation_vit_forward.2} parent=107 // pred_fallthru
        _
      // Predicated region
      $region117: #{segmentation_vit_forward.2} parent=107 // pred_check
        %p3365 = pneg %p568
      $region118: #{segmentation_vit_forward.2} parent=107 // pred_check_branch
        %3367 = sbr.rel (%p3365) target = $region120
      $region119: #{segmentation_vit_forward.2} parent=107 // pred_region
        _
      $region120: #{segmentation_vit_forward.2} parent=107 // pred_fallthru
        _
      // Predicated region
      $region121: #{segmentation_vit_forward.2} parent=107 // pred_check
        %p3368 = pneg %p568
      $region122: #{segmentation_vit_forward.2} parent=107 // pred_check_branch
        %3370 = sbr.rel (%p3368) target = $region124
      $region123: #{segmentation_vit_forward.2} parent=107 // pred_region
        _
      $region124: #{segmentation_vit_forward.2} parent=107 // pred_fallthru
        _
    $region108: #{segmentation_vit_forward.2} parent=5 // pred_fallthru
      _
    %p3371 = scmp.le.s32.totalorder 2, %s28
    // Predicated region
    $region125: #{segmentation_vit_forward.2} parent=5 // pred_check
      %p3372 = pneg %p3371
    $region126: #{segmentation_vit_forward.2} parent=5 // pred_check_branch
      %3374 = sbr.rel (%p3372) target = $region128
    $region127: #{segmentation_vit_forward.2} parent=5 // pred_region
      %s3375 = ssub.s32 %s28, 2
    $region128: #{segmentation_vit_forward.2} parent=5 // pred_fallthru
      _
  $region6: #{segmentation_vit_forward.2} parent=0 // loop_footer
    %s32 = sadd.s32 1, %s28
  $region7: #{segmentation_vit_forward.2} parent=0 // loop_footer_branch
    %27 = sbr.rel target = $region3
  $region8: #{segmentation_vit_forward.2} parent=0 // loop_exit
    _

// kernel: segmentation_vit_forward.3
$region0: #{segmentation_vit_forward.3}
  #allocation0 [shape = 'u32[]', space=smem, size = 0x4, offset = 0x4, fixed_abs, tag = 'smem constant byte address 0x4 - core index']
  #allocation1 [shape = 'u32[144,128]{1,0:T(1,128)}', space=vmem, size = 0x12000, scoped, tag = 'internal scratch']
  #allocation2 [shape = 'f32[34,32]{1,0:T(8,128)}', space=vmem, size = 0x5000, scoped, tag = 'scratch operand']
  %s0 = inlined_call_operand.vmem [shape: f32[34,32], index: 0, kind: input, shape index: {}]
  %s1 = inlined_call_operand.vmem [shape: f32[2,1,32], index: 1, kind: input, shape index: {}]
  %s2 = inlined_call_operand.vmem [shape: f32[2,1,32], index: 2, kind: input, shape index: {}]
  %s3 = inlined_call_operand.vmem [shape: bf16[2,32,96], index: 3, kind: input, shape index: {}]
  %s4 = inlined_call_operand.vmem [shape: f32[2,1,96], index: 4, kind: input, shape index: {}]
  %s5 = inlined_call_operand.vmem [shape: bf16[2,32,32], index: 5, kind: input, shape index: {}]
  %s6 = inlined_call_operand.vmem [shape: f32[2,1,32], index: 6, kind: input, shape index: {}]
  %s7 = inlined_call_operand.vmem [shape: f32[2,1,32], index: 7, kind: input, shape index: {}]
  %s8 = inlined_call_operand.vmem [shape: f32[2,1,32], index: 8, kind: input, shape index: {}]
  %s9 = inlined_call_operand.vmem [shape: bf16[2,32,128], index: 9, kind: input, shape index: {}]
  %s10 = inlined_call_operand.vmem [shape: f32[2,1,128], index: 10, kind: input, shape index: {}]
  %s11 = inlined_call_operand.vmem [shape: bf16[2,128,32], index: 11, kind: input, shape index: {}]
  %s12 = inlined_call_operand.vmem [shape: f32[2,1,32], index: 12, kind: input, shape index: {}]
  %s13 = inlined_call_operand.vmem [shape: f32[1,32], index: 13, kind: input, shape index: {}]
  %s14 = inlined_call_operand.vmem [shape: f32[1,32], index: 14, kind: input, shape index: {}]
  %s15 = inlined_call_operand.vmem [shape: bf16[32,32], index: 15, kind: input, shape index: {}]
  %s16 = inlined_call_operand.vmem [shape: f32[1,32], index: 16, kind: input, shape index: {}]
  %s17 = inlined_call_operand.vmem [shape: f32[1,32], index: 17, kind: input, shape index: {}]
  %s18 = inlined_call_operand.vmem [shape: bf16[4,32], index: 18, kind: input, shape index: {}]
  %s19 = inlined_call_operand.vmem [shape: f32[4,1], index: 19, kind: input, shape index: {}]
  %s20 = inlined_call_operand.vmem [shape: s32[2,16], index: 20, kind: input, shape index: {}]
  %s21 = inlined_call_operand.vmem [shape: f32[2,4,16], index: 21, kind: output, shape index: {0}]
  %s22 = inlined_call_operand.hbm [shape: f32[1], index: 22, kind: output, shape index: {1}]
  %23 = xla_tuple %s21, %s22
  %s24 = sld [smem:[#allocation0]]
  $region133: #{segmentation_vit_forward.3} parent=0
    _
  %s26 = ssub.s32 1, %s24
  %s27 = scalar_select 0, %s26, %s24
  $region1: #{segmentation_vit_forward.3} parent=0
    #allocation3 [shape = 'u8[512]{0}', space=smem, size = 0x200, scoped, tag = 'output window, operand 1, single buffered']
    #allocation4 [shape = 's32[2]{0}', space=sflag, size = 0x8, scoped, tag = 'scoped memory for segmentation_vit_forward.3']
    %28 = vsyncpa [#allocation4], 0
    loop: start=0, step=1, limit=4
    $region2: #{segmentation_vit_forward.3} parent=1 // loop_pre_header
      _
    $region3: #{segmentation_vit_forward.3} parent=1 // loop_header
      %s30 = sphi 0, %s34
      %p31 = scmp.ge.s32.totalorder %s30, 4
      %s38 = sphi 0, %s38
      %s40 = sphi 0, %s38
      %s41 = sphi 0, %s40
      %s55 = sphi 0, %s41
      %s61 = sphi 0, %s63
      %s64 = sphi 0, %s61
      %s65 = sphi 0, %s64
      %s81 = sphi 0, %s65
      %s87 = sphi 0, %s89
      %s90 = sphi 0, %s87
      %s91 = sphi 0, %s90
      %s107 = sphi 0, %s91
      %s113 = sphi 0, %s115
      %s116 = sphi 0, %s113
      %s117 = sphi 0, %s116
      %s133 = sphi 0, %s117
      %s139 = sphi 0, %s141
      %s142 = sphi 0, %s139
      %s143 = sphi 0, %s142
      %s159 = sphi 0, %s143
      %s165 = sphi 0, %s167
      %s168 = sphi 0, %s165
      %s169 = sphi 0, %s168
      %s185 = sphi 0, %s169
      %s191 = sphi 0, %s193
      %s194 = sphi 0, %s191
      %s195 = sphi 0, %s194
      %s211 = sphi 0, %s195
      %s217 = sphi 0, %s219
      %s220 = sphi 0, %s217
      %s221 = sphi 0, %s220
      %s237 = sphi 0, %s221
      %s243 = sphi 0, %s245
      %s246 = sphi 0, %s243
      %s247 = sphi 0, %s246
      %s263 = sphi 0, %s247
      %s269 = sphi 0, %s271
      %s272 = sphi 0, %s269
      %s273 = sphi 0, %s272
      %s289 = sphi 0, %s273
      %s295 = sphi 0, %s297
      %s298 = sphi 0, %s295
      %s299 = sphi 0, %s298
      %s315 = sphi 0, %s299
      %s321 = sphi 0, %s323
      %s324 = sphi 0, %s321
      %s325 = sphi 0, %s324
      %s341 = sphi 0, %s325
      %s347 = sphi 0, %s349
      %s350 = sphi 0, %s347
      %s351 = sphi 0, %s350
      %s367 = sphi 0, %s351
      %s371 = sphi 0, %s371
      %s373 = sphi 0, %s371
      %s374 = sphi 0, %s373
      %s388 = sphi 0, %s374
      %s392 = sphi 0, %s392
      %s394 = sphi 0, %s392
      %s395 = sphi 0, %s394
      %s409 = sphi 0, %s395
      %s413 = sphi 0, %s413
      %s415 = sphi 0, %s413
      %s416 = sphi 0, %s415
      %s430 = sphi 0, %s416
      %s434 = sphi 0, %s434
      %s436 = sphi 0, %s434
      %s437 = sphi 0, %s436
      %s451 = sphi 0, %s437
      %s455 = sphi 0, %s455
      %s457 = sphi 0, %s455
      %s458 = sphi 0, %s457
      %s472 = sphi 0, %s458
      %s476 = sphi 0, %s476
      %s478 = sphi 0, %s476
      %s479 = sphi 0, %s478
      %s493 = sphi 0, %s479
      %s497 = sphi 0, %s497
      %s499 = sphi 0, %s497
      %s500 = sphi 0, %s499
      %s514 = sphi 0, %s500
      %s518 = sphi 0, %s518
      %s520 = sphi 0, %s518
      %s521 = sphi 0, %s520
      %s535 = sphi 0, %s521
      %s539 = sphi 0, %s539
      %s541 = sphi 0, %s539
      %s542 = sphi 0, %s541
      %s556 = sphi 0, %s542
      %s560 = sphi 0, %s560
      %s562 = sphi 0, %s560
      %s563 = sphi 0, %s562
      %s577 = sphi 0, %s563
    $region4: #{segmentation_vit_forward.3} parent=1 // loop_header_branch
      %33 = sbr.rel (%p31) target = $region8
    $region5: #{segmentation_vit_forward.3} parent=1 // loop_body
      %s35 = ssub.s32 %s30, 1
      %s36 = ssub.s32 %s30, 2
      %s37 = sadd.s32 %s30, 1
      %s39 = sadd.s32 %s38, 1
      %p42 = scmp.eq.s32.totalorder %s30, 1
      %p43 = scmp.ne.s32.totalorder %s38, %s40
      %p44 = scmp.eq.s32.totalorder %s30, 0
      %p45 = por %p43, %p44
      %p46 = scmp.ne.s32.totalorder %s38, %s40
      %p47 = scmp.eq.s32.totalorder %s35, 1
      %p48 = por %p46, %p47
      %p49 = scmp.ne.s32.totalorder %s40, %s41
      %p50 = scmp.eq.s32.totalorder %s35, 0
      %p51 = por %p49, %p50
      %p52 = scmp.ne.s32.totalorder %s40, %s41
      %p53 = scmp.eq.s32.totalorder %s36, 1
      %p54 = por %p52, %p53
      %p56 = scmp.ne.s32.totalorder %s41, %s55
      %p57 = scmp.eq.s32.totalorder %s36, 0
      %p58 = por %p56, %p57
      %s59 = ssub.s32 %s30, %s37
      %p60 = scmp.eq.s32.totalorder %s59, 0
      %s62 = sadd.s32 %s61, 1
      %s63 = scalar_select %p60, %s61, %s62
      %p66 = pneg %p60
      %p67 = scmp.eq.s32.totalorder %s30, 1
      %p68 = por %p66, %p67
      %p69 = scmp.ne.s32.totalorder %s61, %s64
      %p70 = scmp.eq.s32.totalorder %s30, 0
      %p71 = por %p69, %p70
      %p72 = scmp.ne.s32.totalorder %s61, %s64
      %p73 = scmp.eq.s32.totalorder %s35, 1
      %p74 = por %p72, %p73
      %p75 = scmp.ne.s32.totalorder %s64, %s65
      %p76 = scmp.eq.s32.totalorder %s35, 0
      %p77 = por %p75, %p76
      %p78 = scmp.ne.s32.totalorder %s64, %s65
      %p79 = scmp.eq.s32.totalorder %s36, 1
      %p80 = por %p78, %p79
      %p82 = scmp.ne.s32.totalorder %s65, %s81
      %p83 = scmp.eq.s32.totalorder %s36, 0
      %p84 = por %p82, %p83
      %s85 = ssub.s32 %s30, %s37
      %p86 = scmp.eq.s32.totalorder %s85, 0
      %s88 = sadd.s32 %s87, 1
      %s89 = scalar_select %p86, %s87, %s88
      %p92 = pneg %p86
      %p93 = scmp.eq.s32.totalorder %s30, 1
      %p94 = por %p92, %p93
      %p95 = scmp.ne.s32.totalorder %s87, %s90
      %p96 = scmp.eq.s32.totalorder %s30, 0
      %p97 = por %p95, %p96
      %p98 = scmp.ne.s32.totalorder %s87, %s90
      %p99 = scmp.eq.s32.totalorder %s35, 1
      %p100 = por %p98, %p99
      %p101 = scmp.ne.s32.totalorder %s90, %s91
      %p102 = scmp.eq.s32.totalorder %s35, 0
      %p103 = por %p101, %p102
      %p104 = scmp.ne.s32.totalorder %s90, %s91
      %p105 = scmp.eq.s32.totalorder %s36, 1
      %p106 = por %p104, %p105
      %p108 = scmp.ne.s32.totalorder %s91, %s107
      %p109 = scmp.eq.s32.totalorder %s36, 0
      %p110 = por %p108, %p109
      %s111 = ssub.s32 %s30, %s37
      %p112 = scmp.eq.s32.totalorder %s111, 0
      %s114 = sadd.s32 %s113, 1
      %s115 = scalar_select %p112, %s113, %s114
      %p118 = pneg %p112
      %p119 = scmp.eq.s32.totalorder %s30, 1
      %p120 = por %p118, %p119
      %p121 = scmp.ne.s32.totalorder %s113, %s116
      %p122 = scmp.eq.s32.totalorder %s30, 0
      %p123 = por %p121, %p122
      %p124 = scmp.ne.s32.totalorder %s113, %s116
      %p125 = scmp.eq.s32.totalorder %s35, 1
      %p126 = por %p124, %p125
      %p127 = scmp.ne.s32.totalorder %s116, %s117
      %p128 = scmp.eq.s32.totalorder %s35, 0
      %p129 = por %p127, %p128
      %p130 = scmp.ne.s32.totalorder %s116, %s117
      %p131 = scmp.eq.s32.totalorder %s36, 1
      %p132 = por %p130, %p131
      %p134 = scmp.ne.s32.totalorder %s117, %s133
      %p135 = scmp.eq.s32.totalorder %s36, 0
      %p136 = por %p134, %p135
      %s137 = ssub.s32 %s30, %s37
      %p138 = scmp.eq.s32.totalorder %s137, 0
      %s140 = sadd.s32 %s139, 1
      %s141 = scalar_select %p138, %s139, %s140
      %p144 = pneg %p138
      %p145 = scmp.eq.s32.totalorder %s30, 1
      %p146 = por %p144, %p145
      %p147 = scmp.ne.s32.totalorder %s139, %s142
      %p148 = scmp.eq.s32.totalorder %s30, 0
      %p149 = por %p147, %p148
      %p150 = scmp.ne.s32.totalorder %s139, %s142
      %p151 = scmp.eq.s32.totalorder %s35, 1
      %p152 = por %p150, %p151
      %p153 = scmp.ne.s32.totalorder %s142, %s143
      %p154 = scmp.eq.s32.totalorder %s35, 0
      %p155 = por %p153, %p154
      %p156 = scmp.ne.s32.totalorder %s142, %s143
      %p157 = scmp.eq.s32.totalorder %s36, 1
      %p158 = por %p156, %p157
      %p160 = scmp.ne.s32.totalorder %s143, %s159
      %p161 = scmp.eq.s32.totalorder %s36, 0
      %p162 = por %p160, %p161
      %s163 = ssub.s32 %s30, %s37
      %p164 = scmp.eq.s32.totalorder %s163, 0
      %s166 = sadd.s32 %s165, 1
      %s167 = scalar_select %p164, %s165, %s166
      %p170 = pneg %p164
      %p171 = scmp.eq.s32.totalorder %s30, 1
      %p172 = por %p170, %p171
      %p173 = scmp.ne.s32.totalorder %s165, %s168
      %p174 = scmp.eq.s32.totalorder %s30, 0
      %p175 = por %p173, %p174
      %p176 = scmp.ne.s32.totalorder %s165, %s168
      %p177 = scmp.eq.s32.totalorder %s35, 1
      %p178 = por %p176, %p177
      %p179 = scmp.ne.s32.totalorder %s168, %s169
      %p180 = scmp.eq.s32.totalorder %s35, 0
      %p181 = por %p179, %p180
      %p182 = scmp.ne.s32.totalorder %s168, %s169
      %p183 = scmp.eq.s32.totalorder %s36, 1
      %p184 = por %p182, %p183
      %p186 = scmp.ne.s32.totalorder %s169, %s185
      %p187 = scmp.eq.s32.totalorder %s36, 0
      %p188 = por %p186, %p187
      %s189 = ssub.s32 %s30, %s37
      %p190 = scmp.eq.s32.totalorder %s189, 0
      %s192 = sadd.s32 %s191, 1
      %s193 = scalar_select %p190, %s191, %s192
      %p196 = pneg %p190
      %p197 = scmp.eq.s32.totalorder %s30, 1
      %p198 = por %p196, %p197
      %p199 = scmp.ne.s32.totalorder %s191, %s194
      %p200 = scmp.eq.s32.totalorder %s30, 0
      %p201 = por %p199, %p200
      %p202 = scmp.ne.s32.totalorder %s191, %s194
      %p203 = scmp.eq.s32.totalorder %s35, 1
      %p204 = por %p202, %p203
      %p205 = scmp.ne.s32.totalorder %s194, %s195
      %p206 = scmp.eq.s32.totalorder %s35, 0
      %p207 = por %p205, %p206
      %p208 = scmp.ne.s32.totalorder %s194, %s195
      %p209 = scmp.eq.s32.totalorder %s36, 1
      %p210 = por %p208, %p209
      %p212 = scmp.ne.s32.totalorder %s195, %s211
      %p213 = scmp.eq.s32.totalorder %s36, 0
      %p214 = por %p212, %p213
      %s215 = ssub.s32 %s30, %s37
      %p216 = scmp.eq.s32.totalorder %s215, 0
      %s218 = sadd.s32 %s217, 1
      %s219 = scalar_select %p216, %s217, %s218
      %p222 = pneg %p216
      %p223 = scmp.eq.s32.totalorder %s30, 1
      %p224 = por %p222, %p223
      %p225 = scmp.ne.s32.totalorder %s217, %s220
      %p226 = scmp.eq.s32.totalorder %s30, 0
      %p227 = por %p225, %p226
      %p228 = scmp.ne.s32.totalorder %s217, %s220
      %p229 = scmp.eq.s32.totalorder %s35, 1
      %p230 = por %p228, %p229
      %p231 = scmp.ne.s32.totalorder %s220, %s221
      %p232 = scmp.eq.s32.totalorder %s35, 0
      %p233 = por %p231, %p232
      %p234 = scmp.ne.s32.totalorder %s220, %s221
      %p235 = scmp.eq.s32.totalorder %s36, 1
      %p236 = por %p234, %p235
      %p238 = scmp.ne.s32.totalorder %s221, %s237
      %p239 = scmp.eq.s32.totalorder %s36, 0
      %p240 = por %p238, %p239
      %s241 = ssub.s32 %s30, %s37
      %p242 = scmp.eq.s32.totalorder %s241, 0
      %s244 = sadd.s32 %s243, 1
      %s245 = scalar_select %p242, %s243, %s244
      %p248 = pneg %p242
      %p249 = scmp.eq.s32.totalorder %s30, 1
      %p250 = por %p248, %p249
      %p251 = scmp.ne.s32.totalorder %s243, %s246
      %p252 = scmp.eq.s32.totalorder %s30, 0
      %p253 = por %p251, %p252
      %p254 = scmp.ne.s32.totalorder %s243, %s246
      %p255 = scmp.eq.s32.totalorder %s35, 1
      %p256 = por %p254, %p255
      %p257 = scmp.ne.s32.totalorder %s246, %s247
      %p258 = scmp.eq.s32.totalorder %s35, 0
      %p259 = por %p257, %p258
      %p260 = scmp.ne.s32.totalorder %s246, %s247
      %p261 = scmp.eq.s32.totalorder %s36, 1
      %p262 = por %p260, %p261
      %p264 = scmp.ne.s32.totalorder %s247, %s263
      %p265 = scmp.eq.s32.totalorder %s36, 0
      %p266 = por %p264, %p265
      %s267 = ssub.s32 %s30, %s37
      %p268 = scmp.eq.s32.totalorder %s267, 0
      %s270 = sadd.s32 %s269, 1
      %s271 = scalar_select %p268, %s269, %s270
      %p274 = pneg %p268
      %p275 = scmp.eq.s32.totalorder %s30, 1
      %p276 = por %p274, %p275
      %p277 = scmp.ne.s32.totalorder %s269, %s272
      %p278 = scmp.eq.s32.totalorder %s30, 0
      %p279 = por %p277, %p278
      %p280 = scmp.ne.s32.totalorder %s269, %s272
      %p281 = scmp.eq.s32.totalorder %s35, 1
      %p282 = por %p280, %p281
      %p283 = scmp.ne.s32.totalorder %s272, %s273
      %p284 = scmp.eq.s32.totalorder %s35, 0
      %p285 = por %p283, %p284
      %p286 = scmp.ne.s32.totalorder %s272, %s273
      %p287 = scmp.eq.s32.totalorder %s36, 1
      %p288 = por %p286, %p287
      %p290 = scmp.ne.s32.totalorder %s273, %s289
      %p291 = scmp.eq.s32.totalorder %s36, 0
      %p292 = por %p290, %p291
      %s293 = ssub.s32 %s30, %s37
      %p294 = scmp.eq.s32.totalorder %s293, 0
      %s296 = sadd.s32 %s295, 1
      %s297 = scalar_select %p294, %s295, %s296
      %p300 = pneg %p294
      %p301 = scmp.eq.s32.totalorder %s30, 1
      %p302 = por %p300, %p301
      %p303 = scmp.ne.s32.totalorder %s295, %s298
      %p304 = scmp.eq.s32.totalorder %s30, 0
      %p305 = por %p303, %p304
      %p306 = scmp.ne.s32.totalorder %s295, %s298
      %p307 = scmp.eq.s32.totalorder %s35, 1
      %p308 = por %p306, %p307
      %p309 = scmp.ne.s32.totalorder %s298, %s299
      %p310 = scmp.eq.s32.totalorder %s35, 0
      %p311 = por %p309, %p310
      %p312 = scmp.ne.s32.totalorder %s298, %s299
      %p313 = scmp.eq.s32.totalorder %s36, 1
      %p314 = por %p312, %p313
      %p316 = scmp.ne.s32.totalorder %s299, %s315
      %p317 = scmp.eq.s32.totalorder %s36, 0
      %p318 = por %p316, %p317
      %s319 = ssub.s32 %s30, %s37
      %p320 = scmp.eq.s32.totalorder %s319, 0
      %s322 = sadd.s32 %s321, 1
      %s323 = scalar_select %p320, %s321, %s322
      %p326 = pneg %p320
      %p327 = scmp.eq.s32.totalorder %s30, 1
      %p328 = por %p326, %p327
      %p329 = scmp.ne.s32.totalorder %s321, %s324
      %p330 = scmp.eq.s32.totalorder %s30, 0
      %p331 = por %p329, %p330
      %p332 = scmp.ne.s32.totalorder %s321, %s324
      %p333 = scmp.eq.s32.totalorder %s35, 1
      %p334 = por %p332, %p333
      %p335 = scmp.ne.s32.totalorder %s324, %s325
      %p336 = scmp.eq.s32.totalorder %s35, 0
      %p337 = por %p335, %p336
      %p338 = scmp.ne.s32.totalorder %s324, %s325
      %p339 = scmp.eq.s32.totalorder %s36, 1
      %p340 = por %p338, %p339
      %p342 = scmp.ne.s32.totalorder %s325, %s341
      %p343 = scmp.eq.s32.totalorder %s36, 0
      %p344 = por %p342, %p343
      %s345 = ssub.s32 %s30, %s37
      %p346 = scmp.eq.s32.totalorder %s345, 0
      %s348 = sadd.s32 %s347, 1
      %s349 = scalar_select %p346, %s347, %s348
      %p352 = pneg %p346
      %p353 = scmp.eq.s32.totalorder %s30, 1
      %p354 = por %p352, %p353
      %p355 = scmp.ne.s32.totalorder %s347, %s350
      %p356 = scmp.eq.s32.totalorder %s30, 0
      %p357 = por %p355, %p356
      %p358 = scmp.ne.s32.totalorder %s347, %s350
      %p359 = scmp.eq.s32.totalorder %s35, 1
      %p360 = por %p358, %p359
      %p361 = scmp.ne.s32.totalorder %s350, %s351
      %p362 = scmp.eq.s32.totalorder %s35, 0
      %p363 = por %p361, %p362
      %p364 = scmp.ne.s32.totalorder %s350, %s351
      %p365 = scmp.eq.s32.totalorder %s36, 1
      %p366 = por %p364, %p365
      %p368 = scmp.ne.s32.totalorder %s351, %s367
      %p369 = scmp.eq.s32.totalorder %s36, 0
      %p370 = por %p368, %p369
      %s372 = sadd.s32 %s371, 1
      %p375 = scmp.eq.s32.totalorder %s30, 1
      %p376 = scmp.ne.s32.totalorder %s371, %s373
      %p377 = scmp.eq.s32.totalorder %s30, 0
      %p378 = por %p376, %p377
      %p379 = scmp.ne.s32.totalorder %s371, %s373
      %p380 = scmp.eq.s32.totalorder %s35, 1
      %p381 = por %p379, %p380
      %p382 = scmp.ne.s32.totalorder %s373, %s374
      %p383 = scmp.eq.s32.totalorder %s35, 0
      %p384 = por %p382, %p383
      %p385 = scmp.ne.s32.totalorder %s373, %s374
      %p386 = scmp.eq.s32.totalorder %s36, 1
      %p387 = por %p385, %p386
      %p389 = scmp.ne.s32.totalorder %s374, %s388
      %p390 = scmp.eq.s32.totalorder %s36, 0
      %p391 = por %p389, %p390
      %s393 = sadd.s32 %s392, 1
      %p396 = scmp.eq.s32.totalorder %s30, 1
      %p397 = scmp.ne.s32.totalorder %s392, %s394
      %p398 = scmp.eq.s32.totalorder %s30, 0
      %p399 = por %p397, %p398
      %p400 = scmp.ne.s32.totalorder %s392, %s394
      %p401 = scmp.eq.s32.totalorder %s35, 1
      %p402 = por %p400, %p401
      %p403 = scmp.ne.s32.totalorder %s394, %s395
      %p404 = scmp.eq.s32.totalorder %s35, 0
      %p405 = por %p403, %p404
      %p406 = scmp.ne.s32.totalorder %s394, %s395
      %p407 = scmp.eq.s32.totalorder %s36, 1
      %p408 = por %p406, %p407
      %p410 = scmp.ne.s32.totalorder %s395, %s409
      %p411 = scmp.eq.s32.totalorder %s36, 0
      %p412 = por %p410, %p411
      %s414 = sadd.s32 %s413, 1
      %p417 = scmp.eq.s32.totalorder %s30, 1
      %p418 = scmp.ne.s32.totalorder %s413, %s415
      %p419 = scmp.eq.s32.totalorder %s30, 0
      %p420 = por %p418, %p419
      %p421 = scmp.ne.s32.totalorder %s413, %s415
      %p422 = scmp.eq.s32.totalorder %s35, 1
      %p423 = por %p421, %p422
      %p424 = scmp.ne.s32.totalorder %s415, %s416
      %p425 = scmp.eq.s32.totalorder %s35, 0
      %p426 = por %p424, %p425
      %p427 = scmp.ne.s32.totalorder %s415, %s416
      %p428 = scmp.eq.s32.totalorder %s36, 1
      %p429 = por %p427, %p428
      %p431 = scmp.ne.s32.totalorder %s416, %s430
      %p432 = scmp.eq.s32.totalorder %s36, 0
      %p433 = por %p431, %p432
      %s435 = sadd.s32 %s434, 1
      %p438 = scmp.eq.s32.totalorder %s30, 1
      %p439 = scmp.ne.s32.totalorder %s434, %s436
      %p440 = scmp.eq.s32.totalorder %s30, 0
      %p441 = por %p439, %p440
      %p442 = scmp.ne.s32.totalorder %s434, %s436
      %p443 = scmp.eq.s32.totalorder %s35, 1
      %p444 = por %p442, %p443
      %p445 = scmp.ne.s32.totalorder %s436, %s437
      %p446 = scmp.eq.s32.totalorder %s35, 0
      %p447 = por %p445, %p446
      %p448 = scmp.ne.s32.totalorder %s436, %s437
      %p449 = scmp.eq.s32.totalorder %s36, 1
      %p450 = por %p448, %p449
      %p452 = scmp.ne.s32.totalorder %s437, %s451
      %p453 = scmp.eq.s32.totalorder %s36, 0
      %p454 = por %p452, %p453
      %s456 = sadd.s32 %s455, 1
      %p459 = scmp.eq.s32.totalorder %s30, 1
      %p460 = scmp.ne.s32.totalorder %s455, %s457
      %p461 = scmp.eq.s32.totalorder %s30, 0
      %p462 = por %p460, %p461
      %p463 = scmp.ne.s32.totalorder %s455, %s457
      %p464 = scmp.eq.s32.totalorder %s35, 1
      %p465 = por %p463, %p464
      %p466 = scmp.ne.s32.totalorder %s457, %s458
      %p467 = scmp.eq.s32.totalorder %s35, 0
      %p468 = por %p466, %p467
      %p469 = scmp.ne.s32.totalorder %s457, %s458
      %p470 = scmp.eq.s32.totalorder %s36, 1
      %p471 = por %p469, %p470
      %p473 = scmp.ne.s32.totalorder %s458, %s472
      %p474 = scmp.eq.s32.totalorder %s36, 0
      %p475 = por %p473, %p474
      %s477 = sadd.s32 %s476, 1
      %p480 = scmp.eq.s32.totalorder %s30, 1
      %p481 = scmp.ne.s32.totalorder %s476, %s478
      %p482 = scmp.eq.s32.totalorder %s30, 0
      %p483 = por %p481, %p482
      %p484 = scmp.ne.s32.totalorder %s476, %s478
      %p485 = scmp.eq.s32.totalorder %s35, 1
      %p486 = por %p484, %p485
      %p487 = scmp.ne.s32.totalorder %s478, %s479
      %p488 = scmp.eq.s32.totalorder %s35, 0
      %p489 = por %p487, %p488
      %p490 = scmp.ne.s32.totalorder %s478, %s479
      %p491 = scmp.eq.s32.totalorder %s36, 1
      %p492 = por %p490, %p491
      %p494 = scmp.ne.s32.totalorder %s479, %s493
      %p495 = scmp.eq.s32.totalorder %s36, 0
      %p496 = por %p494, %p495
      %s498 = sadd.s32 %s497, 1
      %p501 = scmp.eq.s32.totalorder %s30, 1
      %p502 = scmp.ne.s32.totalorder %s497, %s499
      %p503 = scmp.eq.s32.totalorder %s30, 0
      %p504 = por %p502, %p503
      %p505 = scmp.ne.s32.totalorder %s497, %s499
      %p506 = scmp.eq.s32.totalorder %s35, 1
      %p507 = por %p505, %p506
      %p508 = scmp.ne.s32.totalorder %s499, %s500
      %p509 = scmp.eq.s32.totalorder %s35, 0
      %p510 = por %p508, %p509
      %p511 = scmp.ne.s32.totalorder %s499, %s500
      %p512 = scmp.eq.s32.totalorder %s36, 1
      %p513 = por %p511, %p512
      %p515 = scmp.ne.s32.totalorder %s500, %s514
      %p516 = scmp.eq.s32.totalorder %s36, 0
      %p517 = por %p515, %p516
      %s519 = sadd.s32 %s518, 1
      %p522 = scmp.eq.s32.totalorder %s30, 1
      %p523 = scmp.ne.s32.totalorder %s518, %s520
      %p524 = scmp.eq.s32.totalorder %s30, 0
      %p525 = por %p523, %p524
      %p526 = scmp.ne.s32.totalorder %s518, %s520
      %p527 = scmp.eq.s32.totalorder %s35, 1
      %p528 = por %p526, %p527
      %p529 = scmp.ne.s32.totalorder %s520, %s521
      %p530 = scmp.eq.s32.totalorder %s35, 0
      %p531 = por %p529, %p530
      %p532 = scmp.ne.s32.totalorder %s520, %s521
      %p533 = scmp.eq.s32.totalorder %s36, 1
      %p534 = por %p532, %p533
      %p536 = scmp.ne.s32.totalorder %s521, %s535
      %p537 = scmp.eq.s32.totalorder %s36, 0
      %p538 = por %p536, %p537
      %s540 = sadd.s32 %s539, 1
      %p543 = scmp.eq.s32.totalorder %s30, 1
      %p544 = scmp.ne.s32.totalorder %s539, %s541
      %p545 = scmp.eq.s32.totalorder %s30, 0
      %p546 = por %p544, %p545
      %p547 = scmp.ne.s32.totalorder %s539, %s541
      %p548 = scmp.eq.s32.totalorder %s35, 1
      %p549 = por %p547, %p548
      %p550 = scmp.ne.s32.totalorder %s541, %s542
      %p551 = scmp.eq.s32.totalorder %s35, 0
      %p552 = por %p550, %p551
      %p553 = scmp.ne.s32.totalorder %s541, %s542
      %p554 = scmp.eq.s32.totalorder %s36, 1
      %p555 = por %p553, %p554
      %p557 = scmp.ne.s32.totalorder %s542, %s556
      %p558 = scmp.eq.s32.totalorder %s36, 0
      %p559 = por %p557, %p558
      %s561 = sadd.s32 %s560, 1
      %p564 = scmp.eq.s32.totalorder %s30, 1
      %p565 = scmp.ne.s32.totalorder %s560, %s562
      %p566 = scmp.eq.s32.totalorder %s30, 0
      %p567 = por %p565, %p566
      %p568 = scmp.ne.s32.totalorder %s560, %s562
      %p569 = scmp.eq.s32.totalorder %s35, 1
      %p570 = por %p568, %p569
      %p571 = scmp.ne.s32.totalorder %s562, %s563
      %p572 = scmp.eq.s32.totalorder %s35, 0
      %p573 = por %p571, %p572
      %p574 = scmp.ne.s32.totalorder %s562, %s563
      %p575 = scmp.eq.s32.totalorder %s36, 1
      %p576 = por %p574, %p575
      %p578 = scmp.ne.s32.totalorder %s563, %s577
      %p579 = scmp.eq.s32.totalorder %s36, 0
      %p580 = por %p578, %p579
      %p581 = scmp.le.s32.totalorder 1, %s30
      %p582 = scmp.lt.s32.totalorder %s30, 3
      %p583 = pnand %p581, %p582
      %p584 = pneg %p583
      // Predicated region
      $region9: #{segmentation_vit_forward.3} parent=5 // pred_check
        _
      $region10: #{segmentation_vit_forward.3} parent=5 // pred_check_branch
        %586 = sbr.rel (%p583) target = $region12
      $region11: #{segmentation_vit_forward.3} parent=5 // pred_region
        %s587 = ssub.s32 %s30, 1
        // Predicated region
        $region13: #{segmentation_vit_forward.3} parent=11 // pred_check
          %p588 = pneg %p51
        $region14: #{segmentation_vit_forward.3} parent=11 // pred_check_branch
          %590 = sbr.rel (%p588) target = $region16
        $region15: #{segmentation_vit_forward.3} parent=11 // pred_region
          _
        $region16: #{segmentation_vit_forward.3} parent=11 // pred_fallthru
          _
        // Predicated region
        $region17: #{segmentation_vit_forward.3} parent=11 // pred_check
          %p591 = pneg %p384
        $region18: #{segmentation_vit_forward.3} parent=11 // pred_check_branch
          %593 = sbr.rel (%p591) target = $region20
        $region19: #{segmentation_vit_forward.3} parent=11 // pred_region
          _
        $region20: #{segmentation_vit_forward.3} parent=11 // pred_fallthru
          _
        // Predicated region
        $region21: #{segmentation_vit_forward.3} parent=11 // pred_check
          %p594 = pneg %p405
        $region22: #{segmentation_vit_forward.3} parent=11 // pred_check_branch
          %596 = sbr.rel (%p594) target = $region24
        $region23: #{segmentation_vit_forward.3} parent=11 // pred_region
          _
        $region24: #{segmentation_vit_forward.3} parent=11 // pred_fallthru
          _
        // Predicated region
        $region25: #{segmentation_vit_forward.3} parent=11 // pred_check
          %p597 = pneg %p426
        $region26: #{segmentation_vit_forward.3} parent=11 // pred_check_branch
          %599 = sbr.rel (%p597) target = $region28
        $region27: #{segmentation_vit_forward.3} parent=11 // pred_region
          _
        $region28: #{segmentation_vit_forward.3} parent=11 // pred_fallthru
          _
        // Predicated region
        $region29: #{segmentation_vit_forward.3} parent=11 // pred_check
          %p600 = pneg %p447
        $region30: #{segmentation_vit_forward.3} parent=11 // pred_check_branch
          %602 = sbr.rel (%p600) target = $region32
        $region31: #{segmentation_vit_forward.3} parent=11 // pred_region
          _
        $region32: #{segmentation_vit_forward.3} parent=11 // pred_fallthru
          _
        // Predicated region
        $region33: #{segmentation_vit_forward.3} parent=11 // pred_check
          %p603 = pneg %p468
        $region34: #{segmentation_vit_forward.3} parent=11 // pred_check_branch
          %605 = sbr.rel (%p603) target = $region36
        $region35: #{segmentation_vit_forward.3} parent=11 // pred_region
          _
        $region36: #{segmentation_vit_forward.3} parent=11 // pred_fallthru
          _
        // Predicated region
        $region37: #{segmentation_vit_forward.3} parent=11 // pred_check
          %p606 = pneg %p489
        $region38: #{segmentation_vit_forward.3} parent=11 // pred_check_branch
          %608 = sbr.rel (%p606) target = $region40
        $region39: #{segmentation_vit_forward.3} parent=11 // pred_region
          _
        $region40: #{segmentation_vit_forward.3} parent=11 // pred_fallthru
          _
        // Predicated region
        $region41: #{segmentation_vit_forward.3} parent=11 // pred_check
          %p609 = pneg %p510
        $region42: #{segmentation_vit_forward.3} parent=11 // pred_check_branch
          %611 = sbr.rel (%p609) target = $region44
        $region43: #{segmentation_vit_forward.3} parent=11 // pred_region
          _
        $region44: #{segmentation_vit_forward.3} parent=11 // pred_fallthru
          _
        // Predicated region
        $region45: #{segmentation_vit_forward.3} parent=11 // pred_check
          %p612 = pneg %p531
        $region46: #{segmentation_vit_forward.3} parent=11 // pred_check_branch
          %614 = sbr.rel (%p612) target = $region48
        $region47: #{segmentation_vit_forward.3} parent=11 // pred_region
          _
        $region48: #{segmentation_vit_forward.3} parent=11 // pred_fallthru
          _
      $region12: #{segmentation_vit_forward.3} parent=5 // pred_fallthru
        _
      %p615 = scmp.lt.s32.totalorder %s30, 2
      // Predicated region
      $region49: #{segmentation_vit_forward.3} parent=5 // pred_check
        %p616 = pneg %p615
      $region50: #{segmentation_vit_forward.3} parent=5 // pred_check_branch
        %618 = sbr.rel (%p616) target = $region52
      $region51: #{segmentation_vit_forward.3} parent=5 // pred_region
        // Predicated region
        $region53: #{segmentation_vit_forward.3} parent=51 // pred_check
          %p619 = pneg %p71
        $region54: #{segmentation_vit_forward.3} parent=51 // pred_check_branch
          %621 = sbr.rel (%p619) target = $region56
        $region55: #{segmentation_vit_forward.3} parent=51 // pred_region
          %p622 = scmp.lt.s32.totalorder %s30, 1
          %s623 = scalar_select %p622, %s30, 1
          %s624 = scalar_lea.vmem %s1, %s623
        $region56: #{segmentation_vit_forward.3} parent=51 // pred_fallthru
          _
        // Predicated region
        $region57: #{segmentation_vit_forward.3} parent=51 // pred_check
          %p625 = pneg %p97
        $region58: #{segmentation_vit_forward.3} parent=51 // pred_check_branch
          %627 = sbr.rel (%p625) target = $region60
        $region59: #{segmentation_vit_forward.3} parent=51 // pred_region
          %p628 = scmp.lt.s32.totalorder %s30, 1
          %s629 = scalar_select %p628, %s30, 1
          %s630 = scalar_lea.vmem %s2, %s629
        $region60: #{segmentation_vit_forward.3} parent=51 // pred_fallthru
          _
        // Predicated region
        $region61: #{segmentation_vit_forward.3} parent=51 // pred_check
          %p631 = pneg %p123
        $region62: #{segmentation_vit_forward.3} parent=51 // pred_check_branch
          %633 = sbr.rel (%p631) target = $region64
        $region63: #{segmentation_vit_forward.3} parent=51 // pred_region
          %p634 = scmp.lt.s32.totalorder %s30, 1
          %s635 = scalar_select %p634, %s30, 1
          %s636 = smul.addr %s635, 4
          %s637 = smul.addr %s636, 4
          %s638 = scalar_lea.vmem %s3, %s637
        $region64: #{segmentation_vit_forward.3} parent=51 // pred_fallthru
          _
        // Predicated region
        $region65: #{segmentation_vit_forward.3} parent=51 // pred_check
          %p639 = pneg %p149
        $region66: #{segmentation_vit_forward.3} parent=51 // pred_check_branch
          %641 = sbr.rel (%p639) target = $region68
        $region67: #{segmentation_vit_forward.3} parent=51 // pred_region
          %p642 = scmp.lt.s32.totalorder %s30, 1
          %s643 = scalar_select %p642, %s30, 1
          %s644 = scalar_lea.vmem %s4, %s643
        $region68: #{segmentation_vit_forward.3} parent=51 // pred_fallthru
          _
        // Predicated region
        $region69: #{segmentation_vit_forward.3} parent=51 // pred_check
          %p645 = pneg %p175
        $region70: #{segmentation_vit_forward.3} parent=51 // pred_check_branch
          %647 = sbr.rel (%p645) target = $region72
        $region71: #{segmentation_vit_forward.3} parent=51 // pred_region
          %p648 = scmp.lt.s32.totalorder %s30, 1
          %s649 = scalar_select %p648, %s30, 1
          %s650 = smul.addr %s649, 4
          %s651 = smul.addr %s650, 4
          %s652 = scalar_lea.vmem %s5, %s651
        $region72: #{segmentation_vit_forward.3} parent=51 // pred_fallthru
          _
        // Predicated region
        $region73: #{segmentation_vit_forward.3} parent=51 // pred_check
          %p653 = pneg %p201
        $region74: #{segmentation_vit_forward.3} parent=51 // pred_check_branch
          %655 = sbr.rel (%p653) target = $region76
        $region75: #{segmentation_vit_forward.3} parent=51 // pred_region
          %p656 = scmp.lt.s32.totalorder %s30, 1
          %s657 = scalar_select %p656, %s30, 1
          %s658 = scalar_lea.vmem %s6, %s657
        $region76: #{segmentation_vit_forward.3} parent=51 // pred_fallthru
          _
        // Predicated region
        $region77: #{segmentation_vit_forward.3} parent=51 // pred_check
          %p659 = pneg %p227
        $region78: #{segmentation_vit_forward.3} parent=51 // pred_check_branch
          %661 = sbr.rel (%p659) target = $region80
        $region79: #{segmentation_vit_forward.3} parent=51 // pred_region
          %p662 = scmp.lt.s32.totalorder %s30, 1
          %s663 = scalar_select %p662, %s30, 1
          %s664 = scalar_lea.vmem %s7, %s663
        $region80: #{segmentation_vit_forward.3} parent=51 // pred_fallthru
          _
        // Predicated region
        $region81: #{segmentation_vit_forward.3} parent=51 // pred_check
          %p665 = pneg %p253
        $region82: #{segmentation_vit_forward.3} parent=51 // pred_check_branch
          %667 = sbr.rel (%p665) target = $region84
        $region83: #{segmentation_vit_forward.3} parent=51 // pred_region
          %p668 = scmp.lt.s32.totalorder %s30, 1
          %s669 = scalar_select %p668, %s30, 1
          %s670 = scalar_lea.vmem %s8, %s669
        $region84: #{segmentation_vit_forward.3} parent=51 // pred_fallthru
          _
        // Predicated region
        $region85: #{segmentation_vit_forward.3} parent=51 // pred_check
          %p671 = pneg %p279
        $region86: #{segmentation_vit_forward.3} parent=51 // pred_check_branch
          %673 = sbr.rel (%p671) target = $region88
        $region87: #{segmentation_vit_forward.3} parent=51 // pred_region
          %p674 = scmp.lt.s32.totalorder %s30, 1
          %s675 = scalar_select %p674, %s30, 1
          %s676 = smul.addr %s675, 4
          %s677 = smul.addr %s676, 4
          %s678 = scalar_lea.vmem %s9, %s677
        $region88: #{segmentation_vit_forward.3} parent=51 // pred_fallthru
          _
        // Predicated region
        $region89: #{segmentation_vit_forward.3} parent=51 // pred_check
          %p679 = pneg %p305
        $region90: #{segmentation_vit_forward.3} parent=51 // pred_check_branch
          %681 = sbr.rel (%p679) target = $region92
        $region91: #{segmentation_vit_forward.3} parent=51 // pred_region
          %p682 = scmp.lt.s32.totalorder %s30, 1
          %s683 = scalar_select %p682, %s30, 1
          %s684 = scalar_lea.vmem %s10, %s683
        $region92: #{segmentation_vit_forward.3} parent=51 // pred_fallthru
          _
        // Predicated region
        $region93: #{segmentation_vit_forward.3} parent=51 // pred_check
          %p685 = pneg %p331
        $region94: #{segmentation_vit_forward.3} parent=51 // pred_check_branch
          %687 = sbr.rel (%p685) target = $region96
        $region95: #{segmentation_vit_forward.3} parent=51 // pred_region
          %p688 = scmp.lt.s32.totalorder %s30, 1
          %s689 = scalar_select %p688, %s30, 1
          %s690 = smul.addr %s689, 16
          %s691 = smul.addr %s690, 4
          %s692 = scalar_lea.vmem %s11, %s691
        $region96: #{segmentation_vit_forward.3} parent=51 // pred_fallthru
          _
        // Predicated region
        $region97: #{segmentation_vit_forward.3} parent=51 // pred_check
          %p693 = pneg %p357
        $region98: #{segmentation_vit_forward.3} parent=51 // pred_check_branch
          %695 = sbr.rel (%p693) target = $region100
        $region99: #{segmentation_vit_forward.3} parent=51 // pred_region
          %p696 = scmp.lt.s32.totalorder %s30, 1
          %s697 = scalar_select %p696, %s30, 1
          %s698 = scalar_lea.vmem %s12, %s697
        $region100: #{segmentation_vit_forward.3} parent=51 // pred_fallthru
          _
      $region52: #{segmentation_vit_forward.3} parent=5 // pred_fallthru
        _
      %p699 = scmp.le.s32.totalorder 1, %s30
      %p700 = scmp.lt.s32.totalorder %s30, 3
      %p701 = pnand %p699, %p700
      %p702 = pneg %p701
      // Predicated region
      $region101: #{segmentation_vit_forward.3} parent=5 // pred_check
        _
      $region102: #{segmentation_vit_forward.3} parent=5 // pred_check_branch
        %704 = sbr.rel (%p701) target = $region104
      $region103: #{segmentation_vit_forward.3} parent=5 // pred_region
        %s705 = ssub.s32 %s30, 1
        %p706 = pneg %p51
        %p707 = pneg %p48
        %p708 = scmp.lt.s32.totalorder %s35, 1
        %s709 = scalar_select %p708, %s35, 1
        %s710 = scalar_lea.vmem %s1, %s709
        %p711 = pneg %p77
        %p712 = pneg %p74
        %p713 = scmp.lt.s32.totalorder %s35, 1
        %s714 = scalar_select %p713, %s35, 1
        %s715 = scalar_lea.vmem %s2, %s714
        %p716 = pneg %p103
        %p717 = pneg %p100
        %p718 = scmp.lt.s32.totalorder %s35, 1
        %s719 = scalar_select %p718, %s35, 1
        %s720 = smul.addr %s719, 4
        %s721 = smul.addr %s720, 4
        %s722 = scalar_lea.vmem %s3, %s721
        %p723 = pneg %p129
        %p724 = pneg %p126
        %p725 = scmp.lt.s32.totalorder %s35, 1
        %s726 = scalar_select %p725, %s35, 1
        %s727 = scalar_lea.vmem %s4, %s726
        %p728 = pneg %p155
        %p729 = pneg %p152
        %p730 = scmp.lt.s32.totalorder %s35, 1
        %s731 = scalar_select %p730, %s35, 1
        %s732 = smul.addr %s731, 4
        %s733 = smul.addr %s732, 4
        %s734 = scalar_lea.vmem %s5, %s733
        %p735 = pneg %p181
        %p736 = pneg %p178
        %p737 = scmp.lt.s32.totalorder %s35, 1
        %s738 = scalar_select %p737, %s35, 1
        %s739 = scalar_lea.vmem %s6, %s738
        %p740 = pneg %p207
        %p741 = pneg %p204
        %p742 = scmp.lt.s32.totalorder %s35, 1
        %s743 = scalar_select %p742, %s35, 1
        %s744 = scalar_lea.vmem %s7, %s743
        %p745 = pneg %p233
        %p746 = pneg %p230
        %p747 = scmp.lt.s32.totalorder %s35, 1
        %s748 = scalar_select %p747, %s35, 1
        %s749 = scalar_lea.vmem %s8, %s748
        %p750 = pneg %p259
        %p751 = pneg %p256
        %p752 = scmp.lt.s32.totalorder %s35, 1
        %s753 = scalar_select %p752, %s35, 1
        %s754 = smul.addr %s753, 4
        %s755 = smul.addr %s754, 4
        %s756 = scalar_lea.vmem %s9, %s755
        %p757 = pneg %p285
        %p758 = pneg %p282
        %p759 = scmp.lt.s32.totalorder %s35, 1
        %s760 = scalar_select %p759, %s35, 1
        %s761 = scalar_lea.vmem %s10, %s760
        %p762 = pneg %p311
        %p763 = pneg %p308
        %p764 = scmp.lt.s32.totalorder %s35, 1
        %s765 = scalar_select %p764, %s35, 1
        %s766 = smul.addr %s765, 16
        %s767 = smul.addr %s766, 4
        %s768 = scalar_lea.vmem %s11, %s767
        %p769 = pneg %p337
        %p770 = pneg %p334
        %p771 = scmp.lt.s32.totalorder %s35, 1
        %s772 = scalar_select %p771, %s35, 1
        %s773 = scalar_lea.vmem %s12, %s772
        %p774 = pneg %p363
        %p775 = pneg %p360
        %p776 = pneg %p384
        %p777 = pneg %p381
        %p778 = pneg %p405
        %p779 = pneg %p402
        %p780 = pneg %p426
        %p781 = pneg %p423
        %p782 = pneg %p447
        %p783 = pneg %p444
        %p784 = pneg %p468
        %p785 = pneg %p465
        %p786 = pneg %p489
        %p787 = pneg %p486
        %p788 = pneg %p510
        %p789 = pneg %p507
        %p790 = pneg %p531
        %p791 = pneg %p528
        %p792 = pneg %p552
        %p793 = pneg %p549
        %p794 = pneg %p573
        %p795 = pneg %p570
        %p796 = scmp.lt.s32.totalorder %s35, 1
        %s797 = scalar_select %p796, %s35, 1
        %s798 = scalar_lea.vmem %s1, %s797
        %p799 = scmp.lt.s32.totalorder %s35, 1
        %s800 = scalar_select %p799, %s35, 1
        %s801 = scalar_lea.vmem %s2, %s800
        %p802 = scmp.lt.s32.totalorder %s35, 1
        %s803 = scalar_select %p802, %s35, 1
        %s804 = smul.addr %s803, 4
        %s805 = smul.addr %s804, 4
        %s806 = scalar_lea.vmem %s3, %s805
        %p807 = scmp.lt.s32.totalorder %s35, 1
        %s808 = scalar_select %p807, %s35, 1
        %s809 = scalar_lea.vmem %s4, %s808
        %p810 = scmp.lt.s32.totalorder %s35, 1
        %s811 = scalar_select %p810, %s35, 1
        %s812 = smul.addr %s811, 4
        %s813 = smul.addr %s812, 4
        %s814 = scalar_lea.vmem %s5, %s813
        %p815 = scmp.lt.s32.totalorder %s35, 1
        %s816 = scalar_select %p815, %s35, 1
        %s817 = scalar_lea.vmem %s6, %s816
        %p818 = scmp.lt.s32.totalorder %s35, 1
        %s819 = scalar_select %p818, %s35, 1
        %s820 = scalar_lea.vmem %s7, %s819
        %p821 = scmp.lt.s32.totalorder %s35, 1
        %s822 = scalar_select %p821, %s35, 1
        %s823 = scalar_lea.vmem %s8, %s822
        %p824 = scmp.lt.s32.totalorder %s35, 1
        %s825 = scalar_select %p824, %s35, 1
        %s826 = smul.addr %s825, 4
        %s827 = smul.addr %s826, 4
        %s828 = scalar_lea.vmem %s9, %s827
        %p829 = scmp.lt.s32.totalorder %s35, 1
        %s830 = scalar_select %p829, %s35, 1
        %s831 = scalar_lea.vmem %s10, %s830
        %p832 = scmp.lt.s32.totalorder %s35, 1
        %s833 = scalar_select %p832, %s35, 1
        %s834 = smul.addr %s833, 16
        %s835 = smul.addr %s834, 4
        %s836 = scalar_lea.vmem %s11, %s835
        %p837 = scmp.lt.s32.totalorder %s35, 1
        %s838 = scalar_select %p837, %s35, 1
        %s839 = scalar_lea.vmem %s12, %s838
        %p841 = scmp.eq.s32.totalorder %s35, 0
        // Predicated region
        $region105: #{segmentation_vit_forward.3} parent=103 // pred_check
          %p842 = pneg %p841
        $region106: #{segmentation_vit_forward.3} parent=103 // pred_check_branch
          %844 = sbr.rel (%p842) target = $region108
        $region107: #{segmentation_vit_forward.3} parent=103 // pred_region
          %v845 = vld [vmem:[%s0] sm:$0xff]
          %v846 = vld [vmem:[%s0 + $0x8] sm:$0xff]
          %v847 = vld [vmem:[%s0 + $0x10] sm:$0xff]
          %v848 = vld [vmem:[%s0 + $0x18] sm:$0xff]
          %v849 = vld [vmem:[%s0 + $0x20] sm:$0x3]
          %vm850 = vcmask 261120
          %851 = vst.msk [vmem:[#allocation2] sm:$0xff] %vm850, %v845
          %852 = vst.msk [vmem:[#allocation2 + $0x8] sm:$0xff] %vm850, %v846
          %853 = vst.msk [vmem:[#allocation2 + $0x10] sm:$0xff] %vm850, %v847
          %854 = vst.msk [vmem:[#allocation2 + $0x18] sm:$0xff] %vm850, %v848
          %vm855 = vcmask 254976
          %856 = vst.msk [vmem:[#allocation2 + $0x20] sm:$0x3] %vm855, %v849
          %s857 = scalar_lea.smem [#allocation3], 0
          %858 = sst [smem:[%s857]] 0.0
        $region108: #{segmentation_vit_forward.3} parent=103 // pred_fallthru
          _
        %v859 = vld [vmem:[#allocation2] sm:$0xff]
        %v860 = vld [vmem:[#allocation2 + $0x8] sm:$0xff]
        %v861 = vld [vmem:[#allocation2 + $0x10] sm:$0xff]
        %v862 = vld [vmem:[#allocation2 + $0x18] sm:$0xff]
        %v863 = vld [vmem:[#allocation2 + $0x20] sm:$0x3]
        %v864 = vld [vmem:[%s798] sm:$0x1]
        %v865 = vld [vmem:[%s801] sm:$0x1]
        %v866 = vld [vmem:[%s806] sm:$0xf]
        %v867 = vld [vmem:[%s806 + $0x4] sm:$0xf]
        %v868 = vld [vmem:[%s806 + $0x8] sm:$0xf]
        %v869 = vld [vmem:[%s806 + $0xc] sm:$0xf]
        %v870 = vld [vmem:[%s809] sm:$0x1]
        %v871 = vld [vmem:[%s814] sm:$0xf]
        %v872 = vld [vmem:[%s814 + $0x4] sm:$0xf]
        %v873 = vld [vmem:[%s814 + $0x8] sm:$0xf]
        %v874 = vld [vmem:[%s814 + $0xc] sm:$0xf]
        %v875 = vld [vmem:[%s817] sm:$0x1]
        %v876 = vld [vmem:[%s820] sm:$0x1]
        %v877 = vld [vmem:[%s823] sm:$0x1]
        %v878 = vld [vmem:[%s828] sm:$0xf]
        %v879 = vld [vmem:[%s828 + $0x4] sm:$0xf]
        %v880 = vld [vmem:[%s828 + $0x8] sm:$0xf]
        %v881 = vld [vmem:[%s828 + $0xc] sm:$0xf]
        %v882 = vld [vmem:[%s831] sm:$0x1]
        %v883 = vld [vmem:[%s836] sm:$0xf]
        %v884 = vld [vmem:[%s836 + $0x4] sm:$0xf]
        %v885 = vld [vmem:[%s836 + $0x8] sm:$0xf]
        %v886 = vld [vmem:[%s836 + $0xc] sm:$0xf]
        %v887 = vld [vmem:[%s836 + $0x10] sm:$0xf]
        %v888 = vld [vmem:[%s836 + $0x14] sm:$0xf]
        %v889 = vld [vmem:[%s836 + $0x18] sm:$0xf]
        %v890 = vld [vmem:[%s836 + $0x1c] sm:$0xf]
        %v891 = vld [vmem:[%s836 + $0x20] sm:$0xf]
        %v892 = vld [vmem:[%s836 + $0x24] sm:$0xf]
        %v893 = vld [vmem:[%s836 + $0x28] sm:$0xf]
        %v894 = vld [vmem:[%s836 + $0x2c] sm:$0xf]
        %v895 = vld [vmem:[%s836 + $0x30] sm:$0xf]
        %v896 = vld [vmem:[%s836 + $0x34] sm:$0xf]
        %v897 = vld [vmem:[%s836 + $0x38] sm:$0xf]
        %v898 = vld [vmem:[%s836 + $0x3c] sm:$0xf]
        %v899 = vld [vmem:[%s839] sm:$0x1]
        %vm900 = vcmask 261120
        %v901 = vsel %vm900, %v859, 0.0
        %902 = vadd.xlane.f32.xlu0 %v901
        %v903 = vpop.xlane.xlu0 %902
        %v904 = vsel %vm900, %v860, 0.0
        %905 = vadd.xlane.f32.xlu0 %v904
        %v906 = vpop.xlane.xlu0 %905
        %v907 = vsel %vm900, %v861, 0.0
        %908 = vadd.xlane.f32.xlu0 %v907
        %v909 = vpop.xlane.xlu0 %908
        %v910 = vsel %vm900, %v862, 0.0
        %911 = vadd.xlane.f32.xlu0 %v910
        %v912 = vpop.xlane.xlu0 %911
        %vm913 = vcmask 254976
        %v914 = vsel %vm913, %v863, 0.0
        %915 = vadd.xlane.f32.xlu0 %v914
        %v916 = vpop.xlane.xlu0 %915
        %v917 = vrcp.pop 32.0
        %v918 = vmul.f32 %v903, %v917
        %v919 = vmul.f32 %v906, %v917
        %v920 = vmul.f32 %v909, %v917
        %v921 = vmul.f32 %v912, %v917
        %v922 = vmul.f32 %v916, %v917
        %v923 = vsub.f32 %v859, %v918
        %v924 = vsub.f32 %v860, %v919
        %v925 = vsub.f32 %v861, %v920
        %v926 = vsub.f32 %v862, %v921
        %v927 = vsub.f32 %v863, %v922
        %v928 = vmul.f32 %v923, %v923
        %v929 = vmul.f32 %v924, %v924
        %v930 = vmul.f32 %v925, %v925
        %v931 = vmul.f32 %v926, %v926
        %v932 = vmul.f32 %v927, %v927
        %v933 = vsel %vm900, %v928, 0.0
        %934 = vadd.xlane.f32.xlu0 %v933
        %v935 = vpop.xlane.xlu0 %934
        %v936 = vsel %vm900, %v929, 0.0
        %937 = vadd.xlane.f32.xlu0 %v936
        %v938 = vpop.xlane.xlu0 %937
        %v939 = vsel %vm900, %v930, 0.0
        %940 = vadd.xlane.f32.xlu0 %v939
        %v941 = vpop.xlane.xlu0 %940
        %v942 = vsel %vm900, %v931, 0.0
        %943 = vadd.xlane.f32.xlu0 %v942
        %v944 = vpop.xlane.xlu0 %943
        %v945 = vsel %vm913, %v932, 0.0
        %946 = vadd.xlane.f32.xlu0 %v945
        %v947 = vpop.xlane.xlu0 %946
        %v948 = vmul.f32 %v935, %v917
        %v949 = vmul.f32 %v938, %v917
        %v950 = vmul.f32 %v941, %v917
        %v951 = vmul.f32 %v944, %v917
        %v952 = vmul.f32 %v947, %v917
        %v953 = vadd.f32 %v948, 1e-05
        %v954 = vadd.f32 %v949, 1e-05
        %v955 = vadd.f32 %v950, 1e-05
        %v956 = vadd.f32 %v951, 1e-05
        %v957 = vadd.f32 %v952, 1e-05
        %v958 = vrsqrt.pop %v953
        %v959 = vrsqrt.pop %v954
        %v960 = vrsqrt.pop %v955
        %v961 = vrsqrt.pop %v956
        %v962 = vrsqrt.pop %v957
        %v963 = vmul.f32 %v923, %v958
        %v964 = vmul.f32 %v924, %v959
        %v965 = vmul.f32 %v925, %v960
        %v966 = vmul.f32 %v926, %v961
        %v967 = vmul.f32 %v927, %v962
        %v969 = vlaneseq
        %v970 = vshrl.u32 %v969, 7
        %v971 = vsub.s32 0, %v970
        %v972 = vrot.slane %v864, %v971
        %v974 = vmul.f32 %v963, %v972
        %v975 = vmul.f32 %v964, %v972
        %v976 = vmul.f32 %v965, %v972
        %v977 = vmul.f32 %v966, %v972
        %v978 = vmul.f32 %v967, %v972
        %v980 = vlaneseq
        %v981 = vshrl.u32 %v980, 7
        %v982 = vsub.s32 0, %v981
        %v983 = vrot.slane %v865, %v982
        %v985 = vadd.f32 %v974, %v983
        %v986 = vadd.f32 %v975, %v983
        %v987 = vadd.f32 %v976, %v983
        %v988 = vadd.f32 %v977, %v983
        %v989 = vadd.f32 %v978, %v983
        %v990 = vpack.c.bf16 %v986, %v985
        %v991 = vpack.c.bf16 %v988, %v987
        %v992 = vpack.c.bf16 %v989, %v989
        %v994 = vlaneseq
        %v995 = vshrl.u32 %v994, 7
        %v996 = vsub.s32 0, %v995
        %v997 = vrot.slane %v870, %v996
        %v1003 = vunpack.c.l.b16 %v866
        %v1004 = vunpack.c.l.b16 %v867
        %v1005 = vunpack.c.l.b16 %v868
        %v1006 = vunpack.c.l.b16 %v869
        %v1007 = vpack.c.b16 %v1004, %v1003
        %v1008 = vpack.c.b16 %v1006, %v1005
        %v1012 = vsel %vm900, %v990, 0
        %v1015 = vsel %vm900, %v991, 0
        %v1018 = vsel %vm900, %v992, 0
        %1020 = vmatprep.subr.bf16.mxu0 0
        %1021 = vmatpush1.bf16.msra.mxu0 %v1007
        %1022 = vmatprep.subr.bf16.mxu0 0
        %1023 = vmatpush1.bf16.msra.mxu0 %v1008
        %1024 = vmatprep.subr.bf16.mxu0 0
        %1025 = vmatpush1.bf16.msra.mxu0 0
        %1026 = vmatprep.subr.bf16.mxu0 0
        %1027 = vmatpush1.bf16.msra.mxu0 0
        %1028 = vmatprep.subr.bf16.mxu0 0
        %1029 = vmatpush1.bf16.msra.mxu0 0
        %1030 = vmatprep.subr.bf16.mxu0 0
        %1031 = vmatpush1.bf16.msra.mxu0 0
        %1032 = vmatprep.subr.bf16.mxu0 0
        %1033 = vmatpush1.bf16.msra.mxu0 0
        %1034 = vmatprep.subr.bf16.mxu0 0
        %1035 = vmatpush1.bf16.msra.mxu0 0
        %1036 = vmatprep.subr.bf16.mxu0 0
        %1037 = vmatpush1.bf16.msra.mxu0 0
        %1038 = vmatprep.subr.bf16.mxu0 0
        %1039 = vmatpush1.bf16.msra.mxu0 0
        %1040 = vmatprep.subr.bf16.mxu0 0
        %1041 = vmatpush1.bf16.msra.mxu0 0
        %1042 = vmatprep.subr.bf16.mxu0 0
        %1043 = vmatpush1.bf16.msra.mxu0 0
        %1044 = vmatprep.subr.bf16.mxu0 0
        %1045 = vmatpush1.bf16.msra.mxu0 0
        %1046 = vmatprep.subr.bf16.mxu0 0
        %1047 = vmatpush1.bf16.msra.mxu0 0
        %1048 = vmatprep.subr.bf16.mxu0 0
        %1049 = vmatpush1.bf16.msra.mxu0 0
        %1050 = vmatprep.subr.bf16.mxu0 0
        %1051 = vmatpush1.bf16.msra.mxu0 0
        %1052 = vmatprep.mubr.bf16.mxu0 0
        %1053 = vmatmul.mubr.bf16.gmra.mrb[0].mxu0 %v1012
        %v1054 = vpop.f32.mrb[0].mxu0
        %v1055 = vadd.f32 %v997, %v1054
        %v1056 = vpop.f32.mrb[0].mxu0
        %v1057 = vpop.f32.mrb[0].mxu0
        %v1058 = vadd.f32 %v997, %v1057
        %v1059 = vpop.f32.mrb[0].mxu0
        %1060 = vmatprep.mubr.bf16.mxu0 0
        %1061 = vmatmul.mubr.bf16.gmra.mrb[0].mxu0 %v1015
        %v1062 = vpop.f32.mrb[0].mxu0
        %v1063 = vadd.f32 %v997, %v1062
        %v1064 = vpop.f32.mrb[0].mxu0
        %v1065 = vpop.f32.mrb[0].mxu0
        %v1066 = vadd.f32 %v997, %v1065
        %v1067 = vpop.f32.mrb[0].mxu0
        %1068 = vmatprep.mubr.bf16.mxu0 0
        %1069 = vmatmul.mubr.bf16.gmra.mrb[0].mxu0 %v1018
        %v1070 = vpop.f32.mrb[0].mxu0
        %v1071 = vadd.f32 %v997, %v1070
        %v1072 = vpop.f32.mrb[0].mxu0
        %v1073 = vpop.f32.mrb[0].mxu0
        %v1074 = vpop.f32.mrb[0].mxu0
        %1075 = vdwg.mxu0
        %1079 = vrot.lane.b32.xlu0 %v1055, 120
        %v1080 = vpop.permute.xlu0 %1079
        %1081 = vrot.lane.b32.xlu0 %v1058, 120
        %v1082 = vpop.permute.xlu0 %1081
        %1083 = vrot.lane.b32.xlu0 %v1063, 120
        %v1084 = vpop.permute.xlu0 %1083
        %1088 = vrot.lane.b32.xlu0 %v1055, 112
        %v1089 = vpop.permute.xlu0 %1088
        %1090 = vrot.lane.b32.xlu0 %v1058, 112
        %v1091 = vpop.permute.xlu0 %1090
        %1092 = vrot.lane.b32.xlu0 %v1063, 112
        %v1093 = vpop.permute.xlu0 %1092
        %1097 = vrot.lane.b32.xlu0 %v1055, 104
        %v1098 = vpop.permute.xlu0 %1097
        %1099 = vrot.lane.b32.xlu0 %v1058, 104
        %v1100 = vpop.permute.xlu0 %1099
        %1101 = vrot.lane.b32.xlu0 %v1063, 104
        %v1102 = vpop.permute.xlu0 %1101
        %vm1108 = vcmask 1046528
        %v1109 = vrot.slane %v1063, 1
        %v1110 = vrot.slane %v1066, 1
        %v1111 = vsel %vm1108, %v1109, %v1110
        %v1112 = vrot.slane %v1071, 1
        %v1113 = vsel %vm1108, %v1110, %v1112
        %1117 = vrot.lane.b32.xlu0 %v1111, 120
        %v1118 = vpop.permute.xlu0 %1117
        %1119 = vrot.lane.b32.xlu0 %v1113, 120
        %v1120 = vpop.permute.xlu0 %1119
        %1121 = vrot.lane.b32.xlu0 %v1112, 120
        %v1122 = vpop.permute.xlu0 %1121
        %1126 = vrot.lane.b32.xlu0 %v1111, 112
        %v1127 = vpop.permute.xlu0 %1126
        %1128 = vrot.lane.b32.xlu0 %v1113, 112
        %v1129 = vpop.permute.xlu0 %1128
        %1130 = vrot.lane.b32.xlu0 %v1112, 112
        %v1131 = vpop.permute.xlu0 %1130
        %1135 = vrot.lane.b32.xlu0 %v1111, 104
        %v1136 = vpop.permute.xlu0 %1135
        %1137 = vrot.lane.b32.xlu0 %v1113, 104
        %v1138 = vpop.permute.xlu0 %1137
        %1139 = vrot.lane.b32.xlu0 %v1112, 104
        %v1140 = vpop.permute.xlu0 %1139
        %v1144 = vpack.c.bf16 %v1058, %v1055
        %v1145 = vpack.c.bf16 %v1063, %v1063
        %v1146 = vpack.c.bf16 %v1082, %v1080
        %v1147 = vpack.c.bf16 %v1084, %v1084
        %v1148 = vpack.c.bf16 %v1091, %v1089
        %v1149 = vpack.c.bf16 %v1093, %v1093
        %v1150 = vpack.c.bf16 %v1100, %v1098
        %v1151 = vpack.c.bf16 %v1102, %v1102
        %v1152 = vpack.c.bf16 %v1113, %v1111
        %v1153 = vpack.c.bf16 %v1112, %v1112
        %v1154 = vpack.c.bf16 %v1120, %v1118
        %v1155 = vpack.c.bf16 %v1122, %v1122
        %v1156 = vpack.c.bf16 %v1129, %v1127
        %v1157 = vpack.c.bf16 %v1131, %v1131
        %v1158 = vpack.c.bf16 %v1138, %v1136
        %v1159 = vpack.c.bf16 %v1140, %v1140
        %1162 = vrot.lane.b32.xlu0 %v1144, 96
        %v1163 = vpop.permute.xlu0 %1162
        %1164 = vrot.lane.b32.xlu0 %v1145, 96
        %v1165 = vpop.permute.xlu0 %1164
        %vm1166 = vcmask 64512
        %v1168 = vsel %vm1166, %v1144, 0
        %v1171 = vsel %vm1166, %v1145, 0
        %v1174 = vsel %vm1166, %v1163, 0
        %v1177 = vsel %vm1166, %v1165, 0
        %1179 = vmatprep.subr.bf16.mxu0 0
        %1180 = vmatpush1.bf16.xpose.msra.mxu0 %v1174
        %1181 = vmatprep.subr.bf16.mxu0 0
        %1182 = vmatpush1.bf16.xpose.msra.mxu0 %v1177
        %1183 = vmatprep.subr.bf16.mxu0 0
        %1184 = vmatpush1.bf16.xpose.msra.mxu0 0
        %1185 = vmatprep.subr.bf16.mxu0 0
        %1186 = vmatpush1.bf16.xpose.msra.mxu0 0
        %1187 = vmatprep.subr.bf16.mxu0 0
        %1188 = vmatpush1.bf16.xpose.msra.mxu0 0
        %1189 = vmatprep.subr.bf16.mxu0 0
        %1190 = vmatpush1.bf16.xpose.msra.mxu0 0
        %1191 = vmatprep.subr.bf16.mxu0 0
        %1192 = vmatpush1.bf16.xpose.msra.mxu0 0
        %1193 = vmatprep.subr.bf16.mxu0 0
        %1194 = vmatpush1.bf16.xpose.msra.mxu0 0
        %1195 = vmatprep.subr.bf16.mxu0 0
        %1196 = vmatpush1.bf16.xpose.msra.mxu0 0
        %1197 = vmatprep.subr.bf16.mxu0 0
        %1198 = vmatpush1.bf16.xpose.msra.mxu0 0
        %1199 = vmatprep.subr.bf16.mxu0 0
        %1200 = vmatpush1.bf16.xpose.msra.mxu0 0
        %1201 = vmatprep.subr.bf16.mxu0 0
        %1202 = vmatpush1.bf16.xpose.msra.mxu0 0
        %1203 = vmatprep.subr.bf16.mxu0 0
        %1204 = vmatpush1.bf16.xpose.msra.mxu0 0
        %1205 = vmatprep.subr.bf16.mxu0 0
        %1206 = vmatpush1.bf16.xpose.msra.mxu0 0
        %1207 = vmatprep.subr.bf16.mxu0 0
        %1208 = vmatpush1.bf16.xpose.msra.mxu0 0
        %1209 = vmatprep.subr.bf16.mxu0 0
        %1210 = vmatpush1.bf16.xpose.msra.mxu0 0
        %1211 = vmatprep.mubr.bf16.mxu0 0
        %1212 = vmatmul.mubr.bf16.gmra.mrb[0].mxu0 %v1168
        %v1213 = vpop.f32.mrb[0].mxu0
        %v1214 = vadd.f32 0.0, %v1213
        %v1215 = vpop.f32.mrb[0].mxu0
        %v1216 = vpop.f32.mrb[0].mxu0
        %v1217 = vadd.f32 0.0, %v1216
        %v1218 = vpop.f32.mrb[0].mxu0
        %1219 = vmatprep.mubr.bf16.mxu0 0
        %1220 = vmatmul.mubr.bf16.gmra.mrb[0].mxu0 %v1171
        %v1221 = vpop.f32.mrb[0].mxu0
        %v1222 = vadd.f32 0.0, %v1221
        %v1223 = vpop.f32.mrb[0].mxu0
        %v1224 = vpop.f32.mrb[0].mxu0
        %v1225 = vpop.f32.mrb[0].mxu0
        %1226 = vdwg.mxu0
        %1229 = vrot.lane.b32.xlu0 %v1146, 96
        %v1230 = vpop.permute.xlu0 %1229
        %1231 = vrot.lane.b32.xlu0 %v1147, 96
        %v1232 = vpop.permute.xlu0 %1231
        %v1234 = vsel %vm1166, %v1146, 0
        %v1237 = vsel %vm1166, %v1147, 0
        %v1240 = vsel %vm1166, %v1230, 0
        %v1243 = vsel %vm1166, %v1232, 0
        %1245 = vmatprep.subr.bf16.mxu0 0
        %1246 = vmatpush1.bf16.xpose.msra.mxu0 %v1240
        %1247 = vmatprep.subr.bf16.mxu0 0
        %1248 = vmatpush1.bf16.xpose.msra.mxu0 %v1243
        %1249 = vmatprep.subr.bf16.mxu0 0
        %1250 = vmatpush1.bf16.xpose.msra.mxu0 0
        %1251 = vmatprep.subr.bf16.mxu0 0
        %1252 = vmatpush1.bf16.xpose.msra.mxu0 0
        %1253 = vmatprep.subr.bf16.mxu0 0
        %1254 = vmatpush1.bf16.xpose.msra.mxu0 0
        %1255 = vmatprep.subr.bf16.mxu0 0
        %1256 = vmatpush1.bf16.xpose.msra.mxu0 0
        %1257 = vmatprep.subr.bf16.mxu0 0
        %1258 = vmatpush1.bf16.xpose.msra.mxu0 0
        %1259 = vmatprep.subr.bf16.mxu0 0
        %1260 = vmatpush1.bf16.xpose.msra.mxu0 0
        %1261 = vmatprep.subr.bf16.mxu0 0
        %1262 = vmatpush1.bf16.xpose.msra.mxu0 0
        %1263 = vmatprep.subr.bf16.mxu0 0
        %1264 = vmatpush1.bf16.xpose.msra.mxu0 0
        %1265 = vmatprep.subr.bf16.mxu0 0
        %1266 = vmatpush1.bf16.xpose.msra.mxu0 0
        %1267 = vmatprep.subr.bf16.mxu0 0
        %1268 = vmatpush1.bf16.xpose.msra.mxu0 0
        %1269 = vmatprep.subr.bf16.mxu0 0
        %1270 = vmatpush1.bf16.xpose.msra.mxu0 0
        %1271 = vmatprep.subr.bf16.mxu0 0
        %1272 = vmatpush1.bf16.xpose.msra.mxu0 0
        %1273 = vmatprep.subr.bf16.mxu0 0
        %1274 = vmatpush1.bf16.xpose.msra.mxu0 0
        %1275 = vmatprep.subr.bf16.mxu0 0
        %1276 = vmatpush1.bf16.xpose.msra.mxu0 0
        %1277 = vmatprep.mubr.bf16.mxu0 0
        %1278 = vmatmul.mubr.bf16.gmra.mrb[0].mxu0 %v1234
        %v1279 = vpop.f32.mrb[0].mxu0
        %v1280 = vadd.f32 0.0, %v1279
        %v1281 = vpop.f32.mrb[0].mxu0
        %v1282 = vpop.f32.mrb[0].mxu0
        %v1283 = vadd.f32 0.0, %v1282
        %v1284 = vpop.f32.mrb[0].mxu0
        %1285 = vmatprep.mubr.bf16.mxu0 0
        %1286 = vmatmul.mubr.bf16.gmra.mrb[0].mxu0 %v1237
        %v1287 = vpop.f32.mrb[0].mxu0
        %v1288 = vadd.f32 0.0, %v1287
        %v1289 = vpop.f32.mrb[0].mxu0
        %v1290 = vpop.f32.mrb[0].mxu0
        %v1291 = vpop.f32.mrb[0].mxu0
        %1292 = vdwg.mxu0
        %1295 = vrot.lane.b32.xlu0 %v1148, 96
        %v1296 = vpop.permute.xlu0 %1295
        %1297 = vrot.lane.b32.xlu0 %v1149, 96
        %v1298 = vpop.permute.xlu0 %1297
        %v1300 = vsel %vm1166, %v1148, 0
        %v1303 = vsel %vm1166, %v1149, 0
        %v1306 = vsel %vm1166, %v1296, 0
        %v1309 = vsel %vm1166, %v1298, 0
        %1311 = vmatprep.subr.bf16.mxu0 0
        %1312 = vmatpush1.bf16.xpose.msra.mxu0 %v1306
        %1313 = vmatprep.subr.bf16.mxu0 0
        %1314 = vmatpush1.bf16.xpose.msra.mxu0 %v1309
        %1315 = vmatprep.subr.bf16.mxu0 0
        %1316 = vmatpush1.bf16.xpose.msra.mxu0 0
        %1317 = vmatprep.subr.bf16.mxu0 0
        %1318 = vmatpush1.bf16.xpose.msra.mxu0 0
        %1319 = vmatprep.subr.bf16.mxu0 0
        %1320 = vmatpush1.bf16.xpose.msra.mxu0 0
        %1321 = vmatprep.subr.bf16.mxu0 0
        %1322 = vmatpush1.bf16.xpose.msra.mxu0 0
        %1323 = vmatprep.subr.bf16.mxu0 0
        %1324 = vmatpush1.bf16.xpose.msra.mxu0 0
        %1325 = vmatprep.subr.bf16.mxu0 0
        %1326 = vmatpush1.bf16.xpose.msra.mxu0 0
        %1327 = vmatprep.subr.bf16.mxu0 0
        %1328 = vmatpush1.bf16.xpose.msra.mxu0 0
        %1329 = vmatprep.subr.bf16.mxu0 0
        %1330 = vmatpush1.bf16.xpose.msra.mxu0 0
        %1331 = vmatprep.subr.bf16.mxu0 0
        %1332 = vmatpush1.bf16.xpose.msra.mxu0 0
        %1333 = vmatprep.subr.bf16.mxu0 0
        %1334 = vmatpush1.bf16.xpose.msra.mxu0 0
        %1335 = vmatprep.subr.bf16.mxu0 0
        %1336 = vmatpush1.bf16.xpose.msra.mxu0 0
        %1337 = vmatprep.subr.bf16.mxu0 0
        %1338 = vmatpush1.bf16.xpose.msra.mxu0 0
        %1339 = vmatprep.subr.bf16.mxu0 0
        %1340 = vmatpush1.bf16.xpose.msra.mxu0 0
        %1341 = vmatprep.subr.bf16.mxu0 0
        %1342 = vmatpush1.bf16.xpose.msra.mxu0 0
        %1343 = vmatprep.mubr.bf16.mxu0 0
        %1344 = vmatmul.mubr.bf16.gmra.mrb[0].mxu0 %v1300
        %v1345 = vpop.f32.mrb[0].mxu0
        %v1346 = vadd.f32 0.0, %v1345
        %v1347 = vpop.f32.mrb[0].mxu0
        %v1348 = vpop.f32.mrb[0].mxu0
        %v1349 = vadd.f32 0.0, %v1348
        %v1350 = vpop.f32.mrb[0].mxu0
        %1351 = vmatprep.mubr.bf16.mxu0 0
        %1352 = vmatmul.mubr.bf16.gmra.mrb[0].mxu0 %v1303
        %v1353 = vpop.f32.mrb[0].mxu0
        %v1354 = vadd.f32 0.0, %v1353
        %v1355 = vpop.f32.mrb[0].mxu0
        %v1356 = vpop.f32.mrb[0].mxu0
        %v1357 = vpop.f32.mrb[0].mxu0
        %1358 = vdwg.mxu0
        %1361 = vrot.lane.b32.xlu0 %v1150, 96
        %v1362 = vpop.permute.xlu0 %1361
        %1363 = vrot.lane.b32.xlu0 %v1151, 96
        %v1364 = vpop.permute.xlu0 %1363
        %v1366 = vsel %vm1166, %v1150, 0
        %v1369 = vsel %vm1166, %v1151, 0
        %v1372 = vsel %vm1166, %v1362, 0
        %v1375 = vsel %vm1166, %v1364, 0
        %1377 = vmatprep.subr.bf16.mxu0 0
        %1378 = vmatpush1.bf16.xpose.msra.mxu0 %v1372
        %1379 = vmatprep.subr.bf16.mxu0 0
        %1380 = vmatpush1.bf16.xpose.msra.mxu0 %v1375
        %1381 = vmatprep.subr.bf16.mxu0 0
        %1382 = vmatpush1.bf16.xpose.msra.mxu0 0
        %1383 = vmatprep.subr.bf16.mxu0 0
        %1384 = vmatpush1.bf16.xpose.msra.mxu0 0
        %1385 = vmatprep.subr.bf16.mxu0 0
        %1386 = vmatpush1.bf16.xpose.msra.mxu0 0
        %1387 = vmatprep.subr.bf16.mxu0 0
        %1388 = vmatpush1.bf16.xpose.msra.mxu0 0
        %1389 = vmatprep.subr.bf16.mxu0 0
        %1390 = vmatpush1.bf16.xpose.msra.mxu0 0
        %1391 = vmatprep.subr.bf16.mxu0 0
        %1392 = vmatpush1.bf16.xpose.msra.mxu0 0
        %1393 = vmatprep.subr.bf16.mxu0 0
        %1394 = vmatpush1.bf16.xpose.msra.mxu0 0
        %1395 = vmatprep.subr.bf16.mxu0 0
        %1396 = vmatpush1.bf16.xpose.msra.mxu0 0
        %1397 = vmatprep.subr.bf16.mxu0 0
        %1398 = vmatpush1.bf16.xpose.msra.mxu0 0
        %1399 = vmatprep.subr.bf16.mxu0 0
        %1400 = vmatpush1.bf16.xpose.msra.mxu0 0
        %1401 = vmatprep.subr.bf16.mxu0 0
        %1402 = vmatpush1.bf16.xpose.msra.mxu0 0
        %1403 = vmatprep.subr.bf16.mxu0 0
        %1404 = vmatpush1.bf16.xpose.msra.mxu0 0
        %1405 = vmatprep.subr.bf16.mxu0 0
        %1406 = vmatpush1.bf16.xpose.msra.mxu0 0
        %1407 = vmatprep.subr.bf16.mxu0 0
        %1408 = vmatpush1.bf16.xpose.msra.mxu0 0
        %1409 = vmatprep.mubr.bf16.mxu0 0
        %1410 = vmatmul.mubr.bf16.gmra.mrb[0].mxu0 %v1366
        %v1411 = vpop.f32.mrb[0].mxu0
        %v1412 = vadd.f32 0.0, %v1411
        %v1413 = vpop.f32.mrb[0].mxu0
        %v1414 = vpop.f32.mrb[0].mxu0
        %v1415 = vadd.f32 0.0, %v1414
        %v1416 = vpop.f32.mrb[0].mxu0
        %1417 = vmatprep.mubr.bf16.mxu0 0
        %1418 = vmatmul.mubr.bf16.gmra.mrb[0].mxu0 %v1369
        %v1419 = vpop.f32.mrb[0].mxu0
        %v1420 = vadd.f32 0.0, %v1419
        %v1421 = vpop.f32.mrb[0].mxu0
        %v1422 = vpop.f32.mrb[0].mxu0
        %v1423 = vpop.f32.mrb[0].mxu0
        %1424 = vdwg.mxu0
        %1427 = vrot.lane.b32.xlu0 %v1152, 96
        %v1428 = vpop.permute.xlu0 %1427
        %1429 = vrot.lane.b32.xlu0 %v1153, 96
        %v1430 = vpop.permute.xlu0 %1429
        %v1432 = vsel %vm1166, %v1152, 0
        %v1435 = vsel %vm1166, %v1153, 0
        %v1438 = vsel %vm1166, %v1428, 0
        %v1441 = vsel %vm1166, %v1430, 0
        %1443 = vmatprep.subr.bf16.mxu0 0
        %1444 = vmatpush1.bf16.xpose.msra.mxu0 %v1438
        %1445 = vmatprep.subr.bf16.mxu0 0
        %1446 = vmatpush1.bf16.xpose.msra.mxu0 %v1441
        %1447 = vmatprep.subr.bf16.mxu0 0
        %1448 = vmatpush1.bf16.xpose.msra.mxu0 0
        %1449 = vmatprep.subr.bf16.mxu0 0
        %1450 = vmatpush1.bf16.xpose.msra.mxu0 0
        %1451 = vmatprep.subr.bf16.mxu0 0
        %1452 = vmatpush1.bf16.xpose.msra.mxu0 0
        %1453 = vmatprep.subr.bf16.mxu0 0
        %1454 = vmatpush1.bf16.xpose.msra.mxu0 0
        %1455 = vmatprep.subr.bf16.mxu0 0
        %1456 = vmatpush1.bf16.xpose.msra.mxu0 0
        %1457 = vmatprep.subr.bf16.mxu0 0
        %1458 = vmatpush1.bf16.xpose.msra.mxu0 0
        %1459 = vmatprep.subr.bf16.mxu0 0
        %1460 = vmatpush1.bf16.xpose.msra.mxu0 0
        %1461 = vmatprep.subr.bf16.mxu0 0
        %1462 = vmatpush1.bf16.xpose.msra.mxu0 0
        %1463 = vmatprep.subr.bf16.mxu0 0
        %1464 = vmatpush1.bf16.xpose.msra.mxu0 0
        %1465 = vmatprep.subr.bf16.mxu0 0
        %1466 = vmatpush1.bf16.xpose.msra.mxu0 0
        %1467 = vmatprep.subr.bf16.mxu0 0
        %1468 = vmatpush1.bf16.xpose.msra.mxu0 0
        %1469 = vmatprep.subr.bf16.mxu0 0
        %1470 = vmatpush1.bf16.xpose.msra.mxu0 0
        %1471 = vmatprep.subr.bf16.mxu0 0
        %1472 = vmatpush1.bf16.xpose.msra.mxu0 0
        %1473 = vmatprep.subr.bf16.mxu0 0
        %1474 = vmatpush1.bf16.xpose.msra.mxu0 0
        %1475 = vmatprep.mubr.bf16.mxu0 0
        %1476 = vmatmul.mubr.bf16.gmra.mrb[0].mxu0 %v1432
        %v1477 = vpop.f32.mrb[0].mxu0
        %v1478 = vadd.f32 0.0, %v1477
        %v1479 = vpop.f32.mrb[0].mxu0
        %v1480 = vpop.f32.mrb[0].mxu0
        %v1481 = vadd.f32 0.0, %v1480
        %v1482 = vpop.f32.mrb[0].mxu0
        %1483 = vmatprep.mubr.bf16.mxu0 0
        %1484 = vmatmul.mubr.bf16.gmra.mrb[0].mxu0 %v1435
        %v1485 = vpop.f32.mrb[0].mxu0
        %v1486 = vadd.f32 0.0, %v1485
        %v1487 = vpop.f32.mrb[0].mxu0
        %v1488 = vpop.f32.mrb[0].mxu0
        %v1489 = vpop.f32.mrb[0].mxu0
        %1490 = vdwg.mxu0
        %1493 = vrot.lane.b32.xlu0 %v1154, 96
        %v1494 = vpop.permute.xlu0 %1493
        %1495 = vrot.lane.b32.xlu0 %v1155, 96
        %v1496 = vpop.permute.xlu0 %1495
        %v1498 = vsel %vm1166, %v1154, 0
        %v1501 = vsel %vm1166, %v1155, 0
        %v1504 = vsel %vm1166, %v1494, 0
        %v1507 = vsel %vm1166, %v1496, 0
        %1509 = vmatprep.subr.bf16.mxu0 0
        %1510 = vmatpush1.bf16.xpose.msra.mxu0 %v1504
        %1511 = vmatprep.subr.bf16.mxu0 0
        %1512 = vmatpush1.bf16.xpose.msra.mxu0 %v1507
        %1513 = vmatprep.subr.bf16.mxu0 0
        %1514 = vmatpush1.bf16.xpose.msra.mxu0 0
        %1515 = vmatprep.subr.bf16.mxu0 0
        %1516 = vmatpush1.bf16.xpose.msra.mxu0 0
        %1517 = vmatprep.subr.bf16.mxu0 0
        %1518 = vmatpush1.bf16.xpose.msra.mxu0 0
        %1519 = vmatprep.subr.bf16.mxu0 0
        %1520 = vmatpush1.bf16.xpose.msra.mxu0 0
        %1521 = vmatprep.subr.bf16.mxu0 0
        %1522 = vmatpush1.bf16.xpose.msra.mxu0 0
        %1523 = vmatprep.subr.bf16.mxu0 0
        %1524 = vmatpush1.bf16.xpose.msra.mxu0 0
        %1525 = vmatprep.subr.bf16.mxu0 0
        %1526 = vmatpush1.bf16.xpose.msra.mxu0 0
        %1527 = vmatprep.subr.bf16.mxu0 0
        %1528 = vmatpush1.bf16.xpose.msra.mxu0 0
        %1529 = vmatprep.subr.bf16.mxu0 0
        %1530 = vmatpush1.bf16.xpose.msra.mxu0 0
        %1531 = vmatprep.subr.bf16.mxu0 0
        %1532 = vmatpush1.bf16.xpose.msra.mxu0 0
        %1533 = vmatprep.subr.bf16.mxu0 0
        %1534 = vmatpush1.bf16.xpose.msra.mxu0 0
        %1535 = vmatprep.subr.bf16.mxu0 0
        %1536 = vmatpush1.bf16.xpose.msra.mxu0 0
        %1537 = vmatprep.subr.bf16.mxu0 0
        %1538 = vmatpush1.bf16.xpose.msra.mxu0 0
        %1539 = vmatprep.subr.bf16.mxu0 0
        %1540 = vmatpush1.bf16.xpose.msra.mxu0 0
        %1541 = vmatprep.mubr.bf16.mxu0 0
        %1542 = vmatmul.mubr.bf16.gmra.mrb[0].mxu0 %v1498
        %v1543 = vpop.f32.mrb[0].mxu0
        %v1544 = vadd.f32 0.0, %v1543
        %v1545 = vpop.f32.mrb[0].mxu0
        %v1546 = vpop.f32.mrb[0].mxu0
        %v1547 = vadd.f32 0.0, %v1546
        %v1548 = vpop.f32.mrb[0].mxu0
        %1549 = vmatprep.mubr.bf16.mxu0 0
        %1550 = vmatmul.mubr.bf16.gmra.mrb[0].mxu0 %v1501
        %v1551 = vpop.f32.mrb[0].mxu0
        %v1552 = vadd.f32 0.0, %v1551
        %v1553 = vpop.f32.mrb[0].mxu0
        %v1554 = vpop.f32.mrb[0].mxu0
        %v1555 = vpop.f32.mrb[0].mxu0
        %1556 = vdwg.mxu0
        %1559 = vrot.lane.b32.xlu0 %v1156, 96
        %v1560 = vpop.permute.xlu0 %1559
        %1561 = vrot.lane.b32.xlu0 %v1157, 96
        %v1562 = vpop.permute.xlu0 %1561
        %v1564 = vsel %vm1166, %v1156, 0
        %v1567 = vsel %vm1166, %v1157, 0
        %v1570 = vsel %vm1166, %v1560, 0
        %v1573 = vsel %vm1166, %v1562, 0
        %1575 = vmatprep.subr.bf16.mxu0 0
        %1576 = vmatpush1.bf16.xpose.msra.mxu0 %v1570
        %1577 = vmatprep.subr.bf16.mxu0 0
        %1578 = vmatpush1.bf16.xpose.msra.mxu0 %v1573
        %1579 = vmatprep.subr.bf16.mxu0 0
        %1580 = vmatpush1.bf16.xpose.msra.mxu0 0
        %1581 = vmatprep.subr.bf16.mxu0 0
        %1582 = vmatpush1.bf16.xpose.msra.mxu0 0
        %1583 = vmatprep.subr.bf16.mxu0 0
        %1584 = vmatpush1.bf16.xpose.msra.mxu0 0
        %1585 = vmatprep.subr.bf16.mxu0 0
        %1586 = vmatpush1.bf16.xpose.msra.mxu0 0
        %1587 = vmatprep.subr.bf16.mxu0 0
        %1588 = vmatpush1.bf16.xpose.msra.mxu0 0
        %1589 = vmatprep.subr.bf16.mxu0 0
        %1590 = vmatpush1.bf16.xpose.msra.mxu0 0
        %1591 = vmatprep.subr.bf16.mxu0 0
        %1592 = vmatpush1.bf16.xpose.msra.mxu0 0
        %1593 = vmatprep.subr.bf16.mxu0 0
        %1594 = vmatpush1.bf16.xpose.msra.mxu0 0
        %1595 = vmatprep.subr.bf16.mxu0 0
        %1596 = vmatpush1.bf16.xpose.msra.mxu0 0
        %1597 = vmatprep.subr.bf16.mxu0 0
        %1598 = vmatpush1.bf16.xpose.msra.mxu0 0
        %1599 = vmatprep.subr.bf16.mxu0 0
        %1600 = vmatpush1.bf16.xpose.msra.mxu0 0
        %1601 = vmatprep.subr.bf16.mxu0 0
        %1602 = vmatpush1.bf16.xpose.msra.mxu0 0
        %1603 = vmatprep.subr.bf16.mxu0 0
        %1604 = vmatpush1.bf16.xpose.msra.mxu0 0
        %1605 = vmatprep.subr.bf16.mxu0 0
        %1606 = vmatpush1.bf16.xpose.msra.mxu0 0
        %1607 = vmatprep.mubr.bf16.mxu0 0
        %1608 = vmatmul.mubr.bf16.gmra.mrb[0].mxu0 %v1564
        %v1609 = vpop.f32.mrb[0].mxu0
        %v1610 = vadd.f32 0.0, %v1609
        %v1611 = vpop.f32.mrb[0].mxu0
        %v1612 = vpop.f32.mrb[0].mxu0
        %v1613 = vadd.f32 0.0, %v1612
        %v1614 = vpop.f32.mrb[0].mxu0
        %1615 = vmatprep.mubr.bf16.mxu0 0
        %1616 = vmatmul.mubr.bf16.gmra.mrb[0].mxu0 %v1567
        %v1617 = vpop.f32.mrb[0].mxu0
        %v1618 = vadd.f32 0.0, %v1617
        %v1619 = vpop.f32.mrb[0].mxu0
        %v1620 = vpop.f32.mrb[0].mxu0
        %v1621 = vpop.f32.mrb[0].mxu0
        %1622 = vdwg.mxu0
        %1625 = vrot.lane.b32.xlu0 %v1158, 96
        %v1626 = vpop.permute.xlu0 %1625
        %1627 = vrot.lane.b32.xlu0 %v1159, 96
        %v1628 = vpop.permute.xlu0 %1627
        %v1630 = vsel %vm1166, %v1158, 0
        %v1633 = vsel %vm1166, %v1159, 0
        %v1636 = vsel %vm1166, %v1626, 0
        %v1639 = vsel %vm1166, %v1628, 0
        %1641 = vmatprep.subr.bf16.mxu0 0
        %1642 = vmatpush1.bf16.xpose.msra.mxu0 %v1636
        %1643 = vmatprep.subr.bf16.mxu0 0
        %1644 = vmatpush1.bf16.xpose.msra.mxu0 %v1639
        %1645 = vmatprep.subr.bf16.mxu0 0
        %1646 = vmatpush1.bf16.xpose.msra.mxu0 0
        %1647 = vmatprep.subr.bf16.mxu0 0
        %1648 = vmatpush1.bf16.xpose.msra.mxu0 0
        %1649 = vmatprep.subr.bf16.mxu0 0
        %1650 = vmatpush1.bf16.xpose.msra.mxu0 0
        %1651 = vmatprep.subr.bf16.mxu0 0
        %1652 = vmatpush1.bf16.xpose.msra.mxu0 0
        %1653 = vmatprep.subr.bf16.mxu0 0
        %1654 = vmatpush1.bf16.xpose.msra.mxu0 0
        %1655 = vmatprep.subr.bf16.mxu0 0
        %1656 = vmatpush1.bf16.xpose.msra.mxu0 0
        %1657 = vmatprep.subr.bf16.mxu0 0
        %1658 = vmatpush1.bf16.xpose.msra.mxu0 0
        %1659 = vmatprep.subr.bf16.mxu0 0
        %1660 = vmatpush1.bf16.xpose.msra.mxu0 0
        %1661 = vmatprep.subr.bf16.mxu0 0
        %1662 = vmatpush1.bf16.xpose.msra.mxu0 0
        %1663 = vmatprep.subr.bf16.mxu0 0
        %1664 = vmatpush1.bf16.xpose.msra.mxu0 0
        %1665 = vmatprep.subr.bf16.mxu0 0
        %1666 = vmatpush1.bf16.xpose.msra.mxu0 0
        %1667 = vmatprep.subr.bf16.mxu0 0
        %1668 = vmatpush1.bf16.xpose.msra.mxu0 0
        %1669 = vmatprep.subr.bf16.mxu0 0
        %1670 = vmatpush1.bf16.xpose.msra.mxu0 0
        %1671 = vmatprep.subr.bf16.mxu0 0
        %1672 = vmatpush1.bf16.xpose.msra.mxu0 0
        %1673 = vmatprep.mubr.bf16.mxu0 0
        %1674 = vmatmul.mubr.bf16.gmra.mrb[0].mxu0 %v1630
        %v1675 = vpop.f32.mrb[0].mxu0
        %v1676 = vadd.f32 0.0, %v1675
        %v1677 = vpop.f32.mrb[0].mxu0
        %v1678 = vpop.f32.mrb[0].mxu0
        %v1679 = vadd.f32 0.0, %v1678
        %v1680 = vpop.f32.mrb[0].mxu0
        %1681 = vmatprep.mubr.bf16.mxu0 0
        %1682 = vmatmul.mubr.bf16.gmra.mrb[0].mxu0 %v1633
        %v1683 = vpop.f32.mrb[0].mxu0
        %v1684 = vadd.f32 0.0, %v1683
        %v1685 = vpop.f32.mrb[0].mxu0
        %v1686 = vpop.f32.mrb[0].mxu0
        %v1687 = vpop.f32.mrb[0].mxu0
        %1688 = vdwg.mxu0
        %v1689 = vmul.f32 %v1214, 0.35355338
        %v1690 = vmul.f32 %v1217, 0.35355338
        %v1691 = vmul.f32 %v1222, 0.35355338
        %v1692 = vmul.f32 %v1280, 0.35355338
        %v1693 = vmul.f32 %v1283, 0.35355338
        %v1694 = vmul.f32 %v1288, 0.35355338
        %v1695 = vmul.f32 %v1346, 0.35355338
        %v1696 = vmul.f32 %v1349, 0.35355338
        %v1697 = vmul.f32 %v1354, 0.35355338
        %v1698 = vmul.f32 %v1412, 0.35355338
        %v1699 = vmul.f32 %v1415, 0.35355338
        %v1700 = vmul.f32 %v1420, 0.35355338
        %v1701 = vmul.f32 %v1478, 0.35355338
        %v1702 = vmul.f32 %v1481, 0.35355338
        %v1703 = vmul.f32 %v1486, 0.35355338
        %v1704 = vmul.f32 %v1544, 0.35355338
        %v1705 = vmul.f32 %v1547, 0.35355338
        %v1706 = vmul.f32 %v1552, 0.35355338
        %v1707 = vmul.f32 %v1610, 0.35355338
        %v1708 = vmul.f32 %v1613, 0.35355338
        %v1709 = vmul.f32 %v1618, 0.35355338
        %v1710 = vmul.f32 %v1676, 0.35355338
        %v1711 = vmul.f32 %v1679, 0.35355338
        %v1712 = vmul.f32 %v1684, 0.35355338
        %vm1713 = vcmask 138240
        %v1714 = vsel %vm1713, %v1689, -inf
        %1715 = vmax.xlane.f32.xlu0 %v1714
        %v1716 = vpop.xlane.xlu0 %1715
        %v1717 = vsel %vm1713, %v1690, -inf
        %1718 = vmax.xlane.f32.xlu0 %v1717
        %v1719 = vpop.xlane.xlu0 %1718
        %vm1720 = vcmask 131072
        %v1721 = vsel %vm1720, %v1691, -inf
        %1722 = vmax.xlane.f32.xlu0 %v1721
        %v1723 = vpop.xlane.xlu0 %1722
        %v1724 = vsel %vm1713, %v1692, -inf
        %1725 = vmax.xlane.f32.xlu0 %v1724
        %v1726 = vpop.xlane.xlu0 %1725
        %v1727 = vsel %vm1713, %v1693, -inf
        %1728 = vmax.xlane.f32.xlu0 %v1727
        %v1729 = vpop.xlane.xlu0 %1728
        %v1730 = vsel %vm1720, %v1694, -inf
        %1731 = vmax.xlane.f32.xlu0 %v1730
        %v1732 = vpop.xlane.xlu0 %1731
        %v1733 = vsel %vm1713, %v1695, -inf
        %1734 = vmax.xlane.f32.xlu0 %v1733
        %v1735 = vpop.xlane.xlu0 %1734
        %v1736 = vsel %vm1713, %v1696, -inf
        %1737 = vmax.xlane.f32.xlu0 %v1736
        %v1738 = vpop.xlane.xlu0 %1737
        %v1739 = vsel %vm1720, %v1697, -inf
        %1740 = vmax.xlane.f32.xlu0 %v1739
        %v1741 = vpop.xlane.xlu0 %1740
        %v1742 = vsel %vm1713, %v1698, -inf
        %1743 = vmax.xlane.f32.xlu0 %v1742
        %v1744 = vpop.xlane.xlu0 %1743
        %v1745 = vsel %vm1713, %v1699, -inf
        %1746 = vmax.xlane.f32.xlu0 %v1745
        %v1747 = vpop.xlane.xlu0 %1746
        %v1748 = vsel %vm1720, %v1700, -inf
        %1749 = vmax.xlane.f32.xlu0 %v1748
        %v1750 = vpop.xlane.xlu0 %1749
        %v1751 = vsel %vm1713, %v1701, -inf
        %1752 = vmax.xlane.f32.xlu0 %v1751
        %v1753 = vpop.xlane.xlu0 %1752
        %v1754 = vsel %vm1713, %v1702, -inf
        %1755 = vmax.xlane.f32.xlu0 %v1754
        %v1756 = vpop.xlane.xlu0 %1755
        %v1757 = vsel %vm1720, %v1703, -inf
        %1758 = vmax.xlane.f32.xlu0 %v1757
        %v1759 = vpop.xlane.xlu0 %1758
        %v1760 = vsel %vm1713, %v1704, -inf
        %1761 = vmax.xlane.f32.xlu0 %v1760
        %v1762 = vpop.xlane.xlu0 %1761
        %v1763 = vsel %vm1713, %v1705, -inf
        %1764 = vmax.xlane.f32.xlu0 %v1763
        %v1765 = vpop.xlane.xlu0 %1764
        %v1766 = vsel %vm1720, %v1706, -inf
        %1767 = vmax.xlane.f32.xlu0 %v1766
        %v1768 = vpop.xlane.xlu0 %1767
        %v1769 = vsel %vm1713, %v1707, -inf
        %1770 = vmax.xlane.f32.xlu0 %v1769
        %v1771 = vpop.xlane.xlu0 %1770
        %v1772 = vsel %vm1713, %v1708, -inf
        %1773 = vmax.xlane.f32.xlu0 %v1772
        %v1774 = vpop.xlane.xlu0 %1773
        %v1775 = vsel %vm1720, %v1709, -inf
        %1776 = vmax.xlane.f32.xlu0 %v1775
        %v1777 = vpop.xlane.xlu0 %1776
        %v1778 = vsel %vm1713, %v1710, -inf
        %1779 = vmax.xlane.f32.xlu0 %v1778
        %v1780 = vpop.xlane.xlu0 %1779
        %v1781 = vsel %vm1713, %v1711, -inf
        %1782 = vmax.xlane.f32.xlu0 %v1781
        %v1783 = vpop.xlane.xlu0 %1782
        %v1784 = vsel %vm1720, %v1712, -inf
        %1785 = vmax.xlane.f32.xlu0 %v1784
        %v1786 = vpop.xlane.xlu0 %1785
        %v1787 = vsub.f32 %v1689, %v1716
        %v1788 = vsub.f32 %v1690, %v1719
        %v1789 = vsub.f32 %v1691, %v1723
        %v1790 = vsub.f32 %v1692, %v1726
        %v1791 = vsub.f32 %v1693, %v1729
        %v1792 = vsub.f32 %v1694, %v1732
        %v1793 = vsub.f32 %v1695, %v1735
        %v1794 = vsub.f32 %v1696, %v1738
        %v1795 = vsub.f32 %v1697, %v1741
        %v1796 = vsub.f32 %v1698, %v1744
        %v1797 = vsub.f32 %v1699, %v1747
        %v1798 = vsub.f32 %v1700, %v1750
        %v1799 = vsub.f32 %v1701, %v1753
        %v1800 = vsub.f32 %v1702, %v1756
        %v1801 = vsub.f32 %v1703, %v1759
        %v1802 = vsub.f32 %v1704, %v1762
        %v1803 = vsub.f32 %v1705, %v1765
        %v1804 = vsub.f32 %v1706, %v1768
        %v1805 = vsub.f32 %v1707, %v1771
        %v1806 = vsub.f32 %v1708, %v1774
        %v1807 = vsub.f32 %v1709, %v1777
        %v1808 = vsub.f32 %v1710, %v1780
        %v1809 = vsub.f32 %v1711, %v1783
        %v1810 = vsub.f32 %v1712, %v1786
        %v1811 = vmul.f32 %v1787, 1.442695
        %v1812 = vpow.pop %v1811
        %v1813 = vmul.f32 %v1788, 1.442695
        %v1814 = vpow.pop %v1813
        %v1815 = vmul.f32 %v1789, 1.442695
        %v1816 = vpow.pop %v1815
        %v1817 = vmul.f32 %v1790, 1.442695
        %v1818 = vpow.pop %v1817
        %v1819 = vmul.f32 %v1791, 1.442695
        %v1820 = vpow.pop %v1819
        %v1821 = vmul.f32 %v1792, 1.442695
        %v1822 = vpow.pop %v1821
        %v1823 = vmul.f32 %v1793, 1.442695
        %v1824 = vpow.pop %v1823
        %v1825 = vmul.f32 %v1794, 1.442695
        %v1826 = vpow.pop %v1825
        %v1827 = vmul.f32 %v1795, 1.442695
        %v1828 = vpow.pop %v1827
        %v1829 = vmul.f32 %v1796, 1.442695
        %v1830 = vpow.pop %v1829
        %v1831 = vmul.f32 %v1797, 1.442695
        %v1832 = vpow.pop %v1831
        %v1833 = vmul.f32 %v1798, 1.442695
        %v1834 = vpow.pop %v1833
        %v1835 = vmul.f32 %v1799, 1.442695
        %v1836 = vpow.pop %v1835
        %v1837 = vmul.f32 %v1800, 1.442695
        %v1838 = vpow.pop %v1837
        %v1839 = vmul.f32 %v1801, 1.442695
        %v1840 = vpow.pop %v1839
        %v1841 = vmul.f32 %v1802, 1.442695
        %v1842 = vpow.pop %v1841
        %v1843 = vmul.f32 %v1803, 1.442695
        %v1844 = vpow.pop %v1843
        %v1845 = vmul.f32 %v1804, 1.442695
        %v1846 = vpow.pop %v1845
        %v1847 = vmul.f32 %v1805, 1.442695
        %v1848 = vpow.pop %v1847
        %v1849 = vmul.f32 %v1806, 1.442695
        %v1850 = vpow.pop %v1849
        %v1851 = vmul.f32 %v1807, 1.442695
        %v1852 = vpow.pop %v1851
        %v1853 = vmul.f32 %v1808, 1.442695
        %v1854 = vpow.pop %v1853
        %v1855 = vmul.f32 %v1809, 1.442695
        %v1856 = vpow.pop %v1855
        %v1857 = vmul.f32 %v1810, 1.442695
        %v1858 = vpow.pop %v1857
        %v1859 = vsel %vm1713, %v1812, 0.0
        %1860 = vadd.xlane.f32.xlu0 %v1859
        %v1861 = vpop.xlane.xlu0 %1860
        %v1862 = vsel %vm1713, %v1814, 0.0
        %1863 = vadd.xlane.f32.xlu0 %v1862
        %v1864 = vpop.xlane.xlu0 %1863
        %v1865 = vsel %vm1720, %v1816, 0.0
        %1866 = vadd.xlane.f32.xlu0 %v1865
        %v1867 = vpop.xlane.xlu0 %1866
        %v1868 = vsel %vm1713, %v1818, 0.0
        %1869 = vadd.xlane.f32.xlu0 %v1868
        %v1870 = vpop.xlane.xlu0 %1869
        %v1871 = vsel %vm1713, %v1820, 0.0
        %1872 = vadd.xlane.f32.xlu0 %v1871
        %v1873 = vpop.xlane.xlu0 %1872
        %v1874 = vsel %vm1720, %v1822, 0.0
        %1875 = vadd.xlane.f32.xlu0 %v1874
        %v1876 = vpop.xlane.xlu0 %1875
        %v1877 = vsel %vm1713, %v1824, 0.0
        %1878 = vadd.xlane.f32.xlu0 %v1877
        %v1879 = vpop.xlane.xlu0 %1878
        %v1880 = vsel %vm1713, %v1826, 0.0
        %1881 = vadd.xlane.f32.xlu0 %v1880
        %v1882 = vpop.xlane.xlu0 %1881
        %v1883 = vsel %vm1720, %v1828, 0.0
        %1884 = vadd.xlane.f32.xlu0 %v1883
        %v1885 = vpop.xlane.xlu0 %1884
        %v1886 = vsel %vm1713, %v1830, 0.0
        %1887 = vadd.xlane.f32.xlu0 %v1886
        %v1888 = vpop.xlane.xlu0 %1887
        %v1889 = vsel %vm1713, %v1832, 0.0
        %1890 = vadd.xlane.f32.xlu0 %v1889
        %v1891 = vpop.xlane.xlu0 %1890
        %v1892 = vsel %vm1720, %v1834, 0.0
        %1893 = vadd.xlane.f32.xlu0 %v1892
        %v1894 = vpop.xlane.xlu0 %1893
        %v1895 = vsel %vm1713, %v1836, 0.0
        %1896 = vadd.xlane.f32.xlu0 %v1895
        %v1897 = vpop.xlane.xlu0 %1896
        %v1898 = vsel %vm1713, %v1838, 0.0
        %1899 = vadd.xlane.f32.xlu0 %v1898
        %v1900 = vpop.xlane.xlu0 %1899
        %v1901 = vsel %vm1720, %v1840, 0.0
        %1902 = vadd.xlane.f32.xlu0 %v1901
        %v1903 = vpop.xlane.xlu0 %1902
        %v1904 = vsel %vm1713, %v1842, 0.0
        %1905 = vadd.xlane.f32.xlu0 %v1904
        %v1906 = vpop.xlane.xlu0 %1905
        %v1907 = vsel %vm1713, %v1844, 0.0
        %1908 = vadd.xlane.f32.xlu0 %v1907
        %v1909 = vpop.xlane.xlu0 %1908
        %v1910 = vsel %vm1720, %v1846, 0.0
        %1911 = vadd.xlane.f32.xlu0 %v1910
        %v1912 = vpop.xlane.xlu0 %1911
        %v1913 = vsel %vm1713, %v1848, 0.0
        %1914 = vadd.xlane.f32.xlu0 %v1913
        %v1915 = vpop.xlane.xlu0 %1914
        %v1916 = vsel %vm1713, %v1850, 0.0
        %1917 = vadd.xlane.f32.xlu0 %v1916
        %v1918 = vpop.xlane.xlu0 %1917
        %v1919 = vsel %vm1720, %v1852, 0.0
        %1920 = vadd.xlane.f32.xlu0 %v1919
        %v1921 = vpop.xlane.xlu0 %1920
        %v1922 = vsel %vm1713, %v1854, 0.0
        %1923 = vadd.xlane.f32.xlu0 %v1922
        %v1924 = vpop.xlane.xlu0 %1923
        %v1925 = vsel %vm1713, %v1856, 0.0
        %1926 = vadd.xlane.f32.xlu0 %v1925
        %v1927 = vpop.xlane.xlu0 %1926
        %v1928 = vsel %vm1720, %v1858, 0.0
        %1929 = vadd.xlane.f32.xlu0 %v1928
        %v1930 = vpop.xlane.xlu0 %1929
        %v1931 = vrcp.pop %v1861
        %v1932 = vrcp.pop %v1864
        %v1933 = vrcp.pop %v1867
        %v1934 = vrcp.pop %v1870
        %v1935 = vrcp.pop %v1873
        %v1936 = vrcp.pop %v1876
        %v1937 = vrcp.pop %v1879
        %v1938 = vrcp.pop %v1882
        %v1939 = vrcp.pop %v1885
        %v1940 = vrcp.pop %v1888
        %v1941 = vrcp.pop %v1891
        %v1942 = vrcp.pop %v1894
        %v1943 = vrcp.pop %v1897
        %v1944 = vrcp.pop %v1900
        %v1945 = vrcp.pop %v1903
        %v1946 = vrcp.pop %v1906
        %v1947 = vrcp.pop %v1909
        %v1948 = vrcp.pop %v1912
        %v1949 = vrcp.pop %v1915
        %v1950 = vrcp.pop %v1918
        %v1951 = vrcp.pop %v1921
        %v1952 = vrcp.pop %v1924
        %v1953 = vrcp.pop %v1927
        %v1954 = vrcp.pop %v1930
        %v1955 = vmul.f32 %v1812, %v1931
        %v1956 = vmul.f32 %v1814, %v1932
        %v1957 = vmul.f32 %v1816, %v1933
        %v1958 = vmul.f32 %v1818, %v1934
        %v1959 = vmul.f32 %v1820, %v1935
        %v1960 = vmul.f32 %v1822, %v1936
        %v1961 = vmul.f32 %v1824, %v1937
        %v1962 = vmul.f32 %v1826, %v1938
        %v1963 = vmul.f32 %v1828, %v1939
        %v1964 = vmul.f32 %v1830, %v1940
        %v1965 = vmul.f32 %v1832, %v1941
        %v1966 = vmul.f32 %v1834, %v1942
        %v1967 = vmul.f32 %v1836, %v1943
        %v1968 = vmul.f32 %v1838, %v1944
        %v1969 = vmul.f32 %v1840, %v1945
        %v1970 = vmul.f32 %v1842, %v1946
        %v1971 = vmul.f32 %v1844, %v1947
        %v1972 = vmul.f32 %v1846, %v1948
        %v1973 = vmul.f32 %v1848, %v1949
        %v1974 = vmul.f32 %v1850, %v1950
        %v1975 = vmul.f32 %v1852, %v1951
        %v1976 = vmul.f32 %v1854, %v1952
        %v1977 = vmul.f32 %v1856, %v1953
        %v1978 = vmul.f32 %v1858, %v1954
        %v1979 = vpack.c.bf16 %v1956, %v1955
        %v1980 = vpack.c.bf16 %v1957, %v1957
        %v1981 = vpack.c.bf16 %v1959, %v1958
        %v1982 = vpack.c.bf16 %v1960, %v1960
        %v1983 = vpack.c.bf16 %v1962, %v1961
        %v1984 = vpack.c.bf16 %v1963, %v1963
        %v1985 = vpack.c.bf16 %v1965, %v1964
        %v1986 = vpack.c.bf16 %v1966, %v1966
        %v1987 = vpack.c.bf16 %v1968, %v1967
        %v1988 = vpack.c.bf16 %v1969, %v1969
        %v1989 = vpack.c.bf16 %v1971, %v1970
        %v1990 = vpack.c.bf16 %v1972, %v1972
        %v1991 = vpack.c.bf16 %v1974, %v1973
        %v1992 = vpack.c.bf16 %v1975, %v1975
        %v1993 = vpack.c.bf16 %v1977, %v1976
        %v1994 = vpack.c.bf16 %v1978, %v1978
        %1995 = vrot.lane.b32.xlu0 %v1144, 64
        %v1996 = vpop.permute.xlu0 %1995
        %1997 = vrot.lane.b32.xlu0 %v1145, 64
        %v1998 = vpop.permute.xlu0 %1997
        %v2001 = vsel %vm1713, %v1979, 0
        %v2004 = vsel %vm1713, %v1980, 0
        %vm2006 = vcmask 1040384
        %v2007 = vsel 0, 4294967295, 65535
        %v2008 = vsel %vm2006, %v2007, 0
        %v2010 = vand.u32 %v1998, %v2008
        %2012 = vmatprep.subr.bf16.mxu0 0
        %2013 = vmatpush1.bf16.msra.mxu0 %v1996
        %2014 = vmatprep.subr.bf16.mxu0 0
        %2015 = vmatpush1.bf16.msra.mxu0 %v2010
        %2016 = vmatprep.subr.bf16.mxu0 0
        %2017 = vmatpush1.bf16.msra.mxu0 0
        %2018 = vmatprep.subr.bf16.mxu0 0
        %2019 = vmatpush1.bf16.msra.mxu0 0
        %2020 = vmatprep.subr.bf16.mxu0 0
        %2021 = vmatpush1.bf16.msra.mxu0 0
        %2022 = vmatprep.subr.bf16.mxu0 0
        %2023 = vmatpush1.bf16.msra.mxu0 0
        %2024 = vmatprep.subr.bf16.mxu0 0
        %2025 = vmatpush1.bf16.msra.mxu0 0
        %2026 = vmatprep.subr.bf16.mxu0 0
        %2027 = vmatpush1.bf16.msra.mxu0 0
        %2028 = vmatprep.subr.bf16.mxu0 0
        %2029 = vmatpush1.bf16.msra.mxu0 0
        %2030 = vmatprep.subr.bf16.mxu0 0
        %2031 = vmatpush1.bf16.msra.mxu0 0
        %2032 = vmatprep.subr.bf16.mxu0 0
        %2033 = vmatpush1.bf16.msra.mxu0 0
        %2034 = vmatprep.subr.bf16.mxu0 0
        %2035 = vmatpush1.bf16.msra.mxu0 0
        %2036 = vmatprep.subr.bf16.mxu0 0
        %2037 = vmatpush1.bf16.msra.mxu0 0
        %2038 = vmatprep.subr.bf16.mxu0 0
        %2039 = vmatpush1.bf16.msra.mxu0 0
        %2040 = vmatprep.subr.bf16.mxu0 0
        %2041 = vmatpush1.bf16.msra.mxu0 0
        %2042 = vmatprep.subr.bf16.mxu0 0
        %2043 = vmatpush1.bf16.msra.mxu0 0
        %2044 = vmatprep.mubr.bf16.mxu0 0
        %2045 = vmatmul.mubr.bf16.gmra.mrb[0].mxu0 %v2001
        %v2046 = vpop.f32.mrb[0].mxu0
        %v2047 = vadd.f32 0.0, %v2046
        %v2048 = vpop.f32.mrb[0].mxu0
        %v2049 = vpop.f32.mrb[0].mxu0
        %v2050 = vadd.f32 0.0, %v2049
        %v2051 = vpop.f32.mrb[0].mxu0
        %2052 = vmatprep.mubr.bf16.mxu0 0
        %2053 = vmatmul.mubr.bf16.gmra.mrb[0].mxu0 %v2004
        %v2054 = vpop.f32.mrb[0].mxu0
        %v2055 = vadd.f32 0.0, %v2054
        %v2056 = vpop.f32.mrb[0].mxu0
        %v2057 = vpop.f32.mrb[0].mxu0
        %v2058 = vpop.f32.mrb[0].mxu0
        %2059 = vdwg.mxu0
        %2060 = vrot.lane.b32.xlu0 %v1146, 64
        %v2061 = vpop.permute.xlu0 %2060
        %2062 = vrot.lane.b32.xlu0 %v1147, 64
        %v2063 = vpop.permute.xlu0 %2062
        %v2066 = vsel %vm1713, %v1981, 0
        %v2069 = vsel %vm1713, %v1982, 0
        %v2072 = vand.u32 %v2063, %v2008
        %2074 = vmatprep.subr.bf16.mxu0 0
        %2075 = vmatpush1.bf16.msra.mxu0 %v2061
        %2076 = vmatprep.subr.bf16.mxu0 0
        %2077 = vmatpush1.bf16.msra.mxu0 %v2072
        %2078 = vmatprep.subr.bf16.mxu0 0
        %2079 = vmatpush1.bf16.msra.mxu0 0
        %2080 = vmatprep.subr.bf16.mxu0 0
        %2081 = vmatpush1.bf16.msra.mxu0 0
        %2082 = vmatprep.subr.bf16.mxu0 0
        %2083 = vmatpush1.bf16.msra.mxu0 0
        %2084 = vmatprep.subr.bf16.mxu0 0
        %2085 = vmatpush1.bf16.msra.mxu0 0
        %2086 = vmatprep.subr.bf16.mxu0 0
        %2087 = vmatpush1.bf16.msra.mxu0 0
        %2088 = vmatprep.subr.bf16.mxu0 0
        %2089 = vmatpush1.bf16.msra.mxu0 0
        %2090 = vmatprep.subr.bf16.mxu0 0
        %2091 = vmatpush1.bf16.msra.mxu0 0
        %2092 = vmatprep.subr.bf16.mxu0 0
        %2093 = vmatpush1.bf16.msra.mxu0 0
        %2094 = vmatprep.subr.bf16.mxu0 0
        %2095 = vmatpush1.bf16.msra.mxu0 0
        %2096 = vmatprep.subr.bf16.mxu0 0
        %2097 = vmatpush1.bf16.msra.mxu0 0
        %2098 = vmatprep.subr.bf16.mxu0 0
        %2099 = vmatpush1.bf16.msra.mxu0 0
        %2100 = vmatprep.subr.bf16.mxu0 0
        %2101 = vmatpush1.bf16.msra.mxu0 0
        %2102 = vmatprep.subr.bf16.mxu0 0
        %2103 = vmatpush1.bf16.msra.mxu0 0
        %2104 = vmatprep.subr.bf16.mxu0 0
        %2105 = vmatpush1.bf16.msra.mxu0 0
        %2106 = vmatprep.mubr.bf16.mxu0 0
        %2107 = vmatmul.mubr.bf16.gmra.mrb[0].mxu0 %v2066
        %v2108 = vpop.f32.mrb[0].mxu0
        %v2109 = vadd.f32 0.0, %v2108
        %v2110 = vpop.f32.mrb[0].mxu0
        %v2111 = vpop.f32.mrb[0].mxu0
        %v2112 = vadd.f32 0.0, %v2111
        %v2113 = vpop.f32.mrb[0].mxu0
        %2114 = vmatprep.mubr.bf16.mxu0 0
        %2115 = vmatmul.mubr.bf16.gmra.mrb[0].mxu0 %v2069
        %v2116 = vpop.f32.mrb[0].mxu0
        %v2117 = vadd.f32 0.0, %v2116
        %v2118 = vpop.f32.mrb[0].mxu0
        %v2119 = vpop.f32.mrb[0].mxu0
        %v2120 = vpop.f32.mrb[0].mxu0
        %2121 = vdwg.mxu0
        %2122 = vrot.lane.b32.xlu0 %v1148, 64
        %v2123 = vpop.permute.xlu0 %2122
        %2124 = vrot.lane.b32.xlu0 %v1149, 64
        %v2125 = vpop.permute.xlu0 %2124
        %v2128 = vsel %vm1713, %v1983, 0
        %v2131 = vsel %vm1713, %v1984, 0
        %v2134 = vand.u32 %v2125, %v2008
        %2136 = vmatprep.subr.bf16.mxu0 0
        %2137 = vmatpush1.bf16.msra.mxu0 %v2123
        %2138 = vmatprep.subr.bf16.mxu0 0
        %2139 = vmatpush1.bf16.msra.mxu0 %v2134
        %2140 = vmatprep.subr.bf16.mxu0 0
        %2141 = vmatpush1.bf16.msra.mxu0 0
        %2142 = vmatprep.subr.bf16.mxu0 0
        %2143 = vmatpush1.bf16.msra.mxu0 0
        %2144 = vmatprep.subr.bf16.mxu0 0
        %2145 = vmatpush1.bf16.msra.mxu0 0
        %2146 = vmatprep.subr.bf16.mxu0 0
        %2147 = vmatpush1.bf16.msra.mxu0 0
        %2148 = vmatprep.subr.bf16.mxu0 0
        %2149 = vmatpush1.bf16.msra.mxu0 0
        %2150 = vmatprep.subr.bf16.mxu0 0
        %2151 = vmatpush1.bf16.msra.mxu0 0
        %2152 = vmatprep.subr.bf16.mxu0 0
        %2153 = vmatpush1.bf16.msra.mxu0 0
        %2154 = vmatprep.subr.bf16.mxu0 0
        %2155 = vmatpush1.bf16.msra.mxu0 0
        %2156 = vmatprep.subr.bf16.mxu0 0
        %2157 = vmatpush1.bf16.msra.mxu0 0
        %2158 = vmatprep.subr.bf16.mxu0 0
        %2159 = vmatpush1.bf16.msra.mxu0 0
        %2160 = vmatprep.subr.bf16.mxu0 0
        %2161 = vmatpush1.bf16.msra.mxu0 0
        %2162 = vmatprep.subr.bf16.mxu0 0
        %2163 = vmatpush1.bf16.msra.mxu0 0
        %2164 = vmatprep.subr.bf16.mxu0 0
        %2165 = vmatpush1.bf16.msra.mxu0 0
        %2166 = vmatprep.subr.bf16.mxu0 0
        %2167 = vmatpush1.bf16.msra.mxu0 0
        %2168 = vmatprep.mubr.bf16.mxu0 0
        %2169 = vmatmul.mubr.bf16.gmra.mrb[0].mxu0 %v2128
        %v2170 = vpop.f32.mrb[0].mxu0
        %v2171 = vadd.f32 0.0, %v2170
        %v2172 = vpop.f32.mrb[0].mxu0
        %v2173 = vpop.f32.mrb[0].mxu0
        %v2174 = vadd.f32 0.0, %v2173
        %v2175 = vpop.f32.mrb[0].mxu0
        %2176 = vmatprep.mubr.bf16.mxu0 0
        %2177 = vmatmul.mubr.bf16.gmra.mrb[0].mxu0 %v2131
        %v2178 = vpop.f32.mrb[0].mxu0
        %v2179 = vadd.f32 0.0, %v2178
        %v2180 = vpop.f32.mrb[0].mxu0
        %v2181 = vpop.f32.mrb[0].mxu0
        %v2182 = vpop.f32.mrb[0].mxu0
        %2183 = vdwg.mxu0
        %2184 = vrot.lane.b32.xlu0 %v1150, 64
        %v2185 = vpop.permute.xlu0 %2184
        %2186 = vrot.lane.b32.xlu0 %v1151, 64
        %v2187 = vpop.permute.xlu0 %2186
        %v2190 = vsel %vm1713, %v1985, 0
        %v2193 = vsel %vm1713, %v1986, 0
        %v2196 = vand.u32 %v2187, %v2008
        %2198 = vmatprep.subr.bf16.mxu0 0
        %2199 = vmatpush1.bf16.msra.mxu0 %v2185
        %2200 = vmatprep.subr.bf16.mxu0 0
        %2201 = vmatpush1.bf16.msra.mxu0 %v2196
        %2202 = vmatprep.subr.bf16.mxu0 0
        %2203 = vmatpush1.bf16.msra.mxu0 0
        %2204 = vmatprep.subr.bf16.mxu0 0
        %2205 = vmatpush1.bf16.msra.mxu0 0
        %2206 = vmatprep.subr.bf16.mxu0 0
        %2207 = vmatpush1.bf16.msra.mxu0 0
        %2208 = vmatprep.subr.bf16.mxu0 0
        %2209 = vmatpush1.bf16.msra.mxu0 0
        %2210 = vmatprep.subr.bf16.mxu0 0
        %2211 = vmatpush1.bf16.msra.mxu0 0
        %2212 = vmatprep.subr.bf16.mxu0 0
        %2213 = vmatpush1.bf16.msra.mxu0 0
        %2214 = vmatprep.subr.bf16.mxu0 0
        %2215 = vmatpush1.bf16.msra.mxu0 0
        %2216 = vmatprep.subr.bf16.mxu0 0
        %2217 = vmatpush1.bf16.msra.mxu0 0
        %2218 = vmatprep.subr.bf16.mxu0 0
        %2219 = vmatpush1.bf16.msra.mxu0 0
        %2220 = vmatprep.subr.bf16.mxu0 0
        %2221 = vmatpush1.bf16.msra.mxu0 0
        %2222 = vmatprep.subr.bf16.mxu0 0
        %2223 = vmatpush1.bf16.msra.mxu0 0
        %2224 = vmatprep.subr.bf16.mxu0 0
        %2225 = vmatpush1.bf16.msra.mxu0 0
        %2226 = vmatprep.subr.bf16.mxu0 0
        %2227 = vmatpush1.bf16.msra.mxu0 0
        %2228 = vmatprep.subr.bf16.mxu0 0
        %2229 = vmatpush1.bf16.msra.mxu0 0
        %2230 = vmatprep.mubr.bf16.mxu0 0
        %2231 = vmatmul.mubr.bf16.gmra.mrb[0].mxu0 %v2190
        %v2232 = vpop.f32.mrb[0].mxu0
        %v2233 = vadd.f32 0.0, %v2232
        %v2234 = vpop.f32.mrb[0].mxu0
        %v2235 = vpop.f32.mrb[0].mxu0
        %v2236 = vadd.f32 0.0, %v2235
        %v2237 = vpop.f32.mrb[0].mxu0
        %2238 = vmatprep.mubr.bf16.mxu0 0
        %2239 = vmatmul.mubr.bf16.gmra.mrb[0].mxu0 %v2193
        %v2240 = vpop.f32.mrb[0].mxu0
        %v2241 = vadd.f32 0.0, %v2240
        %v2242 = vpop.f32.mrb[0].mxu0
        %v2243 = vpop.f32.mrb[0].mxu0
        %v2244 = vpop.f32.mrb[0].mxu0
        %2245 = vdwg.mxu0
        %2246 = vrot.lane.b32.xlu0 %v1152, 64
        %v2247 = vpop.permute.xlu0 %2246
        %2248 = vrot.lane.b32.xlu0 %v1153, 64
        %v2249 = vpop.permute.xlu0 %2248
        %v2252 = vsel %vm1713, %v1987, 0
        %v2255 = vsel %vm1713, %v1988, 0
        %v2258 = vand.u32 %v2249, %v2008
        %2260 = vmatprep.subr.bf16.mxu0 0
        %2261 = vmatpush1.bf16.msra.mxu0 %v2247
        %2262 = vmatprep.subr.bf16.mxu0 0
        %2263 = vmatpush1.bf16.msra.mxu0 %v2258
        %2264 = vmatprep.subr.bf16.mxu0 0
        %2265 = vmatpush1.bf16.msra.mxu0 0
        %2266 = vmatprep.subr.bf16.mxu0 0
        %2267 = vmatpush1.bf16.msra.mxu0 0
        %2268 = vmatprep.subr.bf16.mxu0 0
        %2269 = vmatpush1.bf16.msra.mxu0 0
        %2270 = vmatprep.subr.bf16.mxu0 0
        %2271 = vmatpush1.bf16.msra.mxu0 0
        %2272 = vmatprep.subr.bf16.mxu0 0
        %2273 = vmatpush1.bf16.msra.mxu0 0
        %2274 = vmatprep.subr.bf16.mxu0 0
        %2275 = vmatpush1.bf16.msra.mxu0 0
        %2276 = vmatprep.subr.bf16.mxu0 0
        %2277 = vmatpush1.bf16.msra.mxu0 0
        %2278 = vmatprep.subr.bf16.mxu0 0
        %2279 = vmatpush1.bf16.msra.mxu0 0
        %2280 = vmatprep.subr.bf16.mxu0 0
        %2281 = vmatpush1.bf16.msra.mxu0 0
        %2282 = vmatprep.subr.bf16.mxu0 0
        %2283 = vmatpush1.bf16.msra.mxu0 0
        %2284 = vmatprep.subr.bf16.mxu0 0
        %2285 = vmatpush1.bf16.msra.mxu0 0
        %2286 = vmatprep.subr.bf16.mxu0 0
        %2287 = vmatpush1.bf16.msra.mxu0 0
        %2288 = vmatprep.subr.bf16.mxu0 0
        %2289 = vmatpush1.bf16.msra.mxu0 0
        %2290 = vmatprep.subr.bf16.mxu0 0
        %2291 = vmatpush1.bf16.msra.mxu0 0
        %2292 = vmatprep.mubr.bf16.mxu0 0
        %2293 = vmatmul.mubr.bf16.gmra.mrb[0].mxu0 %v2252
        %v2294 = vpop.f32.mrb[0].mxu0
        %v2295 = vadd.f32 0.0, %v2294
        %v2296 = vpop.f32.mrb[0].mxu0
        %v2297 = vpop.f32.mrb[0].mxu0
        %v2298 = vadd.f32 0.0, %v2297
        %v2299 = vpop.f32.mrb[0].mxu0
        %2300 = vmatprep.mubr.bf16.mxu0 0
        %2301 = vmatmul.mubr.bf16.gmra.mrb[0].mxu0 %v2255
        %v2302 = vpop.f32.mrb[0].mxu0
        %v2303 = vadd.f32 0.0, %v2302
        %v2304 = vpop.f32.mrb[0].mxu0
        %v2305 = vpop.f32.mrb[0].mxu0
        %v2306 = vpop.f32.mrb[0].mxu0
        %2307 = vdwg.mxu0
        %2308 = vrot.lane.b32.xlu0 %v1154, 64
        %v2309 = vpop.permute.xlu0 %2308
        %2310 = vrot.lane.b32.xlu0 %v1155, 64
        %v2311 = vpop.permute.xlu0 %2310
        %v2314 = vsel %vm1713, %v1989, 0
        %v2317 = vsel %vm1713, %v1990, 0
        %v2320 = vand.u32 %v2311, %v2008
        %2322 = vmatprep.subr.bf16.mxu0 0
        %2323 = vmatpush1.bf16.msra.mxu0 %v2309
        %2324 = vmatprep.subr.bf16.mxu0 0
        %2325 = vmatpush1.bf16.msra.mxu0 %v2320
        %2326 = vmatprep.subr.bf16.mxu0 0
        %2327 = vmatpush1.bf16.msra.mxu0 0
        %2328 = vmatprep.subr.bf16.mxu0 0
        %2329 = vmatpush1.bf16.msra.mxu0 0
        %2330 = vmatprep.subr.bf16.mxu0 0
        %2331 = vmatpush1.bf16.msra.mxu0 0
        %2332 = vmatprep.subr.bf16.mxu0 0
        %2333 = vmatpush1.bf16.msra.mxu0 0
        %2334 = vmatprep.subr.bf16.mxu0 0
        %2335 = vmatpush1.bf16.msra.mxu0 0
        %2336 = vmatprep.subr.bf16.mxu0 0
        %2337 = vmatpush1.bf16.msra.mxu0 0
        %2338 = vmatprep.subr.bf16.mxu0 0
        %2339 = vmatpush1.bf16.msra.mxu0 0
        %2340 = vmatprep.subr.bf16.mxu0 0
        %2341 = vmatpush1.bf16.msra.mxu0 0
        %2342 = vmatprep.subr.bf16.mxu0 0
        %2343 = vmatpush1.bf16.msra.mxu0 0
        %2344 = vmatprep.subr.bf16.mxu0 0
        %2345 = vmatpush1.bf16.msra.mxu0 0
        %2346 = vmatprep.subr.bf16.mxu0 0
        %2347 = vmatpush1.bf16.msra.mxu0 0
        %2348 = vmatprep.subr.bf16.mxu0 0
        %2349 = vmatpush1.bf16.msra.mxu0 0
        %2350 = vmatprep.subr.bf16.mxu0 0
        %2351 = vmatpush1.bf16.msra.mxu0 0
        %2352 = vmatprep.subr.bf16.mxu0 0
        %2353 = vmatpush1.bf16.msra.mxu0 0
        %2354 = vmatprep.mubr.bf16.mxu0 0
        %2355 = vmatmul.mubr.bf16.gmra.mrb[0].mxu0 %v2314
        %v2356 = vpop.f32.mrb[0].mxu0
        %v2357 = vadd.f32 0.0, %v2356
        %v2358 = vpop.f32.mrb[0].mxu0
        %v2359 = vpop.f32.mrb[0].mxu0
        %v2360 = vadd.f32 0.0, %v2359
        %v2361 = vpop.f32.mrb[0].mxu0
        %2362 = vmatprep.mubr.bf16.mxu0 0
        %2363 = vmatmul.mubr.bf16.gmra.mrb[0].mxu0 %v2317
        %v2364 = vpop.f32.mrb[0].mxu0
        %v2365 = vadd.f32 0.0, %v2364
        %v2366 = vpop.f32.mrb[0].mxu0
        %v2367 = vpop.f32.mrb[0].mxu0
        %v2368 = vpop.f32.mrb[0].mxu0
        %2369 = vdwg.mxu0
        %2370 = vrot.lane.b32.xlu0 %v1156, 64
        %v2371 = vpop.permute.xlu0 %2370
        %2372 = vrot.lane.b32.xlu0 %v1157, 64
        %v2373 = vpop.permute.xlu0 %2372
        %v2376 = vsel %vm1713, %v1991, 0
        %v2379 = vsel %vm1713, %v1992, 0
        %v2382 = vand.u32 %v2373, %v2008
        %2384 = vmatprep.subr.bf16.mxu0 0
        %2385 = vmatpush1.bf16.msra.mxu0 %v2371
        %2386 = vmatprep.subr.bf16.mxu0 0
        %2387 = vmatpush1.bf16.msra.mxu0 %v2382
        %2388 = vmatprep.subr.bf16.mxu0 0
        %2389 = vmatpush1.bf16.msra.mxu0 0
        %2390 = vmatprep.subr.bf16.mxu0 0
        %2391 = vmatpush1.bf16.msra.mxu0 0
        %2392 = vmatprep.subr.bf16.mxu0 0
        %2393 = vmatpush1.bf16.msra.mxu0 0
        %2394 = vmatprep.subr.bf16.mxu0 0
        %2395 = vmatpush1.bf16.msra.mxu0 0
        %2396 = vmatprep.subr.bf16.mxu0 0
        %2397 = vmatpush1.bf16.msra.mxu0 0
        %2398 = vmatprep.subr.bf16.mxu0 0
        %2399 = vmatpush1.bf16.msra.mxu0 0
        %2400 = vmatprep.subr.bf16.mxu0 0
        %2401 = vmatpush1.bf16.msra.mxu0 0
        %2402 = vmatprep.subr.bf16.mxu0 0
        %2403 = vmatpush1.bf16.msra.mxu0 0
        %2404 = vmatprep.subr.bf16.mxu0 0
        %2405 = vmatpush1.bf16.msra.mxu0 0
        %2406 = vmatprep.subr.bf16.mxu0 0
        %2407 = vmatpush1.bf16.msra.mxu0 0
        %2408 = vmatprep.subr.bf16.mxu0 0
        %2409 = vmatpush1.bf16.msra.mxu0 0
        %2410 = vmatprep.subr.bf16.mxu0 0
        %2411 = vmatpush1.bf16.msra.mxu0 0
        %2412 = vmatprep.subr.bf16.mxu0 0
        %2413 = vmatpush1.bf16.msra.mxu0 0
        %2414 = vmatprep.subr.bf16.mxu0 0
        %2415 = vmatpush1.bf16.msra.mxu0 0
        %2416 = vmatprep.mubr.bf16.mxu0 0
        %2417 = vmatmul.mubr.bf16.gmra.mrb[0].mxu0 %v2376
        %v2418 = vpop.f32.mrb[0].mxu0
        %v2419 = vadd.f32 0.0, %v2418
        %v2420 = vpop.f32.mrb[0].mxu0
        %v2421 = vpop.f32.mrb[0].mxu0
        %v2422 = vadd.f32 0.0, %v2421
        %v2423 = vpop.f32.mrb[0].mxu0
        %2424 = vmatprep.mubr.bf16.mxu0 0
        %2425 = vmatmul.mubr.bf16.gmra.mrb[0].mxu0 %v2379
        %v2426 = vpop.f32.mrb[0].mxu0
        %v2427 = vadd.f32 0.0, %v2426
        %v2428 = vpop.f32.mrb[0].mxu0
        %v2429 = vpop.f32.mrb[0].mxu0
        %v2430 = vpop.f32.mrb[0].mxu0
        %2431 = vdwg.mxu0
        %2432 = vrot.lane.b32.xlu0 %v1158, 64
        %v2433 = vpop.permute.xlu0 %2432
        %2434 = vrot.lane.b32.xlu0 %v1159, 64
        %v2435 = vpop.permute.xlu0 %2434
        %v2438 = vsel %vm1713, %v1993, 0
        %v2441 = vsel %vm1713, %v1994, 0
        %v2444 = vand.u32 %v2435, %v2008
        %2446 = vmatprep.subr.bf16.mxu0 0
        %2447 = vmatpush1.bf16.msra.mxu0 %v2433
        %2448 = vmatprep.subr.bf16.mxu0 0
        %2449 = vmatpush1.bf16.msra.mxu0 %v2444
        %2450 = vmatprep.subr.bf16.mxu0 0
        %2451 = vmatpush1.bf16.msra.mxu0 0
        %2452 = vmatprep.subr.bf16.mxu0 0
        %2453 = vmatpush1.bf16.msra.mxu0 0
        %2454 = vmatprep.subr.bf16.mxu0 0
        %2455 = vmatpush1.bf16.msra.mxu0 0
        %2456 = vmatprep.subr.bf16.mxu0 0
        %2457 = vmatpush1.bf16.msra.mxu0 0
        %2458 = vmatprep.subr.bf16.mxu0 0
        %2459 = vmatpush1.bf16.msra.mxu0 0
        %2460 = vmatprep.subr.bf16.mxu0 0
        %2461 = vmatpush1.bf16.msra.mxu0 0
        %2462 = vmatprep.subr.bf16.mxu0 0
        %2463 = vmatpush1.bf16.msra.mxu0 0
        %2464 = vmatprep.subr.bf16.mxu0 0
        %2465 = vmatpush1.bf16.msra.mxu0 0
        %2466 = vmatprep.subr.bf16.mxu0 0
        %2467 = vmatpush1.bf16.msra.mxu0 0
        %2468 = vmatprep.subr.bf16.mxu0 0
        %2469 = vmatpush1.bf16.msra.mxu0 0
        %2470 = vmatprep.subr.bf16.mxu0 0
        %2471 = vmatpush1.bf16.msra.mxu0 0
        %2472 = vmatprep.subr.bf16.mxu0 0
        %2473 = vmatpush1.bf16.msra.mxu0 0
        %2474 = vmatprep.subr.bf16.mxu0 0
        %2475 = vmatpush1.bf16.msra.mxu0 0
        %2476 = vmatprep.subr.bf16.mxu0 0
        %2477 = vmatpush1.bf16.msra.mxu0 0
        %2478 = vmatprep.mubr.bf16.mxu0 0
        %2479 = vmatmul.mubr.bf16.gmra.mrb[0].mxu0 %v2438
        %v2480 = vpop.f32.mrb[0].mxu0
        %v2481 = vadd.f32 0.0, %v2480
        %v2482 = vpop.f32.mrb[0].mxu0
        %v2483 = vpop.f32.mrb[0].mxu0
        %v2484 = vadd.f32 0.0, %v2483
        %v2485 = vpop.f32.mrb[0].mxu0
        %2486 = vmatprep.mubr.bf16.mxu0 0
        %2487 = vmatmul.mubr.bf16.gmra.mrb[0].mxu0 %v2441
        %v2488 = vpop.f32.mrb[0].mxu0
        %v2489 = vadd.f32 0.0, %v2488
        %v2490 = vpop.f32.mrb[0].mxu0
        %v2491 = vpop.f32.mrb[0].mxu0
        %v2492 = vpop.f32.mrb[0].mxu0
        %2493 = vdwg.mxu0
        %2497 = vrot.lane.b32.xlu0 %v2109, 8
        %v2498 = vpop.permute.xlu0 %2497
        %2499 = vrot.lane.b32.xlu0 %v2112, 8
        %v2500 = vpop.permute.xlu0 %2499
        %2501 = vrot.lane.b32.xlu0 %v2117, 8
        %v2502 = vpop.permute.xlu0 %2501
        %2509 = vrot.lane.b32.xlu0 %v2171, 16
        %v2510 = vpop.permute.xlu0 %2509
        %2511 = vrot.lane.b32.xlu0 %v2174, 16
        %v2512 = vpop.permute.xlu0 %2511
        %2513 = vrot.lane.b32.xlu0 %v2179, 16
        %v2514 = vpop.permute.xlu0 %2513
        %2521 = vrot.lane.b32.xlu0 %v2233, 24
        %v2522 = vpop.permute.xlu0 %2521
        %2523 = vrot.lane.b32.xlu0 %v2236, 24
        %v2524 = vpop.permute.xlu0 %2523
        %2525 = vrot.lane.b32.xlu0 %v2241, 24
        %v2526 = vpop.permute.xlu0 %2525
        %v2530 = vsel %vm1166, %v2047, %v2498
        %v2531 = vsel %vm1166, %v2050, %v2500
        %v2532 = vsel %vm1166, %v2055, %v2502
        %vm2533 = vcmask 130048
        %v2534 = vsel %vm2533, %v2530, %v2510
        %v2535 = vsel %vm2533, %v2531, %v2512
        %v2536 = vsel %vm2533, %v2532, %v2514
        %vm2537 = vcmask 195584
        %v2538 = vsel %vm2537, %v2534, %v2522
        %v2539 = vsel %vm2537, %v2535, %v2524
        %v2540 = vsel %vm2537, %v2536, %v2526
        %2544 = vrot.lane.b32.xlu0 %v2357, 8
        %v2545 = vpop.permute.xlu0 %2544
        %2546 = vrot.lane.b32.xlu0 %v2360, 8
        %v2547 = vpop.permute.xlu0 %2546
        %2548 = vrot.lane.b32.xlu0 %v2365, 8
        %v2549 = vpop.permute.xlu0 %2548
        %2556 = vrot.lane.b32.xlu0 %v2419, 16
        %v2557 = vpop.permute.xlu0 %2556
        %2558 = vrot.lane.b32.xlu0 %v2422, 16
        %v2559 = vpop.permute.xlu0 %2558
        %2560 = vrot.lane.b32.xlu0 %v2427, 16
        %v2561 = vpop.permute.xlu0 %2560
        %2568 = vrot.lane.b32.xlu0 %v2481, 24
        %v2569 = vpop.permute.xlu0 %2568
        %2570 = vrot.lane.b32.xlu0 %v2484, 24
        %v2571 = vpop.permute.xlu0 %2570
        %2572 = vrot.lane.b32.xlu0 %v2489, 24
        %v2573 = vpop.permute.xlu0 %2572
        %v2577 = vsel %vm1166, %v2295, %v2545
        %v2578 = vsel %vm1166, %v2298, %v2547
        %v2579 = vsel %vm1166, %v2303, %v2549
        %v2580 = vsel %vm2533, %v2577, %v2557
        %v2581 = vsel %vm2533, %v2578, %v2559
        %v2582 = vsel %vm2533, %v2579, %v2561
        %v2583 = vsel %vm2537, %v2580, %v2569
        %v2584 = vsel %vm2537, %v2581, %v2571
        %v2585 = vsel %vm2537, %v2582, %v2573
        %v2589 = vrot.slane %v2583, 7
        %v2590 = vrot.slane %v2584, 7
        %v2591 = vsel %vm2006, %v2589, %v2590
        %v2592 = vrot.slane %v2585, 7
        %v2593 = vsel %vm2006, %v2590, %v2592
        %v2597 = vsel %vm2006, %v2540, %v2589
        %v2598 = vpack.c.bf16 %v2539, %v2538
        %v2599 = vpack.c.bf16 %v2591, %v2597
        %v2600 = vpack.c.bf16 %v2593, %v2593
        %v2602 = vlaneseq
        %v2603 = vshrl.u32 %v2602, 7
        %v2604 = vsub.s32 0, %v2603
        %v2605 = vrot.slane %v875, %v2604
        %v2611 = vunpack.c.l.b16 %v871
        %v2612 = vunpack.c.l.b16 %v872
        %v2613 = vunpack.c.l.b16 %v873
        %v2614 = vunpack.c.l.b16 %v874
        %v2615 = vpack.c.b16 %v2612, %v2611
        %v2616 = vpack.c.b16 %v2614, %v2613
        %v2620 = vsel %vm900, %v2598, 0
        %v2623 = vsel %vm900, %v2599, 0
        %v2626 = vsel %vm900, %v2600, 0
        %2628 = vmatprep.subr.bf16.mxu0 0
        %2629 = vmatpush1.bf16.msra.mxu0 %v2615
        %2630 = vmatprep.subr.bf16.mxu0 0
        %2631 = vmatpush1.bf16.msra.mxu0 %v2616
        %2632 = vmatprep.subr.bf16.mxu0 0
        %2633 = vmatpush1.bf16.msra.mxu0 0
        %2634 = vmatprep.subr.bf16.mxu0 0
        %2635 = vmatpush1.bf16.msra.mxu0 0
        %2636 = vmatprep.subr.bf16.mxu0 0
        %2637 = vmatpush1.bf16.msra.mxu0 0
        %2638 = vmatprep.subr.bf16.mxu0 0
        %2639 = vmatpush1.bf16.msra.mxu0 0
        %2640 = vmatprep.subr.bf16.mxu0 0
        %2641 = vmatpush1.bf16.msra.mxu0 0
        %2642 = vmatprep.subr.bf16.mxu0 0
        %2643 = vmatpush1.bf16.msra.mxu0 0
        %2644 = vmatprep.subr.bf16.mxu0 0
        %2645 = vmatpush1.bf16.msra.mxu0 0
        %2646 = vmatprep.subr.bf16.mxu0 0
        %2647 = vmatpush1.bf16.msra.mxu0 0
        %2648 = vmatprep.subr.bf16.mxu0 0
        %2649 = vmatpush1.bf16.msra.mxu0 0
        %2650 = vmatprep.subr.bf16.mxu0 0
        %2651 = vmatpush1.bf16.msra.mxu0 0
        %2652 = vmatprep.subr.bf16.mxu0 0
        %2653 = vmatpush1.bf16.msra.mxu0 0
        %2654 = vmatprep.subr.bf16.mxu0 0
        %2655 = vmatpush1.bf16.msra.mxu0 0
        %2656 = vmatprep.subr.bf16.mxu0 0
        %2657 = vmatpush1.bf16.msra.mxu0 0
        %2658 = vmatprep.subr.bf16.mxu0 0
        %2659 = vmatpush1.bf16.msra.mxu0 0
        %2660 = vmatprep.mubr.bf16.mxu0 0
        %2661 = vmatmul.mubr.bf16.gmra.mrb[0].mxu0 %v2620
        %v2662 = vpop.f32.mrb[0].mxu0
        %v2663 = vadd.f32 %v2605, %v2662
        %v2664 = vpop.f32.mrb[0].mxu0
        %v2665 = vpop.f32.mrb[0].mxu0
        %v2666 = vadd.f32 %v2605, %v2665
        %v2667 = vpop.f32.mrb[0].mxu0
        %2668 = vmatprep.mubr.bf16.mxu0 0
        %2669 = vmatmul.mubr.bf16.gmra.mrb[0].mxu0 %v2623
        %v2670 = vpop.f32.mrb[0].mxu0
        %v2671 = vadd.f32 %v2605, %v2670
        %v2672 = vpop.f32.mrb[0].mxu0
        %v2673 = vpop.f32.mrb[0].mxu0
        %v2674 = vadd.f32 %v2605, %v2673
        %v2675 = vpop.f32.mrb[0].mxu0
        %2676 = vmatprep.mubr.bf16.mxu0 0
        %2677 = vmatmul.mubr.bf16.gmra.mrb[0].mxu0 %v2626
        %v2678 = vpop.f32.mrb[0].mxu0
        %v2679 = vadd.f32 %v2605, %v2678
        %v2680 = vpop.f32.mrb[0].mxu0
        %v2681 = vpop.f32.mrb[0].mxu0
        %v2682 = vpop.f32.mrb[0].mxu0
        %2683 = vdwg.mxu0
        %v2684 = vadd.f32 %v859, %v2663
        %v2685 = vadd.f32 %v860, %v2666
        %v2686 = vadd.f32 %v861, %v2671
        %v2687 = vadd.f32 %v862, %v2674
        %v2688 = vadd.f32 %v863, %v2679
        %v2689 = vsel %vm900, %v2684, 0.0
        %2690 = vadd.xlane.f32.xlu0 %v2689
        %v2691 = vpop.xlane.xlu0 %2690
        %v2692 = vsel %vm900, %v2685, 0.0
        %2693 = vadd.xlane.f32.xlu0 %v2692
        %v2694 = vpop.xlane.xlu0 %2693
        %v2695 = vsel %vm900, %v2686, 0.0
        %2696 = vadd.xlane.f32.xlu0 %v2695
        %v2697 = vpop.xlane.xlu0 %2696
        %v2698 = vsel %vm900, %v2687, 0.0
        %2699 = vadd.xlane.f32.xlu0 %v2698
        %v2700 = vpop.xlane.xlu0 %2699
        %v2701 = vsel %vm913, %v2688, 0.0
        %2702 = vadd.xlane.f32.xlu0 %v2701
        %v2703 = vpop.xlane.xlu0 %2702
        %v2704 = vmul.f32 %v2691, %v917
        %v2705 = vmul.f32 %v2694, %v917
        %v2706 = vmul.f32 %v2697, %v917
        %v2707 = vmul.f32 %v2700, %v917
        %v2708 = vmul.f32 %v2703, %v917
        %v2709 = vsub.f32 %v2684, %v2704
        %v2710 = vsub.f32 %v2685, %v2705
        %v2711 = vsub.f32 %v2686, %v2706
        %v2712 = vsub.f32 %v2687, %v2707
        %v2713 = vsub.f32 %v2688, %v2708
        %v2714 = vmul.f32 %v2709, %v2709
        %v2715 = vmul.f32 %v2710, %v2710
        %v2716 = vmul.f32 %v2711, %v2711
        %v2717 = vmul.f32 %v2712, %v2712
        %v2718 = vmul.f32 %v2713, %v2713
        %v2719 = vsel %vm900, %v2714, 0.0
        %2720 = vadd.xlane.f32.xlu0 %v2719
        %v2721 = vpop.xlane.xlu0 %2720
        %v2722 = vsel %vm900, %v2715, 0.0
        %2723 = vadd.xlane.f32.xlu0 %v2722
        %v2724 = vpop.xlane.xlu0 %2723
        %v2725 = vsel %vm900, %v2716, 0.0
        %2726 = vadd.xlane.f32.xlu0 %v2725
        %v2727 = vpop.xlane.xlu0 %2726
        %v2728 = vsel %vm900, %v2717, 0.0
        %2729 = vadd.xlane.f32.xlu0 %v2728
        %v2730 = vpop.xlane.xlu0 %2729
        %v2731 = vsel %vm913, %v2718, 0.0
        %2732 = vadd.xlane.f32.xlu0 %v2731
        %v2733 = vpop.xlane.xlu0 %2732
        %v2734 = vmul.f32 %v2721, %v917
        %v2735 = vmul.f32 %v2724, %v917
        %v2736 = vmul.f32 %v2727, %v917
        %v2737 = vmul.f32 %v2730, %v917
        %v2738 = vmul.f32 %v2733, %v917
        %v2739 = vadd.f32 %v2734, 1e-05
        %v2740 = vadd.f32 %v2735, 1e-05
        %v2741 = vadd.f32 %v2736, 1e-05
        %v2742 = vadd.f32 %v2737, 1e-05
        %v2743 = vadd.f32 %v2738, 1e-05
        %v2744 = vrsqrt.pop %v2739
        %v2745 = vrsqrt.pop %v2740
        %v2746 = vrsqrt.pop %v2741
        %v2747 = vrsqrt.pop %v2742
        %v2748 = vrsqrt.pop %v2743
        %v2749 = vmul.f32 %v2709, %v2744
        %v2750 = vmul.f32 %v2710, %v2745
        %v2751 = vmul.f32 %v2711, %v2746
        %v2752 = vmul.f32 %v2712, %v2747
        %v2753 = vmul.f32 %v2713, %v2748
        %v2755 = vlaneseq
        %v2756 = vshrl.u32 %v2755, 7
        %v2757 = vsub.s32 0, %v2756
        %v2758 = vrot.slane %v876, %v2757
        %v2760 = vmul.f32 %v2749, %v2758
        %v2761 = vmul.f32 %v2750, %v2758
        %v2762 = vmul.f32 %v2751, %v2758
        %v2763 = vmul.f32 %v2752, %v2758
        %v2764 = vmul.f32 %v2753, %v2758
        %v2766 = vlaneseq
        %v2767 = vshrl.u32 %v2766, 7
        %v2768 = vsub.s32 0, %v2767
        %v2769 = vrot.slane %v877, %v2768
        %v2771 = vadd.f32 %v2760, %v2769
        %v2772 = vadd.f32 %v2761, %v2769
        %v2773 = vadd.f32 %v2762, %v2769
        %v2774 = vadd.f32 %v2763, %v2769
        %v2775 = vadd.f32 %v2764, %v2769
        %v2776 = vpack.c.bf16 %v2772, %v2771
        %v2777 = vpack.c.bf16 %v2774, %v2773
        %v2778 = vpack.c.bf16 %v2775, %v2775
        %v2780 = vlaneseq
        %v2781 = vshrl.u32 %v2780, 7
        %v2782 = vsub.s32 0, %v2781
        %v2783 = vrot.slane %v882, %v2782
        %v2789 = vunpack.c.l.b16 %v878
        %v2790 = vunpack.c.l.b16 %v879
        %v2791 = vunpack.c.l.b16 %v880
        %v2792 = vunpack.c.l.b16 %v881
        %v2793 = vpack.c.b16 %v2790, %v2789
        %v2794 = vpack.c.b16 %v2792, %v2791
        %v2798 = vsel %vm900, %v2776, 0
        %v2801 = vsel %vm900, %v2777, 0
        %v2804 = vsel %vm900, %v2778, 0
        %2806 = vmatprep.subr.bf16.mxu0 0
        %2807 = vmatpush1.bf16.msra.mxu0 %v2793
        %2808 = vmatprep.subr.bf16.mxu0 0
        %2809 = vmatpush1.bf16.msra.mxu0 %v2794
        %2810 = vmatprep.subr.bf16.mxu0 0
        %2811 = vmatpush1.bf16.msra.mxu0 0
        %2812 = vmatprep.subr.bf16.mxu0 0
        %2813 = vmatpush1.bf16.msra.mxu0 0
        %2814 = vmatprep.subr.bf16.mxu0 0
        %2815 = vmatpush1.bf16.msra.mxu0 0
        %2816 = vmatprep.subr.bf16.mxu0 0
        %2817 = vmatpush1.bf16.msra.mxu0 0
        %2818 = vmatprep.subr.bf16.mxu0 0
        %2819 = vmatpush1.bf16.msra.mxu0 0
        %2820 = vmatprep.subr.bf16.mxu0 0
        %2821 = vmatpush1.bf16.msra.mxu0 0
        %2822 = vmatprep.subr.bf16.mxu0 0
        %2823 = vmatpush1.bf16.msra.mxu0 0
        %2824 = vmatprep.subr.bf16.mxu0 0
        %2825 = vmatpush1.bf16.msra.mxu0 0
        %2826 = vmatprep.subr.bf16.mxu0 0
        %2827 = vmatpush1.bf16.msra.mxu0 0
        %2828 = vmatprep.subr.bf16.mxu0 0
        %2829 = vmatpush1.bf16.msra.mxu0 0
        %2830 = vmatprep.subr.bf16.mxu0 0
        %2831 = vmatpush1.bf16.msra.mxu0 0
        %2832 = vmatprep.subr.bf16.mxu0 0
        %2833 = vmatpush1.bf16.msra.mxu0 0
        %2834 = vmatprep.subr.bf16.mxu0 0
        %2835 = vmatpush1.bf16.msra.mxu0 0
        %2836 = vmatprep.subr.bf16.mxu0 0
        %2837 = vmatpush1.bf16.msra.mxu0 0
        %2838 = vmatprep.mubr.bf16.mxu0 0
        %2839 = vmatmul.mubr.bf16.gmra.mrb[0].mxu0 %v2798
        %v2840 = vpop.f32.mrb[0].mxu0
        %v2841 = vadd.f32 %v2783, %v2840
        %v2842 = vpop.f32.mrb[0].mxu0
        %v2843 = vpop.f32.mrb[0].mxu0
        %v2844 = vadd.f32 %v2783, %v2843
        %v2845 = vpop.f32.mrb[0].mxu0
        %2846 = vmatprep.mubr.bf16.mxu0 0
        %2847 = vmatmul.mubr.bf16.gmra.mrb[0].mxu0 %v2801
        %v2848 = vpop.f32.mrb[0].mxu0
        %v2849 = vadd.f32 %v2783, %v2848
        %v2850 = vpop.f32.mrb[0].mxu0
        %v2851 = vpop.f32.mrb[0].mxu0
        %v2852 = vadd.f32 %v2783, %v2851
        %v2853 = vpop.f32.mrb[0].mxu0
        %2854 = vmatprep.mubr.bf16.mxu0 0
        %2855 = vmatmul.mubr.bf16.gmra.mrb[0].mxu0 %v2804
        %v2856 = vpop.f32.mrb[0].mxu0
        %v2857 = vadd.f32 %v2783, %v2856
        %v2858 = vpop.f32.mrb[0].mxu0
        %v2859 = vpop.f32.mrb[0].mxu0
        %v2860 = vpop.f32.mrb[0].mxu0
        %2861 = vdwg.mxu0
        %v2862 = vmul.f32 %v2841, %v2841
        %v2863 = vmul.f32 %v2844, %v2844
        %v2864 = vmul.f32 %v2849, %v2849
        %v2865 = vmul.f32 %v2852, %v2852
        %v2866 = vmul.f32 %v2857, %v2857
        %v2867 = vmul.f32 %v2841, %v2862
        %v2868 = vmul.f32 %v2844, %v2863
        %v2869 = vmul.f32 %v2849, %v2864
        %v2870 = vmul.f32 %v2852, %v2865
        %v2871 = vmul.f32 %v2857, %v2866
        %v2872 = vmul.f32 %v2867, 0.044715
        %v2873 = vmul.f32 %v2868, 0.044715
        %v2874 = vmul.f32 %v2869, 0.044715
        %v2875 = vmul.f32 %v2870, 0.044715
        %v2876 = vmul.f32 %v2871, 0.044715
        %v2877 = vadd.f32 %v2841, %v2872
        %v2878 = vadd.f32 %v2844, %v2873
        %v2879 = vadd.f32 %v2849, %v2874
        %v2880 = vadd.f32 %v2852, %v2875
        %v2881 = vadd.f32 %v2857, %v2876
        %v2882 = vmul.f32 %v2877, 0.7978846
        %v2883 = vmul.f32 %v2878, 0.7978846
        %v2884 = vmul.f32 %v2879, 0.7978846
        %v2885 = vmul.f32 %v2880, 0.7978846
        %v2886 = vmul.f32 %v2881, 0.7978846
        %v2887 = vtanh.pop %v2882
        %v2888 = vtanh.pop %v2883
        %v2889 = vtanh.pop %v2884
        %v2890 = vtanh.pop %v2885
        %v2891 = vtanh.pop %v2886
        %v2892 = vadd.f32 %v2887, 1.0
        %v2893 = vadd.f32 %v2888, 1.0
        %v2894 = vadd.f32 %v2889, 1.0
        %v2895 = vadd.f32 %v2890, 1.0
        %v2896 = vadd.f32 %v2891, 1.0
        %v2897 = vmul.f32 %v2892, 0.5
        %v2898 = vmul.f32 %v2893, 0.5
        %v2899 = vmul.f32 %v2894, 0.5
        %v2900 = vmul.f32 %v2895, 0.5
        %v2901 = vmul.f32 %v2896, 0.5
        %v2902 = vmul.f32 %v2841, %v2897
        %v2903 = vmul.f32 %v2844, %v2898
        %v2904 = vmul.f32 %v2849, %v2899
        %v2905 = vmul.f32 %v2852, %v2900
        %v2906 = vmul.f32 %v2857, %v2901
        %v2907 = vpack.c.bf16 %v2903, %v2902
        %v2908 = vpack.c.bf16 %v2905, %v2904
        %v2909 = vpack.c.bf16 %v2906, %v2906
        %v2926 = vunpack.c.l.b16 %v883
        %v2927 = vunpack.c.l.b16 %v884
        %v2928 = vunpack.c.l.b16 %v885
        %v2929 = vunpack.c.l.b16 %v886
        %v2930 = vunpack.c.l.b16 %v887
        %v2931 = vunpack.c.l.b16 %v888
        %v2932 = vunpack.c.l.b16 %v889
        %v2933 = vunpack.c.l.b16 %v890
        %v2934 = vunpack.c.l.b16 %v891
        %v2935 = vunpack.c.l.b16 %v892
        %v2936 = vunpack.c.l.b16 %v893
        %v2937 = vunpack.c.l.b16 %v894
        %v2938 = vunpack.c.l.b16 %v895
        %v2939 = vunpack.c.l.b16 %v896
        %v2940 = vunpack.c.l.b16 %v897
        %v2941 = vunpack.c.l.b16 %v898
        %v2942 = vpack.c.b16 %v2927, %v2926
        %v2943 = vpack.c.b16 %v2929, %v2928
        %v2944 = vpack.c.b16 %v2931, %v2930
        %v2945 = vpack.c.b16 %v2933, %v2932
        %v2946 = vpack.c.b16 %v2935, %v2934
        %v2947 = vpack.c.b16 %v2937, %v2936
        %v2948 = vpack.c.b16 %v2939, %v2938
        %v2949 = vpack.c.b16 %v2941, %v2940
        %2958 = vmatprep.subr.bf16.mxu0 0
        %2959 = vmatpush1.bf16.msra.mxu0 %v2942
        %2960 = vmatprep.subr.bf16.mxu0 0
        %2961 = vmatpush1.bf16.msra.mxu0 %v2943
        %2962 = vmatprep.subr.bf16.mxu0 0
        %2963 = vmatpush1.bf16.msra.mxu0 %v2944
        %2964 = vmatprep.subr.bf16.mxu0 0
        %2965 = vmatpush1.bf16.msra.mxu0 %v2945
        %2966 = vmatprep.subr.bf16.mxu0 0
        %2967 = vmatpush1.bf16.msra.mxu0 %v2946
        %2968 = vmatprep.subr.bf16.mxu0 0
        %2969 = vmatpush1.bf16.msra.mxu0 %v2947
        %2970 = vmatprep.subr.bf16.mxu0 0
        %2971 = vmatpush1.bf16.msra.mxu0 %v2948
        %2972 = vmatprep.subr.bf16.mxu0 0
        %2973 = vmatpush1.bf16.msra.mxu0 %v2949
        %2974 = vmatprep.subr.bf16.mxu0 0
        %2975 = vmatpush1.bf16.msra.mxu0 0
        %2976 = vmatprep.subr.bf16.mxu0 0
        %2977 = vmatpush1.bf16.msra.mxu0 0
        %2978 = vmatprep.subr.bf16.mxu0 0
        %2979 = vmatpush1.bf16.msra.mxu0 0
        %2980 = vmatprep.subr.bf16.mxu0 0
        %2981 = vmatpush1.bf16.msra.mxu0 0
        %2982 = vmatprep.subr.bf16.mxu0 0
        %2983 = vmatpush1.bf16.msra.mxu0 0
        %2984 = vmatprep.subr.bf16.mxu0 0
        %2985 = vmatpush1.bf16.msra.mxu0 0
        %2986 = vmatprep.subr.bf16.mxu0 0
        %2987 = vmatpush1.bf16.msra.mxu0 0
        %2988 = vmatprep.subr.bf16.mxu0 0
        %2989 = vmatpush1.bf16.msra.mxu0 0
        %2990 = vmatprep.mubr.bf16.mxu0 0
        %2991 = vmatmul.mubr.bf16.gmra.mrb[0].mxu0 %v2907
        %v2992 = vpop.f32.mrb[0].mxu0
        %v2993 = vadd.f32 0.0, %v2992
        %v2994 = vpop.f32.mrb[0].mxu0
        %v2995 = vpop.f32.mrb[0].mxu0
        %v2996 = vadd.f32 0.0, %v2995
        %v2997 = vpop.f32.mrb[0].mxu0
        %2998 = vmatprep.mubr.bf16.mxu0 0
        %2999 = vmatmul.mubr.bf16.gmra.mrb[0].mxu0 %v2908
        %v3000 = vpop.f32.mrb[0].mxu0
        %v3001 = vadd.f32 0.0, %v3000
        %v3002 = vpop.f32.mrb[0].mxu0
        %v3003 = vpop.f32.mrb[0].mxu0
        %v3004 = vadd.f32 0.0, %v3003
        %v3005 = vpop.f32.mrb[0].mxu0
        %3006 = vmatprep.mubr.bf16.mxu0 0
        %3007 = vmatmul.mubr.bf16.gmra.mrb[0].mxu0 %v2909
        %v3008 = vpop.f32.mrb[0].mxu0
        %v3009 = vadd.f32 0.0, %v3008
        %v3010 = vpop.f32.mrb[0].mxu0
        %v3011 = vpop.f32.mrb[0].mxu0
        %v3012 = vpop.f32.mrb[0].mxu0
        %3013 = vdwg.mxu0
        %v3014 = vadd.f32 %v2684, %v2993
        %v3015 = vadd.f32 %v2685, %v2996
        %v3016 = vadd.f32 %v2686, %v3001
        %v3017 = vadd.f32 %v2687, %v3004
        %v3018 = vadd.f32 %v2688, %v3009
        %v3020 = vlaneseq
        %v3021 = vshrl.u32 %v3020, 7
        %v3022 = vsub.s32 0, %v3021
        %v3023 = vrot.slane %v899, %v3022
        %v3025 = vadd.f32 %v3014, %v3023
        %v3026 = vadd.f32 %v3015, %v3023
        %v3027 = vadd.f32 %v3016, %v3023
        %v3028 = vadd.f32 %v3017, %v3023
        %v3029 = vadd.f32 %v3018, %v3023
        %3030 = vst.msk [vmem:[#allocation2] sm:$0xff] %vm900, %v3025
        %3031 = vst.msk [vmem:[#allocation2 + $0x8] sm:$0xff] %vm900, %v3026
        %3032 = vst.msk [vmem:[#allocation2 + $0x10] sm:$0xff] %vm900, %v3027
        %3033 = vst.msk [vmem:[#allocation2 + $0x18] sm:$0xff] %vm900, %v3028
        %3034 = vst.msk [vmem:[#allocation2 + $0x20] sm:$0x3] %vm913, %v3029
        %p3035 = scmp.eq.s32.totalorder %s35, 1
        // Predicated region
        $region109: #{segmentation_vit_forward.3} parent=103 // pred_check
          %p3036 = pneg %p3035
        $region110: #{segmentation_vit_forward.3} parent=103 // pred_check_branch
          %3038 = sbr.rel (%p3036) target = $region112
        $region111: #{segmentation_vit_forward.3} parent=103 // pred_region
          %v3039 = vld [vmem:[%s13] sm:$0x1]
          %v3040 = vld [vmem:[%s14] sm:$0x1]
          %v3041 = vsel %vm900, %v3025, 0.0
          %3042 = vadd.xlane.f32.xlu0 %v3041
          %v3043 = vpop.xlane.xlu0 %3042
          %v3044 = vsel %vm900, %v3026, 0.0
          %3045 = vadd.xlane.f32.xlu0 %v3044
          %v3046 = vpop.xlane.xlu0 %3045
          %v3047 = vsel %vm900, %v3027, 0.0
          %3048 = vadd.xlane.f32.xlu0 %v3047
          %v3049 = vpop.xlane.xlu0 %3048
          %v3050 = vsel %vm900, %v3028, 0.0
          %3051 = vadd.xlane.f32.xlu0 %v3050
          %v3052 = vpop.xlane.xlu0 %3051
          %v3053 = vsel %vm913, %v3029, 0.0
          %3054 = vadd.xlane.f32.xlu0 %v3053
          %v3055 = vpop.xlane.xlu0 %3054
          %v3056 = vmul.f32 %v3043, %v917
          %v3057 = vmul.f32 %v3046, %v917
          %v3058 = vmul.f32 %v3049, %v917
          %v3059 = vmul.f32 %v3052, %v917
          %v3060 = vmul.f32 %v3055, %v917
          %v3061 = vsub.f32 %v3025, %v3056
          %v3062 = vsub.f32 %v3026, %v3057
          %v3063 = vsub.f32 %v3027, %v3058
          %v3064 = vsub.f32 %v3028, %v3059
          %v3065 = vsub.f32 %v3029, %v3060
          %v3066 = vmul.f32 %v3061, %v3061
          %v3067 = vmul.f32 %v3062, %v3062
          %v3068 = vmul.f32 %v3063, %v3063
          %v3069 = vmul.f32 %v3064, %v3064
          %v3070 = vmul.f32 %v3065, %v3065
          %v3071 = vsel %vm900, %v3066, 0.0
          %3072 = vadd.xlane.f32.xlu0 %v3071
          %v3073 = vpop.xlane.xlu0 %3072
          %v3074 = vsel %vm900, %v3067, 0.0
          %3075 = vadd.xlane.f32.xlu0 %v3074
          %v3076 = vpop.xlane.xlu0 %3075
          %v3077 = vsel %vm900, %v3068, 0.0
          %3078 = vadd.xlane.f32.xlu0 %v3077
          %v3079 = vpop.xlane.xlu0 %3078
          %v3080 = vsel %vm900, %v3069, 0.0
          %3081 = vadd.xlane.f32.xlu0 %v3080
          %v3082 = vpop.xlane.xlu0 %3081
          %v3083 = vsel %vm913, %v3070, 0.0
          %3084 = vadd.xlane.f32.xlu0 %v3083
          %v3085 = vpop.xlane.xlu0 %3084
          %v3086 = vmul.f32 %v3073, %v917
          %v3087 = vmul.f32 %v3076, %v917
          %v3088 = vmul.f32 %v3079, %v917
          %v3089 = vmul.f32 %v3082, %v917
          %v3090 = vmul.f32 %v3085, %v917
          %v3091 = vadd.f32 %v3086, 1e-05
          %v3092 = vadd.f32 %v3087, 1e-05
          %v3093 = vadd.f32 %v3088, 1e-05
          %v3094 = vadd.f32 %v3089, 1e-05
          %v3095 = vadd.f32 %v3090, 1e-05
          %v3096 = vrsqrt.pop %v3091
          %v3097 = vrsqrt.pop %v3092
          %v3098 = vrsqrt.pop %v3093
          %v3099 = vrsqrt.pop %v3094
          %v3100 = vrsqrt.pop %v3095
          %v3101 = vmul.f32 %v3061, %v3096
          %v3102 = vmul.f32 %v3062, %v3097
          %v3103 = vmul.f32 %v3063, %v3098
          %v3104 = vmul.f32 %v3064, %v3099
          %v3105 = vmul.f32 %v3065, %v3100
          %v3107 = vlaneseq
          %v3108 = vshrl.u32 %v3107, 7
          %v3109 = vsub.s32 0, %v3108
          %v3110 = vrot.slane %v3039, %v3109
          %v3112 = vmul.f32 %v3101, %v3110
          %v3113 = vmul.f32 %v3102, %v3110
          %v3114 = vmul.f32 %v3103, %v3110
          %v3115 = vmul.f32 %v3104, %v3110
          %v3116 = vmul.f32 %v3105, %v3110
          %v3118 = vlaneseq
          %v3119 = vshrl.u32 %v3118, 7
          %v3120 = vsub.s32 0, %v3119
          %v3121 = vrot.slane %v3040, %v3120
          %v3123 = vadd.f32 %v3112, %v3121
          %v3124 = vadd.f32 %v3113, %v3121
          %v3125 = vadd.f32 %v3114, %v3121
          %v3126 = vadd.f32 %v3115, %v3121
          %v3127 = vadd.f32 %v3116, %v3121
          %v3131 = vrot.slane %v3123, 1
          %v3132 = vrot.slane %v3124, 1
          %v3133 = vsel %vm1108, %v3131, %v3132
          %v3134 = vrot.slane %v3125, 1
          %v3135 = vsel %vm1108, %v3132, %v3134
          %vm3140 = vcmask 1045504
          %v3141 = vrot.slane %v3125, 2
          %v3142 = vrot.slane %v3126, 2
          %v3143 = vsel %vm3140, %v3141, %v3142
          %v3144 = vrot.slane %v3127, 2
          %v3145 = vsel %vm3140, %v3142, %v3144
          %v3148 = vld [vmem:[%s15] sm:$0xf]
          %v3149 = vld [vmem:[%s15 + $0x4] sm:$0xf]
          %v3150 = vld [vmem:[%s15 + $0x8] sm:$0xf]
          %v3151 = vld [vmem:[%s15 + $0xc] sm:$0xf]
          %v3152 = vpack.c.bf16 %v3135, %v3133
          %v3153 = vpack.c.bf16 %v3145, %v3143
          %v3158 = vunpack.c.l.b16 %v3148
          %v3159 = vunpack.c.l.b16 %v3149
          %v3160 = vunpack.c.l.b16 %v3150
          %v3161 = vunpack.c.l.b16 %v3151
          %v3162 = vpack.c.b16 %v3159, %v3158
          %v3163 = vpack.c.b16 %v3161, %v3160
          %v3167 = vsel %vm900, %v3152, 0
          %v3170 = vsel %vm900, %v3153, 0
          %3172 = vmatprep.subr.bf16.mxu0 0
          %3173 = vmatpush1.bf16.msra.mxu0 %v3162
          %3174 = vmatprep.subr.bf16.mxu0 0
          %3175 = vmatpush1.bf16.msra.mxu0 %v3163
          %3176 = vmatprep.subr.bf16.mxu0 0
          %3177 = vmatpush1.bf16.msra.mxu0 0
          %3178 = vmatprep.subr.bf16.mxu0 0
          %3179 = vmatpush1.bf16.msra.mxu0 0
          %3180 = vmatprep.subr.bf16.mxu0 0
          %3181 = vmatpush1.bf16.msra.mxu0 0
          %3182 = vmatprep.subr.bf16.mxu0 0
          %3183 = vmatpush1.bf16.msra.mxu0 0
          %3184 = vmatprep.subr.bf16.mxu0 0
          %3185 = vmatpush1.bf16.msra.mxu0 0
          %3186 = vmatprep.subr.bf16.mxu0 0
          %3187 = vmatpush1.bf16.msra.mxu0 0
          %3188 = vmatprep.subr.bf16.mxu0 0
          %3189 = vmatpush1.bf16.msra.mxu0 0
          %3190 = vmatprep.subr.bf16.mxu0 0
          %3191 = vmatpush1.bf16.msra.mxu0 0
          %3192 = vmatprep.subr.bf16.mxu0 0
          %3193 = vmatpush1.bf16.msra.mxu0 0
          %3194 = vmatprep.subr.bf16.mxu0 0
          %3195 = vmatpush1.bf16.msra.mxu0 0
          %3196 = vmatprep.subr.bf16.mxu0 0
          %3197 = vmatpush1.bf16.msra.mxu0 0
          %3198 = vmatprep.subr.bf16.mxu0 0
          %3199 = vmatpush1.bf16.msra.mxu0 0
          %3200 = vmatprep.subr.bf16.mxu0 0
          %3201 = vmatpush1.bf16.msra.mxu0 0
          %3202 = vmatprep.subr.bf16.mxu0 0
          %3203 = vmatpush1.bf16.msra.mxu0 0
          %3204 = vmatprep.mubr.bf16.mxu0 0
          %3205 = vmatmul.mubr.bf16.gmra.mrb[0].mxu0 %v3167
          %v3206 = vpop.f32.mrb[0].mxu0
          %v3207 = vadd.f32 0.0, %v3206
          %v3208 = vpop.f32.mrb[0].mxu0
          %v3209 = vpop.f32.mrb[0].mxu0
          %v3210 = vadd.f32 0.0, %v3209
          %v3211 = vpop.f32.mrb[0].mxu0
          %3212 = vmatprep.mubr.bf16.mxu0 0
          %3213 = vmatmul.mubr.bf16.gmra.mrb[0].mxu0 %v3170
          %v3214 = vpop.f32.mrb[0].mxu0
          %v3215 = vadd.f32 0.0, %v3214
          %v3216 = vpop.f32.mrb[0].mxu0
          %v3217 = vpop.f32.mrb[0].mxu0
          %v3218 = vadd.f32 0.0, %v3217
          %v3219 = vpop.f32.mrb[0].mxu0
          %3220 = vdwg.mxu0
          %v3221 = vmax.f32 %v3207, 0.0
          %v3222 = vmax.f32 %v3210, 0.0
          %v3223 = vmax.f32 %v3215, 0.0
          %v3224 = vmax.f32 %v3218, 0.0
          %v3225 = vsel %vm900, %v3221, 0.0
          %v3226 = vsel %vm900, %v3222, 0.0
          %v3227 = vadd.f32 %v3225, %v3226
          %v3228 = vsel %vm900, %v3223, 0.0
          %v3229 = vadd.f32 %v3227, %v3228
          %v3230 = vsel %vm900, %v3224, 0.0
          %v3231 = vadd.f32 %v3229, %v3230
          %v3232 = vrot.slane %v3231, 4
          %v3233 = vadd.f32 %v3231, %v3232
          %v3234 = vrot.slane %v3233, 2
          %v3235 = vadd.f32 %v3233, %v3234
          %v3236 = vrot.slane %v3235, 1
          %v3237 = vadd.f32 %v3235, %v3236
          %v3238 = vmul.f32 %v3237, %v917
          %v3239 = vmul.f32 %v3221, %v3221
          %v3240 = vmul.f32 %v3222, %v3222
          %v3241 = vmul.f32 %v3223, %v3223
          %v3242 = vmul.f32 %v3224, %v3224
          %v3243 = vsel %vm900, %v3239, 0.0
          %v3244 = vsel %vm900, %v3240, 0.0
          %v3245 = vadd.f32 %v3243, %v3244
          %v3246 = vsel %vm900, %v3241, 0.0
          %v3247 = vadd.f32 %v3245, %v3246
          %v3248 = vsel %vm900, %v3242, 0.0
          %v3249 = vadd.f32 %v3247, %v3248
          %v3250 = vrot.slane %v3249, 4
          %v3251 = vadd.f32 %v3249, %v3250
          %v3252 = vrot.slane %v3251, 2
          %v3253 = vadd.f32 %v3251, %v3252
          %v3254 = vrot.slane %v3253, 1
          %v3255 = vadd.f32 %v3253, %v3254
          %v3256 = vmul.f32 %v3255, %v917
          %v3257 = vmul.f32 %v3238, %v3238
          %v3258 = vsub.f32 %v3256, %v3257
          %v3259 = vadd.f32 %v3258, 1e-05
          %v3260 = vrsqrt.pop %v3259
          %v3261 = vsub.f32 %v3221, %v3238
          %v3262 = vsub.f32 %v3222, %v3238
          %v3263 = vsub.f32 %v3223, %v3238
          %v3264 = vsub.f32 %v3224, %v3238
          %v3265 = vmul.f32 %v3261, %v3260
          %v3266 = vmul.f32 %v3262, %v3260
          %v3267 = vmul.f32 %v3263, %v3260
          %v3268 = vmul.f32 %v3264, %v3260
          %v3269 = vld [vmem:[%s16] sm:$0x1]
          %v3271 = vlaneseq
          %v3272 = vshrl.u32 %v3271, 7
          %v3273 = vsub.s32 0, %v3272
          %v3274 = vrot.slane %v3269, %v3273
          %v3276 = vmul.f32 %v3265, %v3274
          %v3277 = vmul.f32 %v3266, %v3274
          %v3278 = vmul.f32 %v3267, %v3274
          %v3279 = vmul.f32 %v3268, %v3274
          %v3280 = vld [vmem:[%s17] sm:$0x1]
          %v3282 = vlaneseq
          %v3283 = vshrl.u32 %v3282, 7
          %v3284 = vsub.s32 0, %v3283
          %v3285 = vrot.slane %v3280, %v3284
          %v3287 = vadd.f32 %v3276, %v3285
          %v3288 = vadd.f32 %v3277, %v3285
          %v3289 = vadd.f32 %v3278, %v3285
          %v3290 = vadd.f32 %v3279, %v3285
          %v3291 = vld [vmem:[%s18] sm:$0x3]
          %v3292 = vpack.c.bf16 %v3288, %v3287
          %v3293 = vld [vmem:[%s19] sm:$0xf]
          %3295 = vset.pattern.permute.xlu0 0
          %3296 = vperm.xlu0 %3295, %v3293
          %v3297 = vpop.permute.xlu0 %3296
          %v3300 = vsel %vm900, %v3291, 0
          %v3303 = vsel %vm900, %v3292, 0
          %3305 = vmatprep.subr.bf16.mxu0 0
          %3306 = vmatpush1.bf16.xpose.msra.mxu0 %v3303
          %3307 = vmatprep.subr.bf16.mxu0 0
          %3308 = vmatpush1.bf16.xpose.msra.mxu0 0
          %3309 = vmatprep.subr.bf16.mxu0 0
          %3310 = vmatpush1.bf16.xpose.msra.mxu0 0
          %3311 = vmatprep.subr.bf16.mxu0 0
          %3312 = vmatpush1.bf16.xpose.msra.mxu0 0
          %3313 = vmatprep.subr.bf16.mxu0 0
          %3314 = vmatpush1.bf16.xpose.msra.mxu0 0
          %3315 = vmatprep.subr.bf16.mxu0 0
          %3316 = vmatpush1.bf16.xpose.msra.mxu0 0
          %3317 = vmatprep.subr.bf16.mxu0 0
          %3318 = vmatpush1.bf16.xpose.msra.mxu0 0
          %3319 = vmatprep.subr.bf16.mxu0 0
          %3320 = vmatpush1.bf16.xpose.msra.mxu0 0
          %3321 = vmatprep.subr.bf16.mxu0 0
          %3322 = vmatpush1.bf16.xpose.msra.mxu0 0
          %3323 = vmatprep.subr.bf16.mxu0 0
          %3324 = vmatpush1.bf16.xpose.msra.mxu0 0
          %3325 = vmatprep.subr.bf16.mxu0 0
          %3326 = vmatpush1.bf16.xpose.msra.mxu0 0
          %3327 = vmatprep.subr.bf16.mxu0 0
          %3328 = vmatpush1.bf16.xpose.msra.mxu0 0
          %3329 = vmatprep.subr.bf16.mxu0 0
          %3330 = vmatpush1.bf16.xpose.msra.mxu0 0
          %3331 = vmatprep.subr.bf16.mxu0 0
          %3332 = vmatpush1.bf16.xpose.msra.mxu0 0
          %3333 = vmatprep.subr.bf16.mxu0 0
          %3334 = vmatpush1.bf16.xpose.msra.mxu0 0
          %3335 = vmatprep.subr.bf16.mxu0 0
          %3336 = vmatpush1.bf16.xpose.msra.mxu0 0
          %3337 = vmatprep.mubr.bf16.mxu0 0
          %3338 = vmatmul.mubr.bf16.gmra.mrb[0].mxu0 %v3300
          %v3339 = vpop.f32.mrb[0].mxu0
          %v3340 = vadd.f32 %v3297, %v3339
          %v3341 = vpop.f32.mrb[0].mxu0
          %v3342 = vpop.f32.mrb[0].mxu0
          %v3343 = vpop.f32.mrb[0].mxu0
          %3344 = vdwg.mxu0
          %vm3345 = vcmask 125952
          %3346 = vst.msk [vmem:[%s21] sm:$0xf] %vm3345, %v3340
          %v3347 = vld [vmem:[%s20] sm:$0x1]
          %v3348 = vsel %vm3345, %v3340, -inf
          %v3349 = vrot.slane %v3348, 4
          %v3350 = vmax.f32 %v3348, %v3349
          %v3351 = vrot.slane %v3350, 2
          %v3352 = vmax.f32 %v3350, %v3351
          %v3353 = vrot.slane %v3352, 1
          %v3354 = vmax.f32 %v3352, %v3353
          %v3355 = vsub.f32 %v3340, %v3354
          %v3356 = vmul.f32 %v3355, 1.442695
          %v3357 = vpow.pop %v3356
          %v3358 = vsel %vm3345, %v3357, 0.0
          %v3359 = vrot.slane %v3358, 4
          %v3360 = vadd.f32 %v3358, %v3359
          %v3361 = vrot.slane %v3360, 2
          %v3362 = vadd.f32 %v3360, %v3361
          %v3363 = vrot.slane %v3362, 1
          %v3364 = vadd.f32 %v3362, %v3363
          %v3365 = vlog2.pop %v3364
          %v3366 = vmul.f32 %v3365, 0.6931472
          %v3367 = vadd.f32 %v3354, %v3366
          %v3368 = vlaneseq
          %v3369 = vshrl.u32 %v3368, 7
          %v3370 = vlaneseq
          %v3371 = vshrl.u32 %v3370, 7
          %v3372 = vsub.s32 0, %v3371
          %v3373 = vrot.slane %v3347, %v3372
          %vm3374 = vcmp.eq.s32.totalorder %v3369, %v3373
          %v3375 = vsel %vm3374, 1, 0
          %v3376 = vcvt.s32.f32 %v3375
          %v3377 = vmul.f32 %v3340, %v3376
          %v3378 = vsel %vm3345, %v3377, 0.0
          %v3379 = vrot.slane %v3378, 4
          %v3380 = vadd.f32 %v3378, %v3379
          %v3381 = vrot.slane %v3380, 2
          %v3382 = vadd.f32 %v3380, %v3381
          %v3383 = vrot.slane %v3382, 1
          %v3384 = vadd.f32 %v3382, %v3383
          %vm3385 = vcmp.ne.s32.totalorder %v3347, 0
          %v3386 = vsel %vm3385, 1, 0
          %v3387 = vcvt.s32.f32 %v3386
          %v3388 = vsub.f32 %v3367, %v3384
          %v3389 = vmul.f32 %v3387, %v3388
          %vm3390 = vcmask 122880
          %v3391 = vsel %vm3390, %v3389, 0.0
          %3392 = vadd.xlane.f32.xlu0 %v3391
          %v3393 = vpop.xlane.xlu0 %3392
          %v3394 = vrot.slane %v3393, 4
          %v3395 = vadd.f32 %v3393, %v3394
          %v3396 = vrot.slane %v3395, 2
          %v3397 = vadd.f32 %v3395, %v3396
          %v3398 = vrot.slane %v3397, 1
          %v3399 = vadd.f32 %v3397, %v3398
          %s3400 = vtos %v3399
          %s3401 = sadd.f32 %s3400, 0.0
          %v3402 = vsel %vm3390, %v3387, 0.0
          %3403 = vadd.xlane.f32.xlu0 %v3402
          %v3404 = vpop.xlane.xlu0 %3403
          %v3405 = vrot.slane %v3404, 4
          %v3406 = vadd.f32 %v3404, %v3405
          %v3407 = vrot.slane %v3406, 2
          %v3408 = vadd.f32 %v3406, %v3407
          %v3409 = vrot.slane %v3408, 1
          %v3410 = vadd.f32 %v3408, %v3409
          %s3411 = vtos %v3410
          %s3412 = sadd.f32 %s3411, 0.0
          %v3413 = vld [vmem:[%s18] sm:$0x3]
          %v3414 = vpack.c.bf16 %v3290, %v3289
          %v3415 = vld [vmem:[%s19] sm:$0xf]
          %3417 = vset.pattern.permute.xlu0 0
          %3418 = vperm.xlu0 %3417, %v3415
          %v3419 = vpop.permute.xlu0 %3418
          %v3422 = vsel %vm900, %v3413, 0
          %v3425 = vsel %vm900, %v3414, 0
          %3427 = vmatprep.subr.bf16.mxu0 0
          %3428 = vmatpush1.bf16.xpose.msra.mxu0 %v3425
          %3429 = vmatprep.subr.bf16.mxu0 0
          %3430 = vmatpush1.bf16.xpose.msra.mxu0 0
          %3431 = vmatprep.subr.bf16.mxu0 0
          %3432 = vmatpush1.bf16.xpose.msra.mxu0 0
          %3433 = vmatprep.subr.bf16.mxu0 0
          %3434 = vmatpush1.bf16.xpose.msra.mxu0 0
          %3435 = vmatprep.subr.bf16.mxu0 0
          %3436 = vmatpush1.bf16.xpose.msra.mxu0 0
          %3437 = vmatprep.subr.bf16.mxu0 0
          %3438 = vmatpush1.bf16.xpose.msra.mxu0 0
          %3439 = vmatprep.subr.bf16.mxu0 0
          %3440 = vmatpush1.bf16.xpose.msra.mxu0 0
          %3441 = vmatprep.subr.bf16.mxu0 0
          %3442 = vmatpush1.bf16.xpose.msra.mxu0 0
          %3443 = vmatprep.subr.bf16.mxu0 0
          %3444 = vmatpush1.bf16.xpose.msra.mxu0 0
          %3445 = vmatprep.subr.bf16.mxu0 0
          %3446 = vmatpush1.bf16.xpose.msra.mxu0 0
          %3447 = vmatprep.subr.bf16.mxu0 0
          %3448 = vmatpush1.bf16.xpose.msra.mxu0 0
          %3449 = vmatprep.subr.bf16.mxu0 0
          %3450 = vmatpush1.bf16.xpose.msra.mxu0 0
          %3451 = vmatprep.subr.bf16.mxu0 0
          %3452 = vmatpush1.bf16.xpose.msra.mxu0 0
          %3453 = vmatprep.subr.bf16.mxu0 0
          %3454 = vmatpush1.bf16.xpose.msra.mxu0 0
          %3455 = vmatprep.subr.bf16.mxu0 0
          %3456 = vmatpush1.bf16.xpose.msra.mxu0 0
          %3457 = vmatprep.subr.bf16.mxu0 0
          %3458 = vmatpush1.bf16.xpose.msra.mxu0 0
          %3459 = vmatprep.mubr.bf16.mxu0 0
          %3460 = vmatmul.mubr.bf16.gmra.mrb[0].mxu0 %v3422
          %v3461 = vpop.f32.mrb[0].mxu0
          %v3462 = vadd.f32 %v3419, %v3461
          %v3463 = vpop.f32.mrb[0].mxu0
          %v3464 = vpop.f32.mrb[0].mxu0
          %v3465 = vpop.f32.mrb[0].mxu0
          %3466 = vdwg.mxu0
          %s3467 = scalar_lea.vmem %s21, 4
          %3468 = vst.msk [vmem:[%s3467] sm:$0xf] %vm3345, %v3462
          %v3469 = vld [vmem:[%s20 + $0x1] sm:$0x1]
          %v3470 = vsel %vm3345, %v3462, -inf
          %v3471 = vrot.slane %v3470, 4
          %v3472 = vmax.f32 %v3470, %v3471
          %v3473 = vrot.slane %v3472, 2
          %v3474 = vmax.f32 %v3472, %v3473
          %v3475 = vrot.slane %v3474, 1
          %v3476 = vmax.f32 %v3474, %v3475
          %v3477 = vsub.f32 %v3462, %v3476
          %v3478 = vmul.f32 %v3477, 1.442695
          %v3479 = vpow.pop %v3478
          %v3480 = vsel %vm3345, %v3479, 0.0
          %v3481 = vrot.slane %v3480, 4
          %v3482 = vadd.f32 %v3480, %v3481
          %v3483 = vrot.slane %v3482, 2
          %v3484 = vadd.f32 %v3482, %v3483
          %v3485 = vrot.slane %v3484, 1
          %v3486 = vadd.f32 %v3484, %v3485
          %v3487 = vlog2.pop %v3486
          %v3488 = vmul.f32 %v3487, 0.6931472
          %v3489 = vadd.f32 %v3476, %v3488
          %v3490 = vlaneseq
          %v3491 = vshrl.u32 %v3490, 7
          %v3492 = vsub.s32 0, %v3491
          %v3493 = vrot.slane %v3469, %v3492
          %vm3494 = vcmp.eq.s32.totalorder %v3369, %v3493
          %v3495 = vsel %vm3494, 1, 0
          %v3496 = vcvt.s32.f32 %v3495
          %v3497 = vmul.f32 %v3462, %v3496
          %v3498 = vsel %vm3345, %v3497, 0.0
          %v3499 = vrot.slane %v3498, 4
          %v3500 = vadd.f32 %v3498, %v3499
          %v3501 = vrot.slane %v3500, 2
          %v3502 = vadd.f32 %v3500, %v3501
          %v3503 = vrot.slane %v3502, 1
          %v3504 = vadd.f32 %v3502, %v3503
          %vm3505 = vcmp.ne.s32.totalorder %v3469, 0
          %v3506 = vsel %vm3505, 1, 0
          %v3507 = vcvt.s32.f32 %v3506
          %v3508 = vsub.f32 %v3489, %v3504
          %v3509 = vmul.f32 %v3507, %v3508
          %v3510 = vsel %vm3390, %v3509, 0.0
          %3511 = vadd.xlane.f32.xlu0 %v3510
          %v3512 = vpop.xlane.xlu0 %3511
          %v3513 = vrot.slane %v3512, 4
          %v3514 = vadd.f32 %v3512, %v3513
          %v3515 = vrot.slane %v3514, 2
          %v3516 = vadd.f32 %v3514, %v3515
          %v3517 = vrot.slane %v3516, 1
          %v3518 = vadd.f32 %v3516, %v3517
          %s3519 = vtos %v3518
          %s3520 = sadd.f32 %s3401, %s3519
          %v3521 = vsel %vm3390, %v3507, 0.0
          %3522 = vadd.xlane.f32.xlu0 %v3521
          %v3523 = vpop.xlane.xlu0 %3522
          %v3524 = vrot.slane %v3523, 4
          %v3525 = vadd.f32 %v3523, %v3524
          %v3526 = vrot.slane %v3525, 2
          %v3527 = vadd.f32 %v3525, %v3526
          %v3528 = vrot.slane %v3527, 1
          %v3529 = vadd.f32 %v3527, %v3528
          %s3530 = vtos %v3529
          %s3531 = sadd.f32 %s3412, %s3530
          %p3532 = scmp.gt.f32.partialorder %s3531, 0.0
          %v3533 = vstv %s3531
          %v3534 = vrcp.pop %v3533
          %s3535 = vtos %v3534
          %s3536 = smul.f32 %s3520, %s3535
          %s3537 = scalar_select %p3532, %s3536, 0.0
          %s3538 = scalar_lea.smem [#allocation3], 0
          %3539 = sst [smem:[%s3538]] %s3537
        $region112: #{segmentation_vit_forward.3} parent=103 // pred_fallthru
          _
        // Predicated region
        $region113: #{segmentation_vit_forward.3} parent=103 // pred_check
          %p3540 = pneg %p549
        $region114: #{segmentation_vit_forward.3} parent=103 // pred_check_branch
          %3542 = sbr.rel (%p3540) target = $region116
        $region115: #{segmentation_vit_forward.3} parent=103 // pred_region
          _
        $region116: #{segmentation_vit_forward.3} parent=103 // pred_fallthru
          _
        // Predicated region
        $region117: #{segmentation_vit_forward.3} parent=103 // pred_check
          %p3543 = pneg %p570
        $region118: #{segmentation_vit_forward.3} parent=103 // pred_check_branch
          %3545 = sbr.rel (%p3543) target = $region120
        $region119: #{segmentation_vit_forward.3} parent=103 // pred_region
          %s3547 = ssub.s32 16, 16
          %3548 = vsyncadd [#allocation4], %s3547
          %3551 = dma.smem_to_hbm [#allocation3], 16, %s22, [#allocation4]
        $region120: #{segmentation_vit_forward.3} parent=103 // pred_fallthru
          _
        // Predicated region
        $region121: #{segmentation_vit_forward.3} parent=103 // pred_check
          %p3552 = pneg %p549
        $region122: #{segmentation_vit_forward.3} parent=103 // pred_check_branch
          %3554 = sbr.rel (%p3552) target = $region124
        $region123: #{segmentation_vit_forward.3} parent=103 // pred_region
          _
        $region124: #{segmentation_vit_forward.3} parent=103 // pred_fallthru
          _
        // Predicated region
        $region125: #{segmentation_vit_forward.3} parent=103 // pred_check
          %p3555 = pneg %p570
        $region126: #{segmentation_vit_forward.3} parent=103 // pred_check_branch
          %3557 = sbr.rel (%p3555) target = $region128
        $region127: #{segmentation_vit_forward.3} parent=103 // pred_region
          %3558 = dma.done [#allocation4], 16
        $region128: #{segmentation_vit_forward.3} parent=103 // pred_fallthru
          _
        %3559 = sfence
      $region104: #{segmentation_vit_forward.3} parent=5 // pred_fallthru
        _
      %p3560 = scmp.le.s32.totalorder 2, %s30
      // Predicated region
      $region129: #{segmentation_vit_forward.3} parent=5 // pred_check
        %p3561 = pneg %p3560
      $region130: #{segmentation_vit_forward.3} parent=5 // pred_check_branch
        %3563 = sbr.rel (%p3561) target = $region132
      $region131: #{segmentation_vit_forward.3} parent=5 // pred_region
        %s3564 = ssub.s32 %s30, 2
      $region132: #{segmentation_vit_forward.3} parent=5 // pred_fallthru
        _
    $region6: #{segmentation_vit_forward.3} parent=1 // loop_footer
      %s34 = sadd.s32 1, %s30
    $region7: #{segmentation_vit_forward.3} parent=1 // loop_footer_branch
      %29 = sbr.rel target = $region3
    $region8: #{segmentation_vit_forward.3} parent=1 // loop_exit
      _
    %3565 = vsyncpa [#allocation4], 1
    %s3566 = scalar_lea.sflag [#allocation4], 1
    %3567 = vsyncpa %s3566, 1

</llo_original>
